<compile_context>
chip_gen: v6e
topology: v6e:2x2x1
jax: 0.10.0
libtpu: 0.0.40
codegen_flags: <defaults>
</compile_context>

<pallas_src>
import functools

import jax
import jax.numpy as jnp
from jax.experimental import pallas as pl
from jax.experimental.pallas import tpu as pltpu

_A_BLOCK_BYTES = 2 * 1024 * 1024          # budget for one (tm, Kp) bf16 A block
_VMEM_LIMIT = 32 * 1024 * 1024            # explicit scoped-VMEM limit (v5e default is 16 MiB)


def _round_up(x, m):
    return (x + m - 1) // m * m


def _pick_tile(total, cap):
    """Largest multiple of 128 that divides `total` (a 128-multiple) and <= cap."""
    assert total % 128 == 0 and cap >= 128, (total, cap)
    t = min(total, cap)
    t -= t % 128
    while total % t:
        t -= 128
    return t


def _choose_m_tiling(M, Kp):
    """Return (tm, Mp).  Prefer one full-extent M block (no padding, no grid
    steps); otherwise the largest 8-multiple tile within the byte budget that
    divides M; otherwise fall back to padding M up (never hit for this net)."""
    cap = max(256, (_A_BLOCK_BYTES // (2 * Kp)) // 8 * 8)
    if M <= cap:
        return M, M
    t = cap
    while t >= 8:
        if M % t == 0:
            return t, M
        t -= 8
    return cap, _round_up(M, cap)


# ----------------------------------------------------------------------------
# Pallas kernels
# ----------------------------------------------------------------------------
def _gemm_k1_kernel(a_ref, b_ref, bias_ref, o_ref, *, relu):
    # Full K in one shot: no accumulator scratch, no pl.when.
    r = jnp.dot(a_ref[...], b_ref[...], preferred_element_type=jnp.float32)
    r = r + bias_ref[...]
    if relu:
        r = jnp.maximum(r, 0.0)
    o_ref[...] = r.astype(o_ref.dtype)


def _fc_fused_kernel(a_ref, w1_ref, b1_ref, w2_ref, b2_ref, o_ref):
    # fc1 (full 3200x512 weight panel resident) + ReLU + fc2 epilogue.
    h = jnp.dot(a_ref[...], w1_ref[...], preferred_element_type=jnp.float32)
    h = jnp.maximum(h + b1_ref[...], 0.0)
    q = jnp.dot(h.astype(jnp.bfloat16), w2_ref[...],
                preferred_element_type=jnp.float32)
    o_ref[...] = (q + b2_ref[...]).astype(o_ref.dtype)


# ----------------------------------------------------------------------------
# Fused GEMM wrapper (convolutions): out = relu(A @ W + b), single K step
# ----------------------------------------------------------------------------
def gemm_bias_act(a, w_p, bias_p, *, relu, out_dtype=jnp.bfloat16):
    """a: (M, K) activations.  w_p: (Kp, Np) bf16 pre-padded.  bias_p: (1, Np) f32.
    Returns (Mp, Np); Mp == M except in the (unused) fallback padding path."""
    M, K = a.shape
    Kp, Np = w_p.shape
    assert Kp >= K and Kp % 128 == 0 and Np % 128 == 0

    a = a.astype(jnp.bfloat16)
    tm, Mp = _choose_m_tiling(M, Kp)
    pad_m, pad_k = Mp - M, Kp - K
    if pad_m or pad_k:
        a = jnp.pad(a, ((0, pad_m), (0, pad_k)))

    tn = _pick_tile(Np, 512)
    grid = (Mp // tm, Np // tn)

    out_bytes = Mp * Np * jnp.dtype(out_dtype).itemsize
    cost = pl.CostEstimate(
        flops=2 * Mp * Kp * Np,
        transcendentals=0,
        bytes_accessed=int((Mp * Kp + Kp * Np) * 2 + Np * 4 + out_bytes))

    return pl.pallas_call(
        functools.partial(_gemm_k1_kernel, relu=relu),
        out_shape=jax.ShapeDtypeStruct((Mp, Np), out_dtype),
        grid_spec=pltpu.PrefetchScalarGridSpec(
            num_scalar_prefetch=0,
            grid=grid,
            in_specs=[
                pl.BlockSpec((tm, Kp), lambda i, j: (i, 0)),
                pl.BlockSpec((Kp, tn), lambda i, j: (0, j)),
                pl.BlockSpec((1, tn), lambda i, j: (0, j)),
            ],
            out_specs=pl.BlockSpec((tm, tn), lambda i, j: (i, j)),
        ),
        compiler_params=pltpu.CompilerParams(
            dimension_semantics=("parallel", "parallel"),
            vmem_limit_bytes=_VMEM_LIMIT),
        cost_estimate=cost,
    )(a, w_p, bias_p)


# ----------------------------------------------------------------------------
# Fused fc1 + fc2 head
# ----------------------------------------------------------------------------
def fc_head(x, fw1, fb1, fw2, fb2, num_actions):
    M, K = x.shape
    K1p, H = fw1.shape            # (3200, 512)
    H2, Ap = fw2.shape            # (512, 128)
    assert H2 == H and K1p >= K

    x = x.astype(jnp.bfloat16)
    tm, Mp = _choose_m_tiling(M, K1p)
    pad_m, pad_k = Mp - M, K1p - K
    if pad_m or pad_k:
        x = jnp.pad(x, ((0, pad_m), (0, pad_k)))

    cost = pl.CostEstimate(
        flops=2 * Mp * K1p * H + 2 * Mp * H * Ap,
        transcendentals=0,
        bytes_accessed=int((Mp * K1p + K1p * H + H * Ap) * 2
                           + (H + Ap) * 4 + Mp * Ap * 4))

    out = pl.pallas_call(
        _fc_fused_kernel,
        out_shape=jax.ShapeDtypeStruct((Mp, Ap), jnp.float32),
        grid_spec=pltpu.PrefetchScalarGridSpec(
            num_scalar_prefetch=0,
            grid=(Mp // tm,),
            in_specs=[
                pl.BlockSpec((tm, K1p), lambda i: (i, 0)),
                pl.BlockSpec((K1p, H), lambda i: (0, 0)),
                pl.BlockSpec((1, H), lambda i: (0, 0)),
                pl.BlockSpec((H, Ap), lambda i: (0, 0)),
                pl.BlockSpec((1, Ap), lambda i: (0, 0)),
            ],
            out_specs=pl.BlockSpec((tm, Ap), lambda i: (i, 0)),
        ),
        compiler_params=pltpu.CompilerParams(
            dimension_semantics=("parallel",),
            vmem_limit_bytes=_VMEM_LIMIT),
        cost_estimate=cost,
    )(x, fw1, fb1, fw2, fb2)
    return out[:M, :num_actions]


# ----------------------------------------------------------------------------
# Conv layer = im2col (XLA glue) + Pallas GEMM (hot path)
# ----------------------------------------------------------------------------
def _im2col(x_nhwc, kh, kw, stride, in_c):
    # Columns ordered (kh, kw, C) with C fastest, matching the HWIO weight
    # reshape.  Only the valid :in_c channels of the (possibly 128-padded)
    # activation are gathered, so no separate channel-slice copy is needed.
    N, H, W, _ = x_nhwc.shape
    oh = (H - kh) // stride + 1
    ow = (W - kw) // stride + 1
    cols = []
    for i in range(kh):
        for j in range(kw):
            cols.append(x_nhwc[:, i:i + stride * oh:stride,
                               j:j + stride * ow:stride, :in_c])
    patches = jnp.concatenate(cols, axis=-1)          # (N, oh, ow, kh*kw*in_c)
    return patches.reshape(N * oh * ow, kh * kw * in_c), oh, ow


def conv2d_relu(x_nhwc, w_p, bias_p, *, in_c, kh, kw, stride):
    N = x_nhwc.shape[0]
    patches, oh, ow = _im2col(x_nhwc, kh, kw, stride, in_c)
    M = N * oh * ow
    y = gemm_bias_act(patches, w_p, bias_p, relu=True, out_dtype=jnp.bfloat16)
    if y.shape[0] != M:                               # fallback padding path only
        y = y[:M]
    # Keep the padded 128-lane channel layout; consumer reads only :oc.
    return y.reshape(N, oh, ow, y.shape[1])


# ----------------------------------------------------------------------------
# Qnet forward
# ----------------------------------------------------------------------------
@functools.partial(jax.jit, static_argnames=("num_actions",))
def qnet_forward(x_nchw, p, num_actions):
    # One transpose + one bf16 cast of the network input; everything else NHWC/bf16.
    x = jnp.transpose(x_nchw, (0, 2, 3, 1)).astype(jnp.bfloat16)
    x = conv2d_relu(x, p["w1"], p["b1"], in_c=4, kh=8, kw=8, stride=4)   # (N,20,20,128)
    x = conv2d_relu(x, p["w2"], p["b2"], in_c=32, kh=4, kw=4, stride=2)  # (N, 9, 9,128)
    x = conv2d_relu(x, p["w3"], p["b3"], in_c=64, kh=3, kw=3, stride=1)  # (N, 7, 7,128)
    N = x.shape[0]
    feat = x[..., :64].reshape(N, -1)     # NHWC flatten of valid channels (3136)
    return fc_head(feat, p["fw1"], p["fb1"], p["fw2"], p["fb2"], num_actions)


# ----------------------------------------------------------------------------
# Parameter init (matches torch defaults) and one-time kernel-side preparation
# ----------------------------------------------------------------------------
def init_params(key, num_actions):
    ks = jax.random.split(key, 10)

    def u(k, shape, fan_in):
        lim = 1.0 / jnp.sqrt(jnp.float32(fan_in))
        return jax.random.uniform(k, shape, jnp.float32, -lim, lim)

    return {
        "w1": u(ks[0], (8, 8, 4, 32), 4 * 8 * 8),
        "b1": u(ks[1], (32,), 4 * 8 * 8),
        "w2": u(ks[2], (4, 4, 32, 64), 32 * 4 * 4),
        "b2": u(ks[3], (64,), 32 * 4 * 4),
        "w3": u(ks[4], (3, 3, 64, 64), 64 * 3 * 3),
        "b3": u(ks[5], (64,), 64 * 3 * 3),
        "fw1": u(ks[6], (3136, 512), 3136),   # rows in torch (C, H, W) flatten order
        "fb1": u(ks[7], (512,), 3136),
        "fw2": u(ks[8], (512, num_actions), 512),
        "fb2": u(ks[9], (num_actions,), 512),
    }


def prepare_params(params):
    """One-time: pad weights/biases to (Kp, Np)/(1, Np), cast weights to bf16,
    and permute fc1 rows from (C,H,W) flatten order to (H,W,C) so the NHWC
    flatten feeds it directly (no per-forward NCHW transpose)."""

    def prep(w2d, b):
        K, N = w2d.shape
        Kp, Np = _round_up(K, 128), _round_up(N, 128)
        w_p = jnp.zeros((Kp, Np), jnp.bfloat16).at[:K, :N].set(
            w2d.astype(jnp.bfloat16))
        b_p = jnp.zeros((1, Np), jnp.float32).at[0, :N].set(
            b.astype(jnp.float32))
        return w_p, b_p

    fw1_nhwc = params["fw1"].reshape(64, 7, 7, 512).transpose(1, 2, 0, 3)
    fw1_nhwc = fw1_nhwc.reshape(3136, 512)

    w1, b1 = prep(params["w1"].reshape(-1, 32), params["b1"])
    w2, b2 = prep(params["w2"].reshape(-1, 64), params["b2"])
    w3, b3 = prep(params["w3"].reshape(-1, 64), params["b3"])
    fw1, fb1 = prep(fw1_nhwc, params["fb1"])
    fw2, fb2 = prep(params["fw2"], params["fb2"])
    return dict(w1=w1, b1=b1, w2=w2, b2=b2, w3=w3, b3=b3,
                fw1=fw1, fb1=fb1, fw2=fw2, fb2=fb2)


# Pure-JAX f32 reference (XLA conv) for the correctness check.
def ref_forward(x_nchw, params):
    def conv(x, w, b, s):
        y = jax.lax.conv_general_dilated(
            x, w, (s, s), "VALID",
            dimension_numbers=("NCHW", "HWIO", "NCHW"))
        return jax.nn.relu(y + b[None, :, None, None])

    x = x_nchw.astype(jnp.float32)
    x = conv(x, params["w1"], params["b1"], 4)
    x = conv(x, params["w2"], params["b2"], 2)
    x = conv(x, params["w3"], params["b3"], 1)
    x = x.reshape(x.shape[0], -1)                 # NCHW flatten (torch order)
    x = jax.nn.relu(x @ params["fw1"] + params["fb1"])
    return x @ params["fw2"] + params["fb2"]


if __name__ == "__main__":
    num_actions = 6
    key = jax.random.PRNGKey(0)
    k_x, k_p = jax.random.split(key)

    # NCHW input, matching the PyTorch module (84x84 forced by fc1's 3136 dim).
    x = jax.random.normal(k_x, (2, 4, 84, 84), dtype=jnp.float32)
    params = init_params(k_p, num_actions)
    prep = prepare_params(params)

    out = jax.block_until_ready(qnet_forward(x, prep, num_actions=num_actions))
    ref = jax.block_until_ready(ref_forward(x, params))

    assert out.shape == (2, num_actions), out.shape
    max_err = float(jnp.max(jnp.abs(out - ref)))
    # bf16 operands with f32 accumulation -> small quantization error vs f32 ref.
    assert jnp.allclose(out, ref, atol=3e-2, rtol=3e-2), max_err
    print("KERNEL_OK")
</pallas_src>

<mosaic_0001>
module attributes {stable_mosaic.version = 11 : i64} {
  func.func @_gemm_k1_kernel(%arg0: i32, %arg1: i32, %arg2: memref<800x256xbf16, #tpu.memory_space<vmem>>, %arg3: memref<256x128xbf16, #tpu.memory_space<vmem>>, %arg4: memref<1x128xf32, #tpu.memory_space<vmem>>, %arg5: memref<800x128xbf16, #tpu.memory_space<vmem>>) attributes {dimension_semantics = [#tpu.dimension_semantics<parallel>, #tpu.dimension_semantics<parallel>], iteration_bounds = array<i64: 1, 1>, scalar_prefetch = 0 : i64, scratch_operands = 0 : i64, tpu.core_type = #tpu.core_type<tc>, window_params = [{transform_indices = @transform_0, window_bounds = array<i64: 800, 256>}, {transform_indices = @transform_1, window_bounds = array<i64: 256, 128>}, {transform_indices = @transform_2, window_bounds = array<i64: 1, 128>}, {transform_indices = @transform_3, window_bounds = array<i64: 800, 128>}]} {
    %c0 = arith.constant 0 : index
    %c0_0 = arith.constant 0 : index
    %0 = vector.load %arg2[%c0, %c0_0] : memref<800x256xbf16, #tpu.memory_space<vmem>>, vector<800x256xbf16>
    %c0_1 = arith.constant 0 : index
    %c0_2 = arith.constant 0 : index
    %1 = vector.load %arg3[%c0_1, %c0_2] : memref<256x128xbf16, #tpu.memory_space<vmem>>, vector<256x128xbf16>
    %cst = arith.constant dense<0.000000e+00> : vector<800x128xf32>
    %2 = tpu.matmul %0, %1, %cst {dimension_numbers = #tpu.dot_dimension_numbers<[1], [0], [0], [1], [0, 0, 1, 1], [], []>} : vector<800x256xbf16>, vector<256x128xbf16>, vector<800x128xf32> -> vector<800x128xf32>
    %c0_3 = arith.constant 0 : index
    %c0_4 = arith.constant 0 : index
    %3 = vector.load %arg4[%c0_3, %c0_4] : memref<1x128xf32, #tpu.memory_space<vmem>>, vector<1x128xf32>
    %4 = vector.broadcast %3 : vector<1x128xf32> to vector<800x128xf32>
    %5 = arith.addf %2, %4 : vector<800x128xf32>
    %cst_5 = arith.constant 0.000000e+00 : f32
    %6 = vector.broadcast %cst_5 : f32 to vector<800x128xf32>
    %7 = arith.maximumf %5, %6 : vector<800x128xf32>
    %8 = arith.truncf %7 : vector<800x128xf32> to vector<800x128xbf16>
    %c0_6 = arith.constant 0 : index
    %c0_7 = arith.constant 0 : index
    %9 = vector.load %arg5[%c0_6, %c0_7] : memref<800x128xbf16, #tpu.memory_space<vmem>>, vector<800x128xbf16>
    tpu.vector_store %arg5[%c0_6, %c0_7], %8 {strides = array<i32>} : memref<800x128xbf16, #tpu.memory_space<vmem>>, vector<800x128xbf16>,
    return
  }
  func.func @transform_0(%arg0: i32, %arg1: i32) -> (i32, i32) {
    %c0_i32 = arith.constant 0 : i32
    %c0_i32_0 = arith.constant 0 : i32
    return %arg0, %c0_i32 : i32, i32
  }
  func.func @transform_1(%arg0: i32, %arg1: i32) -> (i32, i32) {
    %c0_i32 = arith.constant 0 : i32
    %c0_i32_0 = arith.constant 0 : i32
    return %c0_i32, %arg1 : i32, i32
  }
  func.func @transform_2(%arg0: i32, %arg1: i32) -> (i32, i32) {
    %c0_i32 = arith.constant 0 : i32
    %c0_i32_0 = arith.constant 0 : i32
    return %c0_i32, %arg1 : i32, i32
  }
  func.func @transform_3(%arg0: i32, %arg1: i32) -> (i32, i32) {
    %c0_i32 = arith.constant 0 : i32
    return %arg0, %arg1 : i32, i32
  }
}

module attributes {stable_mosaic.version = 11 : i64} {
  func.func @_gemm_k1_kernel(%arg0: i32, %arg1: i32, %arg2: memref<162x512xbf16, #tpu.memory_space<vmem>>, %arg3: memref<512x128xbf16, #tpu.memory_space<vmem>>, %arg4: memref<1x128xf32, #tpu.memory_space<vmem>>, %arg5: memref<162x128xbf16, #tpu.memory_space<vmem>>) attributes {dimension_semantics = [#tpu.dimension_semantics<parallel>, #tpu.dimension_semantics<parallel>], iteration_bounds = array<i64: 1, 1>, scalar_prefetch = 0 : i64, scratch_operands = 0 : i64, tpu.core_type = #tpu.core_type<tc>, window_params = [{transform_indices = @transform_0, window_bounds = array<i64: 162, 512>}, {transform_indices = @transform_1, window_bounds = array<i64: 512, 128>}, {transform_indices = @transform_2, window_bounds = array<i64: 1, 128>}, {transform_indices = @transform_3, window_bounds = array<i64: 162, 128>}]} {
    %c0 = arith.constant 0 : index
    %c0_0 = arith.constant 0 : index
    %0 = vector.load %arg2[%c0, %c0_0] : memref<162x512xbf16, #tpu.memory_space<vmem>>, vector<162x512xbf16>
    %c0_1 = arith.constant 0 : index
    %c0_2 = arith.constant 0 : index
    %1 = vector.load %arg3[%c0_1, %c0_2] : memref<512x128xbf16, #tpu.memory_space<vmem>>, vector<512x128xbf16>
    %cst = arith.constant dense<0.000000e+00> : vector<162x128xf32>
    %2 = tpu.matmul %0, %1, %cst {dimension_numbers = #tpu.dot_dimension_numbers<[1], [0], [0], [1], [0, 0, 1, 1], [], []>} : vector<162x512xbf16>, vector<512x128xbf16>, vector<162x128xf32> -> vector<162x128xf32>
    %c0_3 = arith.constant 0 : index
    %c0_4 = arith.constant 0 : index
    %3 = vector.load %arg4[%c0_3, %c0_4] : memref<1x128xf32, #tpu.memory_space<vmem>>, vector<1x128xf32>
    %4 = vector.broadcast %3 : vector<1x128xf32> to vector<162x128xf32>
    %5 = arith.addf %2, %4 : vector<162x128xf32>
    %cst_5 = arith.constant 0.000000e+00 : f32
    %6 = vector.broadcast %cst_5 : f32 to vector<162x128xf32>
    %7 = arith.maximumf %5, %6 : vector<162x128xf32>
    %8 = arith.truncf %7 : vector<162x128xf32> to vector<162x128xbf16>
    %c0_6 = arith.constant 0 : index
    %c0_7 = arith.constant 0 : index
    %9 = vector.load %arg5[%c0_6, %c0_7] : memref<162x128xbf16, #tpu.memory_space<vmem>>, vector<162x128xbf16>
    tpu.vector_store %arg5[%c0_6, %c0_7], %8 {strides = array<i32>} : memref<162x128xbf16, #tpu.memory_space<vmem>>, vector<162x128xbf16>,
    return
  }
  func.func @transform_0(%arg0: i32, %arg1: i32) -> (i32, i32) {
    %c0_i32 = arith.constant 0 : i32
    %c0_i32_0 = arith.constant 0 : i32
    return %arg0, %c0_i32 : i32, i32
  }
  func.func @transform_1(%arg0: i32, %arg1: i32) -> (i32, i32) {
    %c0_i32 = arith.constant 0 : i32
    %c0_i32_0 = arith.constant 0 : i32
    return %c0_i32, %arg1 : i32, i32
  }
  func.func @transform_2(%arg0: i32, %arg1: i32) -> (i32, i32) {
    %c0_i32 = arith.constant 0 : i32
    %c0_i32_0 = arith.constant 0 : i32
    return %c0_i32, %arg1 : i32, i32
  }
  func.func @transform_3(%arg0: i32, %arg1: i32) -> (i32, i32) {
    %c0_i32 = arith.constant 0 : i32
    return %arg0, %arg1 : i32, i32
  }
}

module attributes {stable_mosaic.version = 11 : i64} {
  func.func @_gemm_k1_kernel(%arg0: i32, %arg1: i32, %arg2: memref<98x640xbf16, #tpu.memory_space<vmem>>, %arg3: memref<640x128xbf16, #tpu.memory_space<vmem>>, %arg4: memref<1x128xf32, #tpu.memory_space<vmem>>, %arg5: memref<98x128xbf16, #tpu.memory_space<vmem>>) attributes {dimension_semantics = [#tpu.dimension_semantics<parallel>, #tpu.dimension_semantics<parallel>], iteration_bounds = array<i64: 1, 1>, scalar_prefetch = 0 : i64, scratch_operands = 0 : i64, tpu.core_type = #tpu.core_type<tc>, window_params = [{transform_indices = @transform_0, window_bounds = array<i64: 98, 640>}, {transform_indices = @transform_1, window_bounds = array<i64: 640, 128>}, {transform_indices = @transform_2, window_bounds = array<i64: 1, 128>}, {transform_indices = @transform_3, window_bounds = array<i64: 98, 128>}]} {
    %c0 = arith.constant 0 : index
    %c0_0 = arith.constant 0 : index
    %0 = vector.load %arg2[%c0, %c0_0] : memref<98x640xbf16, #tpu.memory_space<vmem>>, vector<98x640xbf16>
    %c0_1 = arith.constant 0 : index
    %c0_2 = arith.constant 0 : index
    %1 = vector.load %arg3[%c0_1, %c0_2] : memref<640x128xbf16, #tpu.memory_space<vmem>>, vector<640x128xbf16>
    %cst = arith.constant dense<0.000000e+00> : vector<98x128xf32>
    %2 = tpu.matmul %0, %1, %cst {dimension_numbers = #tpu.dot_dimension_numbers<[1], [0], [0], [1], [0, 0, 1, 1], [], []>} : vector<98x640xbf16>, vector<640x128xbf16>, vector<98x128xf32> -> vector<98x128xf32>
    %c0_3 = arith.constant 0 : index
    %c0_4 = arith.constant 0 : index
    %3 = vector.load %arg4[%c0_3, %c0_4] : memref<1x128xf32, #tpu.memory_space<vmem>>, vector<1x128xf32>
    %4 = vector.broadcast %3 : vector<1x128xf32> to vector<98x128xf32>
    %5 = arith.addf %2, %4 : vector<98x128xf32>
    %cst_5 = arith.constant 0.000000e+00 : f32
    %6 = vector.broadcast %cst_5 : f32 to vector<98x128xf32>
    %7 = arith.maximumf %5, %6 : vector<98x128xf32>
    %8 = arith.truncf %7 : vector<98x128xf32> to vector<98x128xbf16>
    %c0_6 = arith.constant 0 : index
    %c0_7 = arith.constant 0 : index
    %9 = vector.load %arg5[%c0_6, %c0_7] : memref<98x128xbf16, #tpu.memory_space<vmem>>, vector<98x128xbf16>
    tpu.vector_store %arg5[%c0_6, %c0_7], %8 {strides = array<i32>} : memref<98x128xbf16, #tpu.memory_space<vmem>>, vector<98x128xbf16>,
    return
  }
  func.func @transform_0(%arg0: i32, %arg1: i32) -> (i32, i32) {
    %c0_i32 = arith.constant 0 : i32
    %c0_i32_0 = arith.constant 0 : i32
    return %arg0, %c0_i32 : i32, i32
  }
  func.func @transform_1(%arg0: i32, %arg1: i32) -> (i32, i32) {
    %c0_i32 = arith.constant 0 : i32
    %c0_i32_0 = arith.constant 0 : i32
    return %c0_i32, %arg1 : i32, i32
  }
  func.func @transform_2(%arg0: i32, %arg1: i32) -> (i32, i32) {
    %c0_i32 = arith.constant 0 : i32
    %c0_i32_0 = arith.constant 0 : i32
    return %c0_i32, %arg1 : i32, i32
  }
  func.func @transform_3(%arg0: i32, %arg1: i32) -> (i32, i32) {
    %c0_i32 = arith.constant 0 : i32
    return %arg0, %arg1 : i32, i32
  }
}

module attributes {stable_mosaic.version = 11 : i64} {
  func.func @_fc_fused_kernel(%arg0: i32, %arg1: memref<2x3200xbf16, #tpu.memory_space<vmem>>, %arg2: memref<3200x512xbf16, #tpu.memory_space<vmem>>, %arg3: memref<1x512xf32, #tpu.memory_space<vmem>>, %arg4: memref<512x128xbf16, #tpu.memory_space<vmem>>, %arg5: memref<1x128xf32, #tpu.memory_space<vmem>>, %arg6: memref<2x128xf32, #tpu.memory_space<vmem>>) attributes {dimension_semantics = [#tpu.dimension_semantics<parallel>], iteration_bounds = array<i64: 1>, scalar_prefetch = 0 : i64, scratch_operands = 0 : i64, tpu.core_type = #tpu.core_type<tc>, window_params = [{transform_indices = @transform_0, window_bounds = array<i64: 2, 3200>}, {pipeline_mode = #tpu.pipeline_mode<synchronous>, transform_indices = @transform_1, window_bounds = array<i64: 3200, 512>}, {pipeline_mode = #tpu.pipeline_mode<synchronous>, transform_indices = @transform_2, window_bounds = array<i64: 1, 512>}, {pipeline_mode = #tpu.pipeline_mode<synchronous>, transform_indices = @transform_3, window_bounds = array<i64: 512, 128>}, {pipeline_mode = #tpu.pipeline_mode<synchronous>, transform_indices = @transform_4, window_bounds = array<i64: 1, 128>}, {transform_indices = @transform_5, window_bounds = array<i64: 2, 128>}]} {
    %c0 = arith.constant 0 : index
    %c0_0 = arith.constant 0 : index
    %0 = vector.load %arg1[%c0, %c0_0] : memref<2x3200xbf16, #tpu.memory_space<vmem>>, vector<2x3200xbf16>
    %c0_1 = arith.constant 0 : index
    %c0_2 = arith.constant 0 : index
    %1 = vector.load %arg2[%c0_1, %c0_2] : memref<3200x512xbf16, #tpu.memory_space<vmem>>, vector<3200x512xbf16>
    %cst = arith.constant dense<0.000000e+00> : vector<2x512xf32>
    %2 = tpu.matmul %0, %1, %cst {dimension_numbers = #tpu.dot_dimension_numbers<[1], [0], [0], [1], [0, 0, 1, 1], [], []>} : vector<2x3200xbf16>, vector<3200x512xbf16>, vector<2x512xf32> -> vector<2x512xf32>
    %c0_3 = arith.constant 0 : index
    %c0_4 = arith.constant 0 : index
    %3 = vector.load %arg3[%c0_3, %c0_4] : memref<1x512xf32, #tpu.memory_space<vmem>>, vector<1x512xf32>
    %4 = vector.broadcast %3 : vector<1x512xf32> to vector<2x512xf32>
    %5 = arith.addf %2, %4 : vector<2x512xf32>
    %cst_5 = arith.constant 0.000000e+00 : f32
    %6 = vector.broadcast %cst_5 : f32 to vector<2x512xf32>
    %7 = arith.maximumf %5, %6 : vector<2x512xf32>
    %8 = arith.truncf %7 : vector<2x512xf32> to vector<2x512xbf16>
    %c0_6 = arith.constant 0 : index
    %c0_7 = arith.constant 0 : index
    %9 = vector.load %arg4[%c0_6, %c0_7] : memref<512x128xbf16, #tpu.memory_space<vmem>>, vector<512x128xbf16>
    %cst_8 = arith.constant dense<0.000000e+00> : vector<2x128xf32>
    %10 = tpu.matmul %8, %9, %cst_8 {dimension_numbers = #tpu.dot_dimension_numbers<[1], [0], [0], [1], [0, 0, 1, 1], [], []>} : vector<2x512xbf16>, vector<512x128xbf16>, vector<2x128xf32> -> vector<2x128xf32>
    %c0_9 = arith.constant 0 : index
    %c0_10 = arith.constant 0 : index
    %11 = vector.load %arg5[%c0_9, %c0_10] : memref<1x128xf32, #tpu.memory_space<vmem>>, vector<1x128xf32>
    %12 = vector.broadcast %11 : vector<1x128xf32> to vector<2x128xf32>
    %13 = arith.addf %10, %12 : vector<2x128xf32>
    %c0_11 = arith.constant 0 : index
    %c0_12 = arith.constant 0 : index
    %14 = vector.load %arg6[%c0_11, %c0_12] : memref<2x128xf32, #tpu.memory_space<vmem>>, vector<2x128xf32>
    tpu.vector_store %arg6[%c0_11, %c0_12], %13 {strides = array<i32>} : memref<2x128xf32, #tpu.memory_space<vmem>>, vector<2x128xf32>,
    return
  }
  func.func @transform_0(%arg0: i32) -> (i32, i32) {
    %c0_i32 = arith.constant 0 : i32
    %c0_i32_0 = arith.constant 0 : i32
    return %arg0, %c0_i32 : i32, i32
  }
  func.func @transform_1(%arg0: i32) -> (i32, i32) {
    %c0_i32 = arith.constant 0 : i32
    %c0_i32_0 = arith.constant 0 : i32
    %c0_i32_1 = arith.constant 0 : i32
    return %c0_i32, %c0_i32_0 : i32, i32
  }
  func.func @transform_2(%arg0: i32) -> (i32, i32) {
    %c0_i32 = arith.constant 0 : i32
    %c0_i32_0 = arith.constant 0 : i32
    %c0_i32_1 = arith.constant 0 : i32
    return %c0_i32, %c0_i32_0 : i32, i32
  }
  func.func @transform_3(%arg0: i32) -> (i32, i32) {
    %c0_i32 = arith.constant 0 : i32
    %c0_i32_0 = arith.constant 0 : i32
    %c0_i32_1 = arith.constant 0 : i32
    return %c0_i32, %c0_i32_0 : i32, i32
  }
  func.func @transform_4(%arg0: i32) -> (i32, i32) {
    %c0_i32 = arith.constant 0 : i32
    %c0_i32_0 = arith.constant 0 : i32
    %c0_i32_1 = arith.constant 0 : i32
    return %c0_i32, %c0_i32_0 : i32, i32
  }
  func.func @transform_5(%arg0: i32) -> (i32, i32) {
    %c0_i32 = arith.constant 0 : i32
    %c0_i32_0 = arith.constant 0 : i32
    return %arg0, %c0_i32 : i32, i32
  }
}

</mosaic_0001>

<llo_original>
// kernel: qnet_forward.4
$region0: #{qnet_forward.4}
  #allocation0 [shape = 'u32[]', space=smem, size = 0x4, offset = 0x4, fixed_abs, tag = 'smem constant byte address 0x4 - core index']
  #allocation1 [shape = 'u32[144,128]{1,0:T(1,128)}', space=vmem, size = 0x12000, scoped, tag = 'internal scratch']
  %s0 = inlined_call_operand.vmem [shape: bf16[800,256], index: 0, kind: input, shape index: {}]
  %s1 = inlined_call_operand.vmem [shape: bf16[256,128], index: 1, kind: input, shape index: {}]
  %s2 = inlined_call_operand.vmem [shape: f32[1,128], index: 2, kind: input, shape index: {}]
  %s3 = inlined_call_operand.vmem [shape: bf16[800,128], index: 3, kind: output, shape index: {}]
  %s4 = sld [smem:[#allocation0]]
  $region22: #{qnet_forward.4} parent=0
    _
  %s6 = ssub.s32 1, %s4
  %s7 = scalar_select 0, %s6, %s4
  // Predicated region
  $region2: #{qnet_forward.4} parent=0 // pred_check
    _
  $region3: #{qnet_forward.4} parent=0 // pred_check_branch
    %9 = sbr.rel (0) target = $region5
  $region4: #{qnet_forward.4} parent=0 // pred_region
    _
  $region5: #{qnet_forward.4} parent=0 // pred_fallthru
    _
  // Predicated region
  $region6: #{qnet_forward.4} parent=0 // pred_check
    _
  $region7: #{qnet_forward.4} parent=0 // pred_check_branch
    %11 = sbr.rel (0) target = $region9
  $region8: #{qnet_forward.4} parent=0 // pred_region
    _
  $region9: #{qnet_forward.4} parent=0 // pred_fallthru
    _
  // Predicated region
  $region10: #{qnet_forward.4} parent=0 // pred_check
    _
  $region11: #{qnet_forward.4} parent=0 // pred_check_branch
    %13 = sbr.rel (0) target = $region13
  $region12: #{qnet_forward.4} parent=0 // pred_region
    _
  $region13: #{qnet_forward.4} parent=0 // pred_fallthru
    _
  %v15 = vld [vmem:[%s0] sm:$0xff]
  %v16 = vld [vmem:[%s0 + $0x8] sm:$0xff]
  %v17 = vld [vmem:[%s0 + $0x10] sm:$0xff]
  %v18 = vld [vmem:[%s0 + $0x18] sm:$0xff]
  %v19 = vld [vmem:[%s0 + $0x20] sm:$0xff]
  %v20 = vld [vmem:[%s0 + $0x28] sm:$0xff]
  %v21 = vld [vmem:[%s0 + $0x30] sm:$0xff]
  %v22 = vld [vmem:[%s0 + $0x38] sm:$0xff]
  %v23 = vld [vmem:[%s0 + $0x40] sm:$0xff]
  %v24 = vld [vmem:[%s0 + $0x48] sm:$0xff]
  %v25 = vld [vmem:[%s0 + $0x50] sm:$0xff]
  %v26 = vld [vmem:[%s0 + $0x58] sm:$0xff]
  %v27 = vld [vmem:[%s0 + $0x60] sm:$0xff]
  %v28 = vld [vmem:[%s0 + $0x68] sm:$0xff]
  %v29 = vld [vmem:[%s0 + $0x70] sm:$0xff]
  %v30 = vld [vmem:[%s0 + $0x78] sm:$0xff]
  %v31 = vld [vmem:[%s0 + $0x80] sm:$0xff]
  %v32 = vld [vmem:[%s0 + $0x88] sm:$0xff]
  %v33 = vld [vmem:[%s0 + $0x90] sm:$0xff]
  %v34 = vld [vmem:[%s0 + $0x98] sm:$0xff]
  %v35 = vld [vmem:[%s0 + $0xa0] sm:$0xff]
  %v36 = vld [vmem:[%s0 + $0xa8] sm:$0xff]
  %v37 = vld [vmem:[%s0 + $0xb0] sm:$0xff]
  %v38 = vld [vmem:[%s0 + $0xb8] sm:$0xff]
  %v39 = vld [vmem:[%s0 + $0xc0] sm:$0xff]
  %v40 = vld [vmem:[%s0 + $0xc8] sm:$0xff]
  %v41 = vld [vmem:[%s0 + $0xd0] sm:$0xff]
  %v42 = vld [vmem:[%s0 + $0xd8] sm:$0xff]
  %v43 = vld [vmem:[%s0 + $0xe0] sm:$0xff]
  %v44 = vld [vmem:[%s0 + $0xe8] sm:$0xff]
  %v45 = vld [vmem:[%s0 + $0xf0] sm:$0xff]
  %v46 = vld [vmem:[%s0 + $0xf8] sm:$0xff]
  %v47 = vld [vmem:[%s0 + $0x100] sm:$0xff]
  %v48 = vld [vmem:[%s0 + $0x108] sm:$0xff]
  %v49 = vld [vmem:[%s0 + $0x110] sm:$0xff]
  %v50 = vld [vmem:[%s0 + $0x118] sm:$0xff]
  %v51 = vld [vmem:[%s0 + $0x120] sm:$0xff]
  %v52 = vld [vmem:[%s0 + $0x128] sm:$0xff]
  %v53 = vld [vmem:[%s0 + $0x130] sm:$0xff]
  %v54 = vld [vmem:[%s0 + $0x138] sm:$0xff]
  %v55 = vld [vmem:[%s0 + $0x140] sm:$0xff]
  %v56 = vld [vmem:[%s0 + $0x148] sm:$0xff]
  %v57 = vld [vmem:[%s0 + $0x150] sm:$0xff]
  %v58 = vld [vmem:[%s0 + $0x158] sm:$0xff]
  %v59 = vld [vmem:[%s0 + $0x160] sm:$0xff]
  %v60 = vld [vmem:[%s0 + $0x168] sm:$0xff]
  %v61 = vld [vmem:[%s0 + $0x170] sm:$0xff]
  %v62 = vld [vmem:[%s0 + $0x178] sm:$0xff]
  %v63 = vld [vmem:[%s0 + $0x180] sm:$0xff]
  %v64 = vld [vmem:[%s0 + $0x188] sm:$0xff]
  %v65 = vld [vmem:[%s0 + $0x190] sm:$0xff]
  %v66 = vld [vmem:[%s0 + $0x198] sm:$0xff]
  %v67 = vld [vmem:[%s0 + $0x1a0] sm:$0xff]
  %v68 = vld [vmem:[%s0 + $0x1a8] sm:$0xff]
  %v69 = vld [vmem:[%s0 + $0x1b0] sm:$0xff]
  %v70 = vld [vmem:[%s0 + $0x1b8] sm:$0xff]
  %v71 = vld [vmem:[%s0 + $0x1c0] sm:$0xff]
  %v72 = vld [vmem:[%s0 + $0x1c8] sm:$0xff]
  %v73 = vld [vmem:[%s0 + $0x1d0] sm:$0xff]
  %v74 = vld [vmem:[%s0 + $0x1d8] sm:$0xff]
  %v75 = vld [vmem:[%s0 + $0x1e0] sm:$0xff]
  %v76 = vld [vmem:[%s0 + $0x1e8] sm:$0xff]
  %v77 = vld [vmem:[%s0 + $0x1f0] sm:$0xff]
  %v78 = vld [vmem:[%s0 + $0x1f8] sm:$0xff]
  %v79 = vld [vmem:[%s0 + $0x200] sm:$0xff]
  %v80 = vld [vmem:[%s0 + $0x208] sm:$0xff]
  %v81 = vld [vmem:[%s0 + $0x210] sm:$0xff]
  %v82 = vld [vmem:[%s0 + $0x218] sm:$0xff]
  %v83 = vld [vmem:[%s0 + $0x220] sm:$0xff]
  %v84 = vld [vmem:[%s0 + $0x228] sm:$0xff]
  %v85 = vld [vmem:[%s0 + $0x230] sm:$0xff]
  %v86 = vld [vmem:[%s0 + $0x238] sm:$0xff]
  %v87 = vld [vmem:[%s0 + $0x240] sm:$0xff]
  %v88 = vld [vmem:[%s0 + $0x248] sm:$0xff]
  %v89 = vld [vmem:[%s0 + $0x250] sm:$0xff]
  %v90 = vld [vmem:[%s0 + $0x258] sm:$0xff]
  %v91 = vld [vmem:[%s0 + $0x260] sm:$0xff]
  %v92 = vld [vmem:[%s0 + $0x268] sm:$0xff]
  %v93 = vld [vmem:[%s0 + $0x270] sm:$0xff]
  %v94 = vld [vmem:[%s0 + $0x278] sm:$0xff]
  %v95 = vld [vmem:[%s0 + $0x280] sm:$0xff]
  %v96 = vld [vmem:[%s0 + $0x288] sm:$0xff]
  %v97 = vld [vmem:[%s0 + $0x290] sm:$0xff]
  %v98 = vld [vmem:[%s0 + $0x298] sm:$0xff]
  %v99 = vld [vmem:[%s0 + $0x2a0] sm:$0xff]
  %v100 = vld [vmem:[%s0 + $0x2a8] sm:$0xff]
  %v101 = vld [vmem:[%s0 + $0x2b0] sm:$0xff]
  %v102 = vld [vmem:[%s0 + $0x2b8] sm:$0xff]
  %v103 = vld [vmem:[%s0 + $0x2c0] sm:$0xff]
  %v104 = vld [vmem:[%s0 + $0x2c8] sm:$0xff]
  %v105 = vld [vmem:[%s0 + $0x2d0] sm:$0xff]
  %v106 = vld [vmem:[%s0 + $0x2d8] sm:$0xff]
  %v107 = vld [vmem:[%s0 + $0x2e0] sm:$0xff]
  %v108 = vld [vmem:[%s0 + $0x2e8] sm:$0xff]
  %v109 = vld [vmem:[%s0 + $0x2f0] sm:$0xff]
  %v110 = vld [vmem:[%s0 + $0x2f8] sm:$0xff]
  %v111 = vld [vmem:[%s0 + $0x300] sm:$0xff]
  %v112 = vld [vmem:[%s0 + $0x308] sm:$0xff]
  %v113 = vld [vmem:[%s0 + $0x310] sm:$0xff]
  %v114 = vld [vmem:[%s0 + $0x318] sm:$0xff]
  %v115 = vld [vmem:[%s1] sm:$0xf]
  %v116 = vld [vmem:[%s1 + $0x4] sm:$0xf]
  %v117 = vld [vmem:[%s1 + $0x8] sm:$0xf]
  %v118 = vld [vmem:[%s1 + $0xc] sm:$0xf]
  %v119 = vld [vmem:[%s1 + $0x10] sm:$0xf]
  %v120 = vld [vmem:[%s1 + $0x14] sm:$0xf]
  %v121 = vld [vmem:[%s1 + $0x18] sm:$0xf]
  %v122 = vld [vmem:[%s1 + $0x1c] sm:$0xf]
  %v123 = vld [vmem:[%s1 + $0x20] sm:$0xf]
  %v124 = vld [vmem:[%s1 + $0x24] sm:$0xf]
  %v125 = vld [vmem:[%s1 + $0x28] sm:$0xf]
  %v126 = vld [vmem:[%s1 + $0x2c] sm:$0xf]
  %v127 = vld [vmem:[%s1 + $0x30] sm:$0xf]
  %v128 = vld [vmem:[%s1 + $0x34] sm:$0xf]
  %v129 = vld [vmem:[%s1 + $0x38] sm:$0xf]
  %v130 = vld [vmem:[%s1 + $0x3c] sm:$0xf]
  %v131 = vld [vmem:[%s1 + $0x40] sm:$0xf]
  %v132 = vld [vmem:[%s1 + $0x44] sm:$0xf]
  %v133 = vld [vmem:[%s1 + $0x48] sm:$0xf]
  %v134 = vld [vmem:[%s1 + $0x4c] sm:$0xf]
  %v135 = vld [vmem:[%s1 + $0x50] sm:$0xf]
  %v136 = vld [vmem:[%s1 + $0x54] sm:$0xf]
  %v137 = vld [vmem:[%s1 + $0x58] sm:$0xf]
  %v138 = vld [vmem:[%s1 + $0x5c] sm:$0xf]
  %v139 = vld [vmem:[%s1 + $0x60] sm:$0xf]
  %v140 = vld [vmem:[%s1 + $0x64] sm:$0xf]
  %v141 = vld [vmem:[%s1 + $0x68] sm:$0xf]
  %v142 = vld [vmem:[%s1 + $0x6c] sm:$0xf]
  %v143 = vld [vmem:[%s1 + $0x70] sm:$0xf]
  %v144 = vld [vmem:[%s1 + $0x74] sm:$0xf]
  %v145 = vld [vmem:[%s1 + $0x78] sm:$0xf]
  %v146 = vld [vmem:[%s1 + $0x7c] sm:$0xf]
  %v147 = vld [vmem:[%s2] sm:$0x1]
  %v149 = vlaneseq
  %v150 = vshrl.u32 %v149, 7
  %v151 = vsub.s32 0, %v150
  %v152 = vrot.slane %v147, %v151
  %v254 = vunpack.c.l.b16 %v15
  %v255 = vunpack.c.h.b16 %v15
  %v256 = vunpack.c.l.b16 %v16
  %v257 = vunpack.c.h.b16 %v16
  %v258 = vunpack.c.l.b16 %v17
  %v259 = vunpack.c.h.b16 %v17
  %v260 = vunpack.c.l.b16 %v18
  %v261 = vunpack.c.h.b16 %v18
  %v262 = vunpack.c.l.b16 %v19
  %v263 = vunpack.c.h.b16 %v19
  %v264 = vunpack.c.l.b16 %v20
  %v265 = vunpack.c.h.b16 %v20
  %v266 = vunpack.c.l.b16 %v21
  %v267 = vunpack.c.h.b16 %v21
  %v268 = vunpack.c.l.b16 %v22
  %v269 = vunpack.c.h.b16 %v22
  %v270 = vunpack.c.l.b16 %v23
  %v271 = vunpack.c.h.b16 %v23
  %v272 = vunpack.c.l.b16 %v24
  %v273 = vunpack.c.h.b16 %v24
  %v274 = vunpack.c.l.b16 %v25
  %v275 = vunpack.c.h.b16 %v25
  %v276 = vunpack.c.l.b16 %v26
  %v277 = vunpack.c.h.b16 %v26
  %v278 = vunpack.c.l.b16 %v27
  %v279 = vunpack.c.h.b16 %v27
  %v280 = vunpack.c.l.b16 %v28
  %v281 = vunpack.c.h.b16 %v28
  %v282 = vunpack.c.l.b16 %v29
  %v283 = vunpack.c.h.b16 %v29
  %v284 = vunpack.c.l.b16 %v30
  %v285 = vunpack.c.h.b16 %v30
  %v286 = vunpack.c.l.b16 %v31
  %v287 = vunpack.c.h.b16 %v31
  %v288 = vunpack.c.l.b16 %v32
  %v289 = vunpack.c.h.b16 %v32
  %v290 = vunpack.c.l.b16 %v33
  %v291 = vunpack.c.h.b16 %v33
  %v292 = vunpack.c.l.b16 %v34
  %v293 = vunpack.c.h.b16 %v34
  %v294 = vunpack.c.l.b16 %v35
  %v295 = vunpack.c.h.b16 %v35
  %v296 = vunpack.c.l.b16 %v36
  %v297 = vunpack.c.h.b16 %v36
  %v298 = vunpack.c.l.b16 %v37
  %v299 = vunpack.c.h.b16 %v37
  %v300 = vunpack.c.l.b16 %v38
  %v301 = vunpack.c.h.b16 %v38
  %v302 = vunpack.c.l.b16 %v39
  %v303 = vunpack.c.h.b16 %v39
  %v304 = vunpack.c.l.b16 %v40
  %v305 = vunpack.c.h.b16 %v40
  %v306 = vunpack.c.l.b16 %v41
  %v307 = vunpack.c.h.b16 %v41
  %v308 = vunpack.c.l.b16 %v42
  %v309 = vunpack.c.h.b16 %v42
  %v310 = vunpack.c.l.b16 %v43
  %v311 = vunpack.c.h.b16 %v43
  %v312 = vunpack.c.l.b16 %v44
  %v313 = vunpack.c.h.b16 %v44
  %v314 = vunpack.c.l.b16 %v45
  %v315 = vunpack.c.h.b16 %v45
  %v316 = vunpack.c.l.b16 %v46
  %v317 = vunpack.c.h.b16 %v46
  %v318 = vunpack.c.l.b16 %v47
  %v319 = vunpack.c.h.b16 %v47
  %v320 = vunpack.c.l.b16 %v48
  %v321 = vunpack.c.h.b16 %v48
  %v322 = vunpack.c.l.b16 %v49
  %v323 = vunpack.c.h.b16 %v49
  %v324 = vunpack.c.l.b16 %v50
  %v325 = vunpack.c.h.b16 %v50
  %v326 = vunpack.c.l.b16 %v51
  %v327 = vunpack.c.h.b16 %v51
  %v328 = vunpack.c.l.b16 %v52
  %v329 = vunpack.c.h.b16 %v52
  %v330 = vunpack.c.l.b16 %v53
  %v331 = vunpack.c.h.b16 %v53
  %v332 = vunpack.c.l.b16 %v54
  %v333 = vunpack.c.h.b16 %v54
  %v334 = vunpack.c.l.b16 %v55
  %v335 = vunpack.c.h.b16 %v55
  %v336 = vunpack.c.l.b16 %v56
  %v337 = vunpack.c.h.b16 %v56
  %v338 = vunpack.c.l.b16 %v57
  %v339 = vunpack.c.h.b16 %v57
  %v340 = vunpack.c.l.b16 %v58
  %v341 = vunpack.c.h.b16 %v58
  %v342 = vunpack.c.l.b16 %v59
  %v343 = vunpack.c.h.b16 %v59
  %v344 = vunpack.c.l.b16 %v60
  %v345 = vunpack.c.h.b16 %v60
  %v346 = vunpack.c.l.b16 %v61
  %v347 = vunpack.c.h.b16 %v61
  %v348 = vunpack.c.l.b16 %v62
  %v349 = vunpack.c.h.b16 %v62
  %v350 = vunpack.c.l.b16 %v63
  %v351 = vunpack.c.h.b16 %v63
  %v352 = vunpack.c.l.b16 %v64
  %v353 = vunpack.c.h.b16 %v64
  %v354 = vunpack.c.l.b16 %v65
  %v355 = vunpack.c.h.b16 %v65
  %v356 = vunpack.c.l.b16 %v66
  %v357 = vunpack.c.h.b16 %v66
  %v358 = vunpack.c.l.b16 %v67
  %v359 = vunpack.c.h.b16 %v67
  %v360 = vunpack.c.l.b16 %v68
  %v361 = vunpack.c.h.b16 %v68
  %v362 = vunpack.c.l.b16 %v69
  %v363 = vunpack.c.h.b16 %v69
  %v364 = vunpack.c.l.b16 %v70
  %v365 = vunpack.c.h.b16 %v70
  %v366 = vunpack.c.l.b16 %v71
  %v367 = vunpack.c.h.b16 %v71
  %v368 = vunpack.c.l.b16 %v72
  %v369 = vunpack.c.h.b16 %v72
  %v370 = vunpack.c.l.b16 %v73
  %v371 = vunpack.c.h.b16 %v73
  %v372 = vunpack.c.l.b16 %v74
  %v373 = vunpack.c.h.b16 %v74
  %v374 = vunpack.c.l.b16 %v75
  %v375 = vunpack.c.h.b16 %v75
  %v376 = vunpack.c.l.b16 %v76
  %v377 = vunpack.c.h.b16 %v76
  %v378 = vunpack.c.l.b16 %v77
  %v379 = vunpack.c.h.b16 %v77
  %v380 = vunpack.c.l.b16 %v78
  %v381 = vunpack.c.h.b16 %v78
  %v382 = vunpack.c.l.b16 %v79
  %v383 = vunpack.c.h.b16 %v79
  %v384 = vunpack.c.l.b16 %v80
  %v385 = vunpack.c.h.b16 %v80
  %v386 = vunpack.c.l.b16 %v81
  %v387 = vunpack.c.h.b16 %v81
  %v388 = vunpack.c.l.b16 %v82
  %v389 = vunpack.c.h.b16 %v82
  %v390 = vunpack.c.l.b16 %v83
  %v391 = vunpack.c.h.b16 %v83
  %v392 = vunpack.c.l.b16 %v84
  %v393 = vunpack.c.h.b16 %v84
  %v394 = vunpack.c.l.b16 %v85
  %v395 = vunpack.c.h.b16 %v85
  %v396 = vunpack.c.l.b16 %v86
  %v397 = vunpack.c.h.b16 %v86
  %v398 = vunpack.c.l.b16 %v87
  %v399 = vunpack.c.h.b16 %v87
  %v400 = vunpack.c.l.b16 %v88
  %v401 = vunpack.c.h.b16 %v88
  %v402 = vunpack.c.l.b16 %v89
  %v403 = vunpack.c.h.b16 %v89
  %v404 = vunpack.c.l.b16 %v90
  %v405 = vunpack.c.h.b16 %v90
  %v406 = vunpack.c.l.b16 %v91
  %v407 = vunpack.c.h.b16 %v91
  %v408 = vunpack.c.l.b16 %v92
  %v409 = vunpack.c.h.b16 %v92
  %v410 = vunpack.c.l.b16 %v93
  %v411 = vunpack.c.h.b16 %v93
  %v412 = vunpack.c.l.b16 %v94
  %v413 = vunpack.c.h.b16 %v94
  %v414 = vunpack.c.l.b16 %v95
  %v415 = vunpack.c.h.b16 %v95
  %v416 = vunpack.c.l.b16 %v96
  %v417 = vunpack.c.h.b16 %v96
  %v418 = vunpack.c.l.b16 %v97
  %v419 = vunpack.c.h.b16 %v97
  %v420 = vunpack.c.l.b16 %v98
  %v421 = vunpack.c.h.b16 %v98
  %v422 = vunpack.c.l.b16 %v99
  %v423 = vunpack.c.h.b16 %v99
  %v424 = vunpack.c.l.b16 %v100
  %v425 = vunpack.c.h.b16 %v100
  %v426 = vunpack.c.l.b16 %v101
  %v427 = vunpack.c.h.b16 %v101
  %v428 = vunpack.c.l.b16 %v102
  %v429 = vunpack.c.h.b16 %v102
  %v430 = vunpack.c.l.b16 %v103
  %v431 = vunpack.c.h.b16 %v103
  %v432 = vunpack.c.l.b16 %v104
  %v433 = vunpack.c.h.b16 %v104
  %v434 = vunpack.c.l.b16 %v105
  %v435 = vunpack.c.h.b16 %v105
  %v436 = vunpack.c.l.b16 %v106
  %v437 = vunpack.c.h.b16 %v106
  %v438 = vunpack.c.l.b16 %v107
  %v439 = vunpack.c.h.b16 %v107
  %v440 = vunpack.c.l.b16 %v108
  %v441 = vunpack.c.h.b16 %v108
  %v442 = vunpack.c.l.b16 %v109
  %v443 = vunpack.c.h.b16 %v109
  %v444 = vunpack.c.l.b16 %v110
  %v445 = vunpack.c.h.b16 %v110
  %v446 = vunpack.c.l.b16 %v111
  %v447 = vunpack.c.h.b16 %v111
  %v448 = vunpack.c.l.b16 %v112
  %v449 = vunpack.c.h.b16 %v112
  %v450 = vunpack.c.l.b16 %v113
  %v451 = vunpack.c.h.b16 %v113
  %v452 = vunpack.c.l.b16 %v114
  %v453 = vunpack.c.h.b16 %v114
  %v454 = vpack.c.b16 %v256, %v254
  %v455 = vpack.c.b16 %v257, %v255
  %v456 = vpack.c.b16 %v260, %v258
  %v457 = vpack.c.b16 %v261, %v259
  %v458 = vpack.c.b16 %v264, %v262
  %v459 = vpack.c.b16 %v265, %v263
  %v460 = vpack.c.b16 %v268, %v266
  %v461 = vpack.c.b16 %v269, %v267
  %v462 = vpack.c.b16 %v272, %v270
  %v463 = vpack.c.b16 %v273, %v271
  %v464 = vpack.c.b16 %v276, %v274
  %v465 = vpack.c.b16 %v277, %v275
  %v466 = vpack.c.b16 %v280, %v278
  %v467 = vpack.c.b16 %v281, %v279
  %v468 = vpack.c.b16 %v284, %v282
  %v469 = vpack.c.b16 %v285, %v283
  %v470 = vpack.c.b16 %v288, %v286
  %v471 = vpack.c.b16 %v289, %v287
  %v472 = vpack.c.b16 %v292, %v290
  %v473 = vpack.c.b16 %v293, %v291
  %v474 = vpack.c.b16 %v296, %v294
  %v475 = vpack.c.b16 %v297, %v295
  %v476 = vpack.c.b16 %v300, %v298
  %v477 = vpack.c.b16 %v301, %v299
  %v478 = vpack.c.b16 %v304, %v302
  %v479 = vpack.c.b16 %v305, %v303
  %v480 = vpack.c.b16 %v308, %v306
  %v481 = vpack.c.b16 %v309, %v307
  %v482 = vpack.c.b16 %v312, %v310
  %v483 = vpack.c.b16 %v313, %v311
  %v484 = vpack.c.b16 %v316, %v314
  %v485 = vpack.c.b16 %v317, %v315
  %v486 = vpack.c.b16 %v320, %v318
  %v487 = vpack.c.b16 %v321, %v319
  %v488 = vpack.c.b16 %v324, %v322
  %v489 = vpack.c.b16 %v325, %v323
  %v490 = vpack.c.b16 %v328, %v326
  %v491 = vpack.c.b16 %v329, %v327
  %v492 = vpack.c.b16 %v332, %v330
  %v493 = vpack.c.b16 %v333, %v331
  %v494 = vpack.c.b16 %v336, %v334
  %v495 = vpack.c.b16 %v337, %v335
  %v496 = vpack.c.b16 %v340, %v338
  %v497 = vpack.c.b16 %v341, %v339
  %v498 = vpack.c.b16 %v344, %v342
  %v499 = vpack.c.b16 %v345, %v343
  %v500 = vpack.c.b16 %v348, %v346
  %v501 = vpack.c.b16 %v349, %v347
  %v502 = vpack.c.b16 %v352, %v350
  %v503 = vpack.c.b16 %v353, %v351
  %v504 = vpack.c.b16 %v356, %v354
  %v505 = vpack.c.b16 %v357, %v355
  %v506 = vpack.c.b16 %v360, %v358
  %v507 = vpack.c.b16 %v361, %v359
  %v508 = vpack.c.b16 %v364, %v362
  %v509 = vpack.c.b16 %v365, %v363
  %v510 = vpack.c.b16 %v368, %v366
  %v511 = vpack.c.b16 %v369, %v367
  %v512 = vpack.c.b16 %v372, %v370
  %v513 = vpack.c.b16 %v373, %v371
  %v514 = vpack.c.b16 %v376, %v374
  %v515 = vpack.c.b16 %v377, %v375
  %v516 = vpack.c.b16 %v380, %v378
  %v517 = vpack.c.b16 %v381, %v379
  %v518 = vpack.c.b16 %v384, %v382
  %v519 = vpack.c.b16 %v385, %v383
  %v520 = vpack.c.b16 %v388, %v386
  %v521 = vpack.c.b16 %v389, %v387
  %v522 = vpack.c.b16 %v392, %v390
  %v523 = vpack.c.b16 %v393, %v391
  %v524 = vpack.c.b16 %v396, %v394
  %v525 = vpack.c.b16 %v397, %v395
  %v526 = vpack.c.b16 %v400, %v398
  %v527 = vpack.c.b16 %v401, %v399
  %v528 = vpack.c.b16 %v404, %v402
  %v529 = vpack.c.b16 %v405, %v403
  %v530 = vpack.c.b16 %v408, %v406
  %v531 = vpack.c.b16 %v409, %v407
  %v532 = vpack.c.b16 %v412, %v410
  %v533 = vpack.c.b16 %v413, %v411
  %v534 = vpack.c.b16 %v416, %v414
  %v535 = vpack.c.b16 %v417, %v415
  %v536 = vpack.c.b16 %v420, %v418
  %v537 = vpack.c.b16 %v421, %v419
  %v538 = vpack.c.b16 %v424, %v422
  %v539 = vpack.c.b16 %v425, %v423
  %v540 = vpack.c.b16 %v428, %v426
  %v541 = vpack.c.b16 %v429, %v427
  %v542 = vpack.c.b16 %v432, %v430
  %v543 = vpack.c.b16 %v433, %v431
  %v544 = vpack.c.b16 %v436, %v434
  %v545 = vpack.c.b16 %v437, %v435
  %v546 = vpack.c.b16 %v440, %v438
  %v547 = vpack.c.b16 %v441, %v439
  %v548 = vpack.c.b16 %v444, %v442
  %v549 = vpack.c.b16 %v445, %v443
  %v550 = vpack.c.b16 %v448, %v446
  %v551 = vpack.c.b16 %v449, %v447
  %v552 = vpack.c.b16 %v452, %v450
  %v553 = vpack.c.b16 %v453, %v451
  %v686 = vunpack.c.l.b16 %v115
  %v687 = vunpack.c.l.b16 %v116
  %v688 = vunpack.c.l.b16 %v117
  %v689 = vunpack.c.l.b16 %v118
  %v690 = vunpack.c.l.b16 %v119
  %v691 = vunpack.c.l.b16 %v120
  %v692 = vunpack.c.l.b16 %v121
  %v693 = vunpack.c.l.b16 %v122
  %v694 = vunpack.c.l.b16 %v123
  %v695 = vunpack.c.l.b16 %v124
  %v696 = vunpack.c.l.b16 %v125
  %v697 = vunpack.c.l.b16 %v126
  %v698 = vunpack.c.l.b16 %v127
  %v699 = vunpack.c.l.b16 %v128
  %v700 = vunpack.c.l.b16 %v129
  %v701 = vunpack.c.l.b16 %v130
  %v702 = vunpack.c.l.b16 %v131
  %v703 = vunpack.c.l.b16 %v132
  %v704 = vunpack.c.l.b16 %v133
  %v705 = vunpack.c.l.b16 %v134
  %v706 = vunpack.c.l.b16 %v135
  %v707 = vunpack.c.l.b16 %v136
  %v708 = vunpack.c.l.b16 %v137
  %v709 = vunpack.c.l.b16 %v138
  %v710 = vunpack.c.l.b16 %v139
  %v711 = vunpack.c.l.b16 %v140
  %v712 = vunpack.c.l.b16 %v141
  %v713 = vunpack.c.l.b16 %v142
  %v714 = vunpack.c.l.b16 %v143
  %v715 = vunpack.c.l.b16 %v144
  %v716 = vunpack.c.l.b16 %v145
  %v717 = vunpack.c.l.b16 %v146
  %v718 = vpack.c.b16 %v687, %v686
  %v719 = vpack.c.b16 %v689, %v688
  %v720 = vpack.c.b16 %v691, %v690
  %v721 = vpack.c.b16 %v693, %v692
  %v722 = vpack.c.b16 %v695, %v694
  %v723 = vpack.c.b16 %v697, %v696
  %v724 = vpack.c.b16 %v699, %v698
  %v725 = vpack.c.b16 %v701, %v700
  %v726 = vpack.c.b16 %v703, %v702
  %v727 = vpack.c.b16 %v705, %v704
  %v728 = vpack.c.b16 %v707, %v706
  %v729 = vpack.c.b16 %v709, %v708
  %v730 = vpack.c.b16 %v711, %v710
  %v731 = vpack.c.b16 %v713, %v712
  %v732 = vpack.c.b16 %v715, %v714
  %v733 = vpack.c.b16 %v717, %v716
  %750 = vmatprep.subr.bf16.mxu0 0
  %751 = vmatpush1.bf16.msra.mxu0 %v725
  %752 = vmatprep.subr.bf16.mxu0 0
  %753 = vmatpush1.bf16.msra.mxu0 %v724
  %754 = vmatprep.subr.bf16.mxu0 0
  %755 = vmatpush1.bf16.msra.mxu0 %v723
  %756 = vmatprep.subr.bf16.mxu0 0
  %757 = vmatpush1.bf16.msra.mxu0 %v722
  %758 = vmatprep.subr.bf16.mxu0 0
  %759 = vmatpush1.bf16.msra.mxu0 %v721
  %760 = vmatprep.subr.bf16.mxu0 0
  %761 = vmatpush1.bf16.msra.mxu0 %v720
  %762 = vmatprep.subr.bf16.mxu0 0
  %763 = vmatpush1.bf16.msra.mxu0 %v719
  %764 = vmatprep.subr.bf16.mxu0 0
  %765 = vmatpush1.bf16.msra.mxu0 %v718
  %766 = vmatprep.subr.bf16.mxu0 0
  %767 = vmatpush2.bf16.msra.mxu0 %v733
  %768 = vmatprep.subr.bf16.mxu0 0
  %769 = vmatpush2.bf16.msra.mxu0 %v732
  %770 = vmatprep.subr.bf16.mxu0 0
  %771 = vmatpush2.bf16.msra.mxu0 %v731
  %772 = vmatprep.subr.bf16.mxu0 0
  %773 = vmatpush2.bf16.msra.mxu0 %v730
  %774 = vmatprep.subr.bf16.mxu0 0
  %775 = vmatpush2.bf16.msra.mxu0 %v729
  %776 = vmatprep.subr.bf16.mxu0 0
  %777 = vmatpush2.bf16.msra.mxu0 %v728
  %778 = vmatprep.subr.bf16.mxu0 0
  %779 = vmatpush2.bf16.msra.mxu0 %v727
  %780 = vmatprep.subr.bf16.mxu0 0
  %781 = vmatpush2.bf16.msra.mxu0 %v726
  %782 = vmatprep.mubr.bf16.mxu0 %v455
  %783 = vmatmul.mubr.bf16.gmra.mxu0 %v454
  %v784 = vpop.f32.mrf.mxu0
  %v785 = vadd.f32 %v152, %v784
  %v786 = vpop.f32.mrf.mxu0
  %v787 = vpop.f32.mrf.mxu0
  %v788 = vadd.f32 %v152, %v787
  %v789 = vpop.f32.mrf.mxu0
  %790 = vmatprep.mubr.bf16.mxu0 %v457
  %791 = vmatmul.mubr.bf16.gmra.mxu0 %v456
  %v792 = vpop.f32.mrf.mxu0
  %v793 = vadd.f32 %v152, %v792
  %v794 = vpop.f32.mrf.mxu0
  %v795 = vpop.f32.mrf.mxu0
  %v796 = vadd.f32 %v152, %v795
  %v797 = vpop.f32.mrf.mxu0
  %798 = vmatprep.mubr.bf16.mxu0 %v459
  %799 = vmatmul.mubr.bf16.gmra.mxu0 %v458
  %v800 = vpop.f32.mrf.mxu0
  %v801 = vadd.f32 %v152, %v800
  %v802 = vpop.f32.mrf.mxu0
  %v803 = vpop.f32.mrf.mxu0
  %v804 = vadd.f32 %v152, %v803
  %v805 = vpop.f32.mrf.mxu0
  %806 = vmatprep.mubr.bf16.mxu0 %v461
  %807 = vmatmul.mubr.bf16.gmra.mxu0 %v460
  %v808 = vpop.f32.mrf.mxu0
  %v809 = vadd.f32 %v152, %v808
  %v810 = vpop.f32.mrf.mxu0
  %v811 = vpop.f32.mrf.mxu0
  %v812 = vadd.f32 %v152, %v811
  %v813 = vpop.f32.mrf.mxu0
  %814 = vmatprep.mubr.bf16.mxu0 %v463
  %815 = vmatmul.mubr.bf16.gmra.mxu0 %v462
  %v816 = vpop.f32.mrf.mxu0
  %v817 = vadd.f32 %v152, %v816
  %v818 = vpop.f32.mrf.mxu0
  %v819 = vpop.f32.mrf.mxu0
  %v820 = vadd.f32 %v152, %v819
  %v821 = vpop.f32.mrf.mxu0
  %822 = vmatprep.mubr.bf16.mxu0 %v465
  %823 = vmatmul.mubr.bf16.gmra.mxu0 %v464
  %v824 = vpop.f32.mrf.mxu0
  %v825 = vadd.f32 %v152, %v824
  %v826 = vpop.f32.mrf.mxu0
  %v827 = vpop.f32.mrf.mxu0
  %v828 = vadd.f32 %v152, %v827
  %v829 = vpop.f32.mrf.mxu0
  %830 = vmatprep.mubr.bf16.mxu0 %v467
  %831 = vmatmul.mubr.bf16.gmra.mxu0 %v466
  %v832 = vpop.f32.mrf.mxu0
  %v833 = vadd.f32 %v152, %v832
  %v834 = vpop.f32.mrf.mxu0
  %v835 = vpop.f32.mrf.mxu0
  %v836 = vadd.f32 %v152, %v835
  %v837 = vpop.f32.mrf.mxu0
  %838 = vmatprep.mubr.bf16.mxu0 %v469
  %839 = vmatmul.mubr.bf16.gmra.mxu0 %v468
  %v840 = vpop.f32.mrf.mxu0
  %v841 = vadd.f32 %v152, %v840
  %v842 = vpop.f32.mrf.mxu0
  %v843 = vpop.f32.mrf.mxu0
  %v844 = vadd.f32 %v152, %v843
  %v845 = vpop.f32.mrf.mxu0
  %846 = vmatprep.mubr.bf16.mxu0 %v471
  %847 = vmatmul.mubr.bf16.gmra.mxu0 %v470
  %v848 = vpop.f32.mrf.mxu0
  %v849 = vadd.f32 %v152, %v848
  %v850 = vpop.f32.mrf.mxu0
  %v851 = vpop.f32.mrf.mxu0
  %v852 = vadd.f32 %v152, %v851
  %v853 = vpop.f32.mrf.mxu0
  %854 = vmatprep.mubr.bf16.mxu0 %v473
  %855 = vmatmul.mubr.bf16.gmra.mxu0 %v472
  %v856 = vpop.f32.mrf.mxu0
  %v857 = vadd.f32 %v152, %v856
  %v858 = vpop.f32.mrf.mxu0
  %v859 = vpop.f32.mrf.mxu0
  %v860 = vadd.f32 %v152, %v859
  %v861 = vpop.f32.mrf.mxu0
  %862 = vmatprep.mubr.bf16.mxu0 %v475
  %863 = vmatmul.mubr.bf16.gmra.mxu0 %v474
  %v864 = vpop.f32.mrf.mxu0
  %v865 = vadd.f32 %v152, %v864
  %v866 = vpop.f32.mrf.mxu0
  %v867 = vpop.f32.mrf.mxu0
  %v868 = vadd.f32 %v152, %v867
  %v869 = vpop.f32.mrf.mxu0
  %870 = vmatprep.mubr.bf16.mxu0 %v477
  %871 = vmatmul.mubr.bf16.gmra.mxu0 %v476
  %v872 = vpop.f32.mrf.mxu0
  %v873 = vadd.f32 %v152, %v872
  %v874 = vpop.f32.mrf.mxu0
  %v875 = vpop.f32.mrf.mxu0
  %v876 = vadd.f32 %v152, %v875
  %v877 = vpop.f32.mrf.mxu0
  %878 = vmatprep.mubr.bf16.mxu0 %v479
  %879 = vmatmul.mubr.bf16.gmra.mxu0 %v478
  %v880 = vpop.f32.mrf.mxu0
  %v881 = vadd.f32 %v152, %v880
  %v882 = vpop.f32.mrf.mxu0
  %v883 = vpop.f32.mrf.mxu0
  %v884 = vadd.f32 %v152, %v883
  %v885 = vpop.f32.mrf.mxu0
  %886 = vmatprep.mubr.bf16.mxu0 %v481
  %887 = vmatmul.mubr.bf16.gmra.mxu0 %v480
  %v888 = vpop.f32.mrf.mxu0
  %v889 = vadd.f32 %v152, %v888
  %v890 = vpop.f32.mrf.mxu0
  %v891 = vpop.f32.mrf.mxu0
  %v892 = vadd.f32 %v152, %v891
  %v893 = vpop.f32.mrf.mxu0
  %894 = vmatprep.mubr.bf16.mxu0 %v483
  %895 = vmatmul.mubr.bf16.gmra.mxu0 %v482
  %v896 = vpop.f32.mrf.mxu0
  %v897 = vadd.f32 %v152, %v896
  %v898 = vpop.f32.mrf.mxu0
  %v899 = vpop.f32.mrf.mxu0
  %v900 = vadd.f32 %v152, %v899
  %v901 = vpop.f32.mrf.mxu0
  %902 = vmatprep.mubr.bf16.mxu0 %v485
  %903 = vmatmul.mubr.bf16.gmra.mxu0 %v484
  %v904 = vpop.f32.mrf.mxu0
  %v905 = vadd.f32 %v152, %v904
  %v906 = vpop.f32.mrf.mxu0
  %v907 = vpop.f32.mrf.mxu0
  %v908 = vadd.f32 %v152, %v907
  %v909 = vpop.f32.mrf.mxu0
  %910 = vmatprep.mubr.bf16.mxu0 %v487
  %911 = vmatmul.mubr.bf16.gmra.mxu0 %v486
  %v912 = vpop.f32.mrf.mxu0
  %v913 = vadd.f32 %v152, %v912
  %v914 = vpop.f32.mrf.mxu0
  %v915 = vpop.f32.mrf.mxu0
  %v916 = vadd.f32 %v152, %v915
  %v917 = vpop.f32.mrf.mxu0
  %918 = vmatprep.mubr.bf16.mxu0 %v489
  %919 = vmatmul.mubr.bf16.gmra.mxu0 %v488
  %v920 = vpop.f32.mrf.mxu0
  %v921 = vadd.f32 %v152, %v920
  %v922 = vpop.f32.mrf.mxu0
  %v923 = vpop.f32.mrf.mxu0
  %v924 = vadd.f32 %v152, %v923
  %v925 = vpop.f32.mrf.mxu0
  %926 = vmatprep.mubr.bf16.mxu0 %v491
  %927 = vmatmul.mubr.bf16.gmra.mxu0 %v490
  %v928 = vpop.f32.mrf.mxu0
  %v929 = vadd.f32 %v152, %v928
  %v930 = vpop.f32.mrf.mxu0
  %v931 = vpop.f32.mrf.mxu0
  %v932 = vadd.f32 %v152, %v931
  %v933 = vpop.f32.mrf.mxu0
  %934 = vmatprep.mubr.bf16.mxu0 %v493
  %935 = vmatmul.mubr.bf16.gmra.mxu0 %v492
  %v936 = vpop.f32.mrf.mxu0
  %v937 = vadd.f32 %v152, %v936
  %v938 = vpop.f32.mrf.mxu0
  %v939 = vpop.f32.mrf.mxu0
  %v940 = vadd.f32 %v152, %v939
  %v941 = vpop.f32.mrf.mxu0
  %942 = vmatprep.mubr.bf16.mxu0 %v495
  %943 = vmatmul.mubr.bf16.gmra.mxu0 %v494
  %v944 = vpop.f32.mrf.mxu0
  %v945 = vadd.f32 %v152, %v944
  %v946 = vpop.f32.mrf.mxu0
  %v947 = vpop.f32.mrf.mxu0
  %v948 = vadd.f32 %v152, %v947
  %v949 = vpop.f32.mrf.mxu0
  %950 = vmatprep.mubr.bf16.mxu0 %v497
  %951 = vmatmul.mubr.bf16.gmra.mxu0 %v496
  %v952 = vpop.f32.mrf.mxu0
  %v953 = vadd.f32 %v152, %v952
  %v954 = vpop.f32.mrf.mxu0
  %v955 = vpop.f32.mrf.mxu0
  %v956 = vadd.f32 %v152, %v955
  %v957 = vpop.f32.mrf.mxu0
  %958 = vmatprep.mubr.bf16.mxu0 %v499
  %959 = vmatmul.mubr.bf16.gmra.mxu0 %v498
  %v960 = vpop.f32.mrf.mxu0
  %v961 = vadd.f32 %v152, %v960
  %v962 = vpop.f32.mrf.mxu0
  %v963 = vpop.f32.mrf.mxu0
  %v964 = vadd.f32 %v152, %v963
  %v965 = vpop.f32.mrf.mxu0
  %966 = vmatprep.mubr.bf16.mxu0 %v501
  %967 = vmatmul.mubr.bf16.gmra.mxu0 %v500
  %v968 = vpop.f32.mrf.mxu0
  %v969 = vadd.f32 %v152, %v968
  %v970 = vpop.f32.mrf.mxu0
  %v971 = vpop.f32.mrf.mxu0
  %v972 = vadd.f32 %v152, %v971
  %v973 = vpop.f32.mrf.mxu0
  %974 = vmatprep.mubr.bf16.mxu0 %v503
  %975 = vmatmul.mubr.bf16.gmra.mxu0 %v502
  %v976 = vpop.f32.mrf.mxu0
  %v977 = vadd.f32 %v152, %v976
  %v978 = vpop.f32.mrf.mxu0
  %v979 = vpop.f32.mrf.mxu0
  %v980 = vadd.f32 %v152, %v979
  %v981 = vpop.f32.mrf.mxu0
  %982 = vmatprep.mubr.bf16.mxu0 %v505
  %983 = vmatmul.mubr.bf16.gmra.mxu0 %v504
  %v984 = vpop.f32.mrf.mxu0
  %v985 = vadd.f32 %v152, %v984
  %v986 = vpop.f32.mrf.mxu0
  %v987 = vpop.f32.mrf.mxu0
  %v988 = vadd.f32 %v152, %v987
  %v989 = vpop.f32.mrf.mxu0
  %990 = vmatprep.mubr.bf16.mxu0 %v507
  %991 = vmatmul.mubr.bf16.gmra.mxu0 %v506
  %v992 = vpop.f32.mrf.mxu0
  %v993 = vadd.f32 %v152, %v992
  %v994 = vpop.f32.mrf.mxu0
  %v995 = vpop.f32.mrf.mxu0
  %v996 = vadd.f32 %v152, %v995
  %v997 = vpop.f32.mrf.mxu0
  %998 = vmatprep.mubr.bf16.mxu0 %v509
  %999 = vmatmul.mubr.bf16.gmra.mxu0 %v508
  %v1000 = vpop.f32.mrf.mxu0
  %v1001 = vadd.f32 %v152, %v1000
  %v1002 = vpop.f32.mrf.mxu0
  %v1003 = vpop.f32.mrf.mxu0
  %v1004 = vadd.f32 %v152, %v1003
  %v1005 = vpop.f32.mrf.mxu0
  %1006 = vmatprep.mubr.bf16.mxu0 %v511
  %1007 = vmatmul.mubr.bf16.gmra.mxu0 %v510
  %v1008 = vpop.f32.mrf.mxu0
  %v1009 = vadd.f32 %v152, %v1008
  %v1010 = vpop.f32.mrf.mxu0
  %v1011 = vpop.f32.mrf.mxu0
  %v1012 = vadd.f32 %v152, %v1011
  %v1013 = vpop.f32.mrf.mxu0
  %1014 = vmatprep.mubr.bf16.mxu0 %v513
  %1015 = vmatmul.mubr.bf16.gmra.mxu0 %v512
  %v1016 = vpop.f32.mrf.mxu0
  %v1017 = vadd.f32 %v152, %v1016
  %v1018 = vpop.f32.mrf.mxu0
  %v1019 = vpop.f32.mrf.mxu0
  %v1020 = vadd.f32 %v152, %v1019
  %v1021 = vpop.f32.mrf.mxu0
  %1022 = vmatprep.mubr.bf16.mxu0 %v515
  %1023 = vmatmul.mubr.bf16.gmra.mxu0 %v514
  %v1024 = vpop.f32.mrf.mxu0
  %v1025 = vadd.f32 %v152, %v1024
  %v1026 = vpop.f32.mrf.mxu0
  %v1027 = vpop.f32.mrf.mxu0
  %v1028 = vadd.f32 %v152, %v1027
  %v1029 = vpop.f32.mrf.mxu0
  %1030 = vmatprep.mubr.bf16.mxu0 %v517
  %1031 = vmatmul.mubr.bf16.gmra.mxu0 %v516
  %v1032 = vpop.f32.mrf.mxu0
  %v1033 = vadd.f32 %v152, %v1032
  %v1034 = vpop.f32.mrf.mxu0
  %v1035 = vpop.f32.mrf.mxu0
  %v1036 = vadd.f32 %v152, %v1035
  %v1037 = vpop.f32.mrf.mxu0
  %1038 = vmatprep.mubr.bf16.mxu0 %v519
  %1039 = vmatmul.mubr.bf16.gmra.mxu0 %v518
  %v1040 = vpop.f32.mrf.mxu0
  %v1041 = vadd.f32 %v152, %v1040
  %v1042 = vpop.f32.mrf.mxu0
  %v1043 = vpop.f32.mrf.mxu0
  %v1044 = vadd.f32 %v152, %v1043
  %v1045 = vpop.f32.mrf.mxu0
  %1046 = vmatprep.mubr.bf16.mxu0 %v521
  %1047 = vmatmul.mubr.bf16.gmra.mxu0 %v520
  %v1048 = vpop.f32.mrf.mxu0
  %v1049 = vadd.f32 %v152, %v1048
  %v1050 = vpop.f32.mrf.mxu0
  %v1051 = vpop.f32.mrf.mxu0
  %v1052 = vadd.f32 %v152, %v1051
  %v1053 = vpop.f32.mrf.mxu0
  %1054 = vmatprep.mubr.bf16.mxu0 %v523
  %1055 = vmatmul.mubr.bf16.gmra.mxu0 %v522
  %v1056 = vpop.f32.mrf.mxu0
  %v1057 = vadd.f32 %v152, %v1056
  %v1058 = vpop.f32.mrf.mxu0
  %v1059 = vpop.f32.mrf.mxu0
  %v1060 = vadd.f32 %v152, %v1059
  %v1061 = vpop.f32.mrf.mxu0
  %1062 = vmatprep.mubr.bf16.mxu0 %v525
  %1063 = vmatmul.mubr.bf16.gmra.mxu0 %v524
  %v1064 = vpop.f32.mrf.mxu0
  %v1065 = vadd.f32 %v152, %v1064
  %v1066 = vpop.f32.mrf.mxu0
  %v1067 = vpop.f32.mrf.mxu0
  %v1068 = vadd.f32 %v152, %v1067
  %v1069 = vpop.f32.mrf.mxu0
  %1070 = vmatprep.mubr.bf16.mxu0 %v527
  %1071 = vmatmul.mubr.bf16.gmra.mxu0 %v526
  %v1072 = vpop.f32.mrf.mxu0
  %v1073 = vadd.f32 %v152, %v1072
  %v1074 = vpop.f32.mrf.mxu0
  %v1075 = vpop.f32.mrf.mxu0
  %v1076 = vadd.f32 %v152, %v1075
  %v1077 = vpop.f32.mrf.mxu0
  %1078 = vmatprep.mubr.bf16.mxu0 %v529
  %1079 = vmatmul.mubr.bf16.gmra.mxu0 %v528
  %v1080 = vpop.f32.mrf.mxu0
  %v1081 = vadd.f32 %v152, %v1080
  %v1082 = vpop.f32.mrf.mxu0
  %v1083 = vpop.f32.mrf.mxu0
  %v1084 = vadd.f32 %v152, %v1083
  %v1085 = vpop.f32.mrf.mxu0
  %1086 = vmatprep.mubr.bf16.mxu0 %v531
  %1087 = vmatmul.mubr.bf16.gmra.mxu0 %v530
  %v1088 = vpop.f32.mrf.mxu0
  %v1089 = vadd.f32 %v152, %v1088
  %v1090 = vpop.f32.mrf.mxu0
  %v1091 = vpop.f32.mrf.mxu0
  %v1092 = vadd.f32 %v152, %v1091
  %v1093 = vpop.f32.mrf.mxu0
  %1094 = vmatprep.mubr.bf16.mxu0 %v533
  %1095 = vmatmul.mubr.bf16.gmra.mxu0 %v532
  %v1096 = vpop.f32.mrf.mxu0
  %v1097 = vadd.f32 %v152, %v1096
  %v1098 = vpop.f32.mrf.mxu0
  %v1099 = vpop.f32.mrf.mxu0
  %v1100 = vadd.f32 %v152, %v1099
  %v1101 = vpop.f32.mrf.mxu0
  %1102 = vmatprep.mubr.bf16.mxu0 %v535
  %1103 = vmatmul.mubr.bf16.gmra.mxu0 %v534
  %v1104 = vpop.f32.mrf.mxu0
  %v1105 = vadd.f32 %v152, %v1104
  %v1106 = vpop.f32.mrf.mxu0
  %v1107 = vpop.f32.mrf.mxu0
  %v1108 = vadd.f32 %v152, %v1107
  %v1109 = vpop.f32.mrf.mxu0
  %1110 = vmatprep.mubr.bf16.mxu0 %v537
  %1111 = vmatmul.mubr.bf16.gmra.mxu0 %v536
  %v1112 = vpop.f32.mrf.mxu0
  %v1113 = vadd.f32 %v152, %v1112
  %v1114 = vpop.f32.mrf.mxu0
  %v1115 = vpop.f32.mrf.mxu0
  %v1116 = vadd.f32 %v152, %v1115
  %v1117 = vpop.f32.mrf.mxu0
  %1118 = vmatprep.mubr.bf16.mxu0 %v539
  %1119 = vmatmul.mubr.bf16.gmra.mxu0 %v538
  %v1120 = vpop.f32.mrf.mxu0
  %v1121 = vadd.f32 %v152, %v1120
  %v1122 = vpop.f32.mrf.mxu0
  %v1123 = vpop.f32.mrf.mxu0
  %v1124 = vadd.f32 %v152, %v1123
  %v1125 = vpop.f32.mrf.mxu0
  %1126 = vmatprep.mubr.bf16.mxu0 %v541
  %1127 = vmatmul.mubr.bf16.gmra.mxu0 %v540
  %v1128 = vpop.f32.mrf.mxu0
  %v1129 = vadd.f32 %v152, %v1128
  %v1130 = vpop.f32.mrf.mxu0
  %v1131 = vpop.f32.mrf.mxu0
  %v1132 = vadd.f32 %v152, %v1131
  %v1133 = vpop.f32.mrf.mxu0
  %1134 = vmatprep.mubr.bf16.mxu0 %v543
  %1135 = vmatmul.mubr.bf16.gmra.mxu0 %v542
  %v1136 = vpop.f32.mrf.mxu0
  %v1137 = vadd.f32 %v152, %v1136
  %v1138 = vpop.f32.mrf.mxu0
  %v1139 = vpop.f32.mrf.mxu0
  %v1140 = vadd.f32 %v152, %v1139
  %v1141 = vpop.f32.mrf.mxu0
  %1142 = vmatprep.mubr.bf16.mxu0 %v545
  %1143 = vmatmul.mubr.bf16.gmra.mxu0 %v544
  %v1144 = vpop.f32.mrf.mxu0
  %v1145 = vadd.f32 %v152, %v1144
  %v1146 = vpop.f32.mrf.mxu0
  %v1147 = vpop.f32.mrf.mxu0
  %v1148 = vadd.f32 %v152, %v1147
  %v1149 = vpop.f32.mrf.mxu0
  %1150 = vmatprep.mubr.bf16.mxu0 %v547
  %1151 = vmatmul.mubr.bf16.gmra.mxu0 %v546
  %v1152 = vpop.f32.mrf.mxu0
  %v1153 = vadd.f32 %v152, %v1152
  %v1154 = vpop.f32.mrf.mxu0
  %v1155 = vpop.f32.mrf.mxu0
  %v1156 = vadd.f32 %v152, %v1155
  %v1157 = vpop.f32.mrf.mxu0
  %1158 = vmatprep.mubr.bf16.mxu0 %v549
  %1159 = vmatmul.mubr.bf16.gmra.mxu0 %v548
  %v1160 = vpop.f32.mrf.mxu0
  %v1161 = vadd.f32 %v152, %v1160
  %v1162 = vpop.f32.mrf.mxu0
  %v1163 = vpop.f32.mrf.mxu0
  %v1164 = vadd.f32 %v152, %v1163
  %v1165 = vpop.f32.mrf.mxu0
  %1166 = vmatprep.mubr.bf16.mxu0 %v551
  %1167 = vmatmul.mubr.bf16.gmra.mxu0 %v550
  %v1168 = vpop.f32.mrf.mxu0
  %v1169 = vadd.f32 %v152, %v1168
  %v1170 = vpop.f32.mrf.mxu0
  %v1171 = vpop.f32.mrf.mxu0
  %v1172 = vadd.f32 %v152, %v1171
  %v1173 = vpop.f32.mrf.mxu0
  %1174 = vmatprep.mubr.bf16.mxu0 %v553
  %1175 = vmatmul.mubr.bf16.gmra.mxu0 %v552
  %v1176 = vpop.f32.mrf.mxu0
  %v1177 = vadd.f32 %v152, %v1176
  %v1178 = vpop.f32.mrf.mxu0
  %v1179 = vpop.f32.mrf.mxu0
  %v1180 = vadd.f32 %v152, %v1179
  %v1181 = vpop.f32.mrf.mxu0
  %1182 = vdwg.mxu0
  %v1183 = vmax.f32 %v785, 0.0
  %v1184 = vmax.f32 %v788, 0.0
  %v1185 = vmax.f32 %v793, 0.0
  %v1186 = vmax.f32 %v796, 0.0
  %v1187 = vmax.f32 %v801, 0.0
  %v1188 = vmax.f32 %v804, 0.0
  %v1189 = vmax.f32 %v809, 0.0
  %v1190 = vmax.f32 %v812, 0.0
  %v1191 = vmax.f32 %v817, 0.0
  %v1192 = vmax.f32 %v820, 0.0
  %v1193 = vmax.f32 %v825, 0.0
  %v1194 = vmax.f32 %v828, 0.0
  %v1195 = vmax.f32 %v833, 0.0
  %v1196 = vmax.f32 %v836, 0.0
  %v1197 = vmax.f32 %v841, 0.0
  %v1198 = vmax.f32 %v844, 0.0
  %v1199 = vmax.f32 %v849, 0.0
  %v1200 = vmax.f32 %v852, 0.0
  %v1201 = vmax.f32 %v857, 0.0
  %v1202 = vmax.f32 %v860, 0.0
  %v1203 = vmax.f32 %v865, 0.0
  %v1204 = vmax.f32 %v868, 0.0
  %v1205 = vmax.f32 %v873, 0.0
  %v1206 = vmax.f32 %v876, 0.0
  %v1207 = vmax.f32 %v881, 0.0
  %v1208 = vmax.f32 %v884, 0.0
  %v1209 = vmax.f32 %v889, 0.0
  %v1210 = vmax.f32 %v892, 0.0
  %v1211 = vmax.f32 %v897, 0.0
  %v1212 = vmax.f32 %v900, 0.0
  %v1213 = vmax.f32 %v905, 0.0
  %v1214 = vmax.f32 %v908, 0.0
  %v1215 = vmax.f32 %v913, 0.0
  %v1216 = vmax.f32 %v916, 0.0
  %v1217 = vmax.f32 %v921, 0.0
  %v1218 = vmax.f32 %v924, 0.0
  %v1219 = vmax.f32 %v929, 0.0
  %v1220 = vmax.f32 %v932, 0.0
  %v1221 = vmax.f32 %v937, 0.0
  %v1222 = vmax.f32 %v940, 0.0
  %v1223 = vmax.f32 %v945, 0.0
  %v1224 = vmax.f32 %v948, 0.0
  %v1225 = vmax.f32 %v953, 0.0
  %v1226 = vmax.f32 %v956, 0.0
  %v1227 = vmax.f32 %v961, 0.0
  %v1228 = vmax.f32 %v964, 0.0
  %v1229 = vmax.f32 %v969, 0.0
  %v1230 = vmax.f32 %v972, 0.0
  %v1231 = vmax.f32 %v977, 0.0
  %v1232 = vmax.f32 %v980, 0.0
  %v1233 = vmax.f32 %v985, 0.0
  %v1234 = vmax.f32 %v988, 0.0
  %v1235 = vmax.f32 %v993, 0.0
  %v1236 = vmax.f32 %v996, 0.0
  %v1237 = vmax.f32 %v1001, 0.0
  %v1238 = vmax.f32 %v1004, 0.0
  %v1239 = vmax.f32 %v1009, 0.0
  %v1240 = vmax.f32 %v1012, 0.0
  %v1241 = vmax.f32 %v1017, 0.0
  %v1242 = vmax.f32 %v1020, 0.0
  %v1243 = vmax.f32 %v1025, 0.0
  %v1244 = vmax.f32 %v1028, 0.0
  %v1245 = vmax.f32 %v1033, 0.0
  %v1246 = vmax.f32 %v1036, 0.0
  %v1247 = vmax.f32 %v1041, 0.0
  %v1248 = vmax.f32 %v1044, 0.0
  %v1249 = vmax.f32 %v1049, 0.0
  %v1250 = vmax.f32 %v1052, 0.0
  %v1251 = vmax.f32 %v1057, 0.0
  %v1252 = vmax.f32 %v1060, 0.0
  %v1253 = vmax.f32 %v1065, 0.0
  %v1254 = vmax.f32 %v1068, 0.0
  %v1255 = vmax.f32 %v1073, 0.0
  %v1256 = vmax.f32 %v1076, 0.0
  %v1257 = vmax.f32 %v1081, 0.0
  %v1258 = vmax.f32 %v1084, 0.0
  %v1259 = vmax.f32 %v1089, 0.0
  %v1260 = vmax.f32 %v1092, 0.0
  %v1261 = vmax.f32 %v1097, 0.0
  %v1262 = vmax.f32 %v1100, 0.0
  %v1263 = vmax.f32 %v1105, 0.0
  %v1264 = vmax.f32 %v1108, 0.0
  %v1265 = vmax.f32 %v1113, 0.0
  %v1266 = vmax.f32 %v1116, 0.0
  %v1267 = vmax.f32 %v1121, 0.0
  %v1268 = vmax.f32 %v1124, 0.0
  %v1269 = vmax.f32 %v1129, 0.0
  %v1270 = vmax.f32 %v1132, 0.0
  %v1271 = vmax.f32 %v1137, 0.0
  %v1272 = vmax.f32 %v1140, 0.0
  %v1273 = vmax.f32 %v1145, 0.0
  %v1274 = vmax.f32 %v1148, 0.0
  %v1275 = vmax.f32 %v1153, 0.0
  %v1276 = vmax.f32 %v1156, 0.0
  %v1277 = vmax.f32 %v1161, 0.0
  %v1278 = vmax.f32 %v1164, 0.0
  %v1279 = vmax.f32 %v1169, 0.0
  %v1280 = vmax.f32 %v1172, 0.0
  %v1281 = vmax.f32 %v1177, 0.0
  %v1282 = vmax.f32 %v1180, 0.0
  %v1283 = vpack.c.bf16 %v1184, %v1183
  %v1284 = vpack.c.bf16 %v1186, %v1185
  %v1285 = vpack.c.bf16 %v1188, %v1187
  %v1286 = vpack.c.bf16 %v1190, %v1189
  %v1287 = vpack.c.bf16 %v1192, %v1191
  %v1288 = vpack.c.bf16 %v1194, %v1193
  %v1289 = vpack.c.bf16 %v1196, %v1195
  %v1290 = vpack.c.bf16 %v1198, %v1197
  %v1291 = vpack.c.bf16 %v1200, %v1199
  %v1292 = vpack.c.bf16 %v1202, %v1201
  %v1293 = vpack.c.bf16 %v1204, %v1203
  %v1294 = vpack.c.bf16 %v1206, %v1205
  %v1295 = vpack.c.bf16 %v1208, %v1207
  %v1296 = vpack.c.bf16 %v1210, %v1209
  %v1297 = vpack.c.bf16 %v1212, %v1211
  %v1298 = vpack.c.bf16 %v1214, %v1213
  %v1299 = vpack.c.bf16 %v1216, %v1215
  %v1300 = vpack.c.bf16 %v1218, %v1217
  %v1301 = vpack.c.bf16 %v1220, %v1219
  %v1302 = vpack.c.bf16 %v1222, %v1221
  %v1303 = vpack.c.bf16 %v1224, %v1223
  %v1304 = vpack.c.bf16 %v1226, %v1225
  %v1305 = vpack.c.bf16 %v1228, %v1227
  %v1306 = vpack.c.bf16 %v1230, %v1229
  %v1307 = vpack.c.bf16 %v1232, %v1231
  %v1308 = vpack.c.bf16 %v1234, %v1233
  %v1309 = vpack.c.bf16 %v1236, %v1235
  %v1310 = vpack.c.bf16 %v1238, %v1237
  %v1311 = vpack.c.bf16 %v1240, %v1239
  %v1312 = vpack.c.bf16 %v1242, %v1241
  %v1313 = vpack.c.bf16 %v1244, %v1243
  %v1314 = vpack.c.bf16 %v1246, %v1245
  %v1315 = vpack.c.bf16 %v1248, %v1247
  %v1316 = vpack.c.bf16 %v1250, %v1249
  %v1317 = vpack.c.bf16 %v1252, %v1251
  %v1318 = vpack.c.bf16 %v1254, %v1253
  %v1319 = vpack.c.bf16 %v1256, %v1255
  %v1320 = vpack.c.bf16 %v1258, %v1257
  %v1321 = vpack.c.bf16 %v1260, %v1259
  %v1322 = vpack.c.bf16 %v1262, %v1261
  %v1323 = vpack.c.bf16 %v1264, %v1263
  %v1324 = vpack.c.bf16 %v1266, %v1265
  %v1325 = vpack.c.bf16 %v1268, %v1267
  %v1326 = vpack.c.bf16 %v1270, %v1269
  %v1327 = vpack.c.bf16 %v1272, %v1271
  %v1328 = vpack.c.bf16 %v1274, %v1273
  %v1329 = vpack.c.bf16 %v1276, %v1275
  %v1330 = vpack.c.bf16 %v1278, %v1277
  %v1331 = vpack.c.bf16 %v1280, %v1279
  %v1332 = vpack.c.bf16 %v1282, %v1281
  %v1383 = vunpack.c.l.b16 %v1283
  %v1384 = vunpack.c.h.b16 %v1283
  %v1385 = vunpack.c.l.b16 %v1284
  %v1386 = vunpack.c.h.b16 %v1284
  %v1387 = vunpack.c.l.b16 %v1285
  %v1388 = vunpack.c.h.b16 %v1285
  %v1389 = vunpack.c.l.b16 %v1286
  %v1390 = vunpack.c.h.b16 %v1286
  %v1391 = vunpack.c.l.b16 %v1287
  %v1392 = vunpack.c.h.b16 %v1287
  %v1393 = vunpack.c.l.b16 %v1288
  %v1394 = vunpack.c.h.b16 %v1288
  %v1395 = vunpack.c.l.b16 %v1289
  %v1396 = vunpack.c.h.b16 %v1289
  %v1397 = vunpack.c.l.b16 %v1290
  %v1398 = vunpack.c.h.b16 %v1290
  %v1399 = vunpack.c.l.b16 %v1291
  %v1400 = vunpack.c.h.b16 %v1291
  %v1401 = vunpack.c.l.b16 %v1292
  %v1402 = vunpack.c.h.b16 %v1292
  %v1403 = vunpack.c.l.b16 %v1293
  %v1404 = vunpack.c.h.b16 %v1293
  %v1405 = vunpack.c.l.b16 %v1294
  %v1406 = vunpack.c.h.b16 %v1294
  %v1407 = vunpack.c.l.b16 %v1295
  %v1408 = vunpack.c.h.b16 %v1295
  %v1409 = vunpack.c.l.b16 %v1296
  %v1410 = vunpack.c.h.b16 %v1296
  %v1411 = vunpack.c.l.b16 %v1297
  %v1412 = vunpack.c.h.b16 %v1297
  %v1413 = vunpack.c.l.b16 %v1298
  %v1414 = vunpack.c.h.b16 %v1298
  %v1415 = vunpack.c.l.b16 %v1299
  %v1416 = vunpack.c.h.b16 %v1299
  %v1417 = vunpack.c.l.b16 %v1300
  %v1418 = vunpack.c.h.b16 %v1300
  %v1419 = vunpack.c.l.b16 %v1301
  %v1420 = vunpack.c.h.b16 %v1301
  %v1421 = vunpack.c.l.b16 %v1302
  %v1422 = vunpack.c.h.b16 %v1302
  %v1423 = vunpack.c.l.b16 %v1303
  %v1424 = vunpack.c.h.b16 %v1303
  %v1425 = vunpack.c.l.b16 %v1304
  %v1426 = vunpack.c.h.b16 %v1304
  %v1427 = vunpack.c.l.b16 %v1305
  %v1428 = vunpack.c.h.b16 %v1305
  %v1429 = vunpack.c.l.b16 %v1306
  %v1430 = vunpack.c.h.b16 %v1306
  %v1431 = vunpack.c.l.b16 %v1307
  %v1432 = vunpack.c.h.b16 %v1307
  %v1433 = vunpack.c.l.b16 %v1308
  %v1434 = vunpack.c.h.b16 %v1308
  %v1435 = vunpack.c.l.b16 %v1309
  %v1436 = vunpack.c.h.b16 %v1309
  %v1437 = vunpack.c.l.b16 %v1310
  %v1438 = vunpack.c.h.b16 %v1310
  %v1439 = vunpack.c.l.b16 %v1311
  %v1440 = vunpack.c.h.b16 %v1311
  %v1441 = vunpack.c.l.b16 %v1312
  %v1442 = vunpack.c.h.b16 %v1312
  %v1443 = vunpack.c.l.b16 %v1313
  %v1444 = vunpack.c.h.b16 %v1313
  %v1445 = vunpack.c.l.b16 %v1314
  %v1446 = vunpack.c.h.b16 %v1314
  %v1447 = vunpack.c.l.b16 %v1315
  %v1448 = vunpack.c.h.b16 %v1315
  %v1449 = vunpack.c.l.b16 %v1316
  %v1450 = vunpack.c.h.b16 %v1316
  %v1451 = vunpack.c.l.b16 %v1317
  %v1452 = vunpack.c.h.b16 %v1317
  %v1453 = vunpack.c.l.b16 %v1318
  %v1454 = vunpack.c.h.b16 %v1318
  %v1455 = vunpack.c.l.b16 %v1319
  %v1456 = vunpack.c.h.b16 %v1319
  %v1457 = vunpack.c.l.b16 %v1320
  %v1458 = vunpack.c.h.b16 %v1320
  %v1459 = vunpack.c.l.b16 %v1321
  %v1460 = vunpack.c.h.b16 %v1321
  %v1461 = vunpack.c.l.b16 %v1322
  %v1462 = vunpack.c.h.b16 %v1322
  %v1463 = vunpack.c.l.b16 %v1323
  %v1464 = vunpack.c.h.b16 %v1323
  %v1465 = vunpack.c.l.b16 %v1324
  %v1466 = vunpack.c.h.b16 %v1324
  %v1467 = vunpack.c.l.b16 %v1325
  %v1468 = vunpack.c.h.b16 %v1325
  %v1469 = vunpack.c.l.b16 %v1326
  %v1470 = vunpack.c.h.b16 %v1326
  %v1471 = vunpack.c.l.b16 %v1327
  %v1472 = vunpack.c.h.b16 %v1327
  %v1473 = vunpack.c.l.b16 %v1328
  %v1474 = vunpack.c.h.b16 %v1328
  %v1475 = vunpack.c.l.b16 %v1329
  %v1476 = vunpack.c.h.b16 %v1329
  %v1477 = vunpack.c.l.b16 %v1330
  %v1478 = vunpack.c.h.b16 %v1330
  %v1479 = vunpack.c.l.b16 %v1331
  %v1480 = vunpack.c.h.b16 %v1331
  %v1481 = vunpack.c.l.b16 %v1332
  %v1482 = vunpack.c.h.b16 %v1332
  %v1483 = vpack.c.b16 %v1383, %v1383
  %v1484 = vpack.c.b16 %v1384, %v1384
  %v1485 = vpack.c.b16 %v1385, %v1385
  %v1486 = vpack.c.b16 %v1386, %v1386
  %v1487 = vpack.c.b16 %v1387, %v1387
  %v1488 = vpack.c.b16 %v1388, %v1388
  %v1489 = vpack.c.b16 %v1389, %v1389
  %v1490 = vpack.c.b16 %v1390, %v1390
  %v1491 = vpack.c.b16 %v1391, %v1391
  %v1492 = vpack.c.b16 %v1392, %v1392
  %v1493 = vpack.c.b16 %v1393, %v1393
  %v1494 = vpack.c.b16 %v1394, %v1394
  %v1495 = vpack.c.b16 %v1395, %v1395
  %v1496 = vpack.c.b16 %v1396, %v1396
  %v1497 = vpack.c.b16 %v1397, %v1397
  %v1498 = vpack.c.b16 %v1398, %v1398
  %v1499 = vpack.c.b16 %v1399, %v1399
  %v1500 = vpack.c.b16 %v1400, %v1400
  %v1501 = vpack.c.b16 %v1401, %v1401
  %v1502 = vpack.c.b16 %v1402, %v1402
  %v1503 = vpack.c.b16 %v1403, %v1403
  %v1504 = vpack.c.b16 %v1404, %v1404
  %v1505 = vpack.c.b16 %v1405, %v1405
  %v1506 = vpack.c.b16 %v1406, %v1406
  %v1507 = vpack.c.b16 %v1407, %v1407
  %v1508 = vpack.c.b16 %v1408, %v1408
  %v1509 = vpack.c.b16 %v1409, %v1409
  %v1510 = vpack.c.b16 %v1410, %v1410
  %v1511 = vpack.c.b16 %v1411, %v1411
  %v1512 = vpack.c.b16 %v1412, %v1412
  %v1513 = vpack.c.b16 %v1413, %v1413
  %v1514 = vpack.c.b16 %v1414, %v1414
  %v1515 = vpack.c.b16 %v1415, %v1415
  %v1516 = vpack.c.b16 %v1416, %v1416
  %v1517 = vpack.c.b16 %v1417, %v1417
  %v1518 = vpack.c.b16 %v1418, %v1418
  %v1519 = vpack.c.b16 %v1419, %v1419
  %v1520 = vpack.c.b16 %v1420, %v1420
  %v1521 = vpack.c.b16 %v1421, %v1421
  %v1522 = vpack.c.b16 %v1422, %v1422
  %v1523 = vpack.c.b16 %v1423, %v1423
  %v1524 = vpack.c.b16 %v1424, %v1424
  %v1525 = vpack.c.b16 %v1425, %v1425
  %v1526 = vpack.c.b16 %v1426, %v1426
  %v1527 = vpack.c.b16 %v1427, %v1427
  %v1528 = vpack.c.b16 %v1428, %v1428
  %v1529 = vpack.c.b16 %v1429, %v1429
  %v1530 = vpack.c.b16 %v1430, %v1430
  %v1531 = vpack.c.b16 %v1431, %v1431
  %v1532 = vpack.c.b16 %v1432, %v1432
  %v1533 = vpack.c.b16 %v1433, %v1433
  %v1534 = vpack.c.b16 %v1434, %v1434
  %v1535 = vpack.c.b16 %v1435, %v1435
  %v1536 = vpack.c.b16 %v1436, %v1436
  %v1537 = vpack.c.b16 %v1437, %v1437
  %v1538 = vpack.c.b16 %v1438, %v1438
  %v1539 = vpack.c.b16 %v1439, %v1439
  %v1540 = vpack.c.b16 %v1440, %v1440
  %v1541 = vpack.c.b16 %v1441, %v1441
  %v1542 = vpack.c.b16 %v1442, %v1442
  %v1543 = vpack.c.b16 %v1443, %v1443
  %v1544 = vpack.c.b16 %v1444, %v1444
  %v1545 = vpack.c.b16 %v1445, %v1445
  %v1546 = vpack.c.b16 %v1446, %v1446
  %v1547 = vpack.c.b16 %v1447, %v1447
  %v1548 = vpack.c.b16 %v1448, %v1448
  %v1549 = vpack.c.b16 %v1449, %v1449
  %v1550 = vpack.c.b16 %v1450, %v1450
  %v1551 = vpack.c.b16 %v1451, %v1451
  %v1552 = vpack.c.b16 %v1452, %v1452
  %v1553 = vpack.c.b16 %v1453, %v1453
  %v1554 = vpack.c.b16 %v1454, %v1454
  %v1555 = vpack.c.b16 %v1455, %v1455
  %v1556 = vpack.c.b16 %v1456, %v1456
  %v1557 = vpack.c.b16 %v1457, %v1457
  %v1558 = vpack.c.b16 %v1458, %v1458
  %v1559 = vpack.c.b16 %v1459, %v1459
  %v1560 = vpack.c.b16 %v1460, %v1460
  %v1561 = vpack.c.b16 %v1461, %v1461
  %v1562 = vpack.c.b16 %v1462, %v1462
  %v1563 = vpack.c.b16 %v1463, %v1463
  %v1564 = vpack.c.b16 %v1464, %v1464
  %v1565 = vpack.c.b16 %v1465, %v1465
  %v1566 = vpack.c.b16 %v1466, %v1466
  %v1567 = vpack.c.b16 %v1467, %v1467
  %v1568 = vpack.c.b16 %v1468, %v1468
  %v1569 = vpack.c.b16 %v1469, %v1469
  %v1570 = vpack.c.b16 %v1470, %v1470
  %v1571 = vpack.c.b16 %v1471, %v1471
  %v1572 = vpack.c.b16 %v1472, %v1472
  %v1573 = vpack.c.b16 %v1473, %v1473
  %v1574 = vpack.c.b16 %v1474, %v1474
  %v1575 = vpack.c.b16 %v1475, %v1475
  %v1576 = vpack.c.b16 %v1476, %v1476
  %v1577 = vpack.c.b16 %v1477, %v1477
  %v1578 = vpack.c.b16 %v1478, %v1478
  %v1579 = vpack.c.b16 %v1479, %v1479
  %v1580 = vpack.c.b16 %v1480, %v1480
  %v1581 = vpack.c.b16 %v1481, %v1481
  %v1582 = vpack.c.b16 %v1482, %v1482
  %1683 = vst [vmem:[%s3] sm:$0xf] %v1483
  %1684 = vst [vmem:[%s3 + $0x4] sm:$0xf] %v1484
  %1685 = vst [vmem:[%s3 + $0x8] sm:$0xf] %v1485
  %1686 = vst [vmem:[%s3 + $0xc] sm:$0xf] %v1486
  %1687 = vst [vmem:[%s3 + $0x10] sm:$0xf] %v1487
  %1688 = vst [vmem:[%s3 + $0x14] sm:$0xf] %v1488
  %1689 = vst [vmem:[%s3 + $0x18] sm:$0xf] %v1489
  %1690 = vst [vmem:[%s3 + $0x1c] sm:$0xf] %v1490
  %1691 = vst [vmem:[%s3 + $0x20] sm:$0xf] %v1491
  %1692 = vst [vmem:[%s3 + $0x24] sm:$0xf] %v1492
  %1693 = vst [vmem:[%s3 + $0x28] sm:$0xf] %v1493
  %1694 = vst [vmem:[%s3 + $0x2c] sm:$0xf] %v1494
  %1695 = vst [vmem:[%s3 + $0x30] sm:$0xf] %v1495
  %1696 = vst [vmem:[%s3 + $0x34] sm:$0xf] %v1496
  %1697 = vst [vmem:[%s3 + $0x38] sm:$0xf] %v1497
  %1698 = vst [vmem:[%s3 + $0x3c] sm:$0xf] %v1498
  %1699 = vst [vmem:[%s3 + $0x40] sm:$0xf] %v1499
  %1700 = vst [vmem:[%s3 + $0x44] sm:$0xf] %v1500
  %1701 = vst [vmem:[%s3 + $0x48] sm:$0xf] %v1501
  %1702 = vst [vmem:[%s3 + $0x4c] sm:$0xf] %v1502
  %1703 = vst [vmem:[%s3 + $0x50] sm:$0xf] %v1503
  %1704 = vst [vmem:[%s3 + $0x54] sm:$0xf] %v1504
  %1705 = vst [vmem:[%s3 + $0x58] sm:$0xf] %v1505
  %1706 = vst [vmem:[%s3 + $0x5c] sm:$0xf] %v1506
  %1707 = vst [vmem:[%s3 + $0x60] sm:$0xf] %v1507
  %1708 = vst [vmem:[%s3 + $0x64] sm:$0xf] %v1508
  %1709 = vst [vmem:[%s3 + $0x68] sm:$0xf] %v1509
  %1710 = vst [vmem:[%s3 + $0x6c] sm:$0xf] %v1510
  %1711 = vst [vmem:[%s3 + $0x70] sm:$0xf] %v1511
  %1712 = vst [vmem:[%s3 + $0x74] sm:$0xf] %v1512
  %1713 = vst [vmem:[%s3 + $0x78] sm:$0xf] %v1513
  %1714 = vst [vmem:[%s3 + $0x7c] sm:$0xf] %v1514
  %1715 = vst [vmem:[%s3 + $0x80] sm:$0xf] %v1515
  %1716 = vst [vmem:[%s3 + $0x84] sm:$0xf] %v1516
  %1717 = vst [vmem:[%s3 + $0x88] sm:$0xf] %v1517
  %1718 = vst [vmem:[%s3 + $0x8c] sm:$0xf] %v1518
  %1719 = vst [vmem:[%s3 + $0x90] sm:$0xf] %v1519
  %1720 = vst [vmem:[%s3 + $0x94] sm:$0xf] %v1520
  %1721 = vst [vmem:[%s3 + $0x98] sm:$0xf] %v1521
  %1722 = vst [vmem:[%s3 + $0x9c] sm:$0xf] %v1522
  %1723 = vst [vmem:[%s3 + $0xa0] sm:$0xf] %v1523
  %1724 = vst [vmem:[%s3 + $0xa4] sm:$0xf] %v1524
  %1725 = vst [vmem:[%s3 + $0xa8] sm:$0xf] %v1525
  %1726 = vst [vmem:[%s3 + $0xac] sm:$0xf] %v1526
  %1727 = vst [vmem:[%s3 + $0xb0] sm:$0xf] %v1527
  %1728 = vst [vmem:[%s3 + $0xb4] sm:$0xf] %v1528
  %1729 = vst [vmem:[%s3 + $0xb8] sm:$0xf] %v1529
  %1730 = vst [vmem:[%s3 + $0xbc] sm:$0xf] %v1530
  %1731 = vst [vmem:[%s3 + $0xc0] sm:$0xf] %v1531
  %1732 = vst [vmem:[%s3 + $0xc4] sm:$0xf] %v1532
  %1733 = vst [vmem:[%s3 + $0xc8] sm:$0xf] %v1533
  %1734 = vst [vmem:[%s3 + $0xcc] sm:$0xf] %v1534
  %1735 = vst [vmem:[%s3 + $0xd0] sm:$0xf] %v1535
  %1736 = vst [vmem:[%s3 + $0xd4] sm:$0xf] %v1536
  %1737 = vst [vmem:[%s3 + $0xd8] sm:$0xf] %v1537
  %1738 = vst [vmem:[%s3 + $0xdc] sm:$0xf] %v1538
  %1739 = vst [vmem:[%s3 + $0xe0] sm:$0xf] %v1539
  %1740 = vst [vmem:[%s3 + $0xe4] sm:$0xf] %v1540
  %1741 = vst [vmem:[%s3 + $0xe8] sm:$0xf] %v1541
  %1742 = vst [vmem:[%s3 + $0xec] sm:$0xf] %v1542
  %1743 = vst [vmem:[%s3 + $0xf0] sm:$0xf] %v1543
  %1744 = vst [vmem:[%s3 + $0xf4] sm:$0xf] %v1544
  %1745 = vst [vmem:[%s3 + $0xf8] sm:$0xf] %v1545
  %1746 = vst [vmem:[%s3 + $0xfc] sm:$0xf] %v1546
  %1747 = vst [vmem:[%s3 + $0x100] sm:$0xf] %v1547
  %1748 = vst [vmem:[%s3 + $0x104] sm:$0xf] %v1548
  %1749 = vst [vmem:[%s3 + $0x108] sm:$0xf] %v1549
  %1750 = vst [vmem:[%s3 + $0x10c] sm:$0xf] %v1550
  %1751 = vst [vmem:[%s3 + $0x110] sm:$0xf] %v1551
  %1752 = vst [vmem:[%s3 + $0x114] sm:$0xf] %v1552
  %1753 = vst [vmem:[%s3 + $0x118] sm:$0xf] %v1553
  %1754 = vst [vmem:[%s3 + $0x11c] sm:$0xf] %v1554
  %1755 = vst [vmem:[%s3 + $0x120] sm:$0xf] %v1555
  %1756 = vst [vmem:[%s3 + $0x124] sm:$0xf] %v1556
  %1757 = vst [vmem:[%s3 + $0x128] sm:$0xf] %v1557
  %1758 = vst [vmem:[%s3 + $0x12c] sm:$0xf] %v1558
  %1759 = vst [vmem:[%s3 + $0x130] sm:$0xf] %v1559
  %1760 = vst [vmem:[%s3 + $0x134] sm:$0xf] %v1560
  %1761 = vst [vmem:[%s3 + $0x138] sm:$0xf] %v1561
  %1762 = vst [vmem:[%s3 + $0x13c] sm:$0xf] %v1562
  %1763 = vst [vmem:[%s3 + $0x140] sm:$0xf] %v1563
  %1764 = vst [vmem:[%s3 + $0x144] sm:$0xf] %v1564
  %1765 = vst [vmem:[%s3 + $0x148] sm:$0xf] %v1565
  %1766 = vst [vmem:[%s3 + $0x14c] sm:$0xf] %v1566
  %1767 = vst [vmem:[%s3 + $0x150] sm:$0xf] %v1567
  %1768 = vst [vmem:[%s3 + $0x154] sm:$0xf] %v1568
  %1769 = vst [vmem:[%s3 + $0x158] sm:$0xf] %v1569
  %1770 = vst [vmem:[%s3 + $0x15c] sm:$0xf] %v1570
  %1771 = vst [vmem:[%s3 + $0x160] sm:$0xf] %v1571
  %1772 = vst [vmem:[%s3 + $0x164] sm:$0xf] %v1572
  %1773 = vst [vmem:[%s3 + $0x168] sm:$0xf] %v1573
  %1774 = vst [vmem:[%s3 + $0x16c] sm:$0xf] %v1574
  %1775 = vst [vmem:[%s3 + $0x170] sm:$0xf] %v1575
  %1776 = vst [vmem:[%s3 + $0x174] sm:$0xf] %v1576
  %1777 = vst [vmem:[%s3 + $0x178] sm:$0xf] %v1577
  %1778 = vst [vmem:[%s3 + $0x17c] sm:$0xf] %v1578
  %1779 = vst [vmem:[%s3 + $0x180] sm:$0xf] %v1579
  %1780 = vst [vmem:[%s3 + $0x184] sm:$0xf] %v1580
  %1781 = vst [vmem:[%s3 + $0x188] sm:$0xf] %v1581
  %1782 = vst [vmem:[%s3 + $0x18c] sm:$0xf] %v1582
  // Predicated region
  $region14: #{qnet_forward.4} parent=0 // pred_check
    _
  $region15: #{qnet_forward.4} parent=0 // pred_check_branch
    %1784 = sbr.rel (0) target = $region17
  $region16: #{qnet_forward.4} parent=0 // pred_region
    _
  $region17: #{qnet_forward.4} parent=0 // pred_fallthru
    _
  // Predicated region
  $region18: #{qnet_forward.4} parent=0 // pred_check
    _
  $region19: #{qnet_forward.4} parent=0 // pred_check_branch
    %1786 = sbr.rel (0) target = $region21
  $region20: #{qnet_forward.4} parent=0 // pred_region
    _
  $region21: #{qnet_forward.4} parent=0 // pred_fallthru
    _

// kernel: qnet_forward.5
$region0: #{qnet_forward.5}
  #allocation0 [shape = 'u32[]', space=smem, size = 0x4, offset = 0x4, fixed_abs, tag = 'smem constant byte address 0x4 - core index']
  #allocation1 [shape = 'u32[144,128]{1,0:T(1,128)}', space=vmem, size = 0x12000, scoped, tag = 'internal scratch']
  %s0 = inlined_call_operand.vmem [shape: bf16[162,512], index: 0, kind: input, shape index: {}]
  %s1 = inlined_call_operand.vmem [shape: bf16[512,128], index: 1, kind: input, shape index: {}]
  %s2 = inlined_call_operand.vmem [shape: f32[1,128], index: 2, kind: input, shape index: {}]
  %s3 = inlined_call_operand.vmem [shape: bf16[162,128], index: 3, kind: output, shape index: {}]
  %s4 = sld [smem:[#allocation0]]
  $region22: #{qnet_forward.5} parent=0
    _
  %s6 = ssub.s32 1, %s4
  %s7 = scalar_select 0, %s6, %s4
  // Predicated region
  $region2: #{qnet_forward.5} parent=0 // pred_check
    _
  $region3: #{qnet_forward.5} parent=0 // pred_check_branch
    %9 = sbr.rel (0) target = $region5
  $region4: #{qnet_forward.5} parent=0 // pred_region
    _
  $region5: #{qnet_forward.5} parent=0 // pred_fallthru
    _
  // Predicated region
  $region6: #{qnet_forward.5} parent=0 // pred_check
    _
  $region7: #{qnet_forward.5} parent=0 // pred_check_branch
    %11 = sbr.rel (0) target = $region9
  $region8: #{qnet_forward.5} parent=0 // pred_region
    _
  $region9: #{qnet_forward.5} parent=0 // pred_fallthru
    _
  // Predicated region
  $region10: #{qnet_forward.5} parent=0 // pred_check
    _
  $region11: #{qnet_forward.5} parent=0 // pred_check_branch
    %13 = sbr.rel (0) target = $region13
  $region12: #{qnet_forward.5} parent=0 // pred_region
    _
  $region13: #{qnet_forward.5} parent=0 // pred_fallthru
    _
  %v15 = vld [vmem:[%s0] sm:$0xff]
  %v16 = vld [vmem:[%s0 + $0x8] sm:$0xff]
  %v17 = vld [vmem:[%s0 + $0x10] sm:$0xff]
  %v18 = vld [vmem:[%s0 + $0x18] sm:$0xff]
  %v19 = vld [vmem:[%s0 + $0x20] sm:$0xff]
  %v20 = vld [vmem:[%s0 + $0x28] sm:$0xff]
  %v21 = vld [vmem:[%s0 + $0x30] sm:$0xff]
  %v22 = vld [vmem:[%s0 + $0x38] sm:$0xff]
  %v23 = vld [vmem:[%s0 + $0x40] sm:$0xff]
  %v24 = vld [vmem:[%s0 + $0x48] sm:$0xff]
  %v25 = vld [vmem:[%s0 + $0x50] sm:$0xff]
  %v26 = vld [vmem:[%s0 + $0x58] sm:$0xff]
  %v27 = vld [vmem:[%s0 + $0x60] sm:$0xff]
  %v28 = vld [vmem:[%s0 + $0x68] sm:$0xff]
  %v29 = vld [vmem:[%s0 + $0x70] sm:$0xff]
  %v30 = vld [vmem:[%s0 + $0x78] sm:$0xff]
  %v31 = vld [vmem:[%s0 + $0x80] sm:$0xff]
  %v32 = vld [vmem:[%s0 + $0x88] sm:$0xff]
  %v33 = vld [vmem:[%s0 + $0x90] sm:$0xff]
  %v34 = vld [vmem:[%s0 + $0x98] sm:$0xff]
  %v35 = vld [vmem:[%s0 + $0xa0] sm:$0xff]
  %v36 = vld [vmem:[%s0 + $0xa8] sm:$0xff]
  %v37 = vld [vmem:[%s0 + $0xb0] sm:$0xff]
  %v38 = vld [vmem:[%s0 + $0xb8] sm:$0xff]
  %v39 = vld [vmem:[%s0 + $0xc0] sm:$0xff]
  %v40 = vld [vmem:[%s0 + $0xc8] sm:$0xff]
  %v41 = vld [vmem:[%s0 + $0xd0] sm:$0xff]
  %v42 = vld [vmem:[%s0 + $0xd8] sm:$0xff]
  %v43 = vld [vmem:[%s0 + $0xe0] sm:$0xff]
  %v44 = vld [vmem:[%s0 + $0xe8] sm:$0xff]
  %v45 = vld [vmem:[%s0 + $0xf0] sm:$0xff]
  %v46 = vld [vmem:[%s0 + $0xf8] sm:$0xff]
  %v47 = vld [vmem:[%s0 + $0x100] sm:$0xff]
  %v48 = vld [vmem:[%s0 + $0x108] sm:$0xff]
  %v49 = vld [vmem:[%s0 + $0x110] sm:$0xff]
  %v50 = vld [vmem:[%s0 + $0x118] sm:$0xff]
  %v51 = vld [vmem:[%s0 + $0x120] sm:$0xff]
  %v52 = vld [vmem:[%s0 + $0x128] sm:$0xff]
  %v53 = vld [vmem:[%s0 + $0x130] sm:$0xff]
  %v54 = vld [vmem:[%s0 + $0x138] sm:$0xff]
  %v55 = vld [vmem:[%s0 + $0x140] sm:$0x11]
  %v56 = vld [vmem:[%s0 + $0x148] sm:$0x11]
  %v57 = vld [vmem:[%s1] sm:$0xf]
  %v58 = vld [vmem:[%s1 + $0x4] sm:$0xf]
  %v59 = vld [vmem:[%s1 + $0x8] sm:$0xf]
  %v60 = vld [vmem:[%s1 + $0xc] sm:$0xf]
  %v61 = vld [vmem:[%s1 + $0x10] sm:$0xf]
  %v62 = vld [vmem:[%s1 + $0x14] sm:$0xf]
  %v63 = vld [vmem:[%s1 + $0x18] sm:$0xf]
  %v64 = vld [vmem:[%s1 + $0x1c] sm:$0xf]
  %v65 = vld [vmem:[%s1 + $0x20] sm:$0xf]
  %v66 = vld [vmem:[%s1 + $0x24] sm:$0xf]
  %v67 = vld [vmem:[%s1 + $0x28] sm:$0xf]
  %v68 = vld [vmem:[%s1 + $0x2c] sm:$0xf]
  %v69 = vld [vmem:[%s1 + $0x30] sm:$0xf]
  %v70 = vld [vmem:[%s1 + $0x34] sm:$0xf]
  %v71 = vld [vmem:[%s1 + $0x38] sm:$0xf]
  %v72 = vld [vmem:[%s1 + $0x3c] sm:$0xf]
  %v73 = vld [vmem:[%s1 + $0x40] sm:$0xf]
  %v74 = vld [vmem:[%s1 + $0x44] sm:$0xf]
  %v75 = vld [vmem:[%s1 + $0x48] sm:$0xf]
  %v76 = vld [vmem:[%s1 + $0x4c] sm:$0xf]
  %v77 = vld [vmem:[%s1 + $0x50] sm:$0xf]
  %v78 = vld [vmem:[%s1 + $0x54] sm:$0xf]
  %v79 = vld [vmem:[%s1 + $0x58] sm:$0xf]
  %v80 = vld [vmem:[%s1 + $0x5c] sm:$0xf]
  %v81 = vld [vmem:[%s1 + $0x60] sm:$0xf]
  %v82 = vld [vmem:[%s1 + $0x64] sm:$0xf]
  %v83 = vld [vmem:[%s1 + $0x68] sm:$0xf]
  %v84 = vld [vmem:[%s1 + $0x6c] sm:$0xf]
  %v85 = vld [vmem:[%s1 + $0x70] sm:$0xf]
  %v86 = vld [vmem:[%s1 + $0x74] sm:$0xf]
  %v87 = vld [vmem:[%s1 + $0x78] sm:$0xf]
  %v88 = vld [vmem:[%s1 + $0x7c] sm:$0xf]
  %v89 = vld [vmem:[%s1 + $0x80] sm:$0xf]
  %v90 = vld [vmem:[%s1 + $0x84] sm:$0xf]
  %v91 = vld [vmem:[%s1 + $0x88] sm:$0xf]
  %v92 = vld [vmem:[%s1 + $0x8c] sm:$0xf]
  %v93 = vld [vmem:[%s1 + $0x90] sm:$0xf]
  %v94 = vld [vmem:[%s1 + $0x94] sm:$0xf]
  %v95 = vld [vmem:[%s1 + $0x98] sm:$0xf]
  %v96 = vld [vmem:[%s1 + $0x9c] sm:$0xf]
  %v97 = vld [vmem:[%s1 + $0xa0] sm:$0xf]
  %v98 = vld [vmem:[%s1 + $0xa4] sm:$0xf]
  %v99 = vld [vmem:[%s1 + $0xa8] sm:$0xf]
  %v100 = vld [vmem:[%s1 + $0xac] sm:$0xf]
  %v101 = vld [vmem:[%s1 + $0xb0] sm:$0xf]
  %v102 = vld [vmem:[%s1 + $0xb4] sm:$0xf]
  %v103 = vld [vmem:[%s1 + $0xb8] sm:$0xf]
  %v104 = vld [vmem:[%s1 + $0xbc] sm:$0xf]
  %v105 = vld [vmem:[%s1 + $0xc0] sm:$0xf]
  %v106 = vld [vmem:[%s1 + $0xc4] sm:$0xf]
  %v107 = vld [vmem:[%s1 + $0xc8] sm:$0xf]
  %v108 = vld [vmem:[%s1 + $0xcc] sm:$0xf]
  %v109 = vld [vmem:[%s1 + $0xd0] sm:$0xf]
  %v110 = vld [vmem:[%s1 + $0xd4] sm:$0xf]
  %v111 = vld [vmem:[%s1 + $0xd8] sm:$0xf]
  %v112 = vld [vmem:[%s1 + $0xdc] sm:$0xf]
  %v113 = vld [vmem:[%s1 + $0xe0] sm:$0xf]
  %v114 = vld [vmem:[%s1 + $0xe4] sm:$0xf]
  %v115 = vld [vmem:[%s1 + $0xe8] sm:$0xf]
  %v116 = vld [vmem:[%s1 + $0xec] sm:$0xf]
  %v117 = vld [vmem:[%s1 + $0xf0] sm:$0xf]
  %v118 = vld [vmem:[%s1 + $0xf4] sm:$0xf]
  %v119 = vld [vmem:[%s1 + $0xf8] sm:$0xf]
  %v120 = vld [vmem:[%s1 + $0xfc] sm:$0xf]
  %v121 = vld [vmem:[%s2] sm:$0x1]
  %v123 = vlaneseq
  %v124 = vshrl.u32 %v123, 7
  %v125 = vsub.s32 0, %v124
  %v126 = vrot.slane %v121, %v125
  %v170 = vunpack.c.l.b16 %v15
  %v171 = vunpack.c.h.b16 %v15
  %v172 = vunpack.c.l.b16 %v16
  %v173 = vunpack.c.h.b16 %v16
  %v174 = vunpack.c.l.b16 %v17
  %v175 = vunpack.c.h.b16 %v17
  %v176 = vunpack.c.l.b16 %v18
  %v177 = vunpack.c.h.b16 %v18
  %v178 = vunpack.c.l.b16 %v19
  %v179 = vunpack.c.h.b16 %v19
  %v180 = vunpack.c.l.b16 %v20
  %v181 = vunpack.c.h.b16 %v20
  %v182 = vunpack.c.l.b16 %v21
  %v183 = vunpack.c.h.b16 %v21
  %v184 = vunpack.c.l.b16 %v22
  %v185 = vunpack.c.h.b16 %v22
  %v186 = vunpack.c.l.b16 %v23
  %v187 = vunpack.c.h.b16 %v23
  %v188 = vunpack.c.l.b16 %v24
  %v189 = vunpack.c.h.b16 %v24
  %v190 = vunpack.c.l.b16 %v25
  %v191 = vunpack.c.h.b16 %v25
  %v192 = vunpack.c.l.b16 %v26
  %v193 = vunpack.c.h.b16 %v26
  %v194 = vunpack.c.l.b16 %v27
  %v195 = vunpack.c.h.b16 %v27
  %v196 = vunpack.c.l.b16 %v28
  %v197 = vunpack.c.h.b16 %v28
  %v198 = vunpack.c.l.b16 %v29
  %v199 = vunpack.c.h.b16 %v29
  %v200 = vunpack.c.l.b16 %v30
  %v201 = vunpack.c.h.b16 %v30
  %v202 = vunpack.c.l.b16 %v31
  %v203 = vunpack.c.h.b16 %v31
  %v204 = vunpack.c.l.b16 %v32
  %v205 = vunpack.c.h.b16 %v32
  %v206 = vunpack.c.l.b16 %v33
  %v207 = vunpack.c.h.b16 %v33
  %v208 = vunpack.c.l.b16 %v34
  %v209 = vunpack.c.h.b16 %v34
  %v210 = vunpack.c.l.b16 %v35
  %v211 = vunpack.c.h.b16 %v35
  %v212 = vunpack.c.l.b16 %v36
  %v213 = vunpack.c.h.b16 %v36
  %v214 = vunpack.c.l.b16 %v37
  %v215 = vunpack.c.h.b16 %v37
  %v216 = vunpack.c.l.b16 %v38
  %v217 = vunpack.c.h.b16 %v38
  %v218 = vunpack.c.l.b16 %v39
  %v219 = vunpack.c.h.b16 %v39
  %v220 = vunpack.c.l.b16 %v40
  %v221 = vunpack.c.h.b16 %v40
  %v222 = vunpack.c.l.b16 %v41
  %v223 = vunpack.c.h.b16 %v41
  %v224 = vunpack.c.l.b16 %v42
  %v225 = vunpack.c.h.b16 %v42
  %v226 = vunpack.c.l.b16 %v43
  %v227 = vunpack.c.h.b16 %v43
  %v228 = vunpack.c.l.b16 %v44
  %v229 = vunpack.c.h.b16 %v44
  %v230 = vunpack.c.l.b16 %v45
  %v231 = vunpack.c.h.b16 %v45
  %v232 = vunpack.c.l.b16 %v46
  %v233 = vunpack.c.h.b16 %v46
  %v234 = vunpack.c.l.b16 %v47
  %v235 = vunpack.c.h.b16 %v47
  %v236 = vunpack.c.l.b16 %v48
  %v237 = vunpack.c.h.b16 %v48
  %v238 = vunpack.c.l.b16 %v49
  %v239 = vunpack.c.h.b16 %v49
  %v240 = vunpack.c.l.b16 %v50
  %v241 = vunpack.c.h.b16 %v50
  %v242 = vunpack.c.l.b16 %v51
  %v243 = vunpack.c.h.b16 %v51
  %v244 = vunpack.c.l.b16 %v52
  %v245 = vunpack.c.h.b16 %v52
  %v246 = vunpack.c.l.b16 %v53
  %v247 = vunpack.c.h.b16 %v53
  %v248 = vunpack.c.l.b16 %v54
  %v249 = vunpack.c.h.b16 %v54
  %v250 = vunpack.c.l.b16 %v55
  %v251 = vunpack.c.h.b16 %v55
  %v252 = vunpack.c.l.b16 %v56
  %v253 = vunpack.c.h.b16 %v56
  %v254 = vpack.c.b16 %v174, %v170
  %v255 = vpack.c.b16 %v175, %v171
  %v256 = vpack.c.b16 %v176, %v172
  %v257 = vpack.c.b16 %v177, %v173
  %v258 = vpack.c.b16 %v182, %v178
  %v259 = vpack.c.b16 %v183, %v179
  %v260 = vpack.c.b16 %v184, %v180
  %v261 = vpack.c.b16 %v185, %v181
  %v262 = vpack.c.b16 %v190, %v186
  %v263 = vpack.c.b16 %v191, %v187
  %v264 = vpack.c.b16 %v192, %v188
  %v265 = vpack.c.b16 %v193, %v189
  %v266 = vpack.c.b16 %v198, %v194
  %v267 = vpack.c.b16 %v199, %v195
  %v268 = vpack.c.b16 %v200, %v196
  %v269 = vpack.c.b16 %v201, %v197
  %v270 = vpack.c.b16 %v206, %v202
  %v271 = vpack.c.b16 %v207, %v203
  %v272 = vpack.c.b16 %v208, %v204
  %v273 = vpack.c.b16 %v209, %v205
  %v274 = vpack.c.b16 %v214, %v210
  %v275 = vpack.c.b16 %v215, %v211
  %v276 = vpack.c.b16 %v216, %v212
  %v277 = vpack.c.b16 %v217, %v213
  %v278 = vpack.c.b16 %v222, %v218
  %v279 = vpack.c.b16 %v223, %v219
  %v280 = vpack.c.b16 %v224, %v220
  %v281 = vpack.c.b16 %v225, %v221
  %v282 = vpack.c.b16 %v230, %v226
  %v283 = vpack.c.b16 %v231, %v227
  %v284 = vpack.c.b16 %v232, %v228
  %v285 = vpack.c.b16 %v233, %v229
  %v286 = vpack.c.b16 %v238, %v234
  %v287 = vpack.c.b16 %v239, %v235
  %v288 = vpack.c.b16 %v240, %v236
  %v289 = vpack.c.b16 %v241, %v237
  %v290 = vpack.c.b16 %v246, %v242
  %v291 = vpack.c.b16 %v247, %v243
  %v292 = vpack.c.b16 %v248, %v244
  %v293 = vpack.c.b16 %v249, %v245
  %v294 = vpack.c.b16 %v250, %v250
  %v295 = vpack.c.b16 %v251, %v251
  %v296 = vpack.c.b16 %v252, %v252
  %v297 = vpack.c.b16 %v253, %v253
  %v406 = vunpack.c.l.b16 %v57
  %v407 = vunpack.c.l.b16 %v58
  %v408 = vunpack.c.l.b16 %v59
  %v409 = vunpack.c.l.b16 %v60
  %v410 = vunpack.c.l.b16 %v61
  %v411 = vunpack.c.l.b16 %v62
  %v412 = vunpack.c.l.b16 %v63
  %v413 = vunpack.c.l.b16 %v64
  %v414 = vunpack.c.l.b16 %v65
  %v415 = vunpack.c.l.b16 %v66
  %v416 = vunpack.c.l.b16 %v67
  %v417 = vunpack.c.l.b16 %v68
  %v418 = vunpack.c.l.b16 %v69
  %v419 = vunpack.c.l.b16 %v70
  %v420 = vunpack.c.l.b16 %v71
  %v421 = vunpack.c.l.b16 %v72
  %v422 = vunpack.c.l.b16 %v73
  %v423 = vunpack.c.l.b16 %v74
  %v424 = vunpack.c.l.b16 %v75
  %v425 = vunpack.c.l.b16 %v76
  %v426 = vunpack.c.l.b16 %v77
  %v427 = vunpack.c.l.b16 %v78
  %v428 = vunpack.c.l.b16 %v79
  %v429 = vunpack.c.l.b16 %v80
  %v430 = vunpack.c.l.b16 %v81
  %v431 = vunpack.c.l.b16 %v82
  %v432 = vunpack.c.l.b16 %v83
  %v433 = vunpack.c.l.b16 %v84
  %v434 = vunpack.c.l.b16 %v85
  %v435 = vunpack.c.l.b16 %v86
  %v436 = vunpack.c.l.b16 %v87
  %v437 = vunpack.c.l.b16 %v88
  %v438 = vunpack.c.l.b16 %v89
  %v439 = vunpack.c.l.b16 %v90
  %v440 = vunpack.c.l.b16 %v91
  %v441 = vunpack.c.l.b16 %v92
  %v442 = vunpack.c.l.b16 %v93
  %v443 = vunpack.c.l.b16 %v94
  %v444 = vunpack.c.l.b16 %v95
  %v445 = vunpack.c.l.b16 %v96
  %v446 = vunpack.c.l.b16 %v97
  %v447 = vunpack.c.l.b16 %v98
  %v448 = vunpack.c.l.b16 %v99
  %v449 = vunpack.c.l.b16 %v100
  %v450 = vunpack.c.l.b16 %v101
  %v451 = vunpack.c.l.b16 %v102
  %v452 = vunpack.c.l.b16 %v103
  %v453 = vunpack.c.l.b16 %v104
  %v454 = vunpack.c.l.b16 %v105
  %v455 = vunpack.c.l.b16 %v106
  %v456 = vunpack.c.l.b16 %v107
  %v457 = vunpack.c.l.b16 %v108
  %v458 = vunpack.c.l.b16 %v109
  %v459 = vunpack.c.l.b16 %v110
  %v460 = vunpack.c.l.b16 %v111
  %v461 = vunpack.c.l.b16 %v112
  %v462 = vunpack.c.l.b16 %v113
  %v463 = vunpack.c.l.b16 %v114
  %v464 = vunpack.c.l.b16 %v115
  %v465 = vunpack.c.l.b16 %v116
  %v466 = vunpack.c.l.b16 %v117
  %v467 = vunpack.c.l.b16 %v118
  %v468 = vunpack.c.l.b16 %v119
  %v469 = vunpack.c.l.b16 %v120
  %v470 = vpack.c.b16 %v407, %v406
  %v471 = vpack.c.b16 %v409, %v408
  %v472 = vpack.c.b16 %v411, %v410
  %v473 = vpack.c.b16 %v413, %v412
  %v474 = vpack.c.b16 %v415, %v414
  %v475 = vpack.c.b16 %v417, %v416
  %v476 = vpack.c.b16 %v419, %v418
  %v477 = vpack.c.b16 %v421, %v420
  %v478 = vpack.c.b16 %v423, %v422
  %v479 = vpack.c.b16 %v425, %v424
  %v480 = vpack.c.b16 %v427, %v426
  %v481 = vpack.c.b16 %v429, %v428
  %v482 = vpack.c.b16 %v431, %v430
  %v483 = vpack.c.b16 %v433, %v432
  %v484 = vpack.c.b16 %v435, %v434
  %v485 = vpack.c.b16 %v437, %v436
  %v486 = vpack.c.b16 %v439, %v438
  %v487 = vpack.c.b16 %v441, %v440
  %v488 = vpack.c.b16 %v443, %v442
  %v489 = vpack.c.b16 %v445, %v444
  %v490 = vpack.c.b16 %v447, %v446
  %v491 = vpack.c.b16 %v449, %v448
  %v492 = vpack.c.b16 %v451, %v450
  %v493 = vpack.c.b16 %v453, %v452
  %v494 = vpack.c.b16 %v455, %v454
  %v495 = vpack.c.b16 %v457, %v456
  %v496 = vpack.c.b16 %v459, %v458
  %v497 = vpack.c.b16 %v461, %v460
  %v498 = vpack.c.b16 %v463, %v462
  %v499 = vpack.c.b16 %v465, %v464
  %v500 = vpack.c.b16 %v467, %v466
  %v501 = vpack.c.b16 %v469, %v468
  %534 = vmatprep.subr.bf16.mxu0 0
  %535 = vmatpush1.bf16.msra.mxu0 %v477
  %536 = vmatprep.subr.bf16.mxu0 0
  %537 = vmatpush1.bf16.msra.mxu0 %v476
  %538 = vmatprep.subr.bf16.mxu0 0
  %539 = vmatpush1.bf16.msra.mxu0 %v475
  %540 = vmatprep.subr.bf16.mxu0 0
  %541 = vmatpush1.bf16.msra.mxu0 %v474
  %542 = vmatprep.subr.bf16.mxu0 0
  %543 = vmatpush1.bf16.msra.mxu0 %v473
  %544 = vmatprep.subr.bf16.mxu0 0
  %545 = vmatpush1.bf16.msra.mxu0 %v472
  %546 = vmatprep.subr.bf16.mxu0 0
  %547 = vmatpush1.bf16.msra.mxu0 %v471
  %548 = vmatprep.subr.bf16.mxu0 0
  %549 = vmatpush1.bf16.msra.mxu0 %v470
  %550 = vmatprep.subr.bf16.mxu0 0
  %551 = vmatpush2.bf16.msra.mxu0 %v485
  %552 = vmatprep.subr.bf16.mxu0 0
  %553 = vmatpush2.bf16.msra.mxu0 %v484
  %554 = vmatprep.subr.bf16.mxu0 0
  %555 = vmatpush2.bf16.msra.mxu0 %v483
  %556 = vmatprep.subr.bf16.mxu0 0
  %557 = vmatpush2.bf16.msra.mxu0 %v482
  %558 = vmatprep.subr.bf16.mxu0 0
  %559 = vmatpush2.bf16.msra.mxu0 %v481
  %560 = vmatprep.subr.bf16.mxu0 0
  %561 = vmatpush2.bf16.msra.mxu0 %v480
  %562 = vmatprep.subr.bf16.mxu0 0
  %563 = vmatpush2.bf16.msra.mxu0 %v479
  %564 = vmatprep.subr.bf16.mxu0 0
  %565 = vmatpush2.bf16.msra.mxu0 %v478
  %566 = vmatprep.mubr.bf16.mxu0 %v255
  %567 = vmatmul.mubr.bf16.gmra.mxu0 %v254
  %v568 = vpop.f32.mrf.mxu0
  %v569 = vadd.f32 %v126, %v568
  %v570 = vpop.f32.mrf.mxu0
  %v571 = vpop.f32.mrf.mxu0
  %v572 = vadd.f32 %v126, %v571
  %v573 = vpop.f32.mrf.mxu0
  %574 = vmatprep.mubr.bf16.mxu0 %v259
  %575 = vmatmul.mubr.bf16.gmra.mxu0 %v258
  %v576 = vpop.f32.mrf.mxu0
  %v577 = vadd.f32 %v126, %v576
  %v578 = vpop.f32.mrf.mxu0
  %v579 = vpop.f32.mrf.mxu0
  %v580 = vadd.f32 %v126, %v579
  %v581 = vpop.f32.mrf.mxu0
  %582 = vmatprep.mubr.bf16.mxu0 %v263
  %583 = vmatmul.mubr.bf16.gmra.mxu0 %v262
  %v584 = vpop.f32.mrf.mxu0
  %v585 = vadd.f32 %v126, %v584
  %v586 = vpop.f32.mrf.mxu0
  %v587 = vpop.f32.mrf.mxu0
  %v588 = vadd.f32 %v126, %v587
  %v589 = vpop.f32.mrf.mxu0
  %590 = vmatprep.mubr.bf16.mxu0 %v267
  %591 = vmatmul.mubr.bf16.gmra.mxu0 %v266
  %v592 = vpop.f32.mrf.mxu0
  %v593 = vadd.f32 %v126, %v592
  %v594 = vpop.f32.mrf.mxu0
  %v595 = vpop.f32.mrf.mxu0
  %v596 = vadd.f32 %v126, %v595
  %v597 = vpop.f32.mrf.mxu0
  %598 = vmatprep.mubr.bf16.mxu0 %v271
  %599 = vmatmul.mubr.bf16.gmra.mxu0 %v270
  %v600 = vpop.f32.mrf.mxu0
  %v601 = vadd.f32 %v126, %v600
  %v602 = vpop.f32.mrf.mxu0
  %v603 = vpop.f32.mrf.mxu0
  %v604 = vadd.f32 %v126, %v603
  %v605 = vpop.f32.mrf.mxu0
  %606 = vmatprep.mubr.bf16.mxu0 %v275
  %607 = vmatmul.mubr.bf16.gmra.mxu0 %v274
  %v608 = vpop.f32.mrf.mxu0
  %v609 = vadd.f32 %v126, %v608
  %v610 = vpop.f32.mrf.mxu0
  %v611 = vpop.f32.mrf.mxu0
  %v612 = vadd.f32 %v126, %v611
  %v613 = vpop.f32.mrf.mxu0
  %614 = vmatprep.mubr.bf16.mxu0 %v279
  %615 = vmatmul.mubr.bf16.gmra.mxu0 %v278
  %v616 = vpop.f32.mrf.mxu0
  %v617 = vadd.f32 %v126, %v616
  %v618 = vpop.f32.mrf.mxu0
  %v619 = vpop.f32.mrf.mxu0
  %v620 = vadd.f32 %v126, %v619
  %v621 = vpop.f32.mrf.mxu0
  %622 = vmatprep.mubr.bf16.mxu0 %v283
  %623 = vmatmul.mubr.bf16.gmra.mxu0 %v282
  %v624 = vpop.f32.mrf.mxu0
  %v625 = vadd.f32 %v126, %v624
  %v626 = vpop.f32.mrf.mxu0
  %v627 = vpop.f32.mrf.mxu0
  %v628 = vadd.f32 %v126, %v627
  %v629 = vpop.f32.mrf.mxu0
  %630 = vmatprep.mubr.bf16.mxu0 %v287
  %631 = vmatmul.mubr.bf16.gmra.mxu0 %v286
  %v632 = vpop.f32.mrf.mxu0
  %v633 = vadd.f32 %v126, %v632
  %v634 = vpop.f32.mrf.mxu0
  %v635 = vpop.f32.mrf.mxu0
  %v636 = vadd.f32 %v126, %v635
  %v637 = vpop.f32.mrf.mxu0
  %638 = vmatprep.mubr.bf16.mxu0 %v291
  %639 = vmatmul.mubr.bf16.gmra.mxu0 %v290
  %v640 = vpop.f32.mrf.mxu0
  %v641 = vadd.f32 %v126, %v640
  %v642 = vpop.f32.mrf.mxu0
  %v643 = vpop.f32.mrf.mxu0
  %v644 = vadd.f32 %v126, %v643
  %v645 = vpop.f32.mrf.mxu0
  %646 = vmatprep.mubr.bf16.mxu0 %v295
  %647 = vmatmul.mubr.bf16.gmra.mxu0 %v294
  %v648 = vpop.f32.mrf.mxu0
  %v649 = vadd.f32 %v126, %v648
  %v650 = vpop.f32.mrf.mxu0
  %v651 = vpop.f32.mrf.mxu0
  %v652 = vpop.f32.mrf.mxu0
  %653 = vdwg.mxu0
  %654 = vmatprep.subr.bf16.mxu0 0
  %655 = vmatpush1.bf16.msra.mxu0 %v493
  %656 = vmatprep.subr.bf16.mxu0 0
  %657 = vmatpush1.bf16.msra.mxu0 %v492
  %658 = vmatprep.subr.bf16.mxu0 0
  %659 = vmatpush1.bf16.msra.mxu0 %v491
  %660 = vmatprep.subr.bf16.mxu0 0
  %661 = vmatpush1.bf16.msra.mxu0 %v490
  %662 = vmatprep.subr.bf16.mxu0 0
  %663 = vmatpush1.bf16.msra.mxu0 %v489
  %664 = vmatprep.subr.bf16.mxu0 0
  %665 = vmatpush1.bf16.msra.mxu0 %v488
  %666 = vmatprep.subr.bf16.mxu0 0
  %667 = vmatpush1.bf16.msra.mxu0 %v487
  %668 = vmatprep.subr.bf16.mxu0 0
  %669 = vmatpush1.bf16.msra.mxu0 %v486
  %670 = vmatprep.subr.bf16.mxu0 0
  %671 = vmatpush2.bf16.msra.mxu0 %v501
  %672 = vmatprep.subr.bf16.mxu0 0
  %673 = vmatpush2.bf16.msra.mxu0 %v500
  %674 = vmatprep.subr.bf16.mxu0 0
  %675 = vmatpush2.bf16.msra.mxu0 %v499
  %676 = vmatprep.subr.bf16.mxu0 0
  %677 = vmatpush2.bf16.msra.mxu0 %v498
  %678 = vmatprep.subr.bf16.mxu0 0
  %679 = vmatpush2.bf16.msra.mxu0 %v497
  %680 = vmatprep.subr.bf16.mxu0 0
  %681 = vmatpush2.bf16.msra.mxu0 %v496
  %682 = vmatprep.subr.bf16.mxu0 0
  %683 = vmatpush2.bf16.msra.mxu0 %v495
  %684 = vmatprep.subr.bf16.mxu0 0
  %685 = vmatpush2.bf16.msra.mxu0 %v494
  %686 = vmatprep.mubr.bf16.mxu0 %v257
  %687 = vmatmul.mubr.bf16.gmra.mxu0 %v256
  %v688 = vpop.f32.mrf.mxu0
  %v689 = vadd.f32 %v569, %v688
  %v690 = vpop.f32.mrf.mxu0
  %v691 = vpop.f32.mrf.mxu0
  %v692 = vadd.f32 %v572, %v691
  %v693 = vpop.f32.mrf.mxu0
  %694 = vmatprep.mubr.bf16.mxu0 %v261
  %695 = vmatmul.mubr.bf16.gmra.mxu0 %v260
  %v696 = vpop.f32.mrf.mxu0
  %v697 = vadd.f32 %v577, %v696
  %v698 = vpop.f32.mrf.mxu0
  %v699 = vpop.f32.mrf.mxu0
  %v700 = vadd.f32 %v580, %v699
  %v701 = vpop.f32.mrf.mxu0
  %702 = vmatprep.mubr.bf16.mxu0 %v265
  %703 = vmatmul.mubr.bf16.gmra.mxu0 %v264
  %v704 = vpop.f32.mrf.mxu0
  %v705 = vadd.f32 %v585, %v704
  %v706 = vpop.f32.mrf.mxu0
  %v707 = vpop.f32.mrf.mxu0
  %v708 = vadd.f32 %v588, %v707
  %v709 = vpop.f32.mrf.mxu0
  %710 = vmatprep.mubr.bf16.mxu0 %v269
  %711 = vmatmul.mubr.bf16.gmra.mxu0 %v268
  %v712 = vpop.f32.mrf.mxu0
  %v713 = vadd.f32 %v593, %v712
  %v714 = vpop.f32.mrf.mxu0
  %v715 = vpop.f32.mrf.mxu0
  %v716 = vadd.f32 %v596, %v715
  %v717 = vpop.f32.mrf.mxu0
  %718 = vmatprep.mubr.bf16.mxu0 %v273
  %719 = vmatmul.mubr.bf16.gmra.mxu0 %v272
  %v720 = vpop.f32.mrf.mxu0
  %v721 = vadd.f32 %v601, %v720
  %v722 = vpop.f32.mrf.mxu0
  %v723 = vpop.f32.mrf.mxu0
  %v724 = vadd.f32 %v604, %v723
  %v725 = vpop.f32.mrf.mxu0
  %726 = vmatprep.mubr.bf16.mxu0 %v277
  %727 = vmatmul.mubr.bf16.gmra.mxu0 %v276
  %v728 = vpop.f32.mrf.mxu0
  %v729 = vadd.f32 %v609, %v728
  %v730 = vpop.f32.mrf.mxu0
  %v731 = vpop.f32.mrf.mxu0
  %v732 = vadd.f32 %v612, %v731
  %v733 = vpop.f32.mrf.mxu0
  %734 = vmatprep.mubr.bf16.mxu0 %v281
  %735 = vmatmul.mubr.bf16.gmra.mxu0 %v280
  %v736 = vpop.f32.mrf.mxu0
  %v737 = vadd.f32 %v617, %v736
  %v738 = vpop.f32.mrf.mxu0
  %v739 = vpop.f32.mrf.mxu0
  %v740 = vadd.f32 %v620, %v739
  %v741 = vpop.f32.mrf.mxu0
  %742 = vmatprep.mubr.bf16.mxu0 %v285
  %743 = vmatmul.mubr.bf16.gmra.mxu0 %v284
  %v744 = vpop.f32.mrf.mxu0
  %v745 = vadd.f32 %v625, %v744
  %v746 = vpop.f32.mrf.mxu0
  %v747 = vpop.f32.mrf.mxu0
  %v748 = vadd.f32 %v628, %v747
  %v749 = vpop.f32.mrf.mxu0
  %750 = vmatprep.mubr.bf16.mxu0 %v289
  %751 = vmatmul.mubr.bf16.gmra.mxu0 %v288
  %v752 = vpop.f32.mrf.mxu0
  %v753 = vadd.f32 %v633, %v752
  %v754 = vpop.f32.mrf.mxu0
  %v755 = vpop.f32.mrf.mxu0
  %v756 = vadd.f32 %v636, %v755
  %v757 = vpop.f32.mrf.mxu0
  %758 = vmatprep.mubr.bf16.mxu0 %v293
  %759 = vmatmul.mubr.bf16.gmra.mxu0 %v292
  %v760 = vpop.f32.mrf.mxu0
  %v761 = vadd.f32 %v641, %v760
  %v762 = vpop.f32.mrf.mxu0
  %v763 = vpop.f32.mrf.mxu0
  %v764 = vadd.f32 %v644, %v763
  %v765 = vpop.f32.mrf.mxu0
  %766 = vmatprep.mubr.bf16.mxu0 %v297
  %767 = vmatmul.mubr.bf16.gmra.mxu0 %v296
  %v768 = vpop.f32.mrf.mxu0
  %v769 = vadd.f32 %v649, %v768
  %v770 = vpop.f32.mrf.mxu0
  %v771 = vpop.f32.mrf.mxu0
  %v772 = vpop.f32.mrf.mxu0
  %773 = vdwg.mxu0
  %v774 = vmax.f32 %v689, 0.0
  %v775 = vmax.f32 %v692, 0.0
  %v776 = vmax.f32 %v697, 0.0
  %v777 = vmax.f32 %v700, 0.0
  %v778 = vmax.f32 %v705, 0.0
  %v779 = vmax.f32 %v708, 0.0
  %v780 = vmax.f32 %v713, 0.0
  %v781 = vmax.f32 %v716, 0.0
  %v782 = vmax.f32 %v721, 0.0
  %v783 = vmax.f32 %v724, 0.0
  %v784 = vmax.f32 %v729, 0.0
  %v785 = vmax.f32 %v732, 0.0
  %v786 = vmax.f32 %v737, 0.0
  %v787 = vmax.f32 %v740, 0.0
  %v788 = vmax.f32 %v745, 0.0
  %v789 = vmax.f32 %v748, 0.0
  %v790 = vmax.f32 %v753, 0.0
  %v791 = vmax.f32 %v756, 0.0
  %v792 = vmax.f32 %v761, 0.0
  %v793 = vmax.f32 %v764, 0.0
  %v794 = vmax.f32 %v769, 0.0
  %v795 = vpack.c.bf16 %v775, %v774
  %v796 = vpack.c.bf16 %v777, %v776
  %v797 = vpack.c.bf16 %v779, %v778
  %v798 = vpack.c.bf16 %v781, %v780
  %v799 = vpack.c.bf16 %v783, %v782
  %v800 = vpack.c.bf16 %v785, %v784
  %v801 = vpack.c.bf16 %v787, %v786
  %v802 = vpack.c.bf16 %v789, %v788
  %v803 = vpack.c.bf16 %v791, %v790
  %v804 = vpack.c.bf16 %v793, %v792
  %v805 = vpack.c.bf16 %v794, %v794
  %v817 = vunpack.c.l.b16 %v795
  %v818 = vunpack.c.h.b16 %v795
  %v819 = vunpack.c.l.b16 %v796
  %v820 = vunpack.c.h.b16 %v796
  %v821 = vunpack.c.l.b16 %v797
  %v822 = vunpack.c.h.b16 %v797
  %v823 = vunpack.c.l.b16 %v798
  %v824 = vunpack.c.h.b16 %v798
  %v825 = vunpack.c.l.b16 %v799
  %v826 = vunpack.c.h.b16 %v799
  %v827 = vunpack.c.l.b16 %v800
  %v828 = vunpack.c.h.b16 %v800
  %v829 = vunpack.c.l.b16 %v801
  %v830 = vunpack.c.h.b16 %v801
  %v831 = vunpack.c.l.b16 %v802
  %v832 = vunpack.c.h.b16 %v802
  %v833 = vunpack.c.l.b16 %v803
  %v834 = vunpack.c.h.b16 %v803
  %v835 = vunpack.c.l.b16 %v804
  %v836 = vunpack.c.h.b16 %v804
  %v837 = vunpack.c.l.b16 %v805
  %v838 = vpack.c.b16 %v817, %v817
  %v839 = vpack.c.b16 %v818, %v818
  %v840 = vpack.c.b16 %v819, %v819
  %v841 = vpack.c.b16 %v820, %v820
  %v842 = vpack.c.b16 %v821, %v821
  %v843 = vpack.c.b16 %v822, %v822
  %v844 = vpack.c.b16 %v823, %v823
  %v845 = vpack.c.b16 %v824, %v824
  %v846 = vpack.c.b16 %v825, %v825
  %v847 = vpack.c.b16 %v826, %v826
  %v848 = vpack.c.b16 %v827, %v827
  %v849 = vpack.c.b16 %v828, %v828
  %v850 = vpack.c.b16 %v829, %v829
  %v851 = vpack.c.b16 %v830, %v830
  %v852 = vpack.c.b16 %v831, %v831
  %v853 = vpack.c.b16 %v832, %v832
  %v854 = vpack.c.b16 %v833, %v833
  %v855 = vpack.c.b16 %v834, %v834
  %v856 = vpack.c.b16 %v835, %v835
  %v857 = vpack.c.b16 %v836, %v836
  %v858 = vpack.c.b16 %v837, %v837
  %880 = vst [vmem:[%s3] sm:$0xf] %v838
  %881 = vst [vmem:[%s3 + $0x4] sm:$0xf] %v839
  %882 = vst [vmem:[%s3 + $0x8] sm:$0xf] %v840
  %883 = vst [vmem:[%s3 + $0xc] sm:$0xf] %v841
  %884 = vst [vmem:[%s3 + $0x10] sm:$0xf] %v842
  %885 = vst [vmem:[%s3 + $0x14] sm:$0xf] %v843
  %886 = vst [vmem:[%s3 + $0x18] sm:$0xf] %v844
  %887 = vst [vmem:[%s3 + $0x1c] sm:$0xf] %v845
  %888 = vst [vmem:[%s3 + $0x20] sm:$0xf] %v846
  %889 = vst [vmem:[%s3 + $0x24] sm:$0xf] %v847
  %890 = vst [vmem:[%s3 + $0x28] sm:$0xf] %v848
  %891 = vst [vmem:[%s3 + $0x2c] sm:$0xf] %v849
  %892 = vst [vmem:[%s3 + $0x30] sm:$0xf] %v850
  %893 = vst [vmem:[%s3 + $0x34] sm:$0xf] %v851
  %894 = vst [vmem:[%s3 + $0x38] sm:$0xf] %v852
  %895 = vst [vmem:[%s3 + $0x3c] sm:$0xf] %v853
  %896 = vst [vmem:[%s3 + $0x40] sm:$0xf] %v854
  %897 = vst [vmem:[%s3 + $0x44] sm:$0xf] %v855
  %898 = vst [vmem:[%s3 + $0x48] sm:$0xf] %v856
  %899 = vst [vmem:[%s3 + $0x4c] sm:$0xf] %v857
  %900 = vst [vmem:[%s3 + $0x50] sm:$0x1] %v858
  // Predicated region
  $region14: #{qnet_forward.5} parent=0 // pred_check
    _
  $region15: #{qnet_forward.5} parent=0 // pred_check_branch
    %902 = sbr.rel (0) target = $region17
  $region16: #{qnet_forward.5} parent=0 // pred_region
    _
  $region17: #{qnet_forward.5} parent=0 // pred_fallthru
    _
  // Predicated region
  $region18: #{qnet_forward.5} parent=0 // pred_check
    _
  $region19: #{qnet_forward.5} parent=0 // pred_check_branch
    %904 = sbr.rel (0) target = $region21
  $region20: #{qnet_forward.5} parent=0 // pred_region
    _
  $region21: #{qnet_forward.5} parent=0 // pred_fallthru
    _

// kernel: qnet_forward.6
$region0: #{qnet_forward.6}
  #allocation0 [shape = 'u32[]', space=smem, size = 0x4, offset = 0x4, fixed_abs, tag = 'smem constant byte address 0x4 - core index']
  #allocation1 [shape = 'u32[144,128]{1,0:T(1,128)}', space=vmem, size = 0x12000, scoped, tag = 'internal scratch']
  %s0 = inlined_call_operand.vmem [shape: bf16[98,640], index: 0, kind: input, shape index: {}]
  %s1 = inlined_call_operand.vmem [shape: bf16[640,128], index: 1, kind: input, shape index: {}]
  %s2 = inlined_call_operand.vmem [shape: f32[1,128], index: 2, kind: input, shape index: {}]
  %s3 = inlined_call_operand.vmem [shape: bf16[98,128], index: 3, kind: output, shape index: {}]
  %s4 = sld [smem:[#allocation0]]
  $region22: #{qnet_forward.6} parent=0
    _
  %s6 = ssub.s32 1, %s4
  %s7 = scalar_select 0, %s6, %s4
  // Predicated region
  $region2: #{qnet_forward.6} parent=0 // pred_check
    _
  $region3: #{qnet_forward.6} parent=0 // pred_check_branch
    %9 = sbr.rel (0) target = $region5
  $region4: #{qnet_forward.6} parent=0 // pred_region
    _
  $region5: #{qnet_forward.6} parent=0 // pred_fallthru
    _
  // Predicated region
  $region6: #{qnet_forward.6} parent=0 // pred_check
    _
  $region7: #{qnet_forward.6} parent=0 // pred_check_branch
    %11 = sbr.rel (0) target = $region9
  $region8: #{qnet_forward.6} parent=0 // pred_region
    _
  $region9: #{qnet_forward.6} parent=0 // pred_fallthru
    _
  // Predicated region
  $region10: #{qnet_forward.6} parent=0 // pred_check
    _
  $region11: #{qnet_forward.6} parent=0 // pred_check_branch
    %13 = sbr.rel (0) target = $region13
  $region12: #{qnet_forward.6} parent=0 // pred_region
    _
  $region13: #{qnet_forward.6} parent=0 // pred_fallthru
    _
  %v15 = vld [vmem:[%s0] sm:$0xff]
  %v16 = vld [vmem:[%s0 + $0x8] sm:$0xff]
  %v17 = vld [vmem:[%s0 + $0x10] sm:$0xf]
  %v18 = vld [vmem:[%s0 + $0x14] sm:$0xff]
  %v19 = vld [vmem:[%s0 + $0x1c] sm:$0xff]
  %v20 = vld [vmem:[%s0 + $0x24] sm:$0xf]
  %v21 = vld [vmem:[%s0 + $0x28] sm:$0xff]
  %v22 = vld [vmem:[%s0 + $0x30] sm:$0xff]
  %v23 = vld [vmem:[%s0 + $0x38] sm:$0xf]
  %v24 = vld [vmem:[%s0 + $0x3c] sm:$0xff]
  %v25 = vld [vmem:[%s0 + $0x44] sm:$0xff]
  %v26 = vld [vmem:[%s0 + $0x4c] sm:$0xf]
  %v27 = vld [vmem:[%s0 + $0x50] sm:$0xff]
  %v28 = vld [vmem:[%s0 + $0x58] sm:$0xff]
  %v29 = vld [vmem:[%s0 + $0x60] sm:$0xf]
  %v30 = vld [vmem:[%s0 + $0x64] sm:$0xff]
  %v31 = vld [vmem:[%s0 + $0x6c] sm:$0xff]
  %v32 = vld [vmem:[%s0 + $0x74] sm:$0xf]
  %v33 = vld [vmem:[%s0 + $0x78] sm:$0xff]
  %v34 = vld [vmem:[%s0 + $0x80] sm:$0xff]
  %v35 = vld [vmem:[%s0 + $0x88] sm:$0xf]
  %v36 = vld [vmem:[%s0 + $0x8c] sm:$0xff]
  %v37 = vld [vmem:[%s0 + $0x94] sm:$0xff]
  %v38 = vld [vmem:[%s0 + $0x9c] sm:$0xf]
  %v39 = vld [vmem:[%s0 + $0xa0] sm:$0xff]
  %v40 = vld [vmem:[%s0 + $0xa8] sm:$0xff]
  %v41 = vld [vmem:[%s0 + $0xb0] sm:$0xf]
  %v42 = vld [vmem:[%s0 + $0xb4] sm:$0xff]
  %v43 = vld [vmem:[%s0 + $0xbc] sm:$0xff]
  %v44 = vld [vmem:[%s0 + $0xc4] sm:$0xf]
  %v45 = vld [vmem:[%s0 + $0xc8] sm:$0xff]
  %v46 = vld [vmem:[%s0 + $0xd0] sm:$0xff]
  %v47 = vld [vmem:[%s0 + $0xd8] sm:$0xf]
  %v48 = vld [vmem:[%s0 + $0xdc] sm:$0xff]
  %v49 = vld [vmem:[%s0 + $0xe4] sm:$0xff]
  %v50 = vld [vmem:[%s0 + $0xec] sm:$0xf]
  %v51 = vld [vmem:[%s0 + $0xf0] sm:$0x11]
  %v52 = vld [vmem:[%s0 + $0xf8] sm:$0x11]
  %v53 = vld [vmem:[%s0 + $0x100] sm:$0x1]
  %v54 = vld [vmem:[%s1] sm:$0xf]
  %v55 = vld [vmem:[%s1 + $0x4] sm:$0xf]
  %v56 = vld [vmem:[%s1 + $0x8] sm:$0xf]
  %v57 = vld [vmem:[%s1 + $0xc] sm:$0xf]
  %v58 = vld [vmem:[%s1 + $0x10] sm:$0xf]
  %v59 = vld [vmem:[%s1 + $0x14] sm:$0xf]
  %v60 = vld [vmem:[%s1 + $0x18] sm:$0xf]
  %v61 = vld [vmem:[%s1 + $0x1c] sm:$0xf]
  %v62 = vld [vmem:[%s1 + $0x20] sm:$0xf]
  %v63 = vld [vmem:[%s1 + $0x24] sm:$0xf]
  %v64 = vld [vmem:[%s1 + $0x28] sm:$0xf]
  %v65 = vld [vmem:[%s1 + $0x2c] sm:$0xf]
  %v66 = vld [vmem:[%s1 + $0x30] sm:$0xf]
  %v67 = vld [vmem:[%s1 + $0x34] sm:$0xf]
  %v68 = vld [vmem:[%s1 + $0x38] sm:$0xf]
  %v69 = vld [vmem:[%s1 + $0x3c] sm:$0xf]
  %v70 = vld [vmem:[%s1 + $0x40] sm:$0xf]
  %v71 = vld [vmem:[%s1 + $0x44] sm:$0xf]
  %v72 = vld [vmem:[%s1 + $0x48] sm:$0xf]
  %v73 = vld [vmem:[%s1 + $0x4c] sm:$0xf]
  %v74 = vld [vmem:[%s1 + $0x50] sm:$0xf]
  %v75 = vld [vmem:[%s1 + $0x54] sm:$0xf]
  %v76 = vld [vmem:[%s1 + $0x58] sm:$0xf]
  %v77 = vld [vmem:[%s1 + $0x5c] sm:$0xf]
  %v78 = vld [vmem:[%s1 + $0x60] sm:$0xf]
  %v79 = vld [vmem:[%s1 + $0x64] sm:$0xf]
  %v80 = vld [vmem:[%s1 + $0x68] sm:$0xf]
  %v81 = vld [vmem:[%s1 + $0x6c] sm:$0xf]
  %v82 = vld [vmem:[%s1 + $0x70] sm:$0xf]
  %v83 = vld [vmem:[%s1 + $0x74] sm:$0xf]
  %v84 = vld [vmem:[%s1 + $0x78] sm:$0xf]
  %v85 = vld [vmem:[%s1 + $0x7c] sm:$0xf]
  %v86 = vld [vmem:[%s1 + $0x80] sm:$0xf]
  %v87 = vld [vmem:[%s1 + $0x84] sm:$0xf]
  %v88 = vld [vmem:[%s1 + $0x88] sm:$0xf]
  %v89 = vld [vmem:[%s1 + $0x8c] sm:$0xf]
  %v90 = vld [vmem:[%s1 + $0x90] sm:$0xf]
  %v91 = vld [vmem:[%s1 + $0x94] sm:$0xf]
  %v92 = vld [vmem:[%s1 + $0x98] sm:$0xf]
  %v93 = vld [vmem:[%s1 + $0x9c] sm:$0xf]
  %v94 = vld [vmem:[%s1 + $0xa0] sm:$0xf]
  %v95 = vld [vmem:[%s1 + $0xa4] sm:$0xf]
  %v96 = vld [vmem:[%s1 + $0xa8] sm:$0xf]
  %v97 = vld [vmem:[%s1 + $0xac] sm:$0xf]
  %v98 = vld [vmem:[%s1 + $0xb0] sm:$0xf]
  %v99 = vld [vmem:[%s1 + $0xb4] sm:$0xf]
  %v100 = vld [vmem:[%s1 + $0xb8] sm:$0xf]
  %v101 = vld [vmem:[%s1 + $0xbc] sm:$0xf]
  %v102 = vld [vmem:[%s1 + $0xc0] sm:$0xf]
  %v103 = vld [vmem:[%s1 + $0xc4] sm:$0xf]
  %v104 = vld [vmem:[%s1 + $0xc8] sm:$0xf]
  %v105 = vld [vmem:[%s1 + $0xcc] sm:$0xf]
  %v106 = vld [vmem:[%s1 + $0xd0] sm:$0xf]
  %v107 = vld [vmem:[%s1 + $0xd4] sm:$0xf]
  %v108 = vld [vmem:[%s1 + $0xd8] sm:$0xf]
  %v109 = vld [vmem:[%s1 + $0xdc] sm:$0xf]
  %v110 = vld [vmem:[%s1 + $0xe0] sm:$0xf]
  %v111 = vld [vmem:[%s1 + $0xe4] sm:$0xf]
  %v112 = vld [vmem:[%s1 + $0xe8] sm:$0xf]
  %v113 = vld [vmem:[%s1 + $0xec] sm:$0xf]
  %v114 = vld [vmem:[%s1 + $0xf0] sm:$0xf]
  %v115 = vld [vmem:[%s1 + $0xf4] sm:$0xf]
  %v116 = vld [vmem:[%s1 + $0xf8] sm:$0xf]
  %v117 = vld [vmem:[%s1 + $0xfc] sm:$0xf]
  %v118 = vld [vmem:[%s1 + $0x100] sm:$0xf]
  %v119 = vld [vmem:[%s1 + $0x104] sm:$0xf]
  %v120 = vld [vmem:[%s1 + $0x108] sm:$0xf]
  %v121 = vld [vmem:[%s1 + $0x10c] sm:$0xf]
  %v122 = vld [vmem:[%s1 + $0x110] sm:$0xf]
  %v123 = vld [vmem:[%s1 + $0x114] sm:$0xf]
  %v124 = vld [vmem:[%s1 + $0x118] sm:$0xf]
  %v125 = vld [vmem:[%s1 + $0x11c] sm:$0xf]
  %v126 = vld [vmem:[%s1 + $0x120] sm:$0xf]
  %v127 = vld [vmem:[%s1 + $0x124] sm:$0xf]
  %v128 = vld [vmem:[%s1 + $0x128] sm:$0xf]
  %v129 = vld [vmem:[%s1 + $0x12c] sm:$0xf]
  %v130 = vld [vmem:[%s1 + $0x130] sm:$0xf]
  %v131 = vld [vmem:[%s1 + $0x134] sm:$0xf]
  %v132 = vld [vmem:[%s1 + $0x138] sm:$0xf]
  %v133 = vld [vmem:[%s1 + $0x13c] sm:$0xf]
  %v134 = vld [vmem:[%s2] sm:$0x1]
  %v136 = vlaneseq
  %v137 = vshrl.u32 %v136, 7
  %v138 = vsub.s32 0, %v137
  %v139 = vrot.slane %v134, %v138
  %v180 = vunpack.c.l.b16 %v15
  %v181 = vunpack.c.h.b16 %v15
  %v182 = vunpack.c.l.b16 %v16
  %v183 = vunpack.c.h.b16 %v16
  %v184 = vunpack.c.l.b16 %v17
  %v185 = vunpack.c.l.b16 %v18
  %v186 = vunpack.c.h.b16 %v18
  %v187 = vunpack.c.l.b16 %v19
  %v188 = vunpack.c.h.b16 %v19
  %v189 = vunpack.c.l.b16 %v20
  %v190 = vunpack.c.l.b16 %v21
  %v191 = vunpack.c.h.b16 %v21
  %v192 = vunpack.c.l.b16 %v22
  %v193 = vunpack.c.h.b16 %v22
  %v194 = vunpack.c.l.b16 %v23
  %v195 = vunpack.c.l.b16 %v24
  %v196 = vunpack.c.h.b16 %v24
  %v197 = vunpack.c.l.b16 %v25
  %v198 = vunpack.c.h.b16 %v25
  %v199 = vunpack.c.l.b16 %v26
  %v200 = vunpack.c.l.b16 %v27
  %v201 = vunpack.c.h.b16 %v27
  %v202 = vunpack.c.l.b16 %v28
  %v203 = vunpack.c.h.b16 %v28
  %v204 = vunpack.c.l.b16 %v29
  %v205 = vunpack.c.l.b16 %v30
  %v206 = vunpack.c.h.b16 %v30
  %v207 = vunpack.c.l.b16 %v31
  %v208 = vunpack.c.h.b16 %v31
  %v209 = vunpack.c.l.b16 %v32
  %v210 = vunpack.c.l.b16 %v33
  %v211 = vunpack.c.h.b16 %v33
  %v212 = vunpack.c.l.b16 %v34
  %v213 = vunpack.c.h.b16 %v34
  %v214 = vunpack.c.l.b16 %v35
  %v215 = vunpack.c.l.b16 %v36
  %v216 = vunpack.c.h.b16 %v36
  %v217 = vunpack.c.l.b16 %v37
  %v218 = vunpack.c.h.b16 %v37
  %v219 = vunpack.c.l.b16 %v38
  %v220 = vunpack.c.l.b16 %v39
  %v221 = vunpack.c.h.b16 %v39
  %v222 = vunpack.c.l.b16 %v40
  %v223 = vunpack.c.h.b16 %v40
  %v224 = vunpack.c.l.b16 %v41
  %v225 = vunpack.c.l.b16 %v42
  %v226 = vunpack.c.h.b16 %v42
  %v227 = vunpack.c.l.b16 %v43
  %v228 = vunpack.c.h.b16 %v43
  %v229 = vunpack.c.l.b16 %v44
  %v230 = vunpack.c.l.b16 %v45
  %v231 = vunpack.c.h.b16 %v45
  %v232 = vunpack.c.l.b16 %v46
  %v233 = vunpack.c.h.b16 %v46
  %v234 = vunpack.c.l.b16 %v47
  %v235 = vunpack.c.l.b16 %v48
  %v236 = vunpack.c.h.b16 %v48
  %v237 = vunpack.c.l.b16 %v49
  %v238 = vunpack.c.h.b16 %v49
  %v239 = vunpack.c.l.b16 %v50
  %v240 = vunpack.c.l.b16 %v51
  %v241 = vunpack.c.h.b16 %v51
  %v242 = vunpack.c.l.b16 %v52
  %v243 = vunpack.c.h.b16 %v52
  %v244 = vunpack.c.l.b16 %v53
  %v245 = vpack.c.b16 %v185, %v180
  %v246 = vpack.c.b16 %v186, %v181
  %v247 = vpack.c.b16 %v187, %v182
  %v248 = vpack.c.b16 %v188, %v183
  %v249 = vpack.c.b16 %v189, %v184
  %v250 = vpack.c.b16 %v195, %v190
  %v251 = vpack.c.b16 %v196, %v191
  %v252 = vpack.c.b16 %v197, %v192
  %v253 = vpack.c.b16 %v198, %v193
  %v254 = vpack.c.b16 %v199, %v194
  %v255 = vpack.c.b16 %v205, %v200
  %v256 = vpack.c.b16 %v206, %v201
  %v257 = vpack.c.b16 %v207, %v202
  %v258 = vpack.c.b16 %v208, %v203
  %v259 = vpack.c.b16 %v209, %v204
  %v260 = vpack.c.b16 %v215, %v210
  %v261 = vpack.c.b16 %v216, %v211
  %v262 = vpack.c.b16 %v217, %v212
  %v263 = vpack.c.b16 %v218, %v213
  %v264 = vpack.c.b16 %v219, %v214
  %v265 = vpack.c.b16 %v225, %v220
  %v266 = vpack.c.b16 %v226, %v221
  %v267 = vpack.c.b16 %v227, %v222
  %v268 = vpack.c.b16 %v228, %v223
  %v269 = vpack.c.b16 %v229, %v224
  %v270 = vpack.c.b16 %v235, %v230
  %v271 = vpack.c.b16 %v236, %v231
  %v272 = vpack.c.b16 %v237, %v232
  %v273 = vpack.c.b16 %v238, %v233
  %v274 = vpack.c.b16 %v239, %v234
  %v275 = vpack.c.b16 %v240, %v240
  %v276 = vpack.c.b16 %v241, %v241
  %v277 = vpack.c.b16 %v242, %v242
  %v278 = vpack.c.b16 %v243, %v243
  %v279 = vpack.c.b16 %v244, %v244
  %v395 = vunpack.c.l.b16 %v54
  %v396 = vunpack.c.l.b16 %v55
  %v397 = vunpack.c.l.b16 %v56
  %v398 = vunpack.c.l.b16 %v57
  %v399 = vunpack.c.l.b16 %v58
  %v400 = vunpack.c.l.b16 %v59
  %v401 = vunpack.c.l.b16 %v60
  %v402 = vunpack.c.l.b16 %v61
  %v403 = vunpack.c.l.b16 %v62
  %v404 = vunpack.c.l.b16 %v63
  %v405 = vunpack.c.l.b16 %v64
  %v406 = vunpack.c.l.b16 %v65
  %v407 = vunpack.c.l.b16 %v66
  %v408 = vunpack.c.l.b16 %v67
  %v409 = vunpack.c.l.b16 %v68
  %v410 = vunpack.c.l.b16 %v69
  %v411 = vunpack.c.l.b16 %v70
  %v412 = vunpack.c.l.b16 %v71
  %v413 = vunpack.c.l.b16 %v72
  %v414 = vunpack.c.l.b16 %v73
  %v415 = vunpack.c.l.b16 %v74
  %v416 = vunpack.c.l.b16 %v75
  %v417 = vunpack.c.l.b16 %v76
  %v418 = vunpack.c.l.b16 %v77
  %v419 = vunpack.c.l.b16 %v78
  %v420 = vunpack.c.l.b16 %v79
  %v421 = vunpack.c.l.b16 %v80
  %v422 = vunpack.c.l.b16 %v81
  %v423 = vunpack.c.l.b16 %v82
  %v424 = vunpack.c.l.b16 %v83
  %v425 = vunpack.c.l.b16 %v84
  %v426 = vunpack.c.l.b16 %v85
  %v427 = vunpack.c.l.b16 %v86
  %v428 = vunpack.c.l.b16 %v87
  %v429 = vunpack.c.l.b16 %v88
  %v430 = vunpack.c.l.b16 %v89
  %v431 = vunpack.c.l.b16 %v90
  %v432 = vunpack.c.l.b16 %v91
  %v433 = vunpack.c.l.b16 %v92
  %v434 = vunpack.c.l.b16 %v93
  %v435 = vunpack.c.l.b16 %v94
  %v436 = vunpack.c.l.b16 %v95
  %v437 = vunpack.c.l.b16 %v96
  %v438 = vunpack.c.l.b16 %v97
  %v439 = vunpack.c.l.b16 %v98
  %v440 = vunpack.c.l.b16 %v99
  %v441 = vunpack.c.l.b16 %v100
  %v442 = vunpack.c.l.b16 %v101
  %v443 = vunpack.c.l.b16 %v102
  %v444 = vunpack.c.l.b16 %v103
  %v445 = vunpack.c.l.b16 %v104
  %v446 = vunpack.c.l.b16 %v105
  %v447 = vunpack.c.l.b16 %v106
  %v448 = vunpack.c.l.b16 %v107
  %v449 = vunpack.c.l.b16 %v108
  %v450 = vunpack.c.l.b16 %v109
  %v451 = vunpack.c.l.b16 %v110
  %v452 = vunpack.c.l.b16 %v111
  %v453 = vunpack.c.l.b16 %v112
  %v454 = vunpack.c.l.b16 %v113
  %v455 = vunpack.c.l.b16 %v114
  %v456 = vunpack.c.l.b16 %v115
  %v457 = vunpack.c.l.b16 %v116
  %v458 = vunpack.c.l.b16 %v117
  %v459 = vunpack.c.l.b16 %v118
  %v460 = vunpack.c.l.b16 %v119
  %v461 = vunpack.c.l.b16 %v120
  %v462 = vunpack.c.l.b16 %v121
  %v463 = vunpack.c.l.b16 %v122
  %v464 = vunpack.c.l.b16 %v123
  %v465 = vunpack.c.l.b16 %v124
  %v466 = vunpack.c.l.b16 %v125
  %v467 = vunpack.c.l.b16 %v126
  %v468 = vunpack.c.l.b16 %v127
  %v469 = vunpack.c.l.b16 %v128
  %v470 = vunpack.c.l.b16 %v129
  %v471 = vunpack.c.l.b16 %v130
  %v472 = vunpack.c.l.b16 %v131
  %v473 = vunpack.c.l.b16 %v132
  %v474 = vunpack.c.l.b16 %v133
  %v475 = vpack.c.b16 %v396, %v395
  %v476 = vpack.c.b16 %v398, %v397
  %v477 = vpack.c.b16 %v400, %v399
  %v478 = vpack.c.b16 %v402, %v401
  %v479 = vpack.c.b16 %v404, %v403
  %v480 = vpack.c.b16 %v406, %v405
  %v481 = vpack.c.b16 %v408, %v407
  %v482 = vpack.c.b16 %v410, %v409
  %v483 = vpack.c.b16 %v412, %v411
  %v484 = vpack.c.b16 %v414, %v413
  %v485 = vpack.c.b16 %v416, %v415
  %v486 = vpack.c.b16 %v418, %v417
  %v487 = vpack.c.b16 %v420, %v419
  %v488 = vpack.c.b16 %v422, %v421
  %v489 = vpack.c.b16 %v424, %v423
  %v490 = vpack.c.b16 %v426, %v425
  %v491 = vpack.c.b16 %v428, %v427
  %v492 = vpack.c.b16 %v430, %v429
  %v493 = vpack.c.b16 %v432, %v431
  %v494 = vpack.c.b16 %v434, %v433
  %v495 = vpack.c.b16 %v436, %v435
  %v496 = vpack.c.b16 %v438, %v437
  %v497 = vpack.c.b16 %v440, %v439
  %v498 = vpack.c.b16 %v442, %v441
  %v499 = vpack.c.b16 %v444, %v443
  %v500 = vpack.c.b16 %v446, %v445
  %v501 = vpack.c.b16 %v448, %v447
  %v502 = vpack.c.b16 %v450, %v449
  %v503 = vpack.c.b16 %v452, %v451
  %v504 = vpack.c.b16 %v454, %v453
  %v505 = vpack.c.b16 %v456, %v455
  %v506 = vpack.c.b16 %v458, %v457
  %v507 = vpack.c.b16 %v460, %v459
  %v508 = vpack.c.b16 %v462, %v461
  %v509 = vpack.c.b16 %v464, %v463
  %v510 = vpack.c.b16 %v466, %v465
  %v511 = vpack.c.b16 %v468, %v467
  %v512 = vpack.c.b16 %v470, %v469
  %v513 = vpack.c.b16 %v472, %v471
  %v514 = vpack.c.b16 %v474, %v473
  %555 = vmatprep.subr.bf16.mxu0 0
  %556 = vmatpush1.bf16.msra.mxu0 %v482
  %557 = vmatprep.subr.bf16.mxu0 0
  %558 = vmatpush1.bf16.msra.mxu0 %v481
  %559 = vmatprep.subr.bf16.mxu0 0
  %560 = vmatpush1.bf16.msra.mxu0 %v480
  %561 = vmatprep.subr.bf16.mxu0 0
  %562 = vmatpush1.bf16.msra.mxu0 %v479
  %563 = vmatprep.subr.bf16.mxu0 0
  %564 = vmatpush1.bf16.msra.mxu0 %v478
  %565 = vmatprep.subr.bf16.mxu0 0
  %566 = vmatpush1.bf16.msra.mxu0 %v477
  %567 = vmatprep.subr.bf16.mxu0 0
  %568 = vmatpush1.bf16.msra.mxu0 %v476
  %569 = vmatprep.subr.bf16.mxu0 0
  %570 = vmatpush1.bf16.msra.mxu0 %v475
  %571 = vmatprep.subr.bf16.mxu0 0
  %572 = vmatpush2.bf16.msra.mxu0 %v490
  %573 = vmatprep.subr.bf16.mxu0 0
  %574 = vmatpush2.bf16.msra.mxu0 %v489
  %575 = vmatprep.subr.bf16.mxu0 0
  %576 = vmatpush2.bf16.msra.mxu0 %v488
  %577 = vmatprep.subr.bf16.mxu0 0
  %578 = vmatpush2.bf16.msra.mxu0 %v487
  %579 = vmatprep.subr.bf16.mxu0 0
  %580 = vmatpush2.bf16.msra.mxu0 %v486
  %581 = vmatprep.subr.bf16.mxu0 0
  %582 = vmatpush2.bf16.msra.mxu0 %v485
  %583 = vmatprep.subr.bf16.mxu0 0
  %584 = vmatpush2.bf16.msra.mxu0 %v484
  %585 = vmatprep.subr.bf16.mxu0 0
  %586 = vmatpush2.bf16.msra.mxu0 %v483
  %587 = vmatprep.mubr.bf16.mxu0 %v246
  %588 = vmatmul.mubr.bf16.gmra.mxu0 %v245
  %v589 = vpop.f32.mrf.mxu0
  %v590 = vadd.f32 %v139, %v589
  %v591 = vpop.f32.mrf.mxu0
  %v592 = vpop.f32.mrf.mxu0
  %v593 = vadd.f32 %v139, %v592
  %v594 = vpop.f32.mrf.mxu0
  %595 = vmatprep.mubr.bf16.mxu0 %v251
  %596 = vmatmul.mubr.bf16.gmra.mxu0 %v250
  %v597 = vpop.f32.mrf.mxu0
  %v598 = vadd.f32 %v139, %v597
  %v599 = vpop.f32.mrf.mxu0
  %v600 = vpop.f32.mrf.mxu0
  %v601 = vadd.f32 %v139, %v600
  %v602 = vpop.f32.mrf.mxu0
  %603 = vmatprep.mubr.bf16.mxu0 %v256
  %604 = vmatmul.mubr.bf16.gmra.mxu0 %v255
  %v605 = vpop.f32.mrf.mxu0
  %v606 = vadd.f32 %v139, %v605
  %v607 = vpop.f32.mrf.mxu0
  %v608 = vpop.f32.mrf.mxu0
  %v609 = vadd.f32 %v139, %v608
  %v610 = vpop.f32.mrf.mxu0
  %611 = vmatprep.mubr.bf16.mxu0 %v261
  %612 = vmatmul.mubr.bf16.gmra.mxu0 %v260
  %v613 = vpop.f32.mrf.mxu0
  %v614 = vadd.f32 %v139, %v613
  %v615 = vpop.f32.mrf.mxu0
  %v616 = vpop.f32.mrf.mxu0
  %v617 = vadd.f32 %v139, %v616
  %v618 = vpop.f32.mrf.mxu0
  %619 = vmatprep.mubr.bf16.mxu0 %v266
  %620 = vmatmul.mubr.bf16.gmra.mxu0 %v265
  %v621 = vpop.f32.mrf.mxu0
  %v622 = vadd.f32 %v139, %v621
  %v623 = vpop.f32.mrf.mxu0
  %v624 = vpop.f32.mrf.mxu0
  %v625 = vadd.f32 %v139, %v624
  %v626 = vpop.f32.mrf.mxu0
  %627 = vmatprep.mubr.bf16.mxu0 %v271
  %628 = vmatmul.mubr.bf16.gmra.mxu0 %v270
  %v629 = vpop.f32.mrf.mxu0
  %v630 = vadd.f32 %v139, %v629
  %v631 = vpop.f32.mrf.mxu0
  %v632 = vpop.f32.mrf.mxu0
  %v633 = vadd.f32 %v139, %v632
  %v634 = vpop.f32.mrf.mxu0
  %635 = vmatprep.mubr.bf16.mxu0 %v276
  %636 = vmatmul.mubr.bf16.gmra.mxu0 %v275
  %v637 = vpop.f32.mrf.mxu0
  %v638 = vadd.f32 %v139, %v637
  %v639 = vpop.f32.mrf.mxu0
  %v640 = vpop.f32.mrf.mxu0
  %v641 = vpop.f32.mrf.mxu0
  %642 = vdwg.mxu0
  %643 = vmatprep.subr.bf16.mxu0 0
  %644 = vmatpush1.bf16.msra.mxu0 %v498
  %645 = vmatprep.subr.bf16.mxu0 0
  %646 = vmatpush1.bf16.msra.mxu0 %v497
  %647 = vmatprep.subr.bf16.mxu0 0
  %648 = vmatpush1.bf16.msra.mxu0 %v496
  %649 = vmatprep.subr.bf16.mxu0 0
  %650 = vmatpush1.bf16.msra.mxu0 %v495
  %651 = vmatprep.subr.bf16.mxu0 0
  %652 = vmatpush1.bf16.msra.mxu0 %v494
  %653 = vmatprep.subr.bf16.mxu0 0
  %654 = vmatpush1.bf16.msra.mxu0 %v493
  %655 = vmatprep.subr.bf16.mxu0 0
  %656 = vmatpush1.bf16.msra.mxu0 %v492
  %657 = vmatprep.subr.bf16.mxu0 0
  %658 = vmatpush1.bf16.msra.mxu0 %v491
  %659 = vmatprep.subr.bf16.mxu0 0
  %660 = vmatpush2.bf16.msra.mxu0 %v506
  %661 = vmatprep.subr.bf16.mxu0 0
  %662 = vmatpush2.bf16.msra.mxu0 %v505
  %663 = vmatprep.subr.bf16.mxu0 0
  %664 = vmatpush2.bf16.msra.mxu0 %v504
  %665 = vmatprep.subr.bf16.mxu0 0
  %666 = vmatpush2.bf16.msra.mxu0 %v503
  %667 = vmatprep.subr.bf16.mxu0 0
  %668 = vmatpush2.bf16.msra.mxu0 %v502
  %669 = vmatprep.subr.bf16.mxu0 0
  %670 = vmatpush2.bf16.msra.mxu0 %v501
  %671 = vmatprep.subr.bf16.mxu0 0
  %672 = vmatpush2.bf16.msra.mxu0 %v500
  %673 = vmatprep.subr.bf16.mxu0 0
  %674 = vmatpush2.bf16.msra.mxu0 %v499
  %675 = vmatprep.mubr.bf16.mxu0 %v248
  %676 = vmatmul.mubr.bf16.gmra.mxu0 %v247
  %v677 = vpop.f32.mrf.mxu0
  %v678 = vadd.f32 %v590, %v677
  %v679 = vpop.f32.mrf.mxu0
  %v680 = vpop.f32.mrf.mxu0
  %v681 = vadd.f32 %v593, %v680
  %v682 = vpop.f32.mrf.mxu0
  %683 = vmatprep.mubr.bf16.mxu0 %v253
  %684 = vmatmul.mubr.bf16.gmra.mxu0 %v252
  %v685 = vpop.f32.mrf.mxu0
  %v686 = vadd.f32 %v598, %v685
  %v687 = vpop.f32.mrf.mxu0
  %v688 = vpop.f32.mrf.mxu0
  %v689 = vadd.f32 %v601, %v688
  %v690 = vpop.f32.mrf.mxu0
  %691 = vmatprep.mubr.bf16.mxu0 %v258
  %692 = vmatmul.mubr.bf16.gmra.mxu0 %v257
  %v693 = vpop.f32.mrf.mxu0
  %v694 = vadd.f32 %v606, %v693
  %v695 = vpop.f32.mrf.mxu0
  %v696 = vpop.f32.mrf.mxu0
  %v697 = vadd.f32 %v609, %v696
  %v698 = vpop.f32.mrf.mxu0
  %699 = vmatprep.mubr.bf16.mxu0 %v263
  %700 = vmatmul.mubr.bf16.gmra.mxu0 %v262
  %v701 = vpop.f32.mrf.mxu0
  %v702 = vadd.f32 %v614, %v701
  %v703 = vpop.f32.mrf.mxu0
  %v704 = vpop.f32.mrf.mxu0
  %v705 = vadd.f32 %v617, %v704
  %v706 = vpop.f32.mrf.mxu0
  %707 = vmatprep.mubr.bf16.mxu0 %v268
  %708 = vmatmul.mubr.bf16.gmra.mxu0 %v267
  %v709 = vpop.f32.mrf.mxu0
  %v710 = vadd.f32 %v622, %v709
  %v711 = vpop.f32.mrf.mxu0
  %v712 = vpop.f32.mrf.mxu0
  %v713 = vadd.f32 %v625, %v712
  %v714 = vpop.f32.mrf.mxu0
  %715 = vmatprep.mubr.bf16.mxu0 %v273
  %716 = vmatmul.mubr.bf16.gmra.mxu0 %v272
  %v717 = vpop.f32.mrf.mxu0
  %v718 = vadd.f32 %v630, %v717
  %v719 = vpop.f32.mrf.mxu0
  %v720 = vpop.f32.mrf.mxu0
  %v721 = vadd.f32 %v633, %v720
  %v722 = vpop.f32.mrf.mxu0
  %723 = vmatprep.mubr.bf16.mxu0 %v278
  %724 = vmatmul.mubr.bf16.gmra.mxu0 %v277
  %v725 = vpop.f32.mrf.mxu0
  %v726 = vadd.f32 %v638, %v725
  %v727 = vpop.f32.mrf.mxu0
  %v728 = vpop.f32.mrf.mxu0
  %v729 = vpop.f32.mrf.mxu0
  %730 = vdwg.mxu0
  %731 = vmatprep.subr.bf16.mxu0 0
  %732 = vmatpush1.bf16.msra.mxu0 %v514
  %733 = vmatprep.subr.bf16.mxu0 0
  %734 = vmatpush1.bf16.msra.mxu0 %v513
  %735 = vmatprep.subr.bf16.mxu0 0
  %736 = vmatpush1.bf16.msra.mxu0 %v512
  %737 = vmatprep.subr.bf16.mxu0 0
  %738 = vmatpush1.bf16.msra.mxu0 %v511
  %739 = vmatprep.subr.bf16.mxu0 0
  %740 = vmatpush1.bf16.msra.mxu0 %v510
  %741 = vmatprep.subr.bf16.mxu0 0
  %742 = vmatpush1.bf16.msra.mxu0 %v509
  %743 = vmatprep.subr.bf16.mxu0 0
  %744 = vmatpush1.bf16.msra.mxu0 %v508
  %745 = vmatprep.subr.bf16.mxu0 0
  %746 = vmatpush1.bf16.msra.mxu0 %v507
  %747 = vmatprep.subr.bf16.mxu0 0
  %748 = vmatpush2.bf16.msra.mxu0 0
  %749 = vmatprep.subr.bf16.mxu0 0
  %750 = vmatpush2.bf16.msra.mxu0 0
  %751 = vmatprep.subr.bf16.mxu0 0
  %752 = vmatpush2.bf16.msra.mxu0 0
  %753 = vmatprep.subr.bf16.mxu0 0
  %754 = vmatpush2.bf16.msra.mxu0 0
  %755 = vmatprep.subr.bf16.mxu0 0
  %756 = vmatpush2.bf16.msra.mxu0 0
  %757 = vmatprep.subr.bf16.mxu0 0
  %758 = vmatpush2.bf16.msra.mxu0 0
  %759 = vmatprep.subr.bf16.mxu0 0
  %760 = vmatpush2.bf16.msra.mxu0 0
  %761 = vmatprep.subr.bf16.mxu0 0
  %762 = vmatpush2.bf16.msra.mxu0 0
  %763 = vmatprep.mubr.bf16.mxu0 0
  %764 = vmatmul.mubr.bf16.gmra.mxu0 %v249
  %v765 = vpop.f32.mrf.mxu0
  %v766 = vadd.f32 %v678, %v765
  %v767 = vpop.f32.mrf.mxu0
  %v768 = vpop.f32.mrf.mxu0
  %v769 = vadd.f32 %v681, %v768
  %v770 = vpop.f32.mrf.mxu0
  %771 = vmatprep.mubr.bf16.mxu0 0
  %772 = vmatmul.mubr.bf16.gmra.mxu0 %v254
  %v773 = vpop.f32.mrf.mxu0
  %v774 = vadd.f32 %v686, %v773
  %v775 = vpop.f32.mrf.mxu0
  %v776 = vpop.f32.mrf.mxu0
  %v777 = vadd.f32 %v689, %v776
  %v778 = vpop.f32.mrf.mxu0
  %779 = vmatprep.mubr.bf16.mxu0 0
  %780 = vmatmul.mubr.bf16.gmra.mxu0 %v259
  %v781 = vpop.f32.mrf.mxu0
  %v782 = vadd.f32 %v694, %v781
  %v783 = vpop.f32.mrf.mxu0
  %v784 = vpop.f32.mrf.mxu0
  %v785 = vadd.f32 %v697, %v784
  %v786 = vpop.f32.mrf.mxu0
  %787 = vmatprep.mubr.bf16.mxu0 0
  %788 = vmatmul.mubr.bf16.gmra.mxu0 %v264
  %v789 = vpop.f32.mrf.mxu0
  %v790 = vadd.f32 %v702, %v789
  %v791 = vpop.f32.mrf.mxu0
  %v792 = vpop.f32.mrf.mxu0
  %v793 = vadd.f32 %v705, %v792
  %v794 = vpop.f32.mrf.mxu0
  %795 = vmatprep.mubr.bf16.mxu0 0
  %796 = vmatmul.mubr.bf16.gmra.mxu0 %v269
  %v797 = vpop.f32.mrf.mxu0
  %v798 = vadd.f32 %v710, %v797
  %v799 = vpop.f32.mrf.mxu0
  %v800 = vpop.f32.mrf.mxu0
  %v801 = vadd.f32 %v713, %v800
  %v802 = vpop.f32.mrf.mxu0
  %803 = vmatprep.mubr.bf16.mxu0 0
  %804 = vmatmul.mubr.bf16.gmra.mxu0 %v274
  %v805 = vpop.f32.mrf.mxu0
  %v806 = vadd.f32 %v718, %v805
  %v807 = vpop.f32.mrf.mxu0
  %v808 = vpop.f32.mrf.mxu0
  %v809 = vadd.f32 %v721, %v808
  %v810 = vpop.f32.mrf.mxu0
  %811 = vmatprep.mubr.bf16.mxu0 0
  %812 = vmatmul.mubr.bf16.gmra.mxu0 %v279
  %v813 = vpop.f32.mrf.mxu0
  %v814 = vadd.f32 %v726, %v813
  %v815 = vpop.f32.mrf.mxu0
  %v816 = vpop.f32.mrf.mxu0
  %v817 = vpop.f32.mrf.mxu0
  %818 = vdwg.mxu0
  %v819 = vmax.f32 %v766, 0.0
  %v820 = vmax.f32 %v769, 0.0
  %v821 = vmax.f32 %v774, 0.0
  %v822 = vmax.f32 %v777, 0.0
  %v823 = vmax.f32 %v782, 0.0
  %v824 = vmax.f32 %v785, 0.0
  %v825 = vmax.f32 %v790, 0.0
  %v826 = vmax.f32 %v793, 0.0
  %v827 = vmax.f32 %v798, 0.0
  %v828 = vmax.f32 %v801, 0.0
  %v829 = vmax.f32 %v806, 0.0
  %v830 = vmax.f32 %v809, 0.0
  %v831 = vmax.f32 %v814, 0.0
  %v832 = vpack.c.bf16 %v820, %v819
  %v833 = vpack.c.bf16 %v822, %v821
  %v834 = vpack.c.bf16 %v824, %v823
  %v835 = vpack.c.bf16 %v826, %v825
  %v836 = vpack.c.bf16 %v828, %v827
  %v837 = vpack.c.bf16 %v830, %v829
  %v838 = vpack.c.bf16 %v831, %v831
  %v846 = vunpack.c.l.b16 %v832
  %v847 = vunpack.c.h.b16 %v832
  %v848 = vunpack.c.l.b16 %v833
  %v849 = vunpack.c.h.b16 %v833
  %v850 = vunpack.c.l.b16 %v834
  %v851 = vunpack.c.h.b16 %v834
  %v852 = vunpack.c.l.b16 %v835
  %v853 = vunpack.c.h.b16 %v835
  %v854 = vunpack.c.l.b16 %v836
  %v855 = vunpack.c.h.b16 %v836
  %v856 = vunpack.c.l.b16 %v837
  %v857 = vunpack.c.h.b16 %v837
  %v858 = vunpack.c.l.b16 %v838
  %v859 = vpack.c.b16 %v846, %v846
  %v860 = vpack.c.b16 %v847, %v847
  %v861 = vpack.c.b16 %v848, %v848
  %v862 = vpack.c.b16 %v849, %v849
  %v863 = vpack.c.b16 %v850, %v850
  %v864 = vpack.c.b16 %v851, %v851
  %v865 = vpack.c.b16 %v852, %v852
  %v866 = vpack.c.b16 %v853, %v853
  %v867 = vpack.c.b16 %v854, %v854
  %v868 = vpack.c.b16 %v855, %v855
  %v869 = vpack.c.b16 %v856, %v856
  %v870 = vpack.c.b16 %v857, %v857
  %v871 = vpack.c.b16 %v858, %v858
  %885 = vst [vmem:[%s3] sm:$0xf] %v859
  %886 = vst [vmem:[%s3 + $0x4] sm:$0xf] %v860
  %887 = vst [vmem:[%s3 + $0x8] sm:$0xf] %v861
  %888 = vst [vmem:[%s3 + $0xc] sm:$0xf] %v862
  %889 = vst [vmem:[%s3 + $0x10] sm:$0xf] %v863
  %890 = vst [vmem:[%s3 + $0x14] sm:$0xf] %v864
  %891 = vst [vmem:[%s3 + $0x18] sm:$0xf] %v865
  %892 = vst [vmem:[%s3 + $0x1c] sm:$0xf] %v866
  %893 = vst [vmem:[%s3 + $0x20] sm:$0xf] %v867
  %894 = vst [vmem:[%s3 + $0x24] sm:$0xf] %v868
  %895 = vst [vmem:[%s3 + $0x28] sm:$0xf] %v869
  %896 = vst [vmem:[%s3 + $0x2c] sm:$0xf] %v870
  %897 = vst [vmem:[%s3 + $0x30] sm:$0x1] %v871
  // Predicated region
  $region14: #{qnet_forward.6} parent=0 // pred_check
    _
  $region15: #{qnet_forward.6} parent=0 // pred_check_branch
    %899 = sbr.rel (0) target = $region17
  $region16: #{qnet_forward.6} parent=0 // pred_region
    _
  $region17: #{qnet_forward.6} parent=0 // pred_fallthru
    _
  // Predicated region
  $region18: #{qnet_forward.6} parent=0 // pred_check
    _
  $region19: #{qnet_forward.6} parent=0 // pred_check_branch
    %901 = sbr.rel (0) target = $region21
  $region20: #{qnet_forward.6} parent=0 // pred_region
    _
  $region21: #{qnet_forward.6} parent=0 // pred_fallthru
    _

// kernel: qnet_forward.7
$region0: #{qnet_forward.7}
  #allocation0 [shape = 'u32[]', space=smem, size = 0x4, offset = 0x4, fixed_abs, tag = 'smem constant byte address 0x4 - core index']
  #allocation1 [shape = 'u32[144,128]{1,0:T(1,128)}', space=vmem, size = 0x12000, scoped, tag = 'internal scratch']
  %s0 = inlined_call_operand.vmem [shape: bf16[2,3200], index: 0, kind: input, shape index: {}]
  %s1 = inlined_call_operand.vmem [shape: bf16[3200,512], index: 1, kind: input, shape index: {}]
  %s2 = inlined_call_operand.vmem [shape: f32[1,512], index: 2, kind: input, shape index: {}]
  %s3 = inlined_call_operand.vmem [shape: bf16[512,128], index: 3, kind: input, shape index: {}]
  %s4 = inlined_call_operand.vmem [shape: f32[1,128], index: 4, kind: input, shape index: {}]
  %s5 = inlined_call_operand.hbm [shape: f32[2,128], index: 5, kind: output, shape index: {}]
  %s6 = sld [smem:[#allocation0]]
  $region30: #{qnet_forward.7} parent=0
    _
  %s8 = ssub.s32 1, %s6
  %s9 = scalar_select 0, %s8, %s6
  $region1: #{qnet_forward.7} parent=0
    #allocation2 [shape = 'u8[1024]{0}', space=vmem, size = 0x400, scoped, tag = 'output window, operand 0, single buffered']
    #allocation3 [shape = 's32[1]{0}', space=sflag, size = 0x4, scoped, tag = 'scoped memory for qnet_forward.7']
    %10 = vsyncpa [#allocation3], 0
    // Predicated region
    $region2: #{qnet_forward.7} parent=1 // pred_check
      _
    $region3: #{qnet_forward.7} parent=1 // pred_check_branch
      %12 = sbr.rel (0) target = $region5
    $region4: #{qnet_forward.7} parent=1 // pred_region
      _
    $region5: #{qnet_forward.7} parent=1 // pred_fallthru
      _
    // Predicated region
    $region6: #{qnet_forward.7} parent=1 // pred_check
      _
    $region7: #{qnet_forward.7} parent=1 // pred_check_branch
      %14 = sbr.rel (0) target = $region9
    $region8: #{qnet_forward.7} parent=1 // pred_region
      _
    $region9: #{qnet_forward.7} parent=1 // pred_fallthru
      _
    // Predicated region
    $region10: #{qnet_forward.7} parent=1 // pred_check
      _
    $region11: #{qnet_forward.7} parent=1 // pred_check_branch
      %16 = sbr.rel (0) target = $region13
    $region12: #{qnet_forward.7} parent=1 // pred_region
      _
    $region13: #{qnet_forward.7} parent=1 // pred_fallthru
      _
    // Predicated region
    $region14: #{qnet_forward.7} parent=1 // pred_check
      _
    $region15: #{qnet_forward.7} parent=1 // pred_check_branch
      %18 = sbr.rel (0) target = $region17
    $region16: #{qnet_forward.7} parent=1 // pred_region
      _
    $region17: #{qnet_forward.7} parent=1 // pred_fallthru
      _
    // Predicated region
    $region18: #{qnet_forward.7} parent=1 // pred_check
      _
    $region19: #{qnet_forward.7} parent=1 // pred_check_branch
      %20 = sbr.rel (0) target = $region21
    $region20: #{qnet_forward.7} parent=1 // pred_region
      _
    $region21: #{qnet_forward.7} parent=1 // pred_fallthru
      _
    %v22 = vld [vmem:[%s0] sm:$0xff]
    %v23 = vld [vmem:[%s0 + $0x8] sm:$0xff]
    %v24 = vld [vmem:[%s0 + $0x10] sm:$0xff]
    %v25 = vld [vmem:[%s0 + $0x18] sm:$0x1]
    %v26 = vld [vmem:[%s1] sm:$0xff]
    %v27 = vld [vmem:[%s1 + $0x8] sm:$0xff]
    %v28 = vld [vmem:[%s1 + $0x10] sm:$0xff]
    %v29 = vld [vmem:[%s1 + $0x18] sm:$0xff]
    %v30 = vld [vmem:[%s1 + $0x20] sm:$0xff]
    %v31 = vld [vmem:[%s1 + $0x28] sm:$0xff]
    %v32 = vld [vmem:[%s1 + $0x30] sm:$0xff]
    %v33 = vld [vmem:[%s1 + $0x38] sm:$0xff]
    %v34 = vld [vmem:[%s1 + $0x40] sm:$0xff]
    %v35 = vld [vmem:[%s1 + $0x48] sm:$0xff]
    %v36 = vld [vmem:[%s1 + $0x50] sm:$0xff]
    %v37 = vld [vmem:[%s1 + $0x58] sm:$0xff]
    %v38 = vld [vmem:[%s1 + $0x60] sm:$0xff]
    %v39 = vld [vmem:[%s1 + $0x68] sm:$0xff]
    %v40 = vld [vmem:[%s1 + $0x70] sm:$0xff]
    %v41 = vld [vmem:[%s1 + $0x78] sm:$0xff]
    %v42 = vld [vmem:[%s1 + $0x80] sm:$0xff]
    %v43 = vld [vmem:[%s1 + $0x88] sm:$0xff]
    %v44 = vld [vmem:[%s1 + $0x90] sm:$0xff]
    %v45 = vld [vmem:[%s1 + $0x98] sm:$0xff]
    %v46 = vld [vmem:[%s1 + $0xa0] sm:$0xff]
    %v47 = vld [vmem:[%s1 + $0xa8] sm:$0xff]
    %v48 = vld [vmem:[%s1 + $0xb0] sm:$0xff]
    %v49 = vld [vmem:[%s1 + $0xb8] sm:$0xff]
    %v50 = vld [vmem:[%s1 + $0xc0] sm:$0xff]
    %v51 = vld [vmem:[%s1 + $0xc8] sm:$0xff]
    %v52 = vld [vmem:[%s1 + $0xd0] sm:$0xff]
    %v53 = vld [vmem:[%s1 + $0xd8] sm:$0xff]
    %v54 = vld [vmem:[%s1 + $0xe0] sm:$0xff]
    %v55 = vld [vmem:[%s1 + $0xe8] sm:$0xff]
    %v56 = vld [vmem:[%s1 + $0xf0] sm:$0xff]
    %v57 = vld [vmem:[%s1 + $0xf8] sm:$0xff]
    %v58 = vld [vmem:[%s1 + $0x100] sm:$0xff]
    %v59 = vld [vmem:[%s1 + $0x108] sm:$0xff]
    %v60 = vld [vmem:[%s1 + $0x110] sm:$0xff]
    %v61 = vld [vmem:[%s1 + $0x118] sm:$0xff]
    %v62 = vld [vmem:[%s1 + $0x120] sm:$0xff]
    %v63 = vld [vmem:[%s1 + $0x128] sm:$0xff]
    %v64 = vld [vmem:[%s1 + $0x130] sm:$0xff]
    %v65 = vld [vmem:[%s1 + $0x138] sm:$0xff]
    %v66 = vld [vmem:[%s1 + $0x140] sm:$0xff]
    %v67 = vld [vmem:[%s1 + $0x148] sm:$0xff]
    %v68 = vld [vmem:[%s1 + $0x150] sm:$0xff]
    %v69 = vld [vmem:[%s1 + $0x158] sm:$0xff]
    %v70 = vld [vmem:[%s1 + $0x160] sm:$0xff]
    %v71 = vld [vmem:[%s1 + $0x168] sm:$0xff]
    %v72 = vld [vmem:[%s1 + $0x170] sm:$0xff]
    %v73 = vld [vmem:[%s1 + $0x178] sm:$0xff]
    %v74 = vld [vmem:[%s1 + $0x180] sm:$0xff]
    %v75 = vld [vmem:[%s1 + $0x188] sm:$0xff]
    %v76 = vld [vmem:[%s1 + $0x190] sm:$0xff]
    %v77 = vld [vmem:[%s1 + $0x198] sm:$0xff]
    %v78 = vld [vmem:[%s1 + $0x1a0] sm:$0xff]
    %v79 = vld [vmem:[%s1 + $0x1a8] sm:$0xff]
    %v80 = vld [vmem:[%s1 + $0x1b0] sm:$0xff]
    %v81 = vld [vmem:[%s1 + $0x1b8] sm:$0xff]
    %v82 = vld [vmem:[%s1 + $0x1c0] sm:$0xff]
    %v83 = vld [vmem:[%s1 + $0x1c8] sm:$0xff]
    %v84 = vld [vmem:[%s1 + $0x1d0] sm:$0xff]
    %v85 = vld [vmem:[%s1 + $0x1d8] sm:$0xff]
    %v86 = vld [vmem:[%s1 + $0x1e0] sm:$0xff]
    %v87 = vld [vmem:[%s1 + $0x1e8] sm:$0xff]
    %v88 = vld [vmem:[%s1 + $0x1f0] sm:$0xff]
    %v89 = vld [vmem:[%s1 + $0x1f8] sm:$0xff]
    %v90 = vld [vmem:[%s1 + $0x200] sm:$0xff]
    %v91 = vld [vmem:[%s1 + $0x208] sm:$0xff]
    %v92 = vld [vmem:[%s1 + $0x210] sm:$0xff]
    %v93 = vld [vmem:[%s1 + $0x218] sm:$0xff]
    %v94 = vld [vmem:[%s1 + $0x220] sm:$0xff]
    %v95 = vld [vmem:[%s1 + $0x228] sm:$0xff]
    %v96 = vld [vmem:[%s1 + $0x230] sm:$0xff]
    %v97 = vld [vmem:[%s1 + $0x238] sm:$0xff]
    %v98 = vld [vmem:[%s1 + $0x240] sm:$0xff]
    %v99 = vld [vmem:[%s1 + $0x248] sm:$0xff]
    %v100 = vld [vmem:[%s1 + $0x250] sm:$0xff]
    %v101 = vld [vmem:[%s1 + $0x258] sm:$0xff]
    %v102 = vld [vmem:[%s1 + $0x260] sm:$0xff]
    %v103 = vld [vmem:[%s1 + $0x268] sm:$0xff]
    %v104 = vld [vmem:[%s1 + $0x270] sm:$0xff]
    %v105 = vld [vmem:[%s1 + $0x278] sm:$0xff]
    %v106 = vld [vmem:[%s1 + $0x280] sm:$0xff]
    %v107 = vld [vmem:[%s1 + $0x288] sm:$0xff]
    %v108 = vld [vmem:[%s1 + $0x290] sm:$0xff]
    %v109 = vld [vmem:[%s1 + $0x298] sm:$0xff]
    %v110 = vld [vmem:[%s1 + $0x2a0] sm:$0xff]
    %v111 = vld [vmem:[%s1 + $0x2a8] sm:$0xff]
    %v112 = vld [vmem:[%s1 + $0x2b0] sm:$0xff]
    %v113 = vld [vmem:[%s1 + $0x2b8] sm:$0xff]
    %v114 = vld [vmem:[%s1 + $0x2c0] sm:$0xff]
    %v115 = vld [vmem:[%s1 + $0x2c8] sm:$0xff]
    %v116 = vld [vmem:[%s1 + $0x2d0] sm:$0xff]
    %v117 = vld [vmem:[%s1 + $0x2d8] sm:$0xff]
    %v118 = vld [vmem:[%s1 + $0x2e0] sm:$0xff]
    %v119 = vld [vmem:[%s1 + $0x2e8] sm:$0xff]
    %v120 = vld [vmem:[%s1 + $0x2f0] sm:$0xff]
    %v121 = vld [vmem:[%s1 + $0x2f8] sm:$0xff]
    %v122 = vld [vmem:[%s1 + $0x300] sm:$0xff]
    %v123 = vld [vmem:[%s1 + $0x308] sm:$0xff]
    %v124 = vld [vmem:[%s1 + $0x310] sm:$0xff]
    %v125 = vld [vmem:[%s1 + $0x318] sm:$0xff]
    %v126 = vld [vmem:[%s1 + $0x320] sm:$0xff]
    %v127 = vld [vmem:[%s1 + $0x328] sm:$0xff]
    %v128 = vld [vmem:[%s1 + $0x330] sm:$0xff]
    %v129 = vld [vmem:[%s1 + $0x338] sm:$0xff]
    %v130 = vld [vmem:[%s1 + $0x340] sm:$0xff]
    %v131 = vld [vmem:[%s1 + $0x348] sm:$0xff]
    %v132 = vld [vmem:[%s1 + $0x350] sm:$0xff]
    %v133 = vld [vmem:[%s1 + $0x358] sm:$0xff]
    %v134 = vld [vmem:[%s1 + $0x360] sm:$0xff]
    %v135 = vld [vmem:[%s1 + $0x368] sm:$0xff]
    %v136 = vld [vmem:[%s1 + $0x370] sm:$0xff]
    %v137 = vld [vmem:[%s1 + $0x378] sm:$0xff]
    %v138 = vld [vmem:[%s1 + $0x380] sm:$0xff]
    %v139 = vld [vmem:[%s1 + $0x388] sm:$0xff]
    %v140 = vld [vmem:[%s1 + $0x390] sm:$0xff]
    %v141 = vld [vmem:[%s1 + $0x398] sm:$0xff]
    %v142 = vld [vmem:[%s1 + $0x3a0] sm:$0xff]
    %v143 = vld [vmem:[%s1 + $0x3a8] sm:$0xff]
    %v144 = vld [vmem:[%s1 + $0x3b0] sm:$0xff]
    %v145 = vld [vmem:[%s1 + $0x3b8] sm:$0xff]
    %v146 = vld [vmem:[%s1 + $0x3c0] sm:$0xff]
    %v147 = vld [vmem:[%s1 + $0x3c8] sm:$0xff]
    %v148 = vld [vmem:[%s1 + $0x3d0] sm:$0xff]
    %v149 = vld [vmem:[%s1 + $0x3d8] sm:$0xff]
    %v150 = vld [vmem:[%s1 + $0x3e0] sm:$0xff]
    %v151 = vld [vmem:[%s1 + $0x3e8] sm:$0xff]
    %v152 = vld [vmem:[%s1 + $0x3f0] sm:$0xff]
    %v153 = vld [vmem:[%s1 + $0x3f8] sm:$0xff]
    %v154 = vld [vmem:[%s1 + $0x400] sm:$0xff]
    %v155 = vld [vmem:[%s1 + $0x408] sm:$0xff]
    %v156 = vld [vmem:[%s1 + $0x410] sm:$0xff]
    %v157 = vld [vmem:[%s1 + $0x418] sm:$0xff]
    %v158 = vld [vmem:[%s1 + $0x420] sm:$0xff]
    %v159 = vld [vmem:[%s1 + $0x428] sm:$0xff]
    %v160 = vld [vmem:[%s1 + $0x430] sm:$0xff]
    %v161 = vld [vmem:[%s1 + $0x438] sm:$0xff]
    %v162 = vld [vmem:[%s1 + $0x440] sm:$0xff]
    %v163 = vld [vmem:[%s1 + $0x448] sm:$0xff]
    %v164 = vld [vmem:[%s1 + $0x450] sm:$0xff]
    %v165 = vld [vmem:[%s1 + $0x458] sm:$0xff]
    %v166 = vld [vmem:[%s1 + $0x460] sm:$0xff]
    %v167 = vld [vmem:[%s1 + $0x468] sm:$0xff]
    %v168 = vld [vmem:[%s1 + $0x470] sm:$0xff]
    %v169 = vld [vmem:[%s1 + $0x478] sm:$0xff]
    %v170 = vld [vmem:[%s1 + $0x480] sm:$0xff]
    %v171 = vld [vmem:[%s1 + $0x488] sm:$0xff]
    %v172 = vld [vmem:[%s1 + $0x490] sm:$0xff]
    %v173 = vld [vmem:[%s1 + $0x498] sm:$0xff]
    %v174 = vld [vmem:[%s1 + $0x4a0] sm:$0xff]
    %v175 = vld [vmem:[%s1 + $0x4a8] sm:$0xff]
    %v176 = vld [vmem:[%s1 + $0x4b0] sm:$0xff]
    %v177 = vld [vmem:[%s1 + $0x4b8] sm:$0xff]
    %v178 = vld [vmem:[%s1 + $0x4c0] sm:$0xff]
    %v179 = vld [vmem:[%s1 + $0x4c8] sm:$0xff]
    %v180 = vld [vmem:[%s1 + $0x4d0] sm:$0xff]
    %v181 = vld [vmem:[%s1 + $0x4d8] sm:$0xff]
    %v182 = vld [vmem:[%s1 + $0x4e0] sm:$0xff]
    %v183 = vld [vmem:[%s1 + $0x4e8] sm:$0xff]
    %v184 = vld [vmem:[%s1 + $0x4f0] sm:$0xff]
    %v185 = vld [vmem:[%s1 + $0x4f8] sm:$0xff]
    %v186 = vld [vmem:[%s1 + $0x500] sm:$0xff]
    %v187 = vld [vmem:[%s1 + $0x508] sm:$0xff]
    %v188 = vld [vmem:[%s1 + $0x510] sm:$0xff]
    %v189 = vld [vmem:[%s1 + $0x518] sm:$0xff]
    %v190 = vld [vmem:[%s1 + $0x520] sm:$0xff]
    %v191 = vld [vmem:[%s1 + $0x528] sm:$0xff]
    %v192 = vld [vmem:[%s1 + $0x530] sm:$0xff]
    %v193 = vld [vmem:[%s1 + $0x538] sm:$0xff]
    %v194 = vld [vmem:[%s1 + $0x540] sm:$0xff]
    %v195 = vld [vmem:[%s1 + $0x548] sm:$0xff]
    %v196 = vld [vmem:[%s1 + $0x550] sm:$0xff]
    %v197 = vld [vmem:[%s1 + $0x558] sm:$0xff]
    %v198 = vld [vmem:[%s1 + $0x560] sm:$0xff]
    %v199 = vld [vmem:[%s1 + $0x568] sm:$0xff]
    %v200 = vld [vmem:[%s1 + $0x570] sm:$0xff]
    %v201 = vld [vmem:[%s1 + $0x578] sm:$0xff]
    %v202 = vld [vmem:[%s1 + $0x580] sm:$0xff]
    %v203 = vld [vmem:[%s1 + $0x588] sm:$0xff]
    %v204 = vld [vmem:[%s1 + $0x590] sm:$0xff]
    %v205 = vld [vmem:[%s1 + $0x598] sm:$0xff]
    %v206 = vld [vmem:[%s1 + $0x5a0] sm:$0xff]
    %v207 = vld [vmem:[%s1 + $0x5a8] sm:$0xff]
    %v208 = vld [vmem:[%s1 + $0x5b0] sm:$0xff]
    %v209 = vld [vmem:[%s1 + $0x5b8] sm:$0xff]
    %v210 = vld [vmem:[%s1 + $0x5c0] sm:$0xff]
    %v211 = vld [vmem:[%s1 + $0x5c8] sm:$0xff]
    %v212 = vld [vmem:[%s1 + $0x5d0] sm:$0xff]
    %v213 = vld [vmem:[%s1 + $0x5d8] sm:$0xff]
    %v214 = vld [vmem:[%s1 + $0x5e0] sm:$0xff]
    %v215 = vld [vmem:[%s1 + $0x5e8] sm:$0xff]
    %v216 = vld [vmem:[%s1 + $0x5f0] sm:$0xff]
    %v217 = vld [vmem:[%s1 + $0x5f8] sm:$0xff]
    %v218 = vld [vmem:[%s1 + $0x600] sm:$0xff]
    %v219 = vld [vmem:[%s1 + $0x608] sm:$0xff]
    %v220 = vld [vmem:[%s1 + $0x610] sm:$0xff]
    %v221 = vld [vmem:[%s1 + $0x618] sm:$0xff]
    %v222 = vld [vmem:[%s1 + $0x620] sm:$0xff]
    %v223 = vld [vmem:[%s1 + $0x628] sm:$0xff]
    %v224 = vld [vmem:[%s1 + $0x630] sm:$0xff]
    %v225 = vld [vmem:[%s1 + $0x638] sm:$0xff]
    %v226 = vld [vmem:[%s1 + $0x640] sm:$0xff]
    %v227 = vld [vmem:[%s1 + $0x648] sm:$0xff]
    %v228 = vld [vmem:[%s1 + $0x650] sm:$0xff]
    %v229 = vld [vmem:[%s1 + $0x658] sm:$0xff]
    %v230 = vld [vmem:[%s1 + $0x660] sm:$0xff]
    %v231 = vld [vmem:[%s1 + $0x668] sm:$0xff]
    %v232 = vld [vmem:[%s1 + $0x670] sm:$0xff]
    %v233 = vld [vmem:[%s1 + $0x678] sm:$0xff]
    %v234 = vld [vmem:[%s1 + $0x680] sm:$0xff]
    %v235 = vld [vmem:[%s1 + $0x688] sm:$0xff]
    %v236 = vld [vmem:[%s1 + $0x690] sm:$0xff]
    %v237 = vld [vmem:[%s1 + $0x698] sm:$0xff]
    %v238 = vld [vmem:[%s1 + $0x6a0] sm:$0xff]
    %v239 = vld [vmem:[%s1 + $0x6a8] sm:$0xff]
    %v240 = vld [vmem:[%s1 + $0x6b0] sm:$0xff]
    %v241 = vld [vmem:[%s1 + $0x6b8] sm:$0xff]
    %v242 = vld [vmem:[%s1 + $0x6c0] sm:$0xff]
    %v243 = vld [vmem:[%s1 + $0x6c8] sm:$0xff]
    %v244 = vld [vmem:[%s1 + $0x6d0] sm:$0xff]
    %v245 = vld [vmem:[%s1 + $0x6d8] sm:$0xff]
    %v246 = vld [vmem:[%s1 + $0x6e0] sm:$0xff]
    %v247 = vld [vmem:[%s1 + $0x6e8] sm:$0xff]
    %v248 = vld [vmem:[%s1 + $0x6f0] sm:$0xff]
    %v249 = vld [vmem:[%s1 + $0x6f8] sm:$0xff]
    %v250 = vld [vmem:[%s1 + $0x700] sm:$0xff]
    %v251 = vld [vmem:[%s1 + $0x708] sm:$0xff]
    %v252 = vld [vmem:[%s1 + $0x710] sm:$0xff]
    %v253 = vld [vmem:[%s1 + $0x718] sm:$0xff]
    %v254 = vld [vmem:[%s1 + $0x720] sm:$0xff]
    %v255 = vld [vmem:[%s1 + $0x728] sm:$0xff]
    %v256 = vld [vmem:[%s1 + $0x730] sm:$0xff]
    %v257 = vld [vmem:[%s1 + $0x738] sm:$0xff]
    %v258 = vld [vmem:[%s1 + $0x740] sm:$0xff]
    %v259 = vld [vmem:[%s1 + $0x748] sm:$0xff]
    %v260 = vld [vmem:[%s1 + $0x750] sm:$0xff]
    %v261 = vld [vmem:[%s1 + $0x758] sm:$0xff]
    %v262 = vld [vmem:[%s1 + $0x760] sm:$0xff]
    %v263 = vld [vmem:[%s1 + $0x768] sm:$0xff]
    %v264 = vld [vmem:[%s1 + $0x770] sm:$0xff]
    %v265 = vld [vmem:[%s1 + $0x778] sm:$0xff]
    %v266 = vld [vmem:[%s1 + $0x780] sm:$0xff]
    %v267 = vld [vmem:[%s1 + $0x788] sm:$0xff]
    %v268 = vld [vmem:[%s1 + $0x790] sm:$0xff]
    %v269 = vld [vmem:[%s1 + $0x798] sm:$0xff]
    %v270 = vld [vmem:[%s1 + $0x7a0] sm:$0xff]
    %v271 = vld [vmem:[%s1 + $0x7a8] sm:$0xff]
    %v272 = vld [vmem:[%s1 + $0x7b0] sm:$0xff]
    %v273 = vld [vmem:[%s1 + $0x7b8] sm:$0xff]
    %v274 = vld [vmem:[%s1 + $0x7c0] sm:$0xff]
    %v275 = vld [vmem:[%s1 + $0x7c8] sm:$0xff]
    %v276 = vld [vmem:[%s1 + $0x7d0] sm:$0xff]
    %v277 = vld [vmem:[%s1 + $0x7d8] sm:$0xff]
    %v278 = vld [vmem:[%s1 + $0x7e0] sm:$0xff]
    %v279 = vld [vmem:[%s1 + $0x7e8] sm:$0xff]
    %v280 = vld [vmem:[%s1 + $0x7f0] sm:$0xff]
    %v281 = vld [vmem:[%s1 + $0x7f8] sm:$0xff]
    %v282 = vld [vmem:[%s1 + $0x800] sm:$0xff]
    %v283 = vld [vmem:[%s1 + $0x808] sm:$0xff]
    %v284 = vld [vmem:[%s1 + $0x810] sm:$0xff]
    %v285 = vld [vmem:[%s1 + $0x818] sm:$0xff]
    %v286 = vld [vmem:[%s1 + $0x820] sm:$0xff]
    %v287 = vld [vmem:[%s1 + $0x828] sm:$0xff]
    %v288 = vld [vmem:[%s1 + $0x830] sm:$0xff]
    %v289 = vld [vmem:[%s1 + $0x838] sm:$0xff]
    %v290 = vld [vmem:[%s1 + $0x840] sm:$0xff]
    %v291 = vld [vmem:[%s1 + $0x848] sm:$0xff]
    %v292 = vld [vmem:[%s1 + $0x850] sm:$0xff]
    %v293 = vld [vmem:[%s1 + $0x858] sm:$0xff]
    %v294 = vld [vmem:[%s1 + $0x860] sm:$0xff]
    %v295 = vld [vmem:[%s1 + $0x868] sm:$0xff]
    %v296 = vld [vmem:[%s1 + $0x870] sm:$0xff]
    %v297 = vld [vmem:[%s1 + $0x878] sm:$0xff]
    %v298 = vld [vmem:[%s1 + $0x880] sm:$0xff]
    %v299 = vld [vmem:[%s1 + $0x888] sm:$0xff]
    %v300 = vld [vmem:[%s1 + $0x890] sm:$0xff]
    %v301 = vld [vmem:[%s1 + $0x898] sm:$0xff]
    %v302 = vld [vmem:[%s1 + $0x8a0] sm:$0xff]
    %v303 = vld [vmem:[%s1 + $0x8a8] sm:$0xff]
    %v304 = vld [vmem:[%s1 + $0x8b0] sm:$0xff]
    %v305 = vld [vmem:[%s1 + $0x8b8] sm:$0xff]
    %v306 = vld [vmem:[%s1 + $0x8c0] sm:$0xff]
    %v307 = vld [vmem:[%s1 + $0x8c8] sm:$0xff]
    %v308 = vld [vmem:[%s1 + $0x8d0] sm:$0xff]
    %v309 = vld [vmem:[%s1 + $0x8d8] sm:$0xff]
    %v310 = vld [vmem:[%s1 + $0x8e0] sm:$0xff]
    %v311 = vld [vmem:[%s1 + $0x8e8] sm:$0xff]
    %v312 = vld [vmem:[%s1 + $0x8f0] sm:$0xff]
    %v313 = vld [vmem:[%s1 + $0x8f8] sm:$0xff]
    %v314 = vld [vmem:[%s1 + $0x900] sm:$0xff]
    %v315 = vld [vmem:[%s1 + $0x908] sm:$0xff]
    %v316 = vld [vmem:[%s1 + $0x910] sm:$0xff]
    %v317 = vld [vmem:[%s1 + $0x918] sm:$0xff]
    %v318 = vld [vmem:[%s1 + $0x920] sm:$0xff]
    %v319 = vld [vmem:[%s1 + $0x928] sm:$0xff]
    %v320 = vld [vmem:[%s1 + $0x930] sm:$0xff]
    %v321 = vld [vmem:[%s1 + $0x938] sm:$0xff]
    %v322 = vld [vmem:[%s1 + $0x940] sm:$0xff]
    %v323 = vld [vmem:[%s1 + $0x948] sm:$0xff]
    %v324 = vld [vmem:[%s1 + $0x950] sm:$0xff]
    %v325 = vld [vmem:[%s1 + $0x958] sm:$0xff]
    %v326 = vld [vmem:[%s1 + $0x960] sm:$0xff]
    %v327 = vld [vmem:[%s1 + $0x968] sm:$0xff]
    %v328 = vld [vmem:[%s1 + $0x970] sm:$0xff]
    %v329 = vld [vmem:[%s1 + $0x978] sm:$0xff]
    %v330 = vld [vmem:[%s1 + $0x980] sm:$0xff]
    %v331 = vld [vmem:[%s1 + $0x988] sm:$0xff]
    %v332 = vld [vmem:[%s1 + $0x990] sm:$0xff]
    %v333 = vld [vmem:[%s1 + $0x998] sm:$0xff]
    %v334 = vld [vmem:[%s1 + $0x9a0] sm:$0xff]
    %v335 = vld [vmem:[%s1 + $0x9a8] sm:$0xff]
    %v336 = vld [vmem:[%s1 + $0x9b0] sm:$0xff]
    %v337 = vld [vmem:[%s1 + $0x9b8] sm:$0xff]
    %v338 = vld [vmem:[%s1 + $0x9c0] sm:$0xff]
    %v339 = vld [vmem:[%s1 + $0x9c8] sm:$0xff]
    %v340 = vld [vmem:[%s1 + $0x9d0] sm:$0xff]
    %v341 = vld [vmem:[%s1 + $0x9d8] sm:$0xff]
    %v342 = vld [vmem:[%s1 + $0x9e0] sm:$0xff]
    %v343 = vld [vmem:[%s1 + $0x9e8] sm:$0xff]
    %v344 = vld [vmem:[%s1 + $0x9f0] sm:$0xff]
    %v345 = vld [vmem:[%s1 + $0x9f8] sm:$0xff]
    %v346 = vld [vmem:[%s1 + $0xa00] sm:$0xff]
    %v347 = vld [vmem:[%s1 + $0xa08] sm:$0xff]
    %v348 = vld [vmem:[%s1 + $0xa10] sm:$0xff]
    %v349 = vld [vmem:[%s1 + $0xa18] sm:$0xff]
    %v350 = vld [vmem:[%s1 + $0xa20] sm:$0xff]
    %v351 = vld [vmem:[%s1 + $0xa28] sm:$0xff]
    %v352 = vld [vmem:[%s1 + $0xa30] sm:$0xff]
    %v353 = vld [vmem:[%s1 + $0xa38] sm:$0xff]
    %v354 = vld [vmem:[%s1 + $0xa40] sm:$0xff]
    %v355 = vld [vmem:[%s1 + $0xa48] sm:$0xff]
    %v356 = vld [vmem:[%s1 + $0xa50] sm:$0xff]
    %v357 = vld [vmem:[%s1 + $0xa58] sm:$0xff]
    %v358 = vld [vmem:[%s1 + $0xa60] sm:$0xff]
    %v359 = vld [vmem:[%s1 + $0xa68] sm:$0xff]
    %v360 = vld [vmem:[%s1 + $0xa70] sm:$0xff]
    %v361 = vld [vmem:[%s1 + $0xa78] sm:$0xff]
    %v362 = vld [vmem:[%s1 + $0xa80] sm:$0xff]
    %v363 = vld [vmem:[%s1 + $0xa88] sm:$0xff]
    %v364 = vld [vmem:[%s1 + $0xa90] sm:$0xff]
    %v365 = vld [vmem:[%s1 + $0xa98] sm:$0xff]
    %v366 = vld [vmem:[%s1 + $0xaa0] sm:$0xff]
    %v367 = vld [vmem:[%s1 + $0xaa8] sm:$0xff]
    %v368 = vld [vmem:[%s1 + $0xab0] sm:$0xff]
    %v369 = vld [vmem:[%s1 + $0xab8] sm:$0xff]
    %v370 = vld [vmem:[%s1 + $0xac0] sm:$0xff]
    %v371 = vld [vmem:[%s1 + $0xac8] sm:$0xff]
    %v372 = vld [vmem:[%s1 + $0xad0] sm:$0xff]
    %v373 = vld [vmem:[%s1 + $0xad8] sm:$0xff]
    %v374 = vld [vmem:[%s1 + $0xae0] sm:$0xff]
    %v375 = vld [vmem:[%s1 + $0xae8] sm:$0xff]
    %v376 = vld [vmem:[%s1 + $0xaf0] sm:$0xff]
    %v377 = vld [vmem:[%s1 + $0xaf8] sm:$0xff]
    %v378 = vld [vmem:[%s1 + $0xb00] sm:$0xff]
    %v379 = vld [vmem:[%s1 + $0xb08] sm:$0xff]
    %v380 = vld [vmem:[%s1 + $0xb10] sm:$0xff]
    %v381 = vld [vmem:[%s1 + $0xb18] sm:$0xff]
    %v382 = vld [vmem:[%s1 + $0xb20] sm:$0xff]
    %v383 = vld [vmem:[%s1 + $0xb28] sm:$0xff]
    %v384 = vld [vmem:[%s1 + $0xb30] sm:$0xff]
    %v385 = vld [vmem:[%s1 + $0xb38] sm:$0xff]
    %v386 = vld [vmem:[%s1 + $0xb40] sm:$0xff]
    %v387 = vld [vmem:[%s1 + $0xb48] sm:$0xff]
    %v388 = vld [vmem:[%s1 + $0xb50] sm:$0xff]
    %v389 = vld [vmem:[%s1 + $0xb58] sm:$0xff]
    %v390 = vld [vmem:[%s1 + $0xb60] sm:$0xff]
    %v391 = vld [vmem:[%s1 + $0xb68] sm:$0xff]
    %v392 = vld [vmem:[%s1 + $0xb70] sm:$0xff]
    %v393 = vld [vmem:[%s1 + $0xb78] sm:$0xff]
    %v394 = vld [vmem:[%s1 + $0xb80] sm:$0xff]
    %v395 = vld [vmem:[%s1 + $0xb88] sm:$0xff]
    %v396 = vld [vmem:[%s1 + $0xb90] sm:$0xff]
    %v397 = vld [vmem:[%s1 + $0xb98] sm:$0xff]
    %v398 = vld [vmem:[%s1 + $0xba0] sm:$0xff]
    %v399 = vld [vmem:[%s1 + $0xba8] sm:$0xff]
    %v400 = vld [vmem:[%s1 + $0xbb0] sm:$0xff]
    %v401 = vld [vmem:[%s1 + $0xbb8] sm:$0xff]
    %v402 = vld [vmem:[%s1 + $0xbc0] sm:$0xff]
    %v403 = vld [vmem:[%s1 + $0xbc8] sm:$0xff]
    %v404 = vld [vmem:[%s1 + $0xbd0] sm:$0xff]
    %v405 = vld [vmem:[%s1 + $0xbd8] sm:$0xff]
    %v406 = vld [vmem:[%s1 + $0xbe0] sm:$0xff]
    %v407 = vld [vmem:[%s1 + $0xbe8] sm:$0xff]
    %v408 = vld [vmem:[%s1 + $0xbf0] sm:$0xff]
    %v409 = vld [vmem:[%s1 + $0xbf8] sm:$0xff]
    %v410 = vld [vmem:[%s1 + $0xc00] sm:$0xff]
    %v411 = vld [vmem:[%s1 + $0xc08] sm:$0xff]
    %v412 = vld [vmem:[%s1 + $0xc10] sm:$0xff]
    %v413 = vld [vmem:[%s1 + $0xc18] sm:$0xff]
    %v414 = vld [vmem:[%s1 + $0xc20] sm:$0xff]
    %v415 = vld [vmem:[%s1 + $0xc28] sm:$0xff]
    %v416 = vld [vmem:[%s1 + $0xc30] sm:$0xff]
    %v417 = vld [vmem:[%s1 + $0xc38] sm:$0xff]
    %v418 = vld [vmem:[%s1 + $0xc40] sm:$0xff]
    %v419 = vld [vmem:[%s1 + $0xc48] sm:$0xff]
    %v420 = vld [vmem:[%s1 + $0xc50] sm:$0xff]
    %v421 = vld [vmem:[%s1 + $0xc58] sm:$0xff]
    %v422 = vld [vmem:[%s1 + $0xc60] sm:$0xff]
    %v423 = vld [vmem:[%s1 + $0xc68] sm:$0xff]
    %v424 = vld [vmem:[%s1 + $0xc70] sm:$0xff]
    %v425 = vld [vmem:[%s1 + $0xc78] sm:$0xff]
    %v426 = vld [vmem:[%s1 + $0xc80] sm:$0xff]
    %v427 = vld [vmem:[%s1 + $0xc88] sm:$0xff]
    %v428 = vld [vmem:[%s1 + $0xc90] sm:$0xff]
    %v429 = vld [vmem:[%s1 + $0xc98] sm:$0xff]
    %v430 = vld [vmem:[%s1 + $0xca0] sm:$0xff]
    %v431 = vld [vmem:[%s1 + $0xca8] sm:$0xff]
    %v432 = vld [vmem:[%s1 + $0xcb0] sm:$0xff]
    %v433 = vld [vmem:[%s1 + $0xcb8] sm:$0xff]
    %v434 = vld [vmem:[%s1 + $0xcc0] sm:$0xff]
    %v435 = vld [vmem:[%s1 + $0xcc8] sm:$0xff]
    %v436 = vld [vmem:[%s1 + $0xcd0] sm:$0xff]
    %v437 = vld [vmem:[%s1 + $0xcd8] sm:$0xff]
    %v438 = vld [vmem:[%s1 + $0xce0] sm:$0xff]
    %v439 = vld [vmem:[%s1 + $0xce8] sm:$0xff]
    %v440 = vld [vmem:[%s1 + $0xcf0] sm:$0xff]
    %v441 = vld [vmem:[%s1 + $0xcf8] sm:$0xff]
    %v442 = vld [vmem:[%s1 + $0xd00] sm:$0xff]
    %v443 = vld [vmem:[%s1 + $0xd08] sm:$0xff]
    %v444 = vld [vmem:[%s1 + $0xd10] sm:$0xff]
    %v445 = vld [vmem:[%s1 + $0xd18] sm:$0xff]
    %v446 = vld [vmem:[%s1 + $0xd20] sm:$0xff]
    %v447 = vld [vmem:[%s1 + $0xd28] sm:$0xff]
    %v448 = vld [vmem:[%s1 + $0xd30] sm:$0xff]
    %v449 = vld [vmem:[%s1 + $0xd38] sm:$0xff]
    %v450 = vld [vmem:[%s1 + $0xd40] sm:$0xff]
    %v451 = vld [vmem:[%s1 + $0xd48] sm:$0xff]
    %v452 = vld [vmem:[%s1 + $0xd50] sm:$0xff]
    %v453 = vld [vmem:[%s1 + $0xd58] sm:$0xff]
    %v454 = vld [vmem:[%s1 + $0xd60] sm:$0xff]
    %v455 = vld [vmem:[%s1 + $0xd68] sm:$0xff]
    %v456 = vld [vmem:[%s1 + $0xd70] sm:$0xff]
    %v457 = vld [vmem:[%s1 + $0xd78] sm:$0xff]
    %v458 = vld [vmem:[%s1 + $0xd80] sm:$0xff]
    %v459 = vld [vmem:[%s1 + $0xd88] sm:$0xff]
    %v460 = vld [vmem:[%s1 + $0xd90] sm:$0xff]
    %v461 = vld [vmem:[%s1 + $0xd98] sm:$0xff]
    %v462 = vld [vmem:[%s1 + $0xda0] sm:$0xff]
    %v463 = vld [vmem:[%s1 + $0xda8] sm:$0xff]
    %v464 = vld [vmem:[%s1 + $0xdb0] sm:$0xff]
    %v465 = vld [vmem:[%s1 + $0xdb8] sm:$0xff]
    %v466 = vld [vmem:[%s1 + $0xdc0] sm:$0xff]
    %v467 = vld [vmem:[%s1 + $0xdc8] sm:$0xff]
    %v468 = vld [vmem:[%s1 + $0xdd0] sm:$0xff]
    %v469 = vld [vmem:[%s1 + $0xdd8] sm:$0xff]
    %v470 = vld [vmem:[%s1 + $0xde0] sm:$0xff]
    %v471 = vld [vmem:[%s1 + $0xde8] sm:$0xff]
    %v472 = vld [vmem:[%s1 + $0xdf0] sm:$0xff]
    %v473 = vld [vmem:[%s1 + $0xdf8] sm:$0xff]
    %v474 = vld [vmem:[%s1 + $0xe00] sm:$0xff]
    %v475 = vld [vmem:[%s1 + $0xe08] sm:$0xff]
    %v476 = vld [vmem:[%s1 + $0xe10] sm:$0xff]
    %v477 = vld [vmem:[%s1 + $0xe18] sm:$0xff]
    %v478 = vld [vmem:[%s1 + $0xe20] sm:$0xff]
    %v479 = vld [vmem:[%s1 + $0xe28] sm:$0xff]
    %v480 = vld [vmem:[%s1 + $0xe30] sm:$0xff]
    %v481 = vld [vmem:[%s1 + $0xe38] sm:$0xff]
    %v482 = vld [vmem:[%s1 + $0xe40] sm:$0xff]
    %v483 = vld [vmem:[%s1 + $0xe48] sm:$0xff]
    %v484 = vld [vmem:[%s1 + $0xe50] sm:$0xff]
    %v485 = vld [vmem:[%s1 + $0xe58] sm:$0xff]
    %v486 = vld [vmem:[%s1 + $0xe60] sm:$0xff]
    %v487 = vld [vmem:[%s1 + $0xe68] sm:$0xff]
    %v488 = vld [vmem:[%s1 + $0xe70] sm:$0xff]
    %v489 = vld [vmem:[%s1 + $0xe78] sm:$0xff]
    %v490 = vld [vmem:[%s1 + $0xe80] sm:$0xff]
    %v491 = vld [vmem:[%s1 + $0xe88] sm:$0xff]
    %v492 = vld [vmem:[%s1 + $0xe90] sm:$0xff]
    %v493 = vld [vmem:[%s1 + $0xe98] sm:$0xff]
    %v494 = vld [vmem:[%s1 + $0xea0] sm:$0xff]
    %v495 = vld [vmem:[%s1 + $0xea8] sm:$0xff]
    %v496 = vld [vmem:[%s1 + $0xeb0] sm:$0xff]
    %v497 = vld [vmem:[%s1 + $0xeb8] sm:$0xff]
    %v498 = vld [vmem:[%s1 + $0xec0] sm:$0xff]
    %v499 = vld [vmem:[%s1 + $0xec8] sm:$0xff]
    %v500 = vld [vmem:[%s1 + $0xed0] sm:$0xff]
    %v501 = vld [vmem:[%s1 + $0xed8] sm:$0xff]
    %v502 = vld [vmem:[%s1 + $0xee0] sm:$0xff]
    %v503 = vld [vmem:[%s1 + $0xee8] sm:$0xff]
    %v504 = vld [vmem:[%s1 + $0xef0] sm:$0xff]
    %v505 = vld [vmem:[%s1 + $0xef8] sm:$0xff]
    %v506 = vld [vmem:[%s1 + $0xf00] sm:$0xff]
    %v507 = vld [vmem:[%s1 + $0xf08] sm:$0xff]
    %v508 = vld [vmem:[%s1 + $0xf10] sm:$0xff]
    %v509 = vld [vmem:[%s1 + $0xf18] sm:$0xff]
    %v510 = vld [vmem:[%s1 + $0xf20] sm:$0xff]
    %v511 = vld [vmem:[%s1 + $0xf28] sm:$0xff]
    %v512 = vld [vmem:[%s1 + $0xf30] sm:$0xff]
    %v513 = vld [vmem:[%s1 + $0xf38] sm:$0xff]
    %v514 = vld [vmem:[%s1 + $0xf40] sm:$0xff]
    %v515 = vld [vmem:[%s1 + $0xf48] sm:$0xff]
    %v516 = vld [vmem:[%s1 + $0xf50] sm:$0xff]
    %v517 = vld [vmem:[%s1 + $0xf58] sm:$0xff]
    %v518 = vld [vmem:[%s1 + $0xf60] sm:$0xff]
    %v519 = vld [vmem:[%s1 + $0xf68] sm:$0xff]
    %v520 = vld [vmem:[%s1 + $0xf70] sm:$0xff]
    %v521 = vld [vmem:[%s1 + $0xf78] sm:$0xff]
    %v522 = vld [vmem:[%s1 + $0xf80] sm:$0xff]
    %v523 = vld [vmem:[%s1 + $0xf88] sm:$0xff]
    %v524 = vld [vmem:[%s1 + $0xf90] sm:$0xff]
    %v525 = vld [vmem:[%s1 + $0xf98] sm:$0xff]
    %v526 = vld [vmem:[%s1 + $0xfa0] sm:$0xff]
    %v527 = vld [vmem:[%s1 + $0xfa8] sm:$0xff]
    %v528 = vld [vmem:[%s1 + $0xfb0] sm:$0xff]
    %v529 = vld [vmem:[%s1 + $0xfb8] sm:$0xff]
    %v530 = vld [vmem:[%s1 + $0xfc0] sm:$0xff]
    %v531 = vld [vmem:[%s1 + $0xfc8] sm:$0xff]
    %v532 = vld [vmem:[%s1 + $0xfd0] sm:$0xff]
    %v533 = vld [vmem:[%s1 + $0xfd8] sm:$0xff]
    %v534 = vld [vmem:[%s1 + $0xfe0] sm:$0xff]
    %v535 = vld [vmem:[%s1 + $0xfe8] sm:$0xff]
    %v536 = vld [vmem:[%s1 + $0xff0] sm:$0xff]
    %v537 = vld [vmem:[%s1 + $0xff8] sm:$0xff]
    %v538 = vld [vmem:[%s1 + $0x1000] sm:$0xff]
    %v539 = vld [vmem:[%s1 + $0x1008] sm:$0xff]
    %v540 = vld [vmem:[%s1 + $0x1010] sm:$0xff]
    %v541 = vld [vmem:[%s1 + $0x1018] sm:$0xff]
    %v542 = vld [vmem:[%s1 + $0x1020] sm:$0xff]
    %v543 = vld [vmem:[%s1 + $0x1028] sm:$0xff]
    %v544 = vld [vmem:[%s1 + $0x1030] sm:$0xff]
    %v545 = vld [vmem:[%s1 + $0x1038] sm:$0xff]
    %v546 = vld [vmem:[%s1 + $0x1040] sm:$0xff]
    %v547 = vld [vmem:[%s1 + $0x1048] sm:$0xff]
    %v548 = vld [vmem:[%s1 + $0x1050] sm:$0xff]
    %v549 = vld [vmem:[%s1 + $0x1058] sm:$0xff]
    %v550 = vld [vmem:[%s1 + $0x1060] sm:$0xff]
    %v551 = vld [vmem:[%s1 + $0x1068] sm:$0xff]
    %v552 = vld [vmem:[%s1 + $0x1070] sm:$0xff]
    %v553 = vld [vmem:[%s1 + $0x1078] sm:$0xff]
    %v554 = vld [vmem:[%s1 + $0x1080] sm:$0xff]
    %v555 = vld [vmem:[%s1 + $0x1088] sm:$0xff]
    %v556 = vld [vmem:[%s1 + $0x1090] sm:$0xff]
    %v557 = vld [vmem:[%s1 + $0x1098] sm:$0xff]
    %v558 = vld [vmem:[%s1 + $0x10a0] sm:$0xff]
    %v559 = vld [vmem:[%s1 + $0x10a8] sm:$0xff]
    %v560 = vld [vmem:[%s1 + $0x10b0] sm:$0xff]
    %v561 = vld [vmem:[%s1 + $0x10b8] sm:$0xff]
    %v562 = vld [vmem:[%s1 + $0x10c0] sm:$0xff]
    %v563 = vld [vmem:[%s1 + $0x10c8] sm:$0xff]
    %v564 = vld [vmem:[%s1 + $0x10d0] sm:$0xff]
    %v565 = vld [vmem:[%s1 + $0x10d8] sm:$0xff]
    %v566 = vld [vmem:[%s1 + $0x10e0] sm:$0xff]
    %v567 = vld [vmem:[%s1 + $0x10e8] sm:$0xff]
    %v568 = vld [vmem:[%s1 + $0x10f0] sm:$0xff]
    %v569 = vld [vmem:[%s1 + $0x10f8] sm:$0xff]
    %v570 = vld [vmem:[%s1 + $0x1100] sm:$0xff]
    %v571 = vld [vmem:[%s1 + $0x1108] sm:$0xff]
    %v572 = vld [vmem:[%s1 + $0x1110] sm:$0xff]
    %v573 = vld [vmem:[%s1 + $0x1118] sm:$0xff]
    %v574 = vld [vmem:[%s1 + $0x1120] sm:$0xff]
    %v575 = vld [vmem:[%s1 + $0x1128] sm:$0xff]
    %v576 = vld [vmem:[%s1 + $0x1130] sm:$0xff]
    %v577 = vld [vmem:[%s1 + $0x1138] sm:$0xff]
    %v578 = vld [vmem:[%s1 + $0x1140] sm:$0xff]
    %v579 = vld [vmem:[%s1 + $0x1148] sm:$0xff]
    %v580 = vld [vmem:[%s1 + $0x1150] sm:$0xff]
    %v581 = vld [vmem:[%s1 + $0x1158] sm:$0xff]
    %v582 = vld [vmem:[%s1 + $0x1160] sm:$0xff]
    %v583 = vld [vmem:[%s1 + $0x1168] sm:$0xff]
    %v584 = vld [vmem:[%s1 + $0x1170] sm:$0xff]
    %v585 = vld [vmem:[%s1 + $0x1178] sm:$0xff]
    %v586 = vld [vmem:[%s1 + $0x1180] sm:$0xff]
    %v587 = vld [vmem:[%s1 + $0x1188] sm:$0xff]
    %v588 = vld [vmem:[%s1 + $0x1190] sm:$0xff]
    %v589 = vld [vmem:[%s1 + $0x1198] sm:$0xff]
    %v590 = vld [vmem:[%s1 + $0x11a0] sm:$0xff]
    %v591 = vld [vmem:[%s1 + $0x11a8] sm:$0xff]
    %v592 = vld [vmem:[%s1 + $0x11b0] sm:$0xff]
    %v593 = vld [vmem:[%s1 + $0x11b8] sm:$0xff]
    %v594 = vld [vmem:[%s1 + $0x11c0] sm:$0xff]
    %v595 = vld [vmem:[%s1 + $0x11c8] sm:$0xff]
    %v596 = vld [vmem:[%s1 + $0x11d0] sm:$0xff]
    %v597 = vld [vmem:[%s1 + $0x11d8] sm:$0xff]
    %v598 = vld [vmem:[%s1 + $0x11e0] sm:$0xff]
    %v599 = vld [vmem:[%s1 + $0x11e8] sm:$0xff]
    %v600 = vld [vmem:[%s1 + $0x11f0] sm:$0xff]
    %v601 = vld [vmem:[%s1 + $0x11f8] sm:$0xff]
    %v602 = vld [vmem:[%s1 + $0x1200] sm:$0xff]
    %v603 = vld [vmem:[%s1 + $0x1208] sm:$0xff]
    %v604 = vld [vmem:[%s1 + $0x1210] sm:$0xff]
    %v605 = vld [vmem:[%s1 + $0x1218] sm:$0xff]
    %v606 = vld [vmem:[%s1 + $0x1220] sm:$0xff]
    %v607 = vld [vmem:[%s1 + $0x1228] sm:$0xff]
    %v608 = vld [vmem:[%s1 + $0x1230] sm:$0xff]
    %v609 = vld [vmem:[%s1 + $0x1238] sm:$0xff]
    %v610 = vld [vmem:[%s1 + $0x1240] sm:$0xff]
    %v611 = vld [vmem:[%s1 + $0x1248] sm:$0xff]
    %v612 = vld [vmem:[%s1 + $0x1250] sm:$0xff]
    %v613 = vld [vmem:[%s1 + $0x1258] sm:$0xff]
    %v614 = vld [vmem:[%s1 + $0x1260] sm:$0xff]
    %v615 = vld [vmem:[%s1 + $0x1268] sm:$0xff]
    %v616 = vld [vmem:[%s1 + $0x1270] sm:$0xff]
    %v617 = vld [vmem:[%s1 + $0x1278] sm:$0xff]
    %v618 = vld [vmem:[%s1 + $0x1280] sm:$0xff]
    %v619 = vld [vmem:[%s1 + $0x1288] sm:$0xff]
    %v620 = vld [vmem:[%s1 + $0x1290] sm:$0xff]
    %v621 = vld [vmem:[%s1 + $0x1298] sm:$0xff]
    %v622 = vld [vmem:[%s1 + $0x12a0] sm:$0xff]
    %v623 = vld [vmem:[%s1 + $0x12a8] sm:$0xff]
    %v624 = vld [vmem:[%s1 + $0x12b0] sm:$0xff]
    %v625 = vld [vmem:[%s1 + $0x12b8] sm:$0xff]
    %v626 = vld [vmem:[%s1 + $0x12c0] sm:$0xff]
    %v627 = vld [vmem:[%s1 + $0x12c8] sm:$0xff]
    %v628 = vld [vmem:[%s1 + $0x12d0] sm:$0xff]
    %v629 = vld [vmem:[%s1 + $0x12d8] sm:$0xff]
    %v630 = vld [vmem:[%s1 + $0x12e0] sm:$0xff]
    %v631 = vld [vmem:[%s1 + $0x12e8] sm:$0xff]
    %v632 = vld [vmem:[%s1 + $0x12f0] sm:$0xff]
    %v633 = vld [vmem:[%s1 + $0x12f8] sm:$0xff]
    %v634 = vld [vmem:[%s1 + $0x1300] sm:$0xff]
    %v635 = vld [vmem:[%s1 + $0x1308] sm:$0xff]
    %v636 = vld [vmem:[%s1 + $0x1310] sm:$0xff]
    %v637 = vld [vmem:[%s1 + $0x1318] sm:$0xff]
    %v638 = vld [vmem:[%s1 + $0x1320] sm:$0xff]
    %v639 = vld [vmem:[%s1 + $0x1328] sm:$0xff]
    %v640 = vld [vmem:[%s1 + $0x1330] sm:$0xff]
    %v641 = vld [vmem:[%s1 + $0x1338] sm:$0xff]
    %v642 = vld [vmem:[%s1 + $0x1340] sm:$0xff]
    %v643 = vld [vmem:[%s1 + $0x1348] sm:$0xff]
    %v644 = vld [vmem:[%s1 + $0x1350] sm:$0xff]
    %v645 = vld [vmem:[%s1 + $0x1358] sm:$0xff]
    %v646 = vld [vmem:[%s1 + $0x1360] sm:$0xff]
    %v647 = vld [vmem:[%s1 + $0x1368] sm:$0xff]
    %v648 = vld [vmem:[%s1 + $0x1370] sm:$0xff]
    %v649 = vld [vmem:[%s1 + $0x1378] sm:$0xff]
    %v650 = vld [vmem:[%s1 + $0x1380] sm:$0xff]
    %v651 = vld [vmem:[%s1 + $0x1388] sm:$0xff]
    %v652 = vld [vmem:[%s1 + $0x1390] sm:$0xff]
    %v653 = vld [vmem:[%s1 + $0x1398] sm:$0xff]
    %v654 = vld [vmem:[%s1 + $0x13a0] sm:$0xff]
    %v655 = vld [vmem:[%s1 + $0x13a8] sm:$0xff]
    %v656 = vld [vmem:[%s1 + $0x13b0] sm:$0xff]
    %v657 = vld [vmem:[%s1 + $0x13b8] sm:$0xff]
    %v658 = vld [vmem:[%s1 + $0x13c0] sm:$0xff]
    %v659 = vld [vmem:[%s1 + $0x13c8] sm:$0xff]
    %v660 = vld [vmem:[%s1 + $0x13d0] sm:$0xff]
    %v661 = vld [vmem:[%s1 + $0x13d8] sm:$0xff]
    %v662 = vld [vmem:[%s1 + $0x13e0] sm:$0xff]
    %v663 = vld [vmem:[%s1 + $0x13e8] sm:$0xff]
    %v664 = vld [vmem:[%s1 + $0x13f0] sm:$0xff]
    %v665 = vld [vmem:[%s1 + $0x13f8] sm:$0xff]
    %v666 = vld [vmem:[%s1 + $0x1400] sm:$0xff]
    %v667 = vld [vmem:[%s1 + $0x1408] sm:$0xff]
    %v668 = vld [vmem:[%s1 + $0x1410] sm:$0xff]
    %v669 = vld [vmem:[%s1 + $0x1418] sm:$0xff]
    %v670 = vld [vmem:[%s1 + $0x1420] sm:$0xff]
    %v671 = vld [vmem:[%s1 + $0x1428] sm:$0xff]
    %v672 = vld [vmem:[%s1 + $0x1430] sm:$0xff]
    %v673 = vld [vmem:[%s1 + $0x1438] sm:$0xff]
    %v674 = vld [vmem:[%s1 + $0x1440] sm:$0xff]
    %v675 = vld [vmem:[%s1 + $0x1448] sm:$0xff]
    %v676 = vld [vmem:[%s1 + $0x1450] sm:$0xff]
    %v677 = vld [vmem:[%s1 + $0x1458] sm:$0xff]
    %v678 = vld [vmem:[%s1 + $0x1460] sm:$0xff]
    %v679 = vld [vmem:[%s1 + $0x1468] sm:$0xff]
    %v680 = vld [vmem:[%s1 + $0x1470] sm:$0xff]
    %v681 = vld [vmem:[%s1 + $0x1478] sm:$0xff]
    %v682 = vld [vmem:[%s1 + $0x1480] sm:$0xff]
    %v683 = vld [vmem:[%s1 + $0x1488] sm:$0xff]
    %v684 = vld [vmem:[%s1 + $0x1490] sm:$0xff]
    %v685 = vld [vmem:[%s1 + $0x1498] sm:$0xff]
    %v686 = vld [vmem:[%s1 + $0x14a0] sm:$0xff]
    %v687 = vld [vmem:[%s1 + $0x14a8] sm:$0xff]
    %v688 = vld [vmem:[%s1 + $0x14b0] sm:$0xff]
    %v689 = vld [vmem:[%s1 + $0x14b8] sm:$0xff]
    %v690 = vld [vmem:[%s1 + $0x14c0] sm:$0xff]
    %v691 = vld [vmem:[%s1 + $0x14c8] sm:$0xff]
    %v692 = vld [vmem:[%s1 + $0x14d0] sm:$0xff]
    %v693 = vld [vmem:[%s1 + $0x14d8] sm:$0xff]
    %v694 = vld [vmem:[%s1 + $0x14e0] sm:$0xff]
    %v695 = vld [vmem:[%s1 + $0x14e8] sm:$0xff]
    %v696 = vld [vmem:[%s1 + $0x14f0] sm:$0xff]
    %v697 = vld [vmem:[%s1 + $0x14f8] sm:$0xff]
    %v698 = vld [vmem:[%s1 + $0x1500] sm:$0xff]
    %v699 = vld [vmem:[%s1 + $0x1508] sm:$0xff]
    %v700 = vld [vmem:[%s1 + $0x1510] sm:$0xff]
    %v701 = vld [vmem:[%s1 + $0x1518] sm:$0xff]
    %v702 = vld [vmem:[%s1 + $0x1520] sm:$0xff]
    %v703 = vld [vmem:[%s1 + $0x1528] sm:$0xff]
    %v704 = vld [vmem:[%s1 + $0x1530] sm:$0xff]
    %v705 = vld [vmem:[%s1 + $0x1538] sm:$0xff]
    %v706 = vld [vmem:[%s1 + $0x1540] sm:$0xff]
    %v707 = vld [vmem:[%s1 + $0x1548] sm:$0xff]
    %v708 = vld [vmem:[%s1 + $0x1550] sm:$0xff]
    %v709 = vld [vmem:[%s1 + $0x1558] sm:$0xff]
    %v710 = vld [vmem:[%s1 + $0x1560] sm:$0xff]
    %v711 = vld [vmem:[%s1 + $0x1568] sm:$0xff]
    %v712 = vld [vmem:[%s1 + $0x1570] sm:$0xff]
    %v713 = vld [vmem:[%s1 + $0x1578] sm:$0xff]
    %v714 = vld [vmem:[%s1 + $0x1580] sm:$0xff]
    %v715 = vld [vmem:[%s1 + $0x1588] sm:$0xff]
    %v716 = vld [vmem:[%s1 + $0x1590] sm:$0xff]
    %v717 = vld [vmem:[%s1 + $0x1598] sm:$0xff]
    %v718 = vld [vmem:[%s1 + $0x15a0] sm:$0xff]
    %v719 = vld [vmem:[%s1 + $0x15a8] sm:$0xff]
    %v720 = vld [vmem:[%s1 + $0x15b0] sm:$0xff]
    %v721 = vld [vmem:[%s1 + $0x15b8] sm:$0xff]
    %v722 = vld [vmem:[%s1 + $0x15c0] sm:$0xff]
    %v723 = vld [vmem:[%s1 + $0x15c8] sm:$0xff]
    %v724 = vld [vmem:[%s1 + $0x15d0] sm:$0xff]
    %v725 = vld [vmem:[%s1 + $0x15d8] sm:$0xff]
    %v726 = vld [vmem:[%s1 + $0x15e0] sm:$0xff]
    %v727 = vld [vmem:[%s1 + $0x15e8] sm:$0xff]
    %v728 = vld [vmem:[%s1 + $0x15f0] sm:$0xff]
    %v729 = vld [vmem:[%s1 + $0x15f8] sm:$0xff]
    %v730 = vld [vmem:[%s1 + $0x1600] sm:$0xff]
    %v731 = vld [vmem:[%s1 + $0x1608] sm:$0xff]
    %v732 = vld [vmem:[%s1 + $0x1610] sm:$0xff]
    %v733 = vld [vmem:[%s1 + $0x1618] sm:$0xff]
    %v734 = vld [vmem:[%s1 + $0x1620] sm:$0xff]
    %v735 = vld [vmem:[%s1 + $0x1628] sm:$0xff]
    %v736 = vld [vmem:[%s1 + $0x1630] sm:$0xff]
    %v737 = vld [vmem:[%s1 + $0x1638] sm:$0xff]
    %v738 = vld [vmem:[%s1 + $0x1640] sm:$0xff]
    %v739 = vld [vmem:[%s1 + $0x1648] sm:$0xff]
    %v740 = vld [vmem:[%s1 + $0x1650] sm:$0xff]
    %v741 = vld [vmem:[%s1 + $0x1658] sm:$0xff]
    %v742 = vld [vmem:[%s1 + $0x1660] sm:$0xff]
    %v743 = vld [vmem:[%s1 + $0x1668] sm:$0xff]
    %v744 = vld [vmem:[%s1 + $0x1670] sm:$0xff]
    %v745 = vld [vmem:[%s1 + $0x1678] sm:$0xff]
    %v746 = vld [vmem:[%s1 + $0x1680] sm:$0xff]
    %v747 = vld [vmem:[%s1 + $0x1688] sm:$0xff]
    %v748 = vld [vmem:[%s1 + $0x1690] sm:$0xff]
    %v749 = vld [vmem:[%s1 + $0x1698] sm:$0xff]
    %v750 = vld [vmem:[%s1 + $0x16a0] sm:$0xff]
    %v751 = vld [vmem:[%s1 + $0x16a8] sm:$0xff]
    %v752 = vld [vmem:[%s1 + $0x16b0] sm:$0xff]
    %v753 = vld [vmem:[%s1 + $0x16b8] sm:$0xff]
    %v754 = vld [vmem:[%s1 + $0x16c0] sm:$0xff]
    %v755 = vld [vmem:[%s1 + $0x16c8] sm:$0xff]
    %v756 = vld [vmem:[%s1 + $0x16d0] sm:$0xff]
    %v757 = vld [vmem:[%s1 + $0x16d8] sm:$0xff]
    %v758 = vld [vmem:[%s1 + $0x16e0] sm:$0xff]
    %v759 = vld [vmem:[%s1 + $0x16e8] sm:$0xff]
    %v760 = vld [vmem:[%s1 + $0x16f0] sm:$0xff]
    %v761 = vld [vmem:[%s1 + $0x16f8] sm:$0xff]
    %v762 = vld [vmem:[%s1 + $0x1700] sm:$0xff]
    %v763 = vld [vmem:[%s1 + $0x1708] sm:$0xff]
    %v764 = vld [vmem:[%s1 + $0x1710] sm:$0xff]
    %v765 = vld [vmem:[%s1 + $0x1718] sm:$0xff]
    %v766 = vld [vmem:[%s1 + $0x1720] sm:$0xff]
    %v767 = vld [vmem:[%s1 + $0x1728] sm:$0xff]
    %v768 = vld [vmem:[%s1 + $0x1730] sm:$0xff]
    %v769 = vld [vmem:[%s1 + $0x1738] sm:$0xff]
    %v770 = vld [vmem:[%s1 + $0x1740] sm:$0xff]
    %v771 = vld [vmem:[%s1 + $0x1748] sm:$0xff]
    %v772 = vld [vmem:[%s1 + $0x1750] sm:$0xff]
    %v773 = vld [vmem:[%s1 + $0x1758] sm:$0xff]
    %v774 = vld [vmem:[%s1 + $0x1760] sm:$0xff]
    %v775 = vld [vmem:[%s1 + $0x1768] sm:$0xff]
    %v776 = vld [vmem:[%s1 + $0x1770] sm:$0xff]
    %v777 = vld [vmem:[%s1 + $0x1778] sm:$0xff]
    %v778 = vld [vmem:[%s1 + $0x1780] sm:$0xff]
    %v779 = vld [vmem:[%s1 + $0x1788] sm:$0xff]
    %v780 = vld [vmem:[%s1 + $0x1790] sm:$0xff]
    %v781 = vld [vmem:[%s1 + $0x1798] sm:$0xff]
    %v782 = vld [vmem:[%s1 + $0x17a0] sm:$0xff]
    %v783 = vld [vmem:[%s1 + $0x17a8] sm:$0xff]
    %v784 = vld [vmem:[%s1 + $0x17b0] sm:$0xff]
    %v785 = vld [vmem:[%s1 + $0x17b8] sm:$0xff]
    %v786 = vld [vmem:[%s1 + $0x17c0] sm:$0xff]
    %v787 = vld [vmem:[%s1 + $0x17c8] sm:$0xff]
    %v788 = vld [vmem:[%s1 + $0x17d0] sm:$0xff]
    %v789 = vld [vmem:[%s1 + $0x17d8] sm:$0xff]
    %v790 = vld [vmem:[%s1 + $0x17e0] sm:$0xff]
    %v791 = vld [vmem:[%s1 + $0x17e8] sm:$0xff]
    %v792 = vld [vmem:[%s1 + $0x17f0] sm:$0xff]
    %v793 = vld [vmem:[%s1 + $0x17f8] sm:$0xff]
    %v794 = vld [vmem:[%s1 + $0x1800] sm:$0xff]
    %v795 = vld [vmem:[%s1 + $0x1808] sm:$0xff]
    %v796 = vld [vmem:[%s1 + $0x1810] sm:$0xff]
    %v797 = vld [vmem:[%s1 + $0x1818] sm:$0xff]
    %v798 = vld [vmem:[%s1 + $0x1820] sm:$0xff]
    %v799 = vld [vmem:[%s1 + $0x1828] sm:$0xff]
    %v800 = vld [vmem:[%s1 + $0x1830] sm:$0xff]
    %v801 = vld [vmem:[%s1 + $0x1838] sm:$0xff]
    %v802 = vld [vmem:[%s1 + $0x1840] sm:$0xff]
    %v803 = vld [vmem:[%s1 + $0x1848] sm:$0xff]
    %v804 = vld [vmem:[%s1 + $0x1850] sm:$0xff]
    %v805 = vld [vmem:[%s1 + $0x1858] sm:$0xff]
    %v806 = vld [vmem:[%s1 + $0x1860] sm:$0xff]
    %v807 = vld [vmem:[%s1 + $0x1868] sm:$0xff]
    %v808 = vld [vmem:[%s1 + $0x1870] sm:$0xff]
    %v809 = vld [vmem:[%s1 + $0x1878] sm:$0xff]
    %v810 = vld [vmem:[%s1 + $0x1880] sm:$0xff]
    %v811 = vld [vmem:[%s1 + $0x1888] sm:$0xff]
    %v812 = vld [vmem:[%s1 + $0x1890] sm:$0xff]
    %v813 = vld [vmem:[%s1 + $0x1898] sm:$0xff]
    %v814 = vld [vmem:[%s1 + $0x18a0] sm:$0xff]
    %v815 = vld [vmem:[%s1 + $0x18a8] sm:$0xff]
    %v816 = vld [vmem:[%s1 + $0x18b0] sm:$0xff]
    %v817 = vld [vmem:[%s1 + $0x18b8] sm:$0xff]
    %v818 = vld [vmem:[%s1 + $0x18c0] sm:$0xff]
    %v819 = vld [vmem:[%s1 + $0x18c8] sm:$0xff]
    %v820 = vld [vmem:[%s1 + $0x18d0] sm:$0xff]
    %v821 = vld [vmem:[%s1 + $0x18d8] sm:$0xff]
    %v822 = vld [vmem:[%s1 + $0x18e0] sm:$0xff]
    %v823 = vld [vmem:[%s1 + $0x18e8] sm:$0xff]
    %v824 = vld [vmem:[%s1 + $0x18f0] sm:$0xff]
    %v825 = vld [vmem:[%s1 + $0x18f8] sm:$0xff]
    %v826 = vld [vmem:[%s2] sm:$0xf]
    %v828 = vlaneseq
    %v829 = vshrl.u32 %v828, 7
    %v830 = vsub.s32 0, %v829
    %v831 = vrot.slane %v826, %v830
    %v832 = vlaneseq
    %v833 = vshrl.u32 %v832, 7
    %v834 = vsub.s32 1, %v833
    %v835 = vrot.slane %v826, %v834
    %v836 = vlaneseq
    %v837 = vshrl.u32 %v836, 7
    %v838 = vsub.s32 2, %v837
    %v839 = vrot.slane %v826, %v838
    %v840 = vlaneseq
    %v841 = vshrl.u32 %v840, 7
    %v842 = vsub.s32 3, %v841
    %v843 = vrot.slane %v826, %v842
    %v852 = vcombine.high %v22, %v22
    %v854 = vunpack.c.l.s4 1966171168
    %v855 = vunpack.c.0.s8 %v854
    %v856 = vlaneseq
    %v857 = vshrl.u32 %v856, 7
    %v858 = vsub.s32 %v855, %v857
    %v859 = vrot.slane %v22, %v858
    %v861 = vunpack.c.l.s4 1966171168
    %v862 = vunpack.c.0.s8 %v861
    %v863 = vlaneseq
    %v864 = vshrl.u32 %v863, 7
    %v865 = vsub.s32 %v862, %v864
    %v866 = vrot.slane %v852, %v865
    %v867 = vcombine.high %v859, %v859
    %v868 = vcombine.high %v866, %v866
    %v870 = vunpack.c.l.s4 1966171168
    %v871 = vunpack.c.0.s8 %v870
    %v872 = vlaneseq
    %v873 = vshrl.u32 %v872, 7
    %v874 = vsub.s32 %v871, %v873
    %v875 = vrot.slane %v859, %v874
    %v877 = vunpack.c.l.s4 1966171168
    %v878 = vunpack.c.0.s8 %v877
    %v879 = vlaneseq
    %v880 = vshrl.u32 %v879, 7
    %v881 = vsub.s32 %v878, %v880
    %v882 = vrot.slane %v866, %v881
    %v884 = vunpack.c.l.s4 1966171168
    %v885 = vunpack.c.0.s8 %v884
    %v886 = vlaneseq
    %v887 = vshrl.u32 %v886, 7
    %v888 = vsub.s32 %v885, %v887
    %v889 = vrot.slane %v867, %v888
    %v891 = vunpack.c.l.s4 1966171168
    %v892 = vunpack.c.0.s8 %v891
    %v893 = vlaneseq
    %v894 = vshrl.u32 %v893, 7
    %v895 = vsub.s32 %v892, %v894
    %v896 = vrot.slane %v868, %v895
    %v897 = vcombine.high %v875, %v875
    %v898 = vcombine.high %v882, %v882
    %v899 = vcombine.high %v889, %v889
    %v900 = vcombine.high %v896, %v896
    %v901 = vcombine.high %v23, %v23
    %v903 = vunpack.c.l.s4 1966171168
    %v904 = vunpack.c.0.s8 %v903
    %v905 = vlaneseq
    %v906 = vshrl.u32 %v905, 7
    %v907 = vsub.s32 %v904, %v906
    %v908 = vrot.slane %v23, %v907
    %v910 = vunpack.c.l.s4 1966171168
    %v911 = vunpack.c.0.s8 %v910
    %v912 = vlaneseq
    %v913 = vshrl.u32 %v912, 7
    %v914 = vsub.s32 %v911, %v913
    %v915 = vrot.slane %v901, %v914
    %v916 = vcombine.high %v908, %v908
    %v917 = vcombine.high %v915, %v915
    %v919 = vunpack.c.l.s4 1966171168
    %v920 = vunpack.c.0.s8 %v919
    %v921 = vlaneseq
    %v922 = vshrl.u32 %v921, 7
    %v923 = vsub.s32 %v920, %v922
    %v924 = vrot.slane %v908, %v923
    %v926 = vunpack.c.l.s4 1966171168
    %v927 = vunpack.c.0.s8 %v926
    %v928 = vlaneseq
    %v929 = vshrl.u32 %v928, 7
    %v930 = vsub.s32 %v927, %v929
    %v931 = vrot.slane %v915, %v930
    %v933 = vunpack.c.l.s4 1966171168
    %v934 = vunpack.c.0.s8 %v933
    %v935 = vlaneseq
    %v936 = vshrl.u32 %v935, 7
    %v937 = vsub.s32 %v934, %v936
    %v938 = vrot.slane %v916, %v937
    %v940 = vunpack.c.l.s4 1966171168
    %v941 = vunpack.c.0.s8 %v940
    %v942 = vlaneseq
    %v943 = vshrl.u32 %v942, 7
    %v944 = vsub.s32 %v941, %v943
    %v945 = vrot.slane %v917, %v944
    %v946 = vcombine.high %v924, %v924
    %v947 = vcombine.high %v931, %v931
    %v948 = vcombine.high %v938, %v938
    %v949 = vcombine.high %v945, %v945
    %v950 = vcombine.high %v24, %v24
    %v952 = vunpack.c.l.s4 1966171168
    %v953 = vunpack.c.0.s8 %v952
    %v954 = vlaneseq
    %v955 = vshrl.u32 %v954, 7
    %v956 = vsub.s32 %v953, %v955
    %v957 = vrot.slane %v24, %v956
    %v959 = vunpack.c.l.s4 1966171168
    %v960 = vunpack.c.0.s8 %v959
    %v961 = vlaneseq
    %v962 = vshrl.u32 %v961, 7
    %v963 = vsub.s32 %v960, %v962
    %v964 = vrot.slane %v950, %v963
    %v965 = vcombine.high %v957, %v957
    %v966 = vcombine.high %v964, %v964
    %v968 = vunpack.c.l.s4 1966171168
    %v969 = vunpack.c.0.s8 %v968
    %v970 = vlaneseq
    %v971 = vshrl.u32 %v970, 7
    %v972 = vsub.s32 %v969, %v971
    %v973 = vrot.slane %v957, %v972
    %v975 = vunpack.c.l.s4 1966171168
    %v976 = vunpack.c.0.s8 %v975
    %v977 = vlaneseq
    %v978 = vshrl.u32 %v977, 7
    %v979 = vsub.s32 %v976, %v978
    %v980 = vrot.slane %v964, %v979
    %v982 = vunpack.c.l.s4 1966171168
    %v983 = vunpack.c.0.s8 %v982
    %v984 = vlaneseq
    %v985 = vshrl.u32 %v984, 7
    %v986 = vsub.s32 %v983, %v985
    %v987 = vrot.slane %v965, %v986
    %v989 = vunpack.c.l.s4 1966171168
    %v990 = vunpack.c.0.s8 %v989
    %v991 = vlaneseq
    %v992 = vshrl.u32 %v991, 7
    %v993 = vsub.s32 %v990, %v992
    %v994 = vrot.slane %v966, %v993
    %v995 = vcombine.high %v973, %v973
    %v996 = vcombine.high %v980, %v980
    %v997 = vcombine.high %v987, %v987
    %v998 = vcombine.high %v994, %v994
    %v1000 = vunpack.c.l.s4 1966171168
    %v1001 = vunpack.c.0.s8 %v1000
    %v1002 = vlaneseq
    %v1003 = vshrl.u32 %v1002, 7
    %v1004 = vsub.s32 %v1001, %v1003
    %v1005 = vrot.slane %v25, %v1004
    %v1007 = vunpack.c.l.s4 1966171168
    %v1008 = vunpack.c.0.s8 %v1007
    %v1009 = vlaneseq
    %v1010 = vshrl.u32 %v1009, 7
    %v1011 = vsub.s32 %v1008, %v1010
    %v1012 = vrot.slane %v1005, %v1011
    %v1838 = vunpack.c.l.b16 %v26
    %v1839 = vunpack.c.h.b16 %v26
    %v1840 = vunpack.c.l.b16 %v27
    %v1841 = vunpack.c.h.b16 %v27
    %v1842 = vunpack.c.l.b16 %v28
    %v1843 = vunpack.c.h.b16 %v28
    %v1844 = vunpack.c.l.b16 %v29
    %v1845 = vunpack.c.h.b16 %v29
    %v1846 = vunpack.c.l.b16 %v30
    %v1847 = vunpack.c.h.b16 %v30
    %v1848 = vunpack.c.l.b16 %v31
    %v1849 = vunpack.c.h.b16 %v31
    %v1850 = vunpack.c.l.b16 %v32
    %v1851 = vunpack.c.h.b16 %v32
    %v1852 = vunpack.c.l.b16 %v33
    %v1853 = vunpack.c.h.b16 %v33
    %v1854 = vunpack.c.l.b16 %v34
    %v1855 = vunpack.c.h.b16 %v34
    %v1856 = vunpack.c.l.b16 %v35
    %v1857 = vunpack.c.h.b16 %v35
    %v1858 = vunpack.c.l.b16 %v36
    %v1859 = vunpack.c.h.b16 %v36
    %v1860 = vunpack.c.l.b16 %v37
    %v1861 = vunpack.c.h.b16 %v37
    %v1862 = vunpack.c.l.b16 %v38
    %v1863 = vunpack.c.h.b16 %v38
    %v1864 = vunpack.c.l.b16 %v39
    %v1865 = vunpack.c.h.b16 %v39
    %v1866 = vunpack.c.l.b16 %v40
    %v1867 = vunpack.c.h.b16 %v40
    %v1868 = vunpack.c.l.b16 %v41
    %v1869 = vunpack.c.h.b16 %v41
    %v1870 = vunpack.c.l.b16 %v42
    %v1871 = vunpack.c.h.b16 %v42
    %v1872 = vunpack.c.l.b16 %v43
    %v1873 = vunpack.c.h.b16 %v43
    %v1874 = vunpack.c.l.b16 %v44
    %v1875 = vunpack.c.h.b16 %v44
    %v1876 = vunpack.c.l.b16 %v45
    %v1877 = vunpack.c.h.b16 %v45
    %v1878 = vunpack.c.l.b16 %v46
    %v1879 = vunpack.c.h.b16 %v46
    %v1880 = vunpack.c.l.b16 %v47
    %v1881 = vunpack.c.h.b16 %v47
    %v1882 = vunpack.c.l.b16 %v48
    %v1883 = vunpack.c.h.b16 %v48
    %v1884 = vunpack.c.l.b16 %v49
    %v1885 = vunpack.c.h.b16 %v49
    %v1886 = vunpack.c.l.b16 %v50
    %v1887 = vunpack.c.h.b16 %v50
    %v1888 = vunpack.c.l.b16 %v51
    %v1889 = vunpack.c.h.b16 %v51
    %v1890 = vunpack.c.l.b16 %v52
    %v1891 = vunpack.c.h.b16 %v52
    %v1892 = vunpack.c.l.b16 %v53
    %v1893 = vunpack.c.h.b16 %v53
    %v1894 = vunpack.c.l.b16 %v54
    %v1895 = vunpack.c.h.b16 %v54
    %v1896 = vunpack.c.l.b16 %v55
    %v1897 = vunpack.c.h.b16 %v55
    %v1898 = vunpack.c.l.b16 %v56
    %v1899 = vunpack.c.h.b16 %v56
    %v1900 = vunpack.c.l.b16 %v57
    %v1901 = vunpack.c.h.b16 %v57
    %v1902 = vunpack.c.l.b16 %v58
    %v1903 = vunpack.c.h.b16 %v58
    %v1904 = vunpack.c.l.b16 %v59
    %v1905 = vunpack.c.h.b16 %v59
    %v1906 = vunpack.c.l.b16 %v60
    %v1907 = vunpack.c.h.b16 %v60
    %v1908 = vunpack.c.l.b16 %v61
    %v1909 = vunpack.c.h.b16 %v61
    %v1910 = vunpack.c.l.b16 %v62
    %v1911 = vunpack.c.h.b16 %v62
    %v1912 = vunpack.c.l.b16 %v63
    %v1913 = vunpack.c.h.b16 %v63
    %v1914 = vunpack.c.l.b16 %v64
    %v1915 = vunpack.c.h.b16 %v64
    %v1916 = vunpack.c.l.b16 %v65
    %v1917 = vunpack.c.h.b16 %v65
    %v1918 = vunpack.c.l.b16 %v66
    %v1919 = vunpack.c.h.b16 %v66
    %v1920 = vunpack.c.l.b16 %v67
    %v1921 = vunpack.c.h.b16 %v67
    %v1922 = vunpack.c.l.b16 %v68
    %v1923 = vunpack.c.h.b16 %v68
    %v1924 = vunpack.c.l.b16 %v69
    %v1925 = vunpack.c.h.b16 %v69
    %v1926 = vunpack.c.l.b16 %v70
    %v1927 = vunpack.c.h.b16 %v70
    %v1928 = vunpack.c.l.b16 %v71
    %v1929 = vunpack.c.h.b16 %v71
    %v1930 = vunpack.c.l.b16 %v72
    %v1931 = vunpack.c.h.b16 %v72
    %v1932 = vunpack.c.l.b16 %v73
    %v1933 = vunpack.c.h.b16 %v73
    %v1934 = vunpack.c.l.b16 %v74
    %v1935 = vunpack.c.h.b16 %v74
    %v1936 = vunpack.c.l.b16 %v75
    %v1937 = vunpack.c.h.b16 %v75
    %v1938 = vunpack.c.l.b16 %v76
    %v1939 = vunpack.c.h.b16 %v76
    %v1940 = vunpack.c.l.b16 %v77
    %v1941 = vunpack.c.h.b16 %v77
    %v1942 = vunpack.c.l.b16 %v78
    %v1943 = vunpack.c.h.b16 %v78
    %v1944 = vunpack.c.l.b16 %v79
    %v1945 = vunpack.c.h.b16 %v79
    %v1946 = vunpack.c.l.b16 %v80
    %v1947 = vunpack.c.h.b16 %v80
    %v1948 = vunpack.c.l.b16 %v81
    %v1949 = vunpack.c.h.b16 %v81
    %v1950 = vunpack.c.l.b16 %v82
    %v1951 = vunpack.c.h.b16 %v82
    %v1952 = vunpack.c.l.b16 %v83
    %v1953 = vunpack.c.h.b16 %v83
    %v1954 = vunpack.c.l.b16 %v84
    %v1955 = vunpack.c.h.b16 %v84
    %v1956 = vunpack.c.l.b16 %v85
    %v1957 = vunpack.c.h.b16 %v85
    %v1958 = vunpack.c.l.b16 %v86
    %v1959 = vunpack.c.h.b16 %v86
    %v1960 = vunpack.c.l.b16 %v87
    %v1961 = vunpack.c.h.b16 %v87
    %v1962 = vunpack.c.l.b16 %v88
    %v1963 = vunpack.c.h.b16 %v88
    %v1964 = vunpack.c.l.b16 %v89
    %v1965 = vunpack.c.h.b16 %v89
    %v1966 = vunpack.c.l.b16 %v90
    %v1967 = vunpack.c.h.b16 %v90
    %v1968 = vunpack.c.l.b16 %v91
    %v1969 = vunpack.c.h.b16 %v91
    %v1970 = vunpack.c.l.b16 %v92
    %v1971 = vunpack.c.h.b16 %v92
    %v1972 = vunpack.c.l.b16 %v93
    %v1973 = vunpack.c.h.b16 %v93
    %v1974 = vunpack.c.l.b16 %v94
    %v1975 = vunpack.c.h.b16 %v94
    %v1976 = vunpack.c.l.b16 %v95
    %v1977 = vunpack.c.h.b16 %v95
    %v1978 = vunpack.c.l.b16 %v96
    %v1979 = vunpack.c.h.b16 %v96
    %v1980 = vunpack.c.l.b16 %v97
    %v1981 = vunpack.c.h.b16 %v97
    %v1982 = vunpack.c.l.b16 %v98
    %v1983 = vunpack.c.h.b16 %v98
    %v1984 = vunpack.c.l.b16 %v99
    %v1985 = vunpack.c.h.b16 %v99
    %v1986 = vunpack.c.l.b16 %v100
    %v1987 = vunpack.c.h.b16 %v100
    %v1988 = vunpack.c.l.b16 %v101
    %v1989 = vunpack.c.h.b16 %v101
    %v1990 = vunpack.c.l.b16 %v102
    %v1991 = vunpack.c.h.b16 %v102
    %v1992 = vunpack.c.l.b16 %v103
    %v1993 = vunpack.c.h.b16 %v103
    %v1994 = vunpack.c.l.b16 %v104
    %v1995 = vunpack.c.h.b16 %v104
    %v1996 = vunpack.c.l.b16 %v105
    %v1997 = vunpack.c.h.b16 %v105
    %v1998 = vunpack.c.l.b16 %v106
    %v1999 = vunpack.c.h.b16 %v106
    %v2000 = vunpack.c.l.b16 %v107
    %v2001 = vunpack.c.h.b16 %v107
    %v2002 = vunpack.c.l.b16 %v108
    %v2003 = vunpack.c.h.b16 %v108
    %v2004 = vunpack.c.l.b16 %v109
    %v2005 = vunpack.c.h.b16 %v109
    %v2006 = vunpack.c.l.b16 %v110
    %v2007 = vunpack.c.h.b16 %v110
    %v2008 = vunpack.c.l.b16 %v111
    %v2009 = vunpack.c.h.b16 %v111
    %v2010 = vunpack.c.l.b16 %v112
    %v2011 = vunpack.c.h.b16 %v112
    %v2012 = vunpack.c.l.b16 %v113
    %v2013 = vunpack.c.h.b16 %v113
    %v2014 = vunpack.c.l.b16 %v114
    %v2015 = vunpack.c.h.b16 %v114
    %v2016 = vunpack.c.l.b16 %v115
    %v2017 = vunpack.c.h.b16 %v115
    %v2018 = vunpack.c.l.b16 %v116
    %v2019 = vunpack.c.h.b16 %v116
    %v2020 = vunpack.c.l.b16 %v117
    %v2021 = vunpack.c.h.b16 %v117
    %v2022 = vunpack.c.l.b16 %v118
    %v2023 = vunpack.c.h.b16 %v118
    %v2024 = vunpack.c.l.b16 %v119
    %v2025 = vunpack.c.h.b16 %v119
    %v2026 = vunpack.c.l.b16 %v120
    %v2027 = vunpack.c.h.b16 %v120
    %v2028 = vunpack.c.l.b16 %v121
    %v2029 = vunpack.c.h.b16 %v121
    %v2030 = vunpack.c.l.b16 %v122
    %v2031 = vunpack.c.h.b16 %v122
    %v2032 = vunpack.c.l.b16 %v123
    %v2033 = vunpack.c.h.b16 %v123
    %v2034 = vunpack.c.l.b16 %v124
    %v2035 = vunpack.c.h.b16 %v124
    %v2036 = vunpack.c.l.b16 %v125
    %v2037 = vunpack.c.h.b16 %v125
    %v2038 = vunpack.c.l.b16 %v126
    %v2039 = vunpack.c.h.b16 %v126
    %v2040 = vunpack.c.l.b16 %v127
    %v2041 = vunpack.c.h.b16 %v127
    %v2042 = vunpack.c.l.b16 %v128
    %v2043 = vunpack.c.h.b16 %v128
    %v2044 = vunpack.c.l.b16 %v129
    %v2045 = vunpack.c.h.b16 %v129
    %v2046 = vunpack.c.l.b16 %v130
    %v2047 = vunpack.c.h.b16 %v130
    %v2048 = vunpack.c.l.b16 %v131
    %v2049 = vunpack.c.h.b16 %v131
    %v2050 = vunpack.c.l.b16 %v132
    %v2051 = vunpack.c.h.b16 %v132
    %v2052 = vunpack.c.l.b16 %v133
    %v2053 = vunpack.c.h.b16 %v133
    %v2054 = vunpack.c.l.b16 %v134
    %v2055 = vunpack.c.h.b16 %v134
    %v2056 = vunpack.c.l.b16 %v135
    %v2057 = vunpack.c.h.b16 %v135
    %v2058 = vunpack.c.l.b16 %v136
    %v2059 = vunpack.c.h.b16 %v136
    %v2060 = vunpack.c.l.b16 %v137
    %v2061 = vunpack.c.h.b16 %v137
    %v2062 = vunpack.c.l.b16 %v138
    %v2063 = vunpack.c.h.b16 %v138
    %v2064 = vunpack.c.l.b16 %v139
    %v2065 = vunpack.c.h.b16 %v139
    %v2066 = vunpack.c.l.b16 %v140
    %v2067 = vunpack.c.h.b16 %v140
    %v2068 = vunpack.c.l.b16 %v141
    %v2069 = vunpack.c.h.b16 %v141
    %v2070 = vunpack.c.l.b16 %v142
    %v2071 = vunpack.c.h.b16 %v142
    %v2072 = vunpack.c.l.b16 %v143
    %v2073 = vunpack.c.h.b16 %v143
    %v2074 = vunpack.c.l.b16 %v144
    %v2075 = vunpack.c.h.b16 %v144
    %v2076 = vunpack.c.l.b16 %v145
    %v2077 = vunpack.c.h.b16 %v145
    %v2078 = vunpack.c.l.b16 %v146
    %v2079 = vunpack.c.h.b16 %v146
    %v2080 = vunpack.c.l.b16 %v147
    %v2081 = vunpack.c.h.b16 %v147
    %v2082 = vunpack.c.l.b16 %v148
    %v2083 = vunpack.c.h.b16 %v148
    %v2084 = vunpack.c.l.b16 %v149
    %v2085 = vunpack.c.h.b16 %v149
    %v2086 = vunpack.c.l.b16 %v150
    %v2087 = vunpack.c.h.b16 %v150
    %v2088 = vunpack.c.l.b16 %v151
    %v2089 = vunpack.c.h.b16 %v151
    %v2090 = vunpack.c.l.b16 %v152
    %v2091 = vunpack.c.h.b16 %v152
    %v2092 = vunpack.c.l.b16 %v153
    %v2093 = vunpack.c.h.b16 %v153
    %v2094 = vunpack.c.l.b16 %v154
    %v2095 = vunpack.c.h.b16 %v154
    %v2096 = vunpack.c.l.b16 %v155
    %v2097 = vunpack.c.h.b16 %v155
    %v2098 = vunpack.c.l.b16 %v156
    %v2099 = vunpack.c.h.b16 %v156
    %v2100 = vunpack.c.l.b16 %v157
    %v2101 = vunpack.c.h.b16 %v157
    %v2102 = vunpack.c.l.b16 %v158
    %v2103 = vunpack.c.h.b16 %v158
    %v2104 = vunpack.c.l.b16 %v159
    %v2105 = vunpack.c.h.b16 %v159
    %v2106 = vunpack.c.l.b16 %v160
    %v2107 = vunpack.c.h.b16 %v160
    %v2108 = vunpack.c.l.b16 %v161
    %v2109 = vunpack.c.h.b16 %v161
    %v2110 = vunpack.c.l.b16 %v162
    %v2111 = vunpack.c.h.b16 %v162
    %v2112 = vunpack.c.l.b16 %v163
    %v2113 = vunpack.c.h.b16 %v163
    %v2114 = vunpack.c.l.b16 %v164
    %v2115 = vunpack.c.h.b16 %v164
    %v2116 = vunpack.c.l.b16 %v165
    %v2117 = vunpack.c.h.b16 %v165
    %v2118 = vunpack.c.l.b16 %v166
    %v2119 = vunpack.c.h.b16 %v166
    %v2120 = vunpack.c.l.b16 %v167
    %v2121 = vunpack.c.h.b16 %v167
    %v2122 = vunpack.c.l.b16 %v168
    %v2123 = vunpack.c.h.b16 %v168
    %v2124 = vunpack.c.l.b16 %v169
    %v2125 = vunpack.c.h.b16 %v169
    %v2126 = vunpack.c.l.b16 %v170
    %v2127 = vunpack.c.h.b16 %v170
    %v2128 = vunpack.c.l.b16 %v171
    %v2129 = vunpack.c.h.b16 %v171
    %v2130 = vunpack.c.l.b16 %v172
    %v2131 = vunpack.c.h.b16 %v172
    %v2132 = vunpack.c.l.b16 %v173
    %v2133 = vunpack.c.h.b16 %v173
    %v2134 = vunpack.c.l.b16 %v174
    %v2135 = vunpack.c.h.b16 %v174
    %v2136 = vunpack.c.l.b16 %v175
    %v2137 = vunpack.c.h.b16 %v175
    %v2138 = vunpack.c.l.b16 %v176
    %v2139 = vunpack.c.h.b16 %v176
    %v2140 = vunpack.c.l.b16 %v177
    %v2141 = vunpack.c.h.b16 %v177
    %v2142 = vunpack.c.l.b16 %v178
    %v2143 = vunpack.c.h.b16 %v178
    %v2144 = vunpack.c.l.b16 %v179
    %v2145 = vunpack.c.h.b16 %v179
    %v2146 = vunpack.c.l.b16 %v180
    %v2147 = vunpack.c.h.b16 %v180
    %v2148 = vunpack.c.l.b16 %v181
    %v2149 = vunpack.c.h.b16 %v181
    %v2150 = vunpack.c.l.b16 %v182
    %v2151 = vunpack.c.h.b16 %v182
    %v2152 = vunpack.c.l.b16 %v183
    %v2153 = vunpack.c.h.b16 %v183
    %v2154 = vunpack.c.l.b16 %v184
    %v2155 = vunpack.c.h.b16 %v184
    %v2156 = vunpack.c.l.b16 %v185
    %v2157 = vunpack.c.h.b16 %v185
    %v2158 = vunpack.c.l.b16 %v186
    %v2159 = vunpack.c.h.b16 %v186
    %v2160 = vunpack.c.l.b16 %v187
    %v2161 = vunpack.c.h.b16 %v187
    %v2162 = vunpack.c.l.b16 %v188
    %v2163 = vunpack.c.h.b16 %v188
    %v2164 = vunpack.c.l.b16 %v189
    %v2165 = vunpack.c.h.b16 %v189
    %v2166 = vunpack.c.l.b16 %v190
    %v2167 = vunpack.c.h.b16 %v190
    %v2168 = vunpack.c.l.b16 %v191
    %v2169 = vunpack.c.h.b16 %v191
    %v2170 = vunpack.c.l.b16 %v192
    %v2171 = vunpack.c.h.b16 %v192
    %v2172 = vunpack.c.l.b16 %v193
    %v2173 = vunpack.c.h.b16 %v193
    %v2174 = vunpack.c.l.b16 %v194
    %v2175 = vunpack.c.h.b16 %v194
    %v2176 = vunpack.c.l.b16 %v195
    %v2177 = vunpack.c.h.b16 %v195
    %v2178 = vunpack.c.l.b16 %v196
    %v2179 = vunpack.c.h.b16 %v196
    %v2180 = vunpack.c.l.b16 %v197
    %v2181 = vunpack.c.h.b16 %v197
    %v2182 = vunpack.c.l.b16 %v198
    %v2183 = vunpack.c.h.b16 %v198
    %v2184 = vunpack.c.l.b16 %v199
    %v2185 = vunpack.c.h.b16 %v199
    %v2186 = vunpack.c.l.b16 %v200
    %v2187 = vunpack.c.h.b16 %v200
    %v2188 = vunpack.c.l.b16 %v201
    %v2189 = vunpack.c.h.b16 %v201
    %v2190 = vunpack.c.l.b16 %v202
    %v2191 = vunpack.c.h.b16 %v202
    %v2192 = vunpack.c.l.b16 %v203
    %v2193 = vunpack.c.h.b16 %v203
    %v2194 = vunpack.c.l.b16 %v204
    %v2195 = vunpack.c.h.b16 %v204
    %v2196 = vunpack.c.l.b16 %v205
    %v2197 = vunpack.c.h.b16 %v205
    %v2198 = vunpack.c.l.b16 %v206
    %v2199 = vunpack.c.h.b16 %v206
    %v2200 = vunpack.c.l.b16 %v207
    %v2201 = vunpack.c.h.b16 %v207
    %v2202 = vunpack.c.l.b16 %v208
    %v2203 = vunpack.c.h.b16 %v208
    %v2204 = vunpack.c.l.b16 %v209
    %v2205 = vunpack.c.h.b16 %v209
    %v2206 = vunpack.c.l.b16 %v210
    %v2207 = vunpack.c.h.b16 %v210
    %v2208 = vunpack.c.l.b16 %v211
    %v2209 = vunpack.c.h.b16 %v211
    %v2210 = vunpack.c.l.b16 %v212
    %v2211 = vunpack.c.h.b16 %v212
    %v2212 = vunpack.c.l.b16 %v213
    %v2213 = vunpack.c.h.b16 %v213
    %v2214 = vunpack.c.l.b16 %v214
    %v2215 = vunpack.c.h.b16 %v214
    %v2216 = vunpack.c.l.b16 %v215
    %v2217 = vunpack.c.h.b16 %v215
    %v2218 = vunpack.c.l.b16 %v216
    %v2219 = vunpack.c.h.b16 %v216
    %v2220 = vunpack.c.l.b16 %v217
    %v2221 = vunpack.c.h.b16 %v217
    %v2222 = vunpack.c.l.b16 %v218
    %v2223 = vunpack.c.h.b16 %v218
    %v2224 = vunpack.c.l.b16 %v219
    %v2225 = vunpack.c.h.b16 %v219
    %v2226 = vunpack.c.l.b16 %v220
    %v2227 = vunpack.c.h.b16 %v220
    %v2228 = vunpack.c.l.b16 %v221
    %v2229 = vunpack.c.h.b16 %v221
    %v2230 = vunpack.c.l.b16 %v222
    %v2231 = vunpack.c.h.b16 %v222
    %v2232 = vunpack.c.l.b16 %v223
    %v2233 = vunpack.c.h.b16 %v223
    %v2234 = vunpack.c.l.b16 %v224
    %v2235 = vunpack.c.h.b16 %v224
    %v2236 = vunpack.c.l.b16 %v225
    %v2237 = vunpack.c.h.b16 %v225
    %v2238 = vunpack.c.l.b16 %v226
    %v2239 = vunpack.c.h.b16 %v226
    %v2240 = vunpack.c.l.b16 %v227
    %v2241 = vunpack.c.h.b16 %v227
    %v2242 = vunpack.c.l.b16 %v228
    %v2243 = vunpack.c.h.b16 %v228
    %v2244 = vunpack.c.l.b16 %v229
    %v2245 = vunpack.c.h.b16 %v229
    %v2246 = vunpack.c.l.b16 %v230
    %v2247 = vunpack.c.h.b16 %v230
    %v2248 = vunpack.c.l.b16 %v231
    %v2249 = vunpack.c.h.b16 %v231
    %v2250 = vunpack.c.l.b16 %v232
    %v2251 = vunpack.c.h.b16 %v232
    %v2252 = vunpack.c.l.b16 %v233
    %v2253 = vunpack.c.h.b16 %v233
    %v2254 = vunpack.c.l.b16 %v234
    %v2255 = vunpack.c.h.b16 %v234
    %v2256 = vunpack.c.l.b16 %v235
    %v2257 = vunpack.c.h.b16 %v235
    %v2258 = vunpack.c.l.b16 %v236
    %v2259 = vunpack.c.h.b16 %v236
    %v2260 = vunpack.c.l.b16 %v237
    %v2261 = vunpack.c.h.b16 %v237
    %v2262 = vunpack.c.l.b16 %v238
    %v2263 = vunpack.c.h.b16 %v238
    %v2264 = vunpack.c.l.b16 %v239
    %v2265 = vunpack.c.h.b16 %v239
    %v2266 = vunpack.c.l.b16 %v240
    %v2267 = vunpack.c.h.b16 %v240
    %v2268 = vunpack.c.l.b16 %v241
    %v2269 = vunpack.c.h.b16 %v241
    %v2270 = vunpack.c.l.b16 %v242
    %v2271 = vunpack.c.h.b16 %v242
    %v2272 = vunpack.c.l.b16 %v243
    %v2273 = vunpack.c.h.b16 %v243
    %v2274 = vunpack.c.l.b16 %v244
    %v2275 = vunpack.c.h.b16 %v244
    %v2276 = vunpack.c.l.b16 %v245
    %v2277 = vunpack.c.h.b16 %v245
    %v2278 = vunpack.c.l.b16 %v246
    %v2279 = vunpack.c.h.b16 %v246
    %v2280 = vunpack.c.l.b16 %v247
    %v2281 = vunpack.c.h.b16 %v247
    %v2282 = vunpack.c.l.b16 %v248
    %v2283 = vunpack.c.h.b16 %v248
    %v2284 = vunpack.c.l.b16 %v249
    %v2285 = vunpack.c.h.b16 %v249
    %v2286 = vunpack.c.l.b16 %v250
    %v2287 = vunpack.c.h.b16 %v250
    %v2288 = vunpack.c.l.b16 %v251
    %v2289 = vunpack.c.h.b16 %v251
    %v2290 = vunpack.c.l.b16 %v252
    %v2291 = vunpack.c.h.b16 %v252
    %v2292 = vunpack.c.l.b16 %v253
    %v2293 = vunpack.c.h.b16 %v253
    %v2294 = vunpack.c.l.b16 %v254
    %v2295 = vunpack.c.h.b16 %v254
    %v2296 = vunpack.c.l.b16 %v255
    %v2297 = vunpack.c.h.b16 %v255
    %v2298 = vunpack.c.l.b16 %v256
    %v2299 = vunpack.c.h.b16 %v256
    %v2300 = vunpack.c.l.b16 %v257
    %v2301 = vunpack.c.h.b16 %v257
    %v2302 = vunpack.c.l.b16 %v258
    %v2303 = vunpack.c.h.b16 %v258
    %v2304 = vunpack.c.l.b16 %v259
    %v2305 = vunpack.c.h.b16 %v259
    %v2306 = vunpack.c.l.b16 %v260
    %v2307 = vunpack.c.h.b16 %v260
    %v2308 = vunpack.c.l.b16 %v261
    %v2309 = vunpack.c.h.b16 %v261
    %v2310 = vunpack.c.l.b16 %v262
    %v2311 = vunpack.c.h.b16 %v262
    %v2312 = vunpack.c.l.b16 %v263
    %v2313 = vunpack.c.h.b16 %v263
    %v2314 = vunpack.c.l.b16 %v264
    %v2315 = vunpack.c.h.b16 %v264
    %v2316 = vunpack.c.l.b16 %v265
    %v2317 = vunpack.c.h.b16 %v265
    %v2318 = vunpack.c.l.b16 %v266
    %v2319 = vunpack.c.h.b16 %v266
    %v2320 = vunpack.c.l.b16 %v267
    %v2321 = vunpack.c.h.b16 %v267
    %v2322 = vunpack.c.l.b16 %v268
    %v2323 = vunpack.c.h.b16 %v268
    %v2324 = vunpack.c.l.b16 %v269
    %v2325 = vunpack.c.h.b16 %v269
    %v2326 = vunpack.c.l.b16 %v270
    %v2327 = vunpack.c.h.b16 %v270
    %v2328 = vunpack.c.l.b16 %v271
    %v2329 = vunpack.c.h.b16 %v271
    %v2330 = vunpack.c.l.b16 %v272
    %v2331 = vunpack.c.h.b16 %v272
    %v2332 = vunpack.c.l.b16 %v273
    %v2333 = vunpack.c.h.b16 %v273
    %v2334 = vunpack.c.l.b16 %v274
    %v2335 = vunpack.c.h.b16 %v274
    %v2336 = vunpack.c.l.b16 %v275
    %v2337 = vunpack.c.h.b16 %v275
    %v2338 = vunpack.c.l.b16 %v276
    %v2339 = vunpack.c.h.b16 %v276
    %v2340 = vunpack.c.l.b16 %v277
    %v2341 = vunpack.c.h.b16 %v277
    %v2342 = vunpack.c.l.b16 %v278
    %v2343 = vunpack.c.h.b16 %v278
    %v2344 = vunpack.c.l.b16 %v279
    %v2345 = vunpack.c.h.b16 %v279
    %v2346 = vunpack.c.l.b16 %v280
    %v2347 = vunpack.c.h.b16 %v280
    %v2348 = vunpack.c.l.b16 %v281
    %v2349 = vunpack.c.h.b16 %v281
    %v2350 = vunpack.c.l.b16 %v282
    %v2351 = vunpack.c.h.b16 %v282
    %v2352 = vunpack.c.l.b16 %v283
    %v2353 = vunpack.c.h.b16 %v283
    %v2354 = vunpack.c.l.b16 %v284
    %v2355 = vunpack.c.h.b16 %v284
    %v2356 = vunpack.c.l.b16 %v285
    %v2357 = vunpack.c.h.b16 %v285
    %v2358 = vunpack.c.l.b16 %v286
    %v2359 = vunpack.c.h.b16 %v286
    %v2360 = vunpack.c.l.b16 %v287
    %v2361 = vunpack.c.h.b16 %v287
    %v2362 = vunpack.c.l.b16 %v288
    %v2363 = vunpack.c.h.b16 %v288
    %v2364 = vunpack.c.l.b16 %v289
    %v2365 = vunpack.c.h.b16 %v289
    %v2366 = vunpack.c.l.b16 %v290
    %v2367 = vunpack.c.h.b16 %v290
    %v2368 = vunpack.c.l.b16 %v291
    %v2369 = vunpack.c.h.b16 %v291
    %v2370 = vunpack.c.l.b16 %v292
    %v2371 = vunpack.c.h.b16 %v292
    %v2372 = vunpack.c.l.b16 %v293
    %v2373 = vunpack.c.h.b16 %v293
    %v2374 = vunpack.c.l.b16 %v294
    %v2375 = vunpack.c.h.b16 %v294
    %v2376 = vunpack.c.l.b16 %v295
    %v2377 = vunpack.c.h.b16 %v295
    %v2378 = vunpack.c.l.b16 %v296
    %v2379 = vunpack.c.h.b16 %v296
    %v2380 = vunpack.c.l.b16 %v297
    %v2381 = vunpack.c.h.b16 %v297
    %v2382 = vunpack.c.l.b16 %v298
    %v2383 = vunpack.c.h.b16 %v298
    %v2384 = vunpack.c.l.b16 %v299
    %v2385 = vunpack.c.h.b16 %v299
    %v2386 = vunpack.c.l.b16 %v300
    %v2387 = vunpack.c.h.b16 %v300
    %v2388 = vunpack.c.l.b16 %v301
    %v2389 = vunpack.c.h.b16 %v301
    %v2390 = vunpack.c.l.b16 %v302
    %v2391 = vunpack.c.h.b16 %v302
    %v2392 = vunpack.c.l.b16 %v303
    %v2393 = vunpack.c.h.b16 %v303
    %v2394 = vunpack.c.l.b16 %v304
    %v2395 = vunpack.c.h.b16 %v304
    %v2396 = vunpack.c.l.b16 %v305
    %v2397 = vunpack.c.h.b16 %v305
    %v2398 = vunpack.c.l.b16 %v306
    %v2399 = vunpack.c.h.b16 %v306
    %v2400 = vunpack.c.l.b16 %v307
    %v2401 = vunpack.c.h.b16 %v307
    %v2402 = vunpack.c.l.b16 %v308
    %v2403 = vunpack.c.h.b16 %v308
    %v2404 = vunpack.c.l.b16 %v309
    %v2405 = vunpack.c.h.b16 %v309
    %v2406 = vunpack.c.l.b16 %v310
    %v2407 = vunpack.c.h.b16 %v310
    %v2408 = vunpack.c.l.b16 %v311
    %v2409 = vunpack.c.h.b16 %v311
    %v2410 = vunpack.c.l.b16 %v312
    %v2411 = vunpack.c.h.b16 %v312
    %v2412 = vunpack.c.l.b16 %v313
    %v2413 = vunpack.c.h.b16 %v313
    %v2414 = vunpack.c.l.b16 %v314
    %v2415 = vunpack.c.h.b16 %v314
    %v2416 = vunpack.c.l.b16 %v315
    %v2417 = vunpack.c.h.b16 %v315
    %v2418 = vunpack.c.l.b16 %v316
    %v2419 = vunpack.c.h.b16 %v316
    %v2420 = vunpack.c.l.b16 %v317
    %v2421 = vunpack.c.h.b16 %v317
    %v2422 = vunpack.c.l.b16 %v318
    %v2423 = vunpack.c.h.b16 %v318
    %v2424 = vunpack.c.l.b16 %v319
    %v2425 = vunpack.c.h.b16 %v319
    %v2426 = vunpack.c.l.b16 %v320
    %v2427 = vunpack.c.h.b16 %v320
    %v2428 = vunpack.c.l.b16 %v321
    %v2429 = vunpack.c.h.b16 %v321
    %v2430 = vunpack.c.l.b16 %v322
    %v2431 = vunpack.c.h.b16 %v322
    %v2432 = vunpack.c.l.b16 %v323
    %v2433 = vunpack.c.h.b16 %v323
    %v2434 = vunpack.c.l.b16 %v324
    %v2435 = vunpack.c.h.b16 %v324
    %v2436 = vunpack.c.l.b16 %v325
    %v2437 = vunpack.c.h.b16 %v325
    %v2438 = vunpack.c.l.b16 %v326
    %v2439 = vunpack.c.h.b16 %v326
    %v2440 = vunpack.c.l.b16 %v327
    %v2441 = vunpack.c.h.b16 %v327
    %v2442 = vunpack.c.l.b16 %v328
    %v2443 = vunpack.c.h.b16 %v328
    %v2444 = vunpack.c.l.b16 %v329
    %v2445 = vunpack.c.h.b16 %v329
    %v2446 = vunpack.c.l.b16 %v330
    %v2447 = vunpack.c.h.b16 %v330
    %v2448 = vunpack.c.l.b16 %v331
    %v2449 = vunpack.c.h.b16 %v331
    %v2450 = vunpack.c.l.b16 %v332
    %v2451 = vunpack.c.h.b16 %v332
    %v2452 = vunpack.c.l.b16 %v333
    %v2453 = vunpack.c.h.b16 %v333
    %v2454 = vunpack.c.l.b16 %v334
    %v2455 = vunpack.c.h.b16 %v334
    %v2456 = vunpack.c.l.b16 %v335
    %v2457 = vunpack.c.h.b16 %v335
    %v2458 = vunpack.c.l.b16 %v336
    %v2459 = vunpack.c.h.b16 %v336
    %v2460 = vunpack.c.l.b16 %v337
    %v2461 = vunpack.c.h.b16 %v337
    %v2462 = vunpack.c.l.b16 %v338
    %v2463 = vunpack.c.h.b16 %v338
    %v2464 = vunpack.c.l.b16 %v339
    %v2465 = vunpack.c.h.b16 %v339
    %v2466 = vunpack.c.l.b16 %v340
    %v2467 = vunpack.c.h.b16 %v340
    %v2468 = vunpack.c.l.b16 %v341
    %v2469 = vunpack.c.h.b16 %v341
    %v2470 = vunpack.c.l.b16 %v342
    %v2471 = vunpack.c.h.b16 %v342
    %v2472 = vunpack.c.l.b16 %v343
    %v2473 = vunpack.c.h.b16 %v343
    %v2474 = vunpack.c.l.b16 %v344
    %v2475 = vunpack.c.h.b16 %v344
    %v2476 = vunpack.c.l.b16 %v345
    %v2477 = vunpack.c.h.b16 %v345
    %v2478 = vunpack.c.l.b16 %v346
    %v2479 = vunpack.c.h.b16 %v346
    %v2480 = vunpack.c.l.b16 %v347
    %v2481 = vunpack.c.h.b16 %v347
    %v2482 = vunpack.c.l.b16 %v348
    %v2483 = vunpack.c.h.b16 %v348
    %v2484 = vunpack.c.l.b16 %v349
    %v2485 = vunpack.c.h.b16 %v349
    %v2486 = vunpack.c.l.b16 %v350
    %v2487 = vunpack.c.h.b16 %v350
    %v2488 = vunpack.c.l.b16 %v351
    %v2489 = vunpack.c.h.b16 %v351
    %v2490 = vunpack.c.l.b16 %v352
    %v2491 = vunpack.c.h.b16 %v352
    %v2492 = vunpack.c.l.b16 %v353
    %v2493 = vunpack.c.h.b16 %v353
    %v2494 = vunpack.c.l.b16 %v354
    %v2495 = vunpack.c.h.b16 %v354
    %v2496 = vunpack.c.l.b16 %v355
    %v2497 = vunpack.c.h.b16 %v355
    %v2498 = vunpack.c.l.b16 %v356
    %v2499 = vunpack.c.h.b16 %v356
    %v2500 = vunpack.c.l.b16 %v357
    %v2501 = vunpack.c.h.b16 %v357
    %v2502 = vunpack.c.l.b16 %v358
    %v2503 = vunpack.c.h.b16 %v358
    %v2504 = vunpack.c.l.b16 %v359
    %v2505 = vunpack.c.h.b16 %v359
    %v2506 = vunpack.c.l.b16 %v360
    %v2507 = vunpack.c.h.b16 %v360
    %v2508 = vunpack.c.l.b16 %v361
    %v2509 = vunpack.c.h.b16 %v361
    %v2510 = vunpack.c.l.b16 %v362
    %v2511 = vunpack.c.h.b16 %v362
    %v2512 = vunpack.c.l.b16 %v363
    %v2513 = vunpack.c.h.b16 %v363
    %v2514 = vunpack.c.l.b16 %v364
    %v2515 = vunpack.c.h.b16 %v364
    %v2516 = vunpack.c.l.b16 %v365
    %v2517 = vunpack.c.h.b16 %v365
    %v2518 = vunpack.c.l.b16 %v366
    %v2519 = vunpack.c.h.b16 %v366
    %v2520 = vunpack.c.l.b16 %v367
    %v2521 = vunpack.c.h.b16 %v367
    %v2522 = vunpack.c.l.b16 %v368
    %v2523 = vunpack.c.h.b16 %v368
    %v2524 = vunpack.c.l.b16 %v369
    %v2525 = vunpack.c.h.b16 %v369
    %v2526 = vunpack.c.l.b16 %v370
    %v2527 = vunpack.c.h.b16 %v370
    %v2528 = vunpack.c.l.b16 %v371
    %v2529 = vunpack.c.h.b16 %v371
    %v2530 = vunpack.c.l.b16 %v372
    %v2531 = vunpack.c.h.b16 %v372
    %v2532 = vunpack.c.l.b16 %v373
    %v2533 = vunpack.c.h.b16 %v373
    %v2534 = vunpack.c.l.b16 %v374
    %v2535 = vunpack.c.h.b16 %v374
    %v2536 = vunpack.c.l.b16 %v375
    %v2537 = vunpack.c.h.b16 %v375
    %v2538 = vunpack.c.l.b16 %v376
    %v2539 = vunpack.c.h.b16 %v376
    %v2540 = vunpack.c.l.b16 %v377
    %v2541 = vunpack.c.h.b16 %v377
    %v2542 = vunpack.c.l.b16 %v378
    %v2543 = vunpack.c.h.b16 %v378
    %v2544 = vunpack.c.l.b16 %v379
    %v2545 = vunpack.c.h.b16 %v379
    %v2546 = vunpack.c.l.b16 %v380
    %v2547 = vunpack.c.h.b16 %v380
    %v2548 = vunpack.c.l.b16 %v381
    %v2549 = vunpack.c.h.b16 %v381
    %v2550 = vunpack.c.l.b16 %v382
    %v2551 = vunpack.c.h.b16 %v382
    %v2552 = vunpack.c.l.b16 %v383
    %v2553 = vunpack.c.h.b16 %v383
    %v2554 = vunpack.c.l.b16 %v384
    %v2555 = vunpack.c.h.b16 %v384
    %v2556 = vunpack.c.l.b16 %v385
    %v2557 = vunpack.c.h.b16 %v385
    %v2558 = vunpack.c.l.b16 %v386
    %v2559 = vunpack.c.h.b16 %v386
    %v2560 = vunpack.c.l.b16 %v387
    %v2561 = vunpack.c.h.b16 %v387
    %v2562 = vunpack.c.l.b16 %v388
    %v2563 = vunpack.c.h.b16 %v388
    %v2564 = vunpack.c.l.b16 %v389
    %v2565 = vunpack.c.h.b16 %v389
    %v2566 = vunpack.c.l.b16 %v390
    %v2567 = vunpack.c.h.b16 %v390
    %v2568 = vunpack.c.l.b16 %v391
    %v2569 = vunpack.c.h.b16 %v391
    %v2570 = vunpack.c.l.b16 %v392
    %v2571 = vunpack.c.h.b16 %v392
    %v2572 = vunpack.c.l.b16 %v393
    %v2573 = vunpack.c.h.b16 %v393
    %v2574 = vunpack.c.l.b16 %v394
    %v2575 = vunpack.c.h.b16 %v394
    %v2576 = vunpack.c.l.b16 %v395
    %v2577 = vunpack.c.h.b16 %v395
    %v2578 = vunpack.c.l.b16 %v396
    %v2579 = vunpack.c.h.b16 %v396
    %v2580 = vunpack.c.l.b16 %v397
    %v2581 = vunpack.c.h.b16 %v397
    %v2582 = vunpack.c.l.b16 %v398
    %v2583 = vunpack.c.h.b16 %v398
    %v2584 = vunpack.c.l.b16 %v399
    %v2585 = vunpack.c.h.b16 %v399
    %v2586 = vunpack.c.l.b16 %v400
    %v2587 = vunpack.c.h.b16 %v400
    %v2588 = vunpack.c.l.b16 %v401
    %v2589 = vunpack.c.h.b16 %v401
    %v2590 = vunpack.c.l.b16 %v402
    %v2591 = vunpack.c.h.b16 %v402
    %v2592 = vunpack.c.l.b16 %v403
    %v2593 = vunpack.c.h.b16 %v403
    %v2594 = vunpack.c.l.b16 %v404
    %v2595 = vunpack.c.h.b16 %v404
    %v2596 = vunpack.c.l.b16 %v405
    %v2597 = vunpack.c.h.b16 %v405
    %v2598 = vunpack.c.l.b16 %v406
    %v2599 = vunpack.c.h.b16 %v406
    %v2600 = vunpack.c.l.b16 %v407
    %v2601 = vunpack.c.h.b16 %v407
    %v2602 = vunpack.c.l.b16 %v408
    %v2603 = vunpack.c.h.b16 %v408
    %v2604 = vunpack.c.l.b16 %v409
    %v2605 = vunpack.c.h.b16 %v409
    %v2606 = vunpack.c.l.b16 %v410
    %v2607 = vunpack.c.h.b16 %v410
    %v2608 = vunpack.c.l.b16 %v411
    %v2609 = vunpack.c.h.b16 %v411
    %v2610 = vunpack.c.l.b16 %v412
    %v2611 = vunpack.c.h.b16 %v412
    %v2612 = vunpack.c.l.b16 %v413
    %v2613 = vunpack.c.h.b16 %v413
    %v2614 = vunpack.c.l.b16 %v414
    %v2615 = vunpack.c.h.b16 %v414
    %v2616 = vunpack.c.l.b16 %v415
    %v2617 = vunpack.c.h.b16 %v415
    %v2618 = vunpack.c.l.b16 %v416
    %v2619 = vunpack.c.h.b16 %v416
    %v2620 = vunpack.c.l.b16 %v417
    %v2621 = vunpack.c.h.b16 %v417
    %v2622 = vunpack.c.l.b16 %v418
    %v2623 = vunpack.c.h.b16 %v418
    %v2624 = vunpack.c.l.b16 %v419
    %v2625 = vunpack.c.h.b16 %v419
    %v2626 = vunpack.c.l.b16 %v420
    %v2627 = vunpack.c.h.b16 %v420
    %v2628 = vunpack.c.l.b16 %v421
    %v2629 = vunpack.c.h.b16 %v421
    %v2630 = vunpack.c.l.b16 %v422
    %v2631 = vunpack.c.h.b16 %v422
    %v2632 = vunpack.c.l.b16 %v423
    %v2633 = vunpack.c.h.b16 %v423
    %v2634 = vunpack.c.l.b16 %v424
    %v2635 = vunpack.c.h.b16 %v424
    %v2636 = vunpack.c.l.b16 %v425
    %v2637 = vunpack.c.h.b16 %v425
    %v2638 = vunpack.c.l.b16 %v426
    %v2639 = vunpack.c.h.b16 %v426
    %v2640 = vunpack.c.l.b16 %v427
    %v2641 = vunpack.c.h.b16 %v427
    %v2642 = vunpack.c.l.b16 %v428
    %v2643 = vunpack.c.h.b16 %v428
    %v2644 = vunpack.c.l.b16 %v429
    %v2645 = vunpack.c.h.b16 %v429
    %v2646 = vunpack.c.l.b16 %v430
    %v2647 = vunpack.c.h.b16 %v430
    %v2648 = vunpack.c.l.b16 %v431
    %v2649 = vunpack.c.h.b16 %v431
    %v2650 = vunpack.c.l.b16 %v432
    %v2651 = vunpack.c.h.b16 %v432
    %v2652 = vunpack.c.l.b16 %v433
    %v2653 = vunpack.c.h.b16 %v433
    %v2654 = vunpack.c.l.b16 %v434
    %v2655 = vunpack.c.h.b16 %v434
    %v2656 = vunpack.c.l.b16 %v435
    %v2657 = vunpack.c.h.b16 %v435
    %v2658 = vunpack.c.l.b16 %v436
    %v2659 = vunpack.c.h.b16 %v436
    %v2660 = vunpack.c.l.b16 %v437
    %v2661 = vunpack.c.h.b16 %v437
    %v2662 = vunpack.c.l.b16 %v438
    %v2663 = vunpack.c.h.b16 %v438
    %v2664 = vunpack.c.l.b16 %v439
    %v2665 = vunpack.c.h.b16 %v439
    %v2666 = vunpack.c.l.b16 %v440
    %v2667 = vunpack.c.h.b16 %v440
    %v2668 = vunpack.c.l.b16 %v441
    %v2669 = vunpack.c.h.b16 %v441
    %v2670 = vunpack.c.l.b16 %v442
    %v2671 = vunpack.c.h.b16 %v442
    %v2672 = vunpack.c.l.b16 %v443
    %v2673 = vunpack.c.h.b16 %v443
    %v2674 = vunpack.c.l.b16 %v444
    %v2675 = vunpack.c.h.b16 %v444
    %v2676 = vunpack.c.l.b16 %v445
    %v2677 = vunpack.c.h.b16 %v445
    %v2678 = vunpack.c.l.b16 %v446
    %v2679 = vunpack.c.h.b16 %v446
    %v2680 = vunpack.c.l.b16 %v447
    %v2681 = vunpack.c.h.b16 %v447
    %v2682 = vunpack.c.l.b16 %v448
    %v2683 = vunpack.c.h.b16 %v448
    %v2684 = vunpack.c.l.b16 %v449
    %v2685 = vunpack.c.h.b16 %v449
    %v2686 = vunpack.c.l.b16 %v450
    %v2687 = vunpack.c.h.b16 %v450
    %v2688 = vunpack.c.l.b16 %v451
    %v2689 = vunpack.c.h.b16 %v451
    %v2690 = vunpack.c.l.b16 %v452
    %v2691 = vunpack.c.h.b16 %v452
    %v2692 = vunpack.c.l.b16 %v453
    %v2693 = vunpack.c.h.b16 %v453
    %v2694 = vunpack.c.l.b16 %v454
    %v2695 = vunpack.c.h.b16 %v454
    %v2696 = vunpack.c.l.b16 %v455
    %v2697 = vunpack.c.h.b16 %v455
    %v2698 = vunpack.c.l.b16 %v456
    %v2699 = vunpack.c.h.b16 %v456
    %v2700 = vunpack.c.l.b16 %v457
    %v2701 = vunpack.c.h.b16 %v457
    %v2702 = vunpack.c.l.b16 %v458
    %v2703 = vunpack.c.h.b16 %v458
    %v2704 = vunpack.c.l.b16 %v459
    %v2705 = vunpack.c.h.b16 %v459
    %v2706 = vunpack.c.l.b16 %v460
    %v2707 = vunpack.c.h.b16 %v460
    %v2708 = vunpack.c.l.b16 %v461
    %v2709 = vunpack.c.h.b16 %v461
    %v2710 = vunpack.c.l.b16 %v462
    %v2711 = vunpack.c.h.b16 %v462
    %v2712 = vunpack.c.l.b16 %v463
    %v2713 = vunpack.c.h.b16 %v463
    %v2714 = vunpack.c.l.b16 %v464
    %v2715 = vunpack.c.h.b16 %v464
    %v2716 = vunpack.c.l.b16 %v465
    %v2717 = vunpack.c.h.b16 %v465
    %v2718 = vunpack.c.l.b16 %v466
    %v2719 = vunpack.c.h.b16 %v466
    %v2720 = vunpack.c.l.b16 %v467
    %v2721 = vunpack.c.h.b16 %v467
    %v2722 = vunpack.c.l.b16 %v468
    %v2723 = vunpack.c.h.b16 %v468
    %v2724 = vunpack.c.l.b16 %v469
    %v2725 = vunpack.c.h.b16 %v469
    %v2726 = vunpack.c.l.b16 %v470
    %v2727 = vunpack.c.h.b16 %v470
    %v2728 = vunpack.c.l.b16 %v471
    %v2729 = vunpack.c.h.b16 %v471
    %v2730 = vunpack.c.l.b16 %v472
    %v2731 = vunpack.c.h.b16 %v472
    %v2732 = vunpack.c.l.b16 %v473
    %v2733 = vunpack.c.h.b16 %v473
    %v2734 = vunpack.c.l.b16 %v474
    %v2735 = vunpack.c.h.b16 %v474
    %v2736 = vunpack.c.l.b16 %v475
    %v2737 = vunpack.c.h.b16 %v475
    %v2738 = vunpack.c.l.b16 %v476
    %v2739 = vunpack.c.h.b16 %v476
    %v2740 = vunpack.c.l.b16 %v477
    %v2741 = vunpack.c.h.b16 %v477
    %v2742 = vunpack.c.l.b16 %v478
    %v2743 = vunpack.c.h.b16 %v478
    %v2744 = vunpack.c.l.b16 %v479
    %v2745 = vunpack.c.h.b16 %v479
    %v2746 = vunpack.c.l.b16 %v480
    %v2747 = vunpack.c.h.b16 %v480
    %v2748 = vunpack.c.l.b16 %v481
    %v2749 = vunpack.c.h.b16 %v481
    %v2750 = vunpack.c.l.b16 %v482
    %v2751 = vunpack.c.h.b16 %v482
    %v2752 = vunpack.c.l.b16 %v483
    %v2753 = vunpack.c.h.b16 %v483
    %v2754 = vunpack.c.l.b16 %v484
    %v2755 = vunpack.c.h.b16 %v484
    %v2756 = vunpack.c.l.b16 %v485
    %v2757 = vunpack.c.h.b16 %v485
    %v2758 = vunpack.c.l.b16 %v486
    %v2759 = vunpack.c.h.b16 %v486
    %v2760 = vunpack.c.l.b16 %v487
    %v2761 = vunpack.c.h.b16 %v487
    %v2762 = vunpack.c.l.b16 %v488
    %v2763 = vunpack.c.h.b16 %v488
    %v2764 = vunpack.c.l.b16 %v489
    %v2765 = vunpack.c.h.b16 %v489
    %v2766 = vunpack.c.l.b16 %v490
    %v2767 = vunpack.c.h.b16 %v490
    %v2768 = vunpack.c.l.b16 %v491
    %v2769 = vunpack.c.h.b16 %v491
    %v2770 = vunpack.c.l.b16 %v492
    %v2771 = vunpack.c.h.b16 %v492
    %v2772 = vunpack.c.l.b16 %v493
    %v2773 = vunpack.c.h.b16 %v493
    %v2774 = vunpack.c.l.b16 %v494
    %v2775 = vunpack.c.h.b16 %v494
    %v2776 = vunpack.c.l.b16 %v495
    %v2777 = vunpack.c.h.b16 %v495
    %v2778 = vunpack.c.l.b16 %v496
    %v2779 = vunpack.c.h.b16 %v496
    %v2780 = vunpack.c.l.b16 %v497
    %v2781 = vunpack.c.h.b16 %v497
    %v2782 = vunpack.c.l.b16 %v498
    %v2783 = vunpack.c.h.b16 %v498
    %v2784 = vunpack.c.l.b16 %v499
    %v2785 = vunpack.c.h.b16 %v499
    %v2786 = vunpack.c.l.b16 %v500
    %v2787 = vunpack.c.h.b16 %v500
    %v2788 = vunpack.c.l.b16 %v501
    %v2789 = vunpack.c.h.b16 %v501
    %v2790 = vunpack.c.l.b16 %v502
    %v2791 = vunpack.c.h.b16 %v502
    %v2792 = vunpack.c.l.b16 %v503
    %v2793 = vunpack.c.h.b16 %v503
    %v2794 = vunpack.c.l.b16 %v504
    %v2795 = vunpack.c.h.b16 %v504
    %v2796 = vunpack.c.l.b16 %v505
    %v2797 = vunpack.c.h.b16 %v505
    %v2798 = vunpack.c.l.b16 %v506
    %v2799 = vunpack.c.h.b16 %v506
    %v2800 = vunpack.c.l.b16 %v507
    %v2801 = vunpack.c.h.b16 %v507
    %v2802 = vunpack.c.l.b16 %v508
    %v2803 = vunpack.c.h.b16 %v508
    %v2804 = vunpack.c.l.b16 %v509
    %v2805 = vunpack.c.h.b16 %v509
    %v2806 = vunpack.c.l.b16 %v510
    %v2807 = vunpack.c.h.b16 %v510
    %v2808 = vunpack.c.l.b16 %v511
    %v2809 = vunpack.c.h.b16 %v511
    %v2810 = vunpack.c.l.b16 %v512
    %v2811 = vunpack.c.h.b16 %v512
    %v2812 = vunpack.c.l.b16 %v513
    %v2813 = vunpack.c.h.b16 %v513
    %v2814 = vunpack.c.l.b16 %v514
    %v2815 = vunpack.c.h.b16 %v514
    %v2816 = vunpack.c.l.b16 %v515
    %v2817 = vunpack.c.h.b16 %v515
    %v2818 = vunpack.c.l.b16 %v516
    %v2819 = vunpack.c.h.b16 %v516
    %v2820 = vunpack.c.l.b16 %v517
    %v2821 = vunpack.c.h.b16 %v517
    %v2822 = vunpack.c.l.b16 %v518
    %v2823 = vunpack.c.h.b16 %v518
    %v2824 = vunpack.c.l.b16 %v519
    %v2825 = vunpack.c.h.b16 %v519
    %v2826 = vunpack.c.l.b16 %v520
    %v2827 = vunpack.c.h.b16 %v520
    %v2828 = vunpack.c.l.b16 %v521
    %v2829 = vunpack.c.h.b16 %v521
    %v2830 = vunpack.c.l.b16 %v522
    %v2831 = vunpack.c.h.b16 %v522
    %v2832 = vunpack.c.l.b16 %v523
    %v2833 = vunpack.c.h.b16 %v523
    %v2834 = vunpack.c.l.b16 %v524
    %v2835 = vunpack.c.h.b16 %v524
    %v2836 = vunpack.c.l.b16 %v525
    %v2837 = vunpack.c.h.b16 %v525
    %v2838 = vunpack.c.l.b16 %v526
    %v2839 = vunpack.c.h.b16 %v526
    %v2840 = vunpack.c.l.b16 %v527
    %v2841 = vunpack.c.h.b16 %v527
    %v2842 = vunpack.c.l.b16 %v528
    %v2843 = vunpack.c.h.b16 %v528
    %v2844 = vunpack.c.l.b16 %v529
    %v2845 = vunpack.c.h.b16 %v529
    %v2846 = vunpack.c.l.b16 %v530
    %v2847 = vunpack.c.h.b16 %v530
    %v2848 = vunpack.c.l.b16 %v531
    %v2849 = vunpack.c.h.b16 %v531
    %v2850 = vunpack.c.l.b16 %v532
    %v2851 = vunpack.c.h.b16 %v532
    %v2852 = vunpack.c.l.b16 %v533
    %v2853 = vunpack.c.h.b16 %v533
    %v2854 = vunpack.c.l.b16 %v534
    %v2855 = vunpack.c.h.b16 %v534
    %v2856 = vunpack.c.l.b16 %v535
    %v2857 = vunpack.c.h.b16 %v535
    %v2858 = vunpack.c.l.b16 %v536
    %v2859 = vunpack.c.h.b16 %v536
    %v2860 = vunpack.c.l.b16 %v537
    %v2861 = vunpack.c.h.b16 %v537
    %v2862 = vunpack.c.l.b16 %v538
    %v2863 = vunpack.c.h.b16 %v538
    %v2864 = vunpack.c.l.b16 %v539
    %v2865 = vunpack.c.h.b16 %v539
    %v2866 = vunpack.c.l.b16 %v540
    %v2867 = vunpack.c.h.b16 %v540
    %v2868 = vunpack.c.l.b16 %v541
    %v2869 = vunpack.c.h.b16 %v541
    %v2870 = vunpack.c.l.b16 %v542
    %v2871 = vunpack.c.h.b16 %v542
    %v2872 = vunpack.c.l.b16 %v543
    %v2873 = vunpack.c.h.b16 %v543
    %v2874 = vunpack.c.l.b16 %v544
    %v2875 = vunpack.c.h.b16 %v544
    %v2876 = vunpack.c.l.b16 %v545
    %v2877 = vunpack.c.h.b16 %v545
    %v2878 = vunpack.c.l.b16 %v546
    %v2879 = vunpack.c.h.b16 %v546
    %v2880 = vunpack.c.l.b16 %v547
    %v2881 = vunpack.c.h.b16 %v547
    %v2882 = vunpack.c.l.b16 %v548
    %v2883 = vunpack.c.h.b16 %v548
    %v2884 = vunpack.c.l.b16 %v549
    %v2885 = vunpack.c.h.b16 %v549
    %v2886 = vunpack.c.l.b16 %v550
    %v2887 = vunpack.c.h.b16 %v550
    %v2888 = vunpack.c.l.b16 %v551
    %v2889 = vunpack.c.h.b16 %v551
    %v2890 = vunpack.c.l.b16 %v552
    %v2891 = vunpack.c.h.b16 %v552
    %v2892 = vunpack.c.l.b16 %v553
    %v2893 = vunpack.c.h.b16 %v553
    %v2894 = vunpack.c.l.b16 %v554
    %v2895 = vunpack.c.h.b16 %v554
    %v2896 = vunpack.c.l.b16 %v555
    %v2897 = vunpack.c.h.b16 %v555
    %v2898 = vunpack.c.l.b16 %v556
    %v2899 = vunpack.c.h.b16 %v556
    %v2900 = vunpack.c.l.b16 %v557
    %v2901 = vunpack.c.h.b16 %v557
    %v2902 = vunpack.c.l.b16 %v558
    %v2903 = vunpack.c.h.b16 %v558
    %v2904 = vunpack.c.l.b16 %v559
    %v2905 = vunpack.c.h.b16 %v559
    %v2906 = vunpack.c.l.b16 %v560
    %v2907 = vunpack.c.h.b16 %v560
    %v2908 = vunpack.c.l.b16 %v561
    %v2909 = vunpack.c.h.b16 %v561
    %v2910 = vunpack.c.l.b16 %v562
    %v2911 = vunpack.c.h.b16 %v562
    %v2912 = vunpack.c.l.b16 %v563
    %v2913 = vunpack.c.h.b16 %v563
    %v2914 = vunpack.c.l.b16 %v564
    %v2915 = vunpack.c.h.b16 %v564
    %v2916 = vunpack.c.l.b16 %v565
    %v2917 = vunpack.c.h.b16 %v565
    %v2918 = vunpack.c.l.b16 %v566
    %v2919 = vunpack.c.h.b16 %v566
    %v2920 = vunpack.c.l.b16 %v567
    %v2921 = vunpack.c.h.b16 %v567
    %v2922 = vunpack.c.l.b16 %v568
    %v2923 = vunpack.c.h.b16 %v568
    %v2924 = vunpack.c.l.b16 %v569
    %v2925 = vunpack.c.h.b16 %v569
    %v2926 = vunpack.c.l.b16 %v570
    %v2927 = vunpack.c.h.b16 %v570
    %v2928 = vunpack.c.l.b16 %v571
    %v2929 = vunpack.c.h.b16 %v571
    %v2930 = vunpack.c.l.b16 %v572
    %v2931 = vunpack.c.h.b16 %v572
    %v2932 = vunpack.c.l.b16 %v573
    %v2933 = vunpack.c.h.b16 %v573
    %v2934 = vunpack.c.l.b16 %v574
    %v2935 = vunpack.c.h.b16 %v574
    %v2936 = vunpack.c.l.b16 %v575
    %v2937 = vunpack.c.h.b16 %v575
    %v2938 = vunpack.c.l.b16 %v576
    %v2939 = vunpack.c.h.b16 %v576
    %v2940 = vunpack.c.l.b16 %v577
    %v2941 = vunpack.c.h.b16 %v577
    %v2942 = vunpack.c.l.b16 %v578
    %v2943 = vunpack.c.h.b16 %v578
    %v2944 = vunpack.c.l.b16 %v579
    %v2945 = vunpack.c.h.b16 %v579
    %v2946 = vunpack.c.l.b16 %v580
    %v2947 = vunpack.c.h.b16 %v580
    %v2948 = vunpack.c.l.b16 %v581
    %v2949 = vunpack.c.h.b16 %v581
    %v2950 = vunpack.c.l.b16 %v582
    %v2951 = vunpack.c.h.b16 %v582
    %v2952 = vunpack.c.l.b16 %v583
    %v2953 = vunpack.c.h.b16 %v583
    %v2954 = vunpack.c.l.b16 %v584
    %v2955 = vunpack.c.h.b16 %v584
    %v2956 = vunpack.c.l.b16 %v585
    %v2957 = vunpack.c.h.b16 %v585
    %v2958 = vunpack.c.l.b16 %v586
    %v2959 = vunpack.c.h.b16 %v586
    %v2960 = vunpack.c.l.b16 %v587
    %v2961 = vunpack.c.h.b16 %v587
    %v2962 = vunpack.c.l.b16 %v588
    %v2963 = vunpack.c.h.b16 %v588
    %v2964 = vunpack.c.l.b16 %v589
    %v2965 = vunpack.c.h.b16 %v589
    %v2966 = vunpack.c.l.b16 %v590
    %v2967 = vunpack.c.h.b16 %v590
    %v2968 = vunpack.c.l.b16 %v591
    %v2969 = vunpack.c.h.b16 %v591
    %v2970 = vunpack.c.l.b16 %v592
    %v2971 = vunpack.c.h.b16 %v592
    %v2972 = vunpack.c.l.b16 %v593
    %v2973 = vunpack.c.h.b16 %v593
    %v2974 = vunpack.c.l.b16 %v594
    %v2975 = vunpack.c.h.b16 %v594
    %v2976 = vunpack.c.l.b16 %v595
    %v2977 = vunpack.c.h.b16 %v595
    %v2978 = vunpack.c.l.b16 %v596
    %v2979 = vunpack.c.h.b16 %v596
    %v2980 = vunpack.c.l.b16 %v597
    %v2981 = vunpack.c.h.b16 %v597
    %v2982 = vunpack.c.l.b16 %v598
    %v2983 = vunpack.c.h.b16 %v598
    %v2984 = vunpack.c.l.b16 %v599
    %v2985 = vunpack.c.h.b16 %v599
    %v2986 = vunpack.c.l.b16 %v600
    %v2987 = vunpack.c.h.b16 %v600
    %v2988 = vunpack.c.l.b16 %v601
    %v2989 = vunpack.c.h.b16 %v601
    %v2990 = vunpack.c.l.b16 %v602
    %v2991 = vunpack.c.h.b16 %v602
    %v2992 = vunpack.c.l.b16 %v603
    %v2993 = vunpack.c.h.b16 %v603
    %v2994 = vunpack.c.l.b16 %v604
    %v2995 = vunpack.c.h.b16 %v604
    %v2996 = vunpack.c.l.b16 %v605
    %v2997 = vunpack.c.h.b16 %v605
    %v2998 = vunpack.c.l.b16 %v606
    %v2999 = vunpack.c.h.b16 %v606
    %v3000 = vunpack.c.l.b16 %v607
    %v3001 = vunpack.c.h.b16 %v607
    %v3002 = vunpack.c.l.b16 %v608
    %v3003 = vunpack.c.h.b16 %v608
    %v3004 = vunpack.c.l.b16 %v609
    %v3005 = vunpack.c.h.b16 %v609
    %v3006 = vunpack.c.l.b16 %v610
    %v3007 = vunpack.c.h.b16 %v610
    %v3008 = vunpack.c.l.b16 %v611
    %v3009 = vunpack.c.h.b16 %v611
    %v3010 = vunpack.c.l.b16 %v612
    %v3011 = vunpack.c.h.b16 %v612
    %v3012 = vunpack.c.l.b16 %v613
    %v3013 = vunpack.c.h.b16 %v613
    %v3014 = vunpack.c.l.b16 %v614
    %v3015 = vunpack.c.h.b16 %v614
    %v3016 = vunpack.c.l.b16 %v615
    %v3017 = vunpack.c.h.b16 %v615
    %v3018 = vunpack.c.l.b16 %v616
    %v3019 = vunpack.c.h.b16 %v616
    %v3020 = vunpack.c.l.b16 %v617
    %v3021 = vunpack.c.h.b16 %v617
    %v3022 = vunpack.c.l.b16 %v618
    %v3023 = vunpack.c.h.b16 %v618
    %v3024 = vunpack.c.l.b16 %v619
    %v3025 = vunpack.c.h.b16 %v619
    %v3026 = vunpack.c.l.b16 %v620
    %v3027 = vunpack.c.h.b16 %v620
    %v3028 = vunpack.c.l.b16 %v621
    %v3029 = vunpack.c.h.b16 %v621
    %v3030 = vunpack.c.l.b16 %v622
    %v3031 = vunpack.c.h.b16 %v622
    %v3032 = vunpack.c.l.b16 %v623
    %v3033 = vunpack.c.h.b16 %v623
    %v3034 = vunpack.c.l.b16 %v624
    %v3035 = vunpack.c.h.b16 %v624
    %v3036 = vunpack.c.l.b16 %v625
    %v3037 = vunpack.c.h.b16 %v625
    %v3038 = vunpack.c.l.b16 %v626
    %v3039 = vunpack.c.h.b16 %v626
    %v3040 = vunpack.c.l.b16 %v627
    %v3041 = vunpack.c.h.b16 %v627
    %v3042 = vunpack.c.l.b16 %v628
    %v3043 = vunpack.c.h.b16 %v628
    %v3044 = vunpack.c.l.b16 %v629
    %v3045 = vunpack.c.h.b16 %v629
    %v3046 = vunpack.c.l.b16 %v630
    %v3047 = vunpack.c.h.b16 %v630
    %v3048 = vunpack.c.l.b16 %v631
    %v3049 = vunpack.c.h.b16 %v631
    %v3050 = vunpack.c.l.b16 %v632
    %v3051 = vunpack.c.h.b16 %v632
    %v3052 = vunpack.c.l.b16 %v633
    %v3053 = vunpack.c.h.b16 %v633
    %v3054 = vunpack.c.l.b16 %v634
    %v3055 = vunpack.c.h.b16 %v634
    %v3056 = vunpack.c.l.b16 %v635
    %v3057 = vunpack.c.h.b16 %v635
    %v3058 = vunpack.c.l.b16 %v636
    %v3059 = vunpack.c.h.b16 %v636
    %v3060 = vunpack.c.l.b16 %v637
    %v3061 = vunpack.c.h.b16 %v637
    %v3062 = vunpack.c.l.b16 %v638
    %v3063 = vunpack.c.h.b16 %v638
    %v3064 = vunpack.c.l.b16 %v639
    %v3065 = vunpack.c.h.b16 %v639
    %v3066 = vunpack.c.l.b16 %v640
    %v3067 = vunpack.c.h.b16 %v640
    %v3068 = vunpack.c.l.b16 %v641
    %v3069 = vunpack.c.h.b16 %v641
    %v3070 = vunpack.c.l.b16 %v642
    %v3071 = vunpack.c.h.b16 %v642
    %v3072 = vunpack.c.l.b16 %v643
    %v3073 = vunpack.c.h.b16 %v643
    %v3074 = vunpack.c.l.b16 %v644
    %v3075 = vunpack.c.h.b16 %v644
    %v3076 = vunpack.c.l.b16 %v645
    %v3077 = vunpack.c.h.b16 %v645
    %v3078 = vunpack.c.l.b16 %v646
    %v3079 = vunpack.c.h.b16 %v646
    %v3080 = vunpack.c.l.b16 %v647
    %v3081 = vunpack.c.h.b16 %v647
    %v3082 = vunpack.c.l.b16 %v648
    %v3083 = vunpack.c.h.b16 %v648
    %v3084 = vunpack.c.l.b16 %v649
    %v3085 = vunpack.c.h.b16 %v649
    %v3086 = vunpack.c.l.b16 %v650
    %v3087 = vunpack.c.h.b16 %v650
    %v3088 = vunpack.c.l.b16 %v651
    %v3089 = vunpack.c.h.b16 %v651
    %v3090 = vunpack.c.l.b16 %v652
    %v3091 = vunpack.c.h.b16 %v652
    %v3092 = vunpack.c.l.b16 %v653
    %v3093 = vunpack.c.h.b16 %v653
    %v3094 = vunpack.c.l.b16 %v654
    %v3095 = vunpack.c.h.b16 %v654
    %v3096 = vunpack.c.l.b16 %v655
    %v3097 = vunpack.c.h.b16 %v655
    %v3098 = vunpack.c.l.b16 %v656
    %v3099 = vunpack.c.h.b16 %v656
    %v3100 = vunpack.c.l.b16 %v657
    %v3101 = vunpack.c.h.b16 %v657
    %v3102 = vunpack.c.l.b16 %v658
    %v3103 = vunpack.c.h.b16 %v658
    %v3104 = vunpack.c.l.b16 %v659
    %v3105 = vunpack.c.h.b16 %v659
    %v3106 = vunpack.c.l.b16 %v660
    %v3107 = vunpack.c.h.b16 %v660
    %v3108 = vunpack.c.l.b16 %v661
    %v3109 = vunpack.c.h.b16 %v661
    %v3110 = vunpack.c.l.b16 %v662
    %v3111 = vunpack.c.h.b16 %v662
    %v3112 = vunpack.c.l.b16 %v663
    %v3113 = vunpack.c.h.b16 %v663
    %v3114 = vunpack.c.l.b16 %v664
    %v3115 = vunpack.c.h.b16 %v664
    %v3116 = vunpack.c.l.b16 %v665
    %v3117 = vunpack.c.h.b16 %v665
    %v3118 = vunpack.c.l.b16 %v666
    %v3119 = vunpack.c.h.b16 %v666
    %v3120 = vunpack.c.l.b16 %v667
    %v3121 = vunpack.c.h.b16 %v667
    %v3122 = vunpack.c.l.b16 %v668
    %v3123 = vunpack.c.h.b16 %v668
    %v3124 = vunpack.c.l.b16 %v669
    %v3125 = vunpack.c.h.b16 %v669
    %v3126 = vunpack.c.l.b16 %v670
    %v3127 = vunpack.c.h.b16 %v670
    %v3128 = vunpack.c.l.b16 %v671
    %v3129 = vunpack.c.h.b16 %v671
    %v3130 = vunpack.c.l.b16 %v672
    %v3131 = vunpack.c.h.b16 %v672
    %v3132 = vunpack.c.l.b16 %v673
    %v3133 = vunpack.c.h.b16 %v673
    %v3134 = vunpack.c.l.b16 %v674
    %v3135 = vunpack.c.h.b16 %v674
    %v3136 = vunpack.c.l.b16 %v675
    %v3137 = vunpack.c.h.b16 %v675
    %v3138 = vunpack.c.l.b16 %v676
    %v3139 = vunpack.c.h.b16 %v676
    %v3140 = vunpack.c.l.b16 %v677
    %v3141 = vunpack.c.h.b16 %v677
    %v3142 = vunpack.c.l.b16 %v678
    %v3143 = vunpack.c.h.b16 %v678
    %v3144 = vunpack.c.l.b16 %v679
    %v3145 = vunpack.c.h.b16 %v679
    %v3146 = vunpack.c.l.b16 %v680
    %v3147 = vunpack.c.h.b16 %v680
    %v3148 = vunpack.c.l.b16 %v681
    %v3149 = vunpack.c.h.b16 %v681
    %v3150 = vunpack.c.l.b16 %v682
    %v3151 = vunpack.c.h.b16 %v682
    %v3152 = vunpack.c.l.b16 %v683
    %v3153 = vunpack.c.h.b16 %v683
    %v3154 = vunpack.c.l.b16 %v684
    %v3155 = vunpack.c.h.b16 %v684
    %v3156 = vunpack.c.l.b16 %v685
    %v3157 = vunpack.c.h.b16 %v685
    %v3158 = vunpack.c.l.b16 %v686
    %v3159 = vunpack.c.h.b16 %v686
    %v3160 = vunpack.c.l.b16 %v687
    %v3161 = vunpack.c.h.b16 %v687
    %v3162 = vunpack.c.l.b16 %v688
    %v3163 = vunpack.c.h.b16 %v688
    %v3164 = vunpack.c.l.b16 %v689
    %v3165 = vunpack.c.h.b16 %v689
    %v3166 = vunpack.c.l.b16 %v690
    %v3167 = vunpack.c.h.b16 %v690
    %v3168 = vunpack.c.l.b16 %v691
    %v3169 = vunpack.c.h.b16 %v691
    %v3170 = vunpack.c.l.b16 %v692
    %v3171 = vunpack.c.h.b16 %v692
    %v3172 = vunpack.c.l.b16 %v693
    %v3173 = vunpack.c.h.b16 %v693
    %v3174 = vunpack.c.l.b16 %v694
    %v3175 = vunpack.c.h.b16 %v694
    %v3176 = vunpack.c.l.b16 %v695
    %v3177 = vunpack.c.h.b16 %v695
    %v3178 = vunpack.c.l.b16 %v696
    %v3179 = vunpack.c.h.b16 %v696
    %v3180 = vunpack.c.l.b16 %v697
    %v3181 = vunpack.c.h.b16 %v697
    %v3182 = vunpack.c.l.b16 %v698
    %v3183 = vunpack.c.h.b16 %v698
    %v3184 = vunpack.c.l.b16 %v699
    %v3185 = vunpack.c.h.b16 %v699
    %v3186 = vunpack.c.l.b16 %v700
    %v3187 = vunpack.c.h.b16 %v700
    %v3188 = vunpack.c.l.b16 %v701
    %v3189 = vunpack.c.h.b16 %v701
    %v3190 = vunpack.c.l.b16 %v702
    %v3191 = vunpack.c.h.b16 %v702
    %v3192 = vunpack.c.l.b16 %v703
    %v3193 = vunpack.c.h.b16 %v703
    %v3194 = vunpack.c.l.b16 %v704
    %v3195 = vunpack.c.h.b16 %v704
    %v3196 = vunpack.c.l.b16 %v705
    %v3197 = vunpack.c.h.b16 %v705
    %v3198 = vunpack.c.l.b16 %v706
    %v3199 = vunpack.c.h.b16 %v706
    %v3200 = vunpack.c.l.b16 %v707
    %v3201 = vunpack.c.h.b16 %v707
    %v3202 = vunpack.c.l.b16 %v708
    %v3203 = vunpack.c.h.b16 %v708
    %v3204 = vunpack.c.l.b16 %v709
    %v3205 = vunpack.c.h.b16 %v709
    %v3206 = vunpack.c.l.b16 %v710
    %v3207 = vunpack.c.h.b16 %v710
    %v3208 = vunpack.c.l.b16 %v711
    %v3209 = vunpack.c.h.b16 %v711
    %v3210 = vunpack.c.l.b16 %v712
    %v3211 = vunpack.c.h.b16 %v712
    %v3212 = vunpack.c.l.b16 %v713
    %v3213 = vunpack.c.h.b16 %v713
    %v3214 = vunpack.c.l.b16 %v714
    %v3215 = vunpack.c.h.b16 %v714
    %v3216 = vunpack.c.l.b16 %v715
    %v3217 = vunpack.c.h.b16 %v715
    %v3218 = vunpack.c.l.b16 %v716
    %v3219 = vunpack.c.h.b16 %v716
    %v3220 = vunpack.c.l.b16 %v717
    %v3221 = vunpack.c.h.b16 %v717
    %v3222 = vunpack.c.l.b16 %v718
    %v3223 = vunpack.c.h.b16 %v718
    %v3224 = vunpack.c.l.b16 %v719
    %v3225 = vunpack.c.h.b16 %v719
    %v3226 = vunpack.c.l.b16 %v720
    %v3227 = vunpack.c.h.b16 %v720
    %v3228 = vunpack.c.l.b16 %v721
    %v3229 = vunpack.c.h.b16 %v721
    %v3230 = vunpack.c.l.b16 %v722
    %v3231 = vunpack.c.h.b16 %v722
    %v3232 = vunpack.c.l.b16 %v723
    %v3233 = vunpack.c.h.b16 %v723
    %v3234 = vunpack.c.l.b16 %v724
    %v3235 = vunpack.c.h.b16 %v724
    %v3236 = vunpack.c.l.b16 %v725
    %v3237 = vunpack.c.h.b16 %v725
    %v3238 = vunpack.c.l.b16 %v726
    %v3239 = vunpack.c.h.b16 %v726
    %v3240 = vunpack.c.l.b16 %v727
    %v3241 = vunpack.c.h.b16 %v727
    %v3242 = vunpack.c.l.b16 %v728
    %v3243 = vunpack.c.h.b16 %v728
    %v3244 = vunpack.c.l.b16 %v729
    %v3245 = vunpack.c.h.b16 %v729
    %v3246 = vunpack.c.l.b16 %v730
    %v3247 = vunpack.c.h.b16 %v730
    %v3248 = vunpack.c.l.b16 %v731
    %v3249 = vunpack.c.h.b16 %v731
    %v3250 = vunpack.c.l.b16 %v732
    %v3251 = vunpack.c.h.b16 %v732
    %v3252 = vunpack.c.l.b16 %v733
    %v3253 = vunpack.c.h.b16 %v733
    %v3254 = vunpack.c.l.b16 %v734
    %v3255 = vunpack.c.h.b16 %v734
    %v3256 = vunpack.c.l.b16 %v735
    %v3257 = vunpack.c.h.b16 %v735
    %v3258 = vunpack.c.l.b16 %v736
    %v3259 = vunpack.c.h.b16 %v736
    %v3260 = vunpack.c.l.b16 %v737
    %v3261 = vunpack.c.h.b16 %v737
    %v3262 = vunpack.c.l.b16 %v738
    %v3263 = vunpack.c.h.b16 %v738
    %v3264 = vunpack.c.l.b16 %v739
    %v3265 = vunpack.c.h.b16 %v739
    %v3266 = vunpack.c.l.b16 %v740
    %v3267 = vunpack.c.h.b16 %v740
    %v3268 = vunpack.c.l.b16 %v741
    %v3269 = vunpack.c.h.b16 %v741
    %v3270 = vunpack.c.l.b16 %v742
    %v3271 = vunpack.c.h.b16 %v742
    %v3272 = vunpack.c.l.b16 %v743
    %v3273 = vunpack.c.h.b16 %v743
    %v3274 = vunpack.c.l.b16 %v744
    %v3275 = vunpack.c.h.b16 %v744
    %v3276 = vunpack.c.l.b16 %v745
    %v3277 = vunpack.c.h.b16 %v745
    %v3278 = vunpack.c.l.b16 %v746
    %v3279 = vunpack.c.h.b16 %v746
    %v3280 = vunpack.c.l.b16 %v747
    %v3281 = vunpack.c.h.b16 %v747
    %v3282 = vunpack.c.l.b16 %v748
    %v3283 = vunpack.c.h.b16 %v748
    %v3284 = vunpack.c.l.b16 %v749
    %v3285 = vunpack.c.h.b16 %v749
    %v3286 = vunpack.c.l.b16 %v750
    %v3287 = vunpack.c.h.b16 %v750
    %v3288 = vunpack.c.l.b16 %v751
    %v3289 = vunpack.c.h.b16 %v751
    %v3290 = vunpack.c.l.b16 %v752
    %v3291 = vunpack.c.h.b16 %v752
    %v3292 = vunpack.c.l.b16 %v753
    %v3293 = vunpack.c.h.b16 %v753
    %v3294 = vunpack.c.l.b16 %v754
    %v3295 = vunpack.c.h.b16 %v754
    %v3296 = vunpack.c.l.b16 %v755
    %v3297 = vunpack.c.h.b16 %v755
    %v3298 = vunpack.c.l.b16 %v756
    %v3299 = vunpack.c.h.b16 %v756
    %v3300 = vunpack.c.l.b16 %v757
    %v3301 = vunpack.c.h.b16 %v757
    %v3302 = vunpack.c.l.b16 %v758
    %v3303 = vunpack.c.h.b16 %v758
    %v3304 = vunpack.c.l.b16 %v759
    %v3305 = vunpack.c.h.b16 %v759
    %v3306 = vunpack.c.l.b16 %v760
    %v3307 = vunpack.c.h.b16 %v760
    %v3308 = vunpack.c.l.b16 %v761
    %v3309 = vunpack.c.h.b16 %v761
    %v3310 = vunpack.c.l.b16 %v762
    %v3311 = vunpack.c.h.b16 %v762
    %v3312 = vunpack.c.l.b16 %v763
    %v3313 = vunpack.c.h.b16 %v763
    %v3314 = vunpack.c.l.b16 %v764
    %v3315 = vunpack.c.h.b16 %v764
    %v3316 = vunpack.c.l.b16 %v765
    %v3317 = vunpack.c.h.b16 %v765
    %v3318 = vunpack.c.l.b16 %v766
    %v3319 = vunpack.c.h.b16 %v766
    %v3320 = vunpack.c.l.b16 %v767
    %v3321 = vunpack.c.h.b16 %v767
    %v3322 = vunpack.c.l.b16 %v768
    %v3323 = vunpack.c.h.b16 %v768
    %v3324 = vunpack.c.l.b16 %v769
    %v3325 = vunpack.c.h.b16 %v769
    %v3326 = vunpack.c.l.b16 %v770
    %v3327 = vunpack.c.h.b16 %v770
    %v3328 = vunpack.c.l.b16 %v771
    %v3329 = vunpack.c.h.b16 %v771
    %v3330 = vunpack.c.l.b16 %v772
    %v3331 = vunpack.c.h.b16 %v772
    %v3332 = vunpack.c.l.b16 %v773
    %v3333 = vunpack.c.h.b16 %v773
    %v3334 = vunpack.c.l.b16 %v774
    %v3335 = vunpack.c.h.b16 %v774
    %v3336 = vunpack.c.l.b16 %v775
    %v3337 = vunpack.c.h.b16 %v775
    %v3338 = vunpack.c.l.b16 %v776
    %v3339 = vunpack.c.h.b16 %v776
    %v3340 = vunpack.c.l.b16 %v777
    %v3341 = vunpack.c.h.b16 %v777
    %v3342 = vunpack.c.l.b16 %v778
    %v3343 = vunpack.c.h.b16 %v778
    %v3344 = vunpack.c.l.b16 %v779
    %v3345 = vunpack.c.h.b16 %v779
    %v3346 = vunpack.c.l.b16 %v780
    %v3347 = vunpack.c.h.b16 %v780
    %v3348 = vunpack.c.l.b16 %v781
    %v3349 = vunpack.c.h.b16 %v781
    %v3350 = vunpack.c.l.b16 %v782
    %v3351 = vunpack.c.h.b16 %v782
    %v3352 = vunpack.c.l.b16 %v783
    %v3353 = vunpack.c.h.b16 %v783
    %v3354 = vunpack.c.l.b16 %v784
    %v3355 = vunpack.c.h.b16 %v784
    %v3356 = vunpack.c.l.b16 %v785
    %v3357 = vunpack.c.h.b16 %v785
    %v3358 = vunpack.c.l.b16 %v786
    %v3359 = vunpack.c.h.b16 %v786
    %v3360 = vunpack.c.l.b16 %v787
    %v3361 = vunpack.c.h.b16 %v787
    %v3362 = vunpack.c.l.b16 %v788
    %v3363 = vunpack.c.h.b16 %v788
    %v3364 = vunpack.c.l.b16 %v789
    %v3365 = vunpack.c.h.b16 %v789
    %v3366 = vunpack.c.l.b16 %v790
    %v3367 = vunpack.c.h.b16 %v790
    %v3368 = vunpack.c.l.b16 %v791
    %v3369 = vunpack.c.h.b16 %v791
    %v3370 = vunpack.c.l.b16 %v792
    %v3371 = vunpack.c.h.b16 %v792
    %v3372 = vunpack.c.l.b16 %v793
    %v3373 = vunpack.c.h.b16 %v793
    %v3374 = vunpack.c.l.b16 %v794
    %v3375 = vunpack.c.h.b16 %v794
    %v3376 = vunpack.c.l.b16 %v795
    %v3377 = vunpack.c.h.b16 %v795
    %v3378 = vunpack.c.l.b16 %v796
    %v3379 = vunpack.c.h.b16 %v796
    %v3380 = vunpack.c.l.b16 %v797
    %v3381 = vunpack.c.h.b16 %v797
    %v3382 = vunpack.c.l.b16 %v798
    %v3383 = vunpack.c.h.b16 %v798
    %v3384 = vunpack.c.l.b16 %v799
    %v3385 = vunpack.c.h.b16 %v799
    %v3386 = vunpack.c.l.b16 %v800
    %v3387 = vunpack.c.h.b16 %v800
    %v3388 = vunpack.c.l.b16 %v801
    %v3389 = vunpack.c.h.b16 %v801
    %v3390 = vunpack.c.l.b16 %v802
    %v3391 = vunpack.c.h.b16 %v802
    %v3392 = vunpack.c.l.b16 %v803
    %v3393 = vunpack.c.h.b16 %v803
    %v3394 = vunpack.c.l.b16 %v804
    %v3395 = vunpack.c.h.b16 %v804
    %v3396 = vunpack.c.l.b16 %v805
    %v3397 = vunpack.c.h.b16 %v805
    %v3398 = vunpack.c.l.b16 %v806
    %v3399 = vunpack.c.h.b16 %v806
    %v3400 = vunpack.c.l.b16 %v807
    %v3401 = vunpack.c.h.b16 %v807
    %v3402 = vunpack.c.l.b16 %v808
    %v3403 = vunpack.c.h.b16 %v808
    %v3404 = vunpack.c.l.b16 %v809
    %v3405 = vunpack.c.h.b16 %v809
    %v3406 = vunpack.c.l.b16 %v810
    %v3407 = vunpack.c.h.b16 %v810
    %v3408 = vunpack.c.l.b16 %v811
    %v3409 = vunpack.c.h.b16 %v811
    %v3410 = vunpack.c.l.b16 %v812
    %v3411 = vunpack.c.h.b16 %v812
    %v3412 = vunpack.c.l.b16 %v813
    %v3413 = vunpack.c.h.b16 %v813
    %v3414 = vunpack.c.l.b16 %v814
    %v3415 = vunpack.c.h.b16 %v814
    %v3416 = vunpack.c.l.b16 %v815
    %v3417 = vunpack.c.h.b16 %v815
    %v3418 = vunpack.c.l.b16 %v816
    %v3419 = vunpack.c.h.b16 %v816
    %v3420 = vunpack.c.l.b16 %v817
    %v3421 = vunpack.c.h.b16 %v817
    %v3422 = vunpack.c.l.b16 %v818
    %v3423 = vunpack.c.h.b16 %v818
    %v3424 = vunpack.c.l.b16 %v819
    %v3425 = vunpack.c.h.b16 %v819
    %v3426 = vunpack.c.l.b16 %v820
    %v3427 = vunpack.c.h.b16 %v820
    %v3428 = vunpack.c.l.b16 %v821
    %v3429 = vunpack.c.h.b16 %v821
    %v3430 = vunpack.c.l.b16 %v822
    %v3431 = vunpack.c.h.b16 %v822
    %v3432 = vunpack.c.l.b16 %v823
    %v3433 = vunpack.c.h.b16 %v823
    %v3434 = vunpack.c.l.b16 %v824
    %v3435 = vunpack.c.h.b16 %v824
    %v3436 = vunpack.c.l.b16 %v825
    %v3437 = vunpack.c.h.b16 %v825
    %v3438 = vpack.c.b16 %v1842, %v1838
    %v3439 = vpack.c.b16 %v1843, %v1839
    %v3440 = vpack.c.b16 %v1844, %v1840
    %v3441 = vpack.c.b16 %v1845, %v1841
    %v3442 = vpack.c.b16 %v1850, %v1846
    %v3443 = vpack.c.b16 %v1851, %v1847
    %v3444 = vpack.c.b16 %v1852, %v1848
    %v3445 = vpack.c.b16 %v1853, %v1849
    %v3446 = vpack.c.b16 %v1858, %v1854
    %v3447 = vpack.c.b16 %v1859, %v1855
    %v3448 = vpack.c.b16 %v1860, %v1856
    %v3449 = vpack.c.b16 %v1861, %v1857
    %v3450 = vpack.c.b16 %v1866, %v1862
    %v3451 = vpack.c.b16 %v1867, %v1863
    %v3452 = vpack.c.b16 %v1868, %v1864
    %v3453 = vpack.c.b16 %v1869, %v1865
    %v3454 = vpack.c.b16 %v1874, %v1870
    %v3455 = vpack.c.b16 %v1875, %v1871
    %v3456 = vpack.c.b16 %v1876, %v1872
    %v3457 = vpack.c.b16 %v1877, %v1873
    %v3458 = vpack.c.b16 %v1882, %v1878
    %v3459 = vpack.c.b16 %v1883, %v1879
    %v3460 = vpack.c.b16 %v1884, %v1880
    %v3461 = vpack.c.b16 %v1885, %v1881
    %v3462 = vpack.c.b16 %v1890, %v1886
    %v3463 = vpack.c.b16 %v1891, %v1887
    %v3464 = vpack.c.b16 %v1892, %v1888
    %v3465 = vpack.c.b16 %v1893, %v1889
    %v3466 = vpack.c.b16 %v1898, %v1894
    %v3467 = vpack.c.b16 %v1899, %v1895
    %v3468 = vpack.c.b16 %v1900, %v1896
    %v3469 = vpack.c.b16 %v1901, %v1897
    %v3470 = vpack.c.b16 %v1906, %v1902
    %v3471 = vpack.c.b16 %v1907, %v1903
    %v3472 = vpack.c.b16 %v1908, %v1904
    %v3473 = vpack.c.b16 %v1909, %v1905
    %v3474 = vpack.c.b16 %v1914, %v1910
    %v3475 = vpack.c.b16 %v1915, %v1911
    %v3476 = vpack.c.b16 %v1916, %v1912
    %v3477 = vpack.c.b16 %v1917, %v1913
    %v3478 = vpack.c.b16 %v1922, %v1918
    %v3479 = vpack.c.b16 %v1923, %v1919
    %v3480 = vpack.c.b16 %v1924, %v1920
    %v3481 = vpack.c.b16 %v1925, %v1921
    %v3482 = vpack.c.b16 %v1930, %v1926
    %v3483 = vpack.c.b16 %v1931, %v1927
    %v3484 = vpack.c.b16 %v1932, %v1928
    %v3485 = vpack.c.b16 %v1933, %v1929
    %v3486 = vpack.c.b16 %v1938, %v1934
    %v3487 = vpack.c.b16 %v1939, %v1935
    %v3488 = vpack.c.b16 %v1940, %v1936
    %v3489 = vpack.c.b16 %v1941, %v1937
    %v3490 = vpack.c.b16 %v1946, %v1942
    %v3491 = vpack.c.b16 %v1947, %v1943
    %v3492 = vpack.c.b16 %v1948, %v1944
    %v3493 = vpack.c.b16 %v1949, %v1945
    %v3494 = vpack.c.b16 %v1954, %v1950
    %v3495 = vpack.c.b16 %v1955, %v1951
    %v3496 = vpack.c.b16 %v1956, %v1952
    %v3497 = vpack.c.b16 %v1957, %v1953
    %v3498 = vpack.c.b16 %v1962, %v1958
    %v3499 = vpack.c.b16 %v1963, %v1959
    %v3500 = vpack.c.b16 %v1964, %v1960
    %v3501 = vpack.c.b16 %v1965, %v1961
    %v3502 = vpack.c.b16 %v1970, %v1966
    %v3503 = vpack.c.b16 %v1971, %v1967
    %v3504 = vpack.c.b16 %v1972, %v1968
    %v3505 = vpack.c.b16 %v1973, %v1969
    %v3506 = vpack.c.b16 %v1978, %v1974
    %v3507 = vpack.c.b16 %v1979, %v1975
    %v3508 = vpack.c.b16 %v1980, %v1976
    %v3509 = vpack.c.b16 %v1981, %v1977
    %v3510 = vpack.c.b16 %v1986, %v1982
    %v3511 = vpack.c.b16 %v1987, %v1983
    %v3512 = vpack.c.b16 %v1988, %v1984
    %v3513 = vpack.c.b16 %v1989, %v1985
    %v3514 = vpack.c.b16 %v1994, %v1990
    %v3515 = vpack.c.b16 %v1995, %v1991
    %v3516 = vpack.c.b16 %v1996, %v1992
    %v3517 = vpack.c.b16 %v1997, %v1993
    %v3518 = vpack.c.b16 %v2002, %v1998
    %v3519 = vpack.c.b16 %v2003, %v1999
    %v3520 = vpack.c.b16 %v2004, %v2000
    %v3521 = vpack.c.b16 %v2005, %v2001
    %v3522 = vpack.c.b16 %v2010, %v2006
    %v3523 = vpack.c.b16 %v2011, %v2007
    %v3524 = vpack.c.b16 %v2012, %v2008
    %v3525 = vpack.c.b16 %v2013, %v2009
    %v3526 = vpack.c.b16 %v2018, %v2014
    %v3527 = vpack.c.b16 %v2019, %v2015
    %v3528 = vpack.c.b16 %v2020, %v2016
    %v3529 = vpack.c.b16 %v2021, %v2017
    %v3530 = vpack.c.b16 %v2026, %v2022
    %v3531 = vpack.c.b16 %v2027, %v2023
    %v3532 = vpack.c.b16 %v2028, %v2024
    %v3533 = vpack.c.b16 %v2029, %v2025
    %v3534 = vpack.c.b16 %v2034, %v2030
    %v3535 = vpack.c.b16 %v2035, %v2031
    %v3536 = vpack.c.b16 %v2036, %v2032
    %v3537 = vpack.c.b16 %v2037, %v2033
    %v3538 = vpack.c.b16 %v2042, %v2038
    %v3539 = vpack.c.b16 %v2043, %v2039
    %v3540 = vpack.c.b16 %v2044, %v2040
    %v3541 = vpack.c.b16 %v2045, %v2041
    %v3542 = vpack.c.b16 %v2050, %v2046
    %v3543 = vpack.c.b16 %v2051, %v2047
    %v3544 = vpack.c.b16 %v2052, %v2048
    %v3545 = vpack.c.b16 %v2053, %v2049
    %v3546 = vpack.c.b16 %v2058, %v2054
    %v3547 = vpack.c.b16 %v2059, %v2055
    %v3548 = vpack.c.b16 %v2060, %v2056
    %v3549 = vpack.c.b16 %v2061, %v2057
    %v3550 = vpack.c.b16 %v2066, %v2062
    %v3551 = vpack.c.b16 %v2067, %v2063
    %v3552 = vpack.c.b16 %v2068, %v2064
    %v3553 = vpack.c.b16 %v2069, %v2065
    %v3554 = vpack.c.b16 %v2074, %v2070
    %v3555 = vpack.c.b16 %v2075, %v2071
    %v3556 = vpack.c.b16 %v2076, %v2072
    %v3557 = vpack.c.b16 %v2077, %v2073
    %v3558 = vpack.c.b16 %v2082, %v2078
    %v3559 = vpack.c.b16 %v2083, %v2079
    %v3560 = vpack.c.b16 %v2084, %v2080
    %v3561 = vpack.c.b16 %v2085, %v2081
    %v3562 = vpack.c.b16 %v2090, %v2086
    %v3563 = vpack.c.b16 %v2091, %v2087
    %v3564 = vpack.c.b16 %v2092, %v2088
    %v3565 = vpack.c.b16 %v2093, %v2089
    %v3566 = vpack.c.b16 %v2098, %v2094
    %v3567 = vpack.c.b16 %v2099, %v2095
    %v3568 = vpack.c.b16 %v2100, %v2096
    %v3569 = vpack.c.b16 %v2101, %v2097
    %v3570 = vpack.c.b16 %v2106, %v2102
    %v3571 = vpack.c.b16 %v2107, %v2103
    %v3572 = vpack.c.b16 %v2108, %v2104
    %v3573 = vpack.c.b16 %v2109, %v2105
    %v3574 = vpack.c.b16 %v2114, %v2110
    %v3575 = vpack.c.b16 %v2115, %v2111
    %v3576 = vpack.c.b16 %v2116, %v2112
    %v3577 = vpack.c.b16 %v2117, %v2113
    %v3578 = vpack.c.b16 %v2122, %v2118
    %v3579 = vpack.c.b16 %v2123, %v2119
    %v3580 = vpack.c.b16 %v2124, %v2120
    %v3581 = vpack.c.b16 %v2125, %v2121
    %v3582 = vpack.c.b16 %v2130, %v2126
    %v3583 = vpack.c.b16 %v2131, %v2127
    %v3584 = vpack.c.b16 %v2132, %v2128
    %v3585 = vpack.c.b16 %v2133, %v2129
    %v3586 = vpack.c.b16 %v2138, %v2134
    %v3587 = vpack.c.b16 %v2139, %v2135
    %v3588 = vpack.c.b16 %v2140, %v2136
    %v3589 = vpack.c.b16 %v2141, %v2137
    %v3590 = vpack.c.b16 %v2146, %v2142
    %v3591 = vpack.c.b16 %v2147, %v2143
    %v3592 = vpack.c.b16 %v2148, %v2144
    %v3593 = vpack.c.b16 %v2149, %v2145
    %v3594 = vpack.c.b16 %v2154, %v2150
    %v3595 = vpack.c.b16 %v2155, %v2151
    %v3596 = vpack.c.b16 %v2156, %v2152
    %v3597 = vpack.c.b16 %v2157, %v2153
    %v3598 = vpack.c.b16 %v2162, %v2158
    %v3599 = vpack.c.b16 %v2163, %v2159
    %v3600 = vpack.c.b16 %v2164, %v2160
    %v3601 = vpack.c.b16 %v2165, %v2161
    %v3602 = vpack.c.b16 %v2170, %v2166
    %v3603 = vpack.c.b16 %v2171, %v2167
    %v3604 = vpack.c.b16 %v2172, %v2168
    %v3605 = vpack.c.b16 %v2173, %v2169
    %v3606 = vpack.c.b16 %v2178, %v2174
    %v3607 = vpack.c.b16 %v2179, %v2175
    %v3608 = vpack.c.b16 %v2180, %v2176
    %v3609 = vpack.c.b16 %v2181, %v2177
    %v3610 = vpack.c.b16 %v2186, %v2182
    %v3611 = vpack.c.b16 %v2187, %v2183
    %v3612 = vpack.c.b16 %v2188, %v2184
    %v3613 = vpack.c.b16 %v2189, %v2185
    %v3614 = vpack.c.b16 %v2194, %v2190
    %v3615 = vpack.c.b16 %v2195, %v2191
    %v3616 = vpack.c.b16 %v2196, %v2192
    %v3617 = vpack.c.b16 %v2197, %v2193
    %v3618 = vpack.c.b16 %v2202, %v2198
    %v3619 = vpack.c.b16 %v2203, %v2199
    %v3620 = vpack.c.b16 %v2204, %v2200
    %v3621 = vpack.c.b16 %v2205, %v2201
    %v3622 = vpack.c.b16 %v2210, %v2206
    %v3623 = vpack.c.b16 %v2211, %v2207
    %v3624 = vpack.c.b16 %v2212, %v2208
    %v3625 = vpack.c.b16 %v2213, %v2209
    %v3626 = vpack.c.b16 %v2218, %v2214
    %v3627 = vpack.c.b16 %v2219, %v2215
    %v3628 = vpack.c.b16 %v2220, %v2216
    %v3629 = vpack.c.b16 %v2221, %v2217
    %v3630 = vpack.c.b16 %v2226, %v2222
    %v3631 = vpack.c.b16 %v2227, %v2223
    %v3632 = vpack.c.b16 %v2228, %v2224
    %v3633 = vpack.c.b16 %v2229, %v2225
    %v3634 = vpack.c.b16 %v2234, %v2230
    %v3635 = vpack.c.b16 %v2235, %v2231
    %v3636 = vpack.c.b16 %v2236, %v2232
    %v3637 = vpack.c.b16 %v2237, %v2233
    %v3638 = vpack.c.b16 %v2242, %v2238
    %v3639 = vpack.c.b16 %v2243, %v2239
    %v3640 = vpack.c.b16 %v2244, %v2240
    %v3641 = vpack.c.b16 %v2245, %v2241
    %v3642 = vpack.c.b16 %v2250, %v2246
    %v3643 = vpack.c.b16 %v2251, %v2247
    %v3644 = vpack.c.b16 %v2252, %v2248
    %v3645 = vpack.c.b16 %v2253, %v2249
    %v3646 = vpack.c.b16 %v2258, %v2254
    %v3647 = vpack.c.b16 %v2259, %v2255
    %v3648 = vpack.c.b16 %v2260, %v2256
    %v3649 = vpack.c.b16 %v2261, %v2257
    %v3650 = vpack.c.b16 %v2266, %v2262
    %v3651 = vpack.c.b16 %v2267, %v2263
    %v3652 = vpack.c.b16 %v2268, %v2264
    %v3653 = vpack.c.b16 %v2269, %v2265
    %v3654 = vpack.c.b16 %v2274, %v2270
    %v3655 = vpack.c.b16 %v2275, %v2271
    %v3656 = vpack.c.b16 %v2276, %v2272
    %v3657 = vpack.c.b16 %v2277, %v2273
    %v3658 = vpack.c.b16 %v2282, %v2278
    %v3659 = vpack.c.b16 %v2283, %v2279
    %v3660 = vpack.c.b16 %v2284, %v2280
    %v3661 = vpack.c.b16 %v2285, %v2281
    %v3662 = vpack.c.b16 %v2290, %v2286
    %v3663 = vpack.c.b16 %v2291, %v2287
    %v3664 = vpack.c.b16 %v2292, %v2288
    %v3665 = vpack.c.b16 %v2293, %v2289
    %v3666 = vpack.c.b16 %v2298, %v2294
    %v3667 = vpack.c.b16 %v2299, %v2295
    %v3668 = vpack.c.b16 %v2300, %v2296
    %v3669 = vpack.c.b16 %v2301, %v2297
    %v3670 = vpack.c.b16 %v2306, %v2302
    %v3671 = vpack.c.b16 %v2307, %v2303
    %v3672 = vpack.c.b16 %v2308, %v2304
    %v3673 = vpack.c.b16 %v2309, %v2305
    %v3674 = vpack.c.b16 %v2314, %v2310
    %v3675 = vpack.c.b16 %v2315, %v2311
    %v3676 = vpack.c.b16 %v2316, %v2312
    %v3677 = vpack.c.b16 %v2317, %v2313
    %v3678 = vpack.c.b16 %v2322, %v2318
    %v3679 = vpack.c.b16 %v2323, %v2319
    %v3680 = vpack.c.b16 %v2324, %v2320
    %v3681 = vpack.c.b16 %v2325, %v2321
    %v3682 = vpack.c.b16 %v2330, %v2326
    %v3683 = vpack.c.b16 %v2331, %v2327
    %v3684 = vpack.c.b16 %v2332, %v2328
    %v3685 = vpack.c.b16 %v2333, %v2329
    %v3686 = vpack.c.b16 %v2338, %v2334
    %v3687 = vpack.c.b16 %v2339, %v2335
    %v3688 = vpack.c.b16 %v2340, %v2336
    %v3689 = vpack.c.b16 %v2341, %v2337
    %v3690 = vpack.c.b16 %v2346, %v2342
    %v3691 = vpack.c.b16 %v2347, %v2343
    %v3692 = vpack.c.b16 %v2348, %v2344
    %v3693 = vpack.c.b16 %v2349, %v2345
    %v3694 = vpack.c.b16 %v2354, %v2350
    %v3695 = vpack.c.b16 %v2355, %v2351
    %v3696 = vpack.c.b16 %v2356, %v2352
    %v3697 = vpack.c.b16 %v2357, %v2353
    %v3698 = vpack.c.b16 %v2362, %v2358
    %v3699 = vpack.c.b16 %v2363, %v2359
    %v3700 = vpack.c.b16 %v2364, %v2360
    %v3701 = vpack.c.b16 %v2365, %v2361
    %v3702 = vpack.c.b16 %v2370, %v2366
    %v3703 = vpack.c.b16 %v2371, %v2367
    %v3704 = vpack.c.b16 %v2372, %v2368
    %v3705 = vpack.c.b16 %v2373, %v2369
    %v3706 = vpack.c.b16 %v2378, %v2374
    %v3707 = vpack.c.b16 %v2379, %v2375
    %v3708 = vpack.c.b16 %v2380, %v2376
    %v3709 = vpack.c.b16 %v2381, %v2377
    %v3710 = vpack.c.b16 %v2386, %v2382
    %v3711 = vpack.c.b16 %v2387, %v2383
    %v3712 = vpack.c.b16 %v2388, %v2384
    %v3713 = vpack.c.b16 %v2389, %v2385
    %v3714 = vpack.c.b16 %v2394, %v2390
    %v3715 = vpack.c.b16 %v2395, %v2391
    %v3716 = vpack.c.b16 %v2396, %v2392
    %v3717 = vpack.c.b16 %v2397, %v2393
    %v3718 = vpack.c.b16 %v2402, %v2398
    %v3719 = vpack.c.b16 %v2403, %v2399
    %v3720 = vpack.c.b16 %v2404, %v2400
    %v3721 = vpack.c.b16 %v2405, %v2401
    %v3722 = vpack.c.b16 %v2410, %v2406
    %v3723 = vpack.c.b16 %v2411, %v2407
    %v3724 = vpack.c.b16 %v2412, %v2408
    %v3725 = vpack.c.b16 %v2413, %v2409
    %v3726 = vpack.c.b16 %v2418, %v2414
    %v3727 = vpack.c.b16 %v2419, %v2415
    %v3728 = vpack.c.b16 %v2420, %v2416
    %v3729 = vpack.c.b16 %v2421, %v2417
    %v3730 = vpack.c.b16 %v2426, %v2422
    %v3731 = vpack.c.b16 %v2427, %v2423
    %v3732 = vpack.c.b16 %v2428, %v2424
    %v3733 = vpack.c.b16 %v2429, %v2425
    %v3734 = vpack.c.b16 %v2434, %v2430
    %v3735 = vpack.c.b16 %v2435, %v2431
    %v3736 = vpack.c.b16 %v2436, %v2432
    %v3737 = vpack.c.b16 %v2437, %v2433
    %v3738 = vpack.c.b16 %v2442, %v2438
    %v3739 = vpack.c.b16 %v2443, %v2439
    %v3740 = vpack.c.b16 %v2444, %v2440
    %v3741 = vpack.c.b16 %v2445, %v2441
    %v3742 = vpack.c.b16 %v2450, %v2446
    %v3743 = vpack.c.b16 %v2451, %v2447
    %v3744 = vpack.c.b16 %v2452, %v2448
    %v3745 = vpack.c.b16 %v2453, %v2449
    %v3746 = vpack.c.b16 %v2458, %v2454
    %v3747 = vpack.c.b16 %v2459, %v2455
    %v3748 = vpack.c.b16 %v2460, %v2456
    %v3749 = vpack.c.b16 %v2461, %v2457
    %v3750 = vpack.c.b16 %v2466, %v2462
    %v3751 = vpack.c.b16 %v2467, %v2463
    %v3752 = vpack.c.b16 %v2468, %v2464
    %v3753 = vpack.c.b16 %v2469, %v2465
    %v3754 = vpack.c.b16 %v2474, %v2470
    %v3755 = vpack.c.b16 %v2475, %v2471
    %v3756 = vpack.c.b16 %v2476, %v2472
    %v3757 = vpack.c.b16 %v2477, %v2473
    %v3758 = vpack.c.b16 %v2482, %v2478
    %v3759 = vpack.c.b16 %v2483, %v2479
    %v3760 = vpack.c.b16 %v2484, %v2480
    %v3761 = vpack.c.b16 %v2485, %v2481
    %v3762 = vpack.c.b16 %v2490, %v2486
    %v3763 = vpack.c.b16 %v2491, %v2487
    %v3764 = vpack.c.b16 %v2492, %v2488
    %v3765 = vpack.c.b16 %v2493, %v2489
    %v3766 = vpack.c.b16 %v2498, %v2494
    %v3767 = vpack.c.b16 %v2499, %v2495
    %v3768 = vpack.c.b16 %v2500, %v2496
    %v3769 = vpack.c.b16 %v2501, %v2497
    %v3770 = vpack.c.b16 %v2506, %v2502
    %v3771 = vpack.c.b16 %v2507, %v2503
    %v3772 = vpack.c.b16 %v2508, %v2504
    %v3773 = vpack.c.b16 %v2509, %v2505
    %v3774 = vpack.c.b16 %v2514, %v2510
    %v3775 = vpack.c.b16 %v2515, %v2511
    %v3776 = vpack.c.b16 %v2516, %v2512
    %v3777 = vpack.c.b16 %v2517, %v2513
    %v3778 = vpack.c.b16 %v2522, %v2518
    %v3779 = vpack.c.b16 %v2523, %v2519
    %v3780 = vpack.c.b16 %v2524, %v2520
    %v3781 = vpack.c.b16 %v2525, %v2521
    %v3782 = vpack.c.b16 %v2530, %v2526
    %v3783 = vpack.c.b16 %v2531, %v2527
    %v3784 = vpack.c.b16 %v2532, %v2528
    %v3785 = vpack.c.b16 %v2533, %v2529
    %v3786 = vpack.c.b16 %v2538, %v2534
    %v3787 = vpack.c.b16 %v2539, %v2535
    %v3788 = vpack.c.b16 %v2540, %v2536
    %v3789 = vpack.c.b16 %v2541, %v2537
    %v3790 = vpack.c.b16 %v2546, %v2542
    %v3791 = vpack.c.b16 %v2547, %v2543
    %v3792 = vpack.c.b16 %v2548, %v2544
    %v3793 = vpack.c.b16 %v2549, %v2545
    %v3794 = vpack.c.b16 %v2554, %v2550
    %v3795 = vpack.c.b16 %v2555, %v2551
    %v3796 = vpack.c.b16 %v2556, %v2552
    %v3797 = vpack.c.b16 %v2557, %v2553
    %v3798 = vpack.c.b16 %v2562, %v2558
    %v3799 = vpack.c.b16 %v2563, %v2559
    %v3800 = vpack.c.b16 %v2564, %v2560
    %v3801 = vpack.c.b16 %v2565, %v2561
    %v3802 = vpack.c.b16 %v2570, %v2566
    %v3803 = vpack.c.b16 %v2571, %v2567
    %v3804 = vpack.c.b16 %v2572, %v2568
    %v3805 = vpack.c.b16 %v2573, %v2569
    %v3806 = vpack.c.b16 %v2578, %v2574
    %v3807 = vpack.c.b16 %v2579, %v2575
    %v3808 = vpack.c.b16 %v2580, %v2576
    %v3809 = vpack.c.b16 %v2581, %v2577
    %v3810 = vpack.c.b16 %v2586, %v2582
    %v3811 = vpack.c.b16 %v2587, %v2583
    %v3812 = vpack.c.b16 %v2588, %v2584
    %v3813 = vpack.c.b16 %v2589, %v2585
    %v3814 = vpack.c.b16 %v2594, %v2590
    %v3815 = vpack.c.b16 %v2595, %v2591
    %v3816 = vpack.c.b16 %v2596, %v2592
    %v3817 = vpack.c.b16 %v2597, %v2593
    %v3818 = vpack.c.b16 %v2602, %v2598
    %v3819 = vpack.c.b16 %v2603, %v2599
    %v3820 = vpack.c.b16 %v2604, %v2600
    %v3821 = vpack.c.b16 %v2605, %v2601
    %v3822 = vpack.c.b16 %v2610, %v2606
    %v3823 = vpack.c.b16 %v2611, %v2607
    %v3824 = vpack.c.b16 %v2612, %v2608
    %v3825 = vpack.c.b16 %v2613, %v2609
    %v3826 = vpack.c.b16 %v2618, %v2614
    %v3827 = vpack.c.b16 %v2619, %v2615
    %v3828 = vpack.c.b16 %v2620, %v2616
    %v3829 = vpack.c.b16 %v2621, %v2617
    %v3830 = vpack.c.b16 %v2626, %v2622
    %v3831 = vpack.c.b16 %v2627, %v2623
    %v3832 = vpack.c.b16 %v2628, %v2624
    %v3833 = vpack.c.b16 %v2629, %v2625
    %v3834 = vpack.c.b16 %v2634, %v2630
    %v3835 = vpack.c.b16 %v2635, %v2631
    %v3836 = vpack.c.b16 %v2636, %v2632
    %v3837 = vpack.c.b16 %v2637, %v2633
    %v3838 = vpack.c.b16 %v2642, %v2638
    %v3839 = vpack.c.b16 %v2643, %v2639
    %v3840 = vpack.c.b16 %v2644, %v2640
    %v3841 = vpack.c.b16 %v2645, %v2641
    %v3842 = vpack.c.b16 %v2650, %v2646
    %v3843 = vpack.c.b16 %v2651, %v2647
    %v3844 = vpack.c.b16 %v2652, %v2648
    %v3845 = vpack.c.b16 %v2653, %v2649
    %v3846 = vpack.c.b16 %v2658, %v2654
    %v3847 = vpack.c.b16 %v2659, %v2655
    %v3848 = vpack.c.b16 %v2660, %v2656
    %v3849 = vpack.c.b16 %v2661, %v2657
    %v3850 = vpack.c.b16 %v2666, %v2662
    %v3851 = vpack.c.b16 %v2667, %v2663
    %v3852 = vpack.c.b16 %v2668, %v2664
    %v3853 = vpack.c.b16 %v2669, %v2665
    %v3854 = vpack.c.b16 %v2674, %v2670
    %v3855 = vpack.c.b16 %v2675, %v2671
    %v3856 = vpack.c.b16 %v2676, %v2672
    %v3857 = vpack.c.b16 %v2677, %v2673
    %v3858 = vpack.c.b16 %v2682, %v2678
    %v3859 = vpack.c.b16 %v2683, %v2679
    %v3860 = vpack.c.b16 %v2684, %v2680
    %v3861 = vpack.c.b16 %v2685, %v2681
    %v3862 = vpack.c.b16 %v2690, %v2686
    %v3863 = vpack.c.b16 %v2691, %v2687
    %v3864 = vpack.c.b16 %v2692, %v2688
    %v3865 = vpack.c.b16 %v2693, %v2689
    %v3866 = vpack.c.b16 %v2698, %v2694
    %v3867 = vpack.c.b16 %v2699, %v2695
    %v3868 = vpack.c.b16 %v2700, %v2696
    %v3869 = vpack.c.b16 %v2701, %v2697
    %v3870 = vpack.c.b16 %v2706, %v2702
    %v3871 = vpack.c.b16 %v2707, %v2703
    %v3872 = vpack.c.b16 %v2708, %v2704
    %v3873 = vpack.c.b16 %v2709, %v2705
    %v3874 = vpack.c.b16 %v2714, %v2710
    %v3875 = vpack.c.b16 %v2715, %v2711
    %v3876 = vpack.c.b16 %v2716, %v2712
    %v3877 = vpack.c.b16 %v2717, %v2713
    %v3878 = vpack.c.b16 %v2722, %v2718
    %v3879 = vpack.c.b16 %v2723, %v2719
    %v3880 = vpack.c.b16 %v2724, %v2720
    %v3881 = vpack.c.b16 %v2725, %v2721
    %v3882 = vpack.c.b16 %v2730, %v2726
    %v3883 = vpack.c.b16 %v2731, %v2727
    %v3884 = vpack.c.b16 %v2732, %v2728
    %v3885 = vpack.c.b16 %v2733, %v2729
    %v3886 = vpack.c.b16 %v2738, %v2734
    %v3887 = vpack.c.b16 %v2739, %v2735
    %v3888 = vpack.c.b16 %v2740, %v2736
    %v3889 = vpack.c.b16 %v2741, %v2737
    %v3890 = vpack.c.b16 %v2746, %v2742
    %v3891 = vpack.c.b16 %v2747, %v2743
    %v3892 = vpack.c.b16 %v2748, %v2744
    %v3893 = vpack.c.b16 %v2749, %v2745
    %v3894 = vpack.c.b16 %v2754, %v2750
    %v3895 = vpack.c.b16 %v2755, %v2751
    %v3896 = vpack.c.b16 %v2756, %v2752
    %v3897 = vpack.c.b16 %v2757, %v2753
    %v3898 = vpack.c.b16 %v2762, %v2758
    %v3899 = vpack.c.b16 %v2763, %v2759
    %v3900 = vpack.c.b16 %v2764, %v2760
    %v3901 = vpack.c.b16 %v2765, %v2761
    %v3902 = vpack.c.b16 %v2770, %v2766
    %v3903 = vpack.c.b16 %v2771, %v2767
    %v3904 = vpack.c.b16 %v2772, %v2768
    %v3905 = vpack.c.b16 %v2773, %v2769
    %v3906 = vpack.c.b16 %v2778, %v2774
    %v3907 = vpack.c.b16 %v2779, %v2775
    %v3908 = vpack.c.b16 %v2780, %v2776
    %v3909 = vpack.c.b16 %v2781, %v2777
    %v3910 = vpack.c.b16 %v2786, %v2782
    %v3911 = vpack.c.b16 %v2787, %v2783
    %v3912 = vpack.c.b16 %v2788, %v2784
    %v3913 = vpack.c.b16 %v2789, %v2785
    %v3914 = vpack.c.b16 %v2794, %v2790
    %v3915 = vpack.c.b16 %v2795, %v2791
    %v3916 = vpack.c.b16 %v2796, %v2792
    %v3917 = vpack.c.b16 %v2797, %v2793
    %v3918 = vpack.c.b16 %v2802, %v2798
    %v3919 = vpack.c.b16 %v2803, %v2799
    %v3920 = vpack.c.b16 %v2804, %v2800
    %v3921 = vpack.c.b16 %v2805, %v2801
    %v3922 = vpack.c.b16 %v2810, %v2806
    %v3923 = vpack.c.b16 %v2811, %v2807
    %v3924 = vpack.c.b16 %v2812, %v2808
    %v3925 = vpack.c.b16 %v2813, %v2809
    %v3926 = vpack.c.b16 %v2818, %v2814
    %v3927 = vpack.c.b16 %v2819, %v2815
    %v3928 = vpack.c.b16 %v2820, %v2816
    %v3929 = vpack.c.b16 %v2821, %v2817
    %v3930 = vpack.c.b16 %v2826, %v2822
    %v3931 = vpack.c.b16 %v2827, %v2823
    %v3932 = vpack.c.b16 %v2828, %v2824
    %v3933 = vpack.c.b16 %v2829, %v2825
    %v3934 = vpack.c.b16 %v2834, %v2830
    %v3935 = vpack.c.b16 %v2835, %v2831
    %v3936 = vpack.c.b16 %v2836, %v2832
    %v3937 = vpack.c.b16 %v2837, %v2833
    %v3938 = vpack.c.b16 %v2842, %v2838
    %v3939 = vpack.c.b16 %v2843, %v2839
    %v3940 = vpack.c.b16 %v2844, %v2840
    %v3941 = vpack.c.b16 %v2845, %v2841
    %v3942 = vpack.c.b16 %v2850, %v2846
    %v3943 = vpack.c.b16 %v2851, %v2847
    %v3944 = vpack.c.b16 %v2852, %v2848
    %v3945 = vpack.c.b16 %v2853, %v2849
    %v3946 = vpack.c.b16 %v2858, %v2854
    %v3947 = vpack.c.b16 %v2859, %v2855
    %v3948 = vpack.c.b16 %v2860, %v2856
    %v3949 = vpack.c.b16 %v2861, %v2857
    %v3950 = vpack.c.b16 %v2866, %v2862
    %v3951 = vpack.c.b16 %v2867, %v2863
    %v3952 = vpack.c.b16 %v2868, %v2864
    %v3953 = vpack.c.b16 %v2869, %v2865
    %v3954 = vpack.c.b16 %v2874, %v2870
    %v3955 = vpack.c.b16 %v2875, %v2871
    %v3956 = vpack.c.b16 %v2876, %v2872
    %v3957 = vpack.c.b16 %v2877, %v2873
    %v3958 = vpack.c.b16 %v2882, %v2878
    %v3959 = vpack.c.b16 %v2883, %v2879
    %v3960 = vpack.c.b16 %v2884, %v2880
    %v3961 = vpack.c.b16 %v2885, %v2881
    %v3962 = vpack.c.b16 %v2890, %v2886
    %v3963 = vpack.c.b16 %v2891, %v2887
    %v3964 = vpack.c.b16 %v2892, %v2888
    %v3965 = vpack.c.b16 %v2893, %v2889
    %v3966 = vpack.c.b16 %v2898, %v2894
    %v3967 = vpack.c.b16 %v2899, %v2895
    %v3968 = vpack.c.b16 %v2900, %v2896
    %v3969 = vpack.c.b16 %v2901, %v2897
    %v3970 = vpack.c.b16 %v2906, %v2902
    %v3971 = vpack.c.b16 %v2907, %v2903
    %v3972 = vpack.c.b16 %v2908, %v2904
    %v3973 = vpack.c.b16 %v2909, %v2905
    %v3974 = vpack.c.b16 %v2914, %v2910
    %v3975 = vpack.c.b16 %v2915, %v2911
    %v3976 = vpack.c.b16 %v2916, %v2912
    %v3977 = vpack.c.b16 %v2917, %v2913
    %v3978 = vpack.c.b16 %v2922, %v2918
    %v3979 = vpack.c.b16 %v2923, %v2919
    %v3980 = vpack.c.b16 %v2924, %v2920
    %v3981 = vpack.c.b16 %v2925, %v2921
    %v3982 = vpack.c.b16 %v2930, %v2926
    %v3983 = vpack.c.b16 %v2931, %v2927
    %v3984 = vpack.c.b16 %v2932, %v2928
    %v3985 = vpack.c.b16 %v2933, %v2929
    %v3986 = vpack.c.b16 %v2938, %v2934
    %v3987 = vpack.c.b16 %v2939, %v2935
    %v3988 = vpack.c.b16 %v2940, %v2936
    %v3989 = vpack.c.b16 %v2941, %v2937
    %v3990 = vpack.c.b16 %v2946, %v2942
    %v3991 = vpack.c.b16 %v2947, %v2943
    %v3992 = vpack.c.b16 %v2948, %v2944
    %v3993 = vpack.c.b16 %v2949, %v2945
    %v3994 = vpack.c.b16 %v2954, %v2950
    %v3995 = vpack.c.b16 %v2955, %v2951
    %v3996 = vpack.c.b16 %v2956, %v2952
    %v3997 = vpack.c.b16 %v2957, %v2953
    %v3998 = vpack.c.b16 %v2962, %v2958
    %v3999 = vpack.c.b16 %v2963, %v2959
    %v4000 = vpack.c.b16 %v2964, %v2960
    %v4001 = vpack.c.b16 %v2965, %v2961
    %v4002 = vpack.c.b16 %v2970, %v2966
    %v4003 = vpack.c.b16 %v2971, %v2967
    %v4004 = vpack.c.b16 %v2972, %v2968
    %v4005 = vpack.c.b16 %v2973, %v2969
    %v4006 = vpack.c.b16 %v2978, %v2974
    %v4007 = vpack.c.b16 %v2979, %v2975
    %v4008 = vpack.c.b16 %v2980, %v2976
    %v4009 = vpack.c.b16 %v2981, %v2977
    %v4010 = vpack.c.b16 %v2986, %v2982
    %v4011 = vpack.c.b16 %v2987, %v2983
    %v4012 = vpack.c.b16 %v2988, %v2984
    %v4013 = vpack.c.b16 %v2989, %v2985
    %v4014 = vpack.c.b16 %v2994, %v2990
    %v4015 = vpack.c.b16 %v2995, %v2991
    %v4016 = vpack.c.b16 %v2996, %v2992
    %v4017 = vpack.c.b16 %v2997, %v2993
    %v4018 = vpack.c.b16 %v3002, %v2998
    %v4019 = vpack.c.b16 %v3003, %v2999
    %v4020 = vpack.c.b16 %v3004, %v3000
    %v4021 = vpack.c.b16 %v3005, %v3001
    %v4022 = vpack.c.b16 %v3010, %v3006
    %v4023 = vpack.c.b16 %v3011, %v3007
    %v4024 = vpack.c.b16 %v3012, %v3008
    %v4025 = vpack.c.b16 %v3013, %v3009
    %v4026 = vpack.c.b16 %v3018, %v3014
    %v4027 = vpack.c.b16 %v3019, %v3015
    %v4028 = vpack.c.b16 %v3020, %v3016
    %v4029 = vpack.c.b16 %v3021, %v3017
    %v4030 = vpack.c.b16 %v3026, %v3022
    %v4031 = vpack.c.b16 %v3027, %v3023
    %v4032 = vpack.c.b16 %v3028, %v3024
    %v4033 = vpack.c.b16 %v3029, %v3025
    %v4034 = vpack.c.b16 %v3034, %v3030
    %v4035 = vpack.c.b16 %v3035, %v3031
    %v4036 = vpack.c.b16 %v3036, %v3032
    %v4037 = vpack.c.b16 %v3037, %v3033
    %v4038 = vpack.c.b16 %v3042, %v3038
    %v4039 = vpack.c.b16 %v3043, %v3039
    %v4040 = vpack.c.b16 %v3044, %v3040
    %v4041 = vpack.c.b16 %v3045, %v3041
    %v4042 = vpack.c.b16 %v3050, %v3046
    %v4043 = vpack.c.b16 %v3051, %v3047
    %v4044 = vpack.c.b16 %v3052, %v3048
    %v4045 = vpack.c.b16 %v3053, %v3049
    %v4046 = vpack.c.b16 %v3058, %v3054
    %v4047 = vpack.c.b16 %v3059, %v3055
    %v4048 = vpack.c.b16 %v3060, %v3056
    %v4049 = vpack.c.b16 %v3061, %v3057
    %v4050 = vpack.c.b16 %v3066, %v3062
    %v4051 = vpack.c.b16 %v3067, %v3063
    %v4052 = vpack.c.b16 %v3068, %v3064
    %v4053 = vpack.c.b16 %v3069, %v3065
    %v4054 = vpack.c.b16 %v3074, %v3070
    %v4055 = vpack.c.b16 %v3075, %v3071
    %v4056 = vpack.c.b16 %v3076, %v3072
    %v4057 = vpack.c.b16 %v3077, %v3073
    %v4058 = vpack.c.b16 %v3082, %v3078
    %v4059 = vpack.c.b16 %v3083, %v3079
    %v4060 = vpack.c.b16 %v3084, %v3080
    %v4061 = vpack.c.b16 %v3085, %v3081
    %v4062 = vpack.c.b16 %v3090, %v3086
    %v4063 = vpack.c.b16 %v3091, %v3087
    %v4064 = vpack.c.b16 %v3092, %v3088
    %v4065 = vpack.c.b16 %v3093, %v3089
    %v4066 = vpack.c.b16 %v3098, %v3094
    %v4067 = vpack.c.b16 %v3099, %v3095
    %v4068 = vpack.c.b16 %v3100, %v3096
    %v4069 = vpack.c.b16 %v3101, %v3097
    %v4070 = vpack.c.b16 %v3106, %v3102
    %v4071 = vpack.c.b16 %v3107, %v3103
    %v4072 = vpack.c.b16 %v3108, %v3104
    %v4073 = vpack.c.b16 %v3109, %v3105
    %v4074 = vpack.c.b16 %v3114, %v3110
    %v4075 = vpack.c.b16 %v3115, %v3111
    %v4076 = vpack.c.b16 %v3116, %v3112
    %v4077 = vpack.c.b16 %v3117, %v3113
    %v4078 = vpack.c.b16 %v3122, %v3118
    %v4079 = vpack.c.b16 %v3123, %v3119
    %v4080 = vpack.c.b16 %v3124, %v3120
    %v4081 = vpack.c.b16 %v3125, %v3121
    %v4082 = vpack.c.b16 %v3130, %v3126
    %v4083 = vpack.c.b16 %v3131, %v3127
    %v4084 = vpack.c.b16 %v3132, %v3128
    %v4085 = vpack.c.b16 %v3133, %v3129
    %v4086 = vpack.c.b16 %v3138, %v3134
    %v4087 = vpack.c.b16 %v3139, %v3135
    %v4088 = vpack.c.b16 %v3140, %v3136
    %v4089 = vpack.c.b16 %v3141, %v3137
    %v4090 = vpack.c.b16 %v3146, %v3142
    %v4091 = vpack.c.b16 %v3147, %v3143
    %v4092 = vpack.c.b16 %v3148, %v3144
    %v4093 = vpack.c.b16 %v3149, %v3145
    %v4094 = vpack.c.b16 %v3154, %v3150
    %v4095 = vpack.c.b16 %v3155, %v3151
    %v4096 = vpack.c.b16 %v3156, %v3152
    %v4097 = vpack.c.b16 %v3157, %v3153
    %v4098 = vpack.c.b16 %v3162, %v3158
    %v4099 = vpack.c.b16 %v3163, %v3159
    %v4100 = vpack.c.b16 %v3164, %v3160
    %v4101 = vpack.c.b16 %v3165, %v3161
    %v4102 = vpack.c.b16 %v3170, %v3166
    %v4103 = vpack.c.b16 %v3171, %v3167
    %v4104 = vpack.c.b16 %v3172, %v3168
    %v4105 = vpack.c.b16 %v3173, %v3169
    %v4106 = vpack.c.b16 %v3178, %v3174
    %v4107 = vpack.c.b16 %v3179, %v3175
    %v4108 = vpack.c.b16 %v3180, %v3176
    %v4109 = vpack.c.b16 %v3181, %v3177
    %v4110 = vpack.c.b16 %v3186, %v3182
    %v4111 = vpack.c.b16 %v3187, %v3183
    %v4112 = vpack.c.b16 %v3188, %v3184
    %v4113 = vpack.c.b16 %v3189, %v3185
    %v4114 = vpack.c.b16 %v3194, %v3190
    %v4115 = vpack.c.b16 %v3195, %v3191
    %v4116 = vpack.c.b16 %v3196, %v3192
    %v4117 = vpack.c.b16 %v3197, %v3193
    %v4118 = vpack.c.b16 %v3202, %v3198
    %v4119 = vpack.c.b16 %v3203, %v3199
    %v4120 = vpack.c.b16 %v3204, %v3200
    %v4121 = vpack.c.b16 %v3205, %v3201
    %v4122 = vpack.c.b16 %v3210, %v3206
    %v4123 = vpack.c.b16 %v3211, %v3207
    %v4124 = vpack.c.b16 %v3212, %v3208
    %v4125 = vpack.c.b16 %v3213, %v3209
    %v4126 = vpack.c.b16 %v3218, %v3214
    %v4127 = vpack.c.b16 %v3219, %v3215
    %v4128 = vpack.c.b16 %v3220, %v3216
    %v4129 = vpack.c.b16 %v3221, %v3217
    %v4130 = vpack.c.b16 %v3226, %v3222
    %v4131 = vpack.c.b16 %v3227, %v3223
    %v4132 = vpack.c.b16 %v3228, %v3224
    %v4133 = vpack.c.b16 %v3229, %v3225
    %v4134 = vpack.c.b16 %v3234, %v3230
    %v4135 = vpack.c.b16 %v3235, %v3231
    %v4136 = vpack.c.b16 %v3236, %v3232
    %v4137 = vpack.c.b16 %v3237, %v3233
    %v4138 = vpack.c.b16 %v3242, %v3238
    %v4139 = vpack.c.b16 %v3243, %v3239
    %v4140 = vpack.c.b16 %v3244, %v3240
    %v4141 = vpack.c.b16 %v3245, %v3241
    %v4142 = vpack.c.b16 %v3250, %v3246
    %v4143 = vpack.c.b16 %v3251, %v3247
    %v4144 = vpack.c.b16 %v3252, %v3248
    %v4145 = vpack.c.b16 %v3253, %v3249
    %v4146 = vpack.c.b16 %v3258, %v3254
    %v4147 = vpack.c.b16 %v3259, %v3255
    %v4148 = vpack.c.b16 %v3260, %v3256
    %v4149 = vpack.c.b16 %v3261, %v3257
    %v4150 = vpack.c.b16 %v3266, %v3262
    %v4151 = vpack.c.b16 %v3267, %v3263
    %v4152 = vpack.c.b16 %v3268, %v3264
    %v4153 = vpack.c.b16 %v3269, %v3265
    %v4154 = vpack.c.b16 %v3274, %v3270
    %v4155 = vpack.c.b16 %v3275, %v3271
    %v4156 = vpack.c.b16 %v3276, %v3272
    %v4157 = vpack.c.b16 %v3277, %v3273
    %v4158 = vpack.c.b16 %v3282, %v3278
    %v4159 = vpack.c.b16 %v3283, %v3279
    %v4160 = vpack.c.b16 %v3284, %v3280
    %v4161 = vpack.c.b16 %v3285, %v3281
    %v4162 = vpack.c.b16 %v3290, %v3286
    %v4163 = vpack.c.b16 %v3291, %v3287
    %v4164 = vpack.c.b16 %v3292, %v3288
    %v4165 = vpack.c.b16 %v3293, %v3289
    %v4166 = vpack.c.b16 %v3298, %v3294
    %v4167 = vpack.c.b16 %v3299, %v3295
    %v4168 = vpack.c.b16 %v3300, %v3296
    %v4169 = vpack.c.b16 %v3301, %v3297
    %v4170 = vpack.c.b16 %v3306, %v3302
    %v4171 = vpack.c.b16 %v3307, %v3303
    %v4172 = vpack.c.b16 %v3308, %v3304
    %v4173 = vpack.c.b16 %v3309, %v3305
    %v4174 = vpack.c.b16 %v3314, %v3310
    %v4175 = vpack.c.b16 %v3315, %v3311
    %v4176 = vpack.c.b16 %v3316, %v3312
    %v4177 = vpack.c.b16 %v3317, %v3313
    %v4178 = vpack.c.b16 %v3322, %v3318
    %v4179 = vpack.c.b16 %v3323, %v3319
    %v4180 = vpack.c.b16 %v3324, %v3320
    %v4181 = vpack.c.b16 %v3325, %v3321
    %v4182 = vpack.c.b16 %v3330, %v3326
    %v4183 = vpack.c.b16 %v3331, %v3327
    %v4184 = vpack.c.b16 %v3332, %v3328
    %v4185 = vpack.c.b16 %v3333, %v3329
    %v4186 = vpack.c.b16 %v3338, %v3334
    %v4187 = vpack.c.b16 %v3339, %v3335
    %v4188 = vpack.c.b16 %v3340, %v3336
    %v4189 = vpack.c.b16 %v3341, %v3337
    %v4190 = vpack.c.b16 %v3346, %v3342
    %v4191 = vpack.c.b16 %v3347, %v3343
    %v4192 = vpack.c.b16 %v3348, %v3344
    %v4193 = vpack.c.b16 %v3349, %v3345
    %v4194 = vpack.c.b16 %v3354, %v3350
    %v4195 = vpack.c.b16 %v3355, %v3351
    %v4196 = vpack.c.b16 %v3356, %v3352
    %v4197 = vpack.c.b16 %v3357, %v3353
    %v4198 = vpack.c.b16 %v3362, %v3358
    %v4199 = vpack.c.b16 %v3363, %v3359
    %v4200 = vpack.c.b16 %v3364, %v3360
    %v4201 = vpack.c.b16 %v3365, %v3361
    %v4202 = vpack.c.b16 %v3370, %v3366
    %v4203 = vpack.c.b16 %v3371, %v3367
    %v4204 = vpack.c.b16 %v3372, %v3368
    %v4205 = vpack.c.b16 %v3373, %v3369
    %v4206 = vpack.c.b16 %v3378, %v3374
    %v4207 = vpack.c.b16 %v3379, %v3375
    %v4208 = vpack.c.b16 %v3380, %v3376
    %v4209 = vpack.c.b16 %v3381, %v3377
    %v4210 = vpack.c.b16 %v3386, %v3382
    %v4211 = vpack.c.b16 %v3387, %v3383
    %v4212 = vpack.c.b16 %v3388, %v3384
    %v4213 = vpack.c.b16 %v3389, %v3385
    %v4214 = vpack.c.b16 %v3394, %v3390
    %v4215 = vpack.c.b16 %v3395, %v3391
    %v4216 = vpack.c.b16 %v3396, %v3392
    %v4217 = vpack.c.b16 %v3397, %v3393
    %v4218 = vpack.c.b16 %v3402, %v3398
    %v4219 = vpack.c.b16 %v3403, %v3399
    %v4220 = vpack.c.b16 %v3404, %v3400
    %v4221 = vpack.c.b16 %v3405, %v3401
    %v4222 = vpack.c.b16 %v3410, %v3406
    %v4223 = vpack.c.b16 %v3411, %v3407
    %v4224 = vpack.c.b16 %v3412, %v3408
    %v4225 = vpack.c.b16 %v3413, %v3409
    %v4226 = vpack.c.b16 %v3418, %v3414
    %v4227 = vpack.c.b16 %v3419, %v3415
    %v4228 = vpack.c.b16 %v3420, %v3416
    %v4229 = vpack.c.b16 %v3421, %v3417
    %v4230 = vpack.c.b16 %v3426, %v3422
    %v4231 = vpack.c.b16 %v3427, %v3423
    %v4232 = vpack.c.b16 %v3428, %v3424
    %v4233 = vpack.c.b16 %v3429, %v3425
    %v4234 = vpack.c.b16 %v3434, %v3430
    %v4235 = vpack.c.b16 %v3435, %v3431
    %v4236 = vpack.c.b16 %v3436, %v3432
    %v4237 = vpack.c.b16 %v3437, %v3433
    %5038 = vmatprep.subr.bf16.mxu0 %v3467
    %5039 = vmatpush1.bf16.msra.mxu0 %v3466
    %5040 = vmatprep.subr.bf16.mxu0 %v3463
    %5041 = vmatpush1.bf16.msra.mxu0 %v3462
    %5042 = vmatprep.subr.bf16.mxu0 %v3459
    %5043 = vmatpush1.bf16.msra.mxu0 %v3458
    %5044 = vmatprep.subr.bf16.mxu0 %v3455
    %5045 = vmatpush1.bf16.msra.mxu0 %v3454
    %5046 = vmatprep.subr.bf16.mxu0 %v3451
    %5047 = vmatpush1.bf16.msra.mxu0 %v3450
    %5048 = vmatprep.subr.bf16.mxu0 %v3447
    %5049 = vmatpush1.bf16.msra.mxu0 %v3446
    %5050 = vmatprep.subr.bf16.mxu0 %v3443
    %5051 = vmatpush1.bf16.msra.mxu0 %v3442
    %5052 = vmatprep.subr.bf16.mxu0 %v3439
    %5053 = vmatpush1.bf16.msra.mxu0 %v3438
    %5054 = vmatprep.subr.bf16.mxu0 %v3499
    %5055 = vmatpush2.bf16.msra.mxu0 %v3498
    %5056 = vmatprep.subr.bf16.mxu0 %v3495
    %5057 = vmatpush2.bf16.msra.mxu0 %v3494
    %5058 = vmatprep.subr.bf16.mxu0 %v3491
    %5059 = vmatpush2.bf16.msra.mxu0 %v3490
    %5060 = vmatprep.subr.bf16.mxu0 %v3487
    %5061 = vmatpush2.bf16.msra.mxu0 %v3486
    %5062 = vmatprep.subr.bf16.mxu0 %v3483
    %5063 = vmatpush2.bf16.msra.mxu0 %v3482
    %5064 = vmatprep.subr.bf16.mxu0 %v3479
    %5065 = vmatpush2.bf16.msra.mxu0 %v3478
    %5066 = vmatprep.subr.bf16.mxu0 %v3475
    %5067 = vmatpush2.bf16.msra.mxu0 %v3474
    %5068 = vmatprep.subr.bf16.mxu0 %v3471
    %5069 = vmatpush2.bf16.msra.mxu0 %v3470
    %5070 = vmatprep.mubr.bf16.mxu0 %v889
    %5071 = vmatmul.mubr.bf16.gmra.mxu0 %v875
    %v5072 = vpop.f32.mrf.mxu0
    %v5073 = vadd.f32 %v831, %v5072
    %v5074 = vpop.f32.mrf.mxu0
    %v5075 = vadd.f32 %v835, %v5074
    %v5076 = vpop.f32.mrf.mxu0
    %v5077 = vpop.f32.mrf.mxu0
    %5078 = vdwg.mxu0
    %5079 = vmatprep.subr.bf16.mxu0 %v3531
    %5080 = vmatpush1.bf16.msra.mxu0 %v3530
    %5081 = vmatprep.subr.bf16.mxu0 %v3527
    %5082 = vmatpush1.bf16.msra.mxu0 %v3526
    %5083 = vmatprep.subr.bf16.mxu0 %v3523
    %5084 = vmatpush1.bf16.msra.mxu0 %v3522
    %5085 = vmatprep.subr.bf16.mxu0 %v3519
    %5086 = vmatpush1.bf16.msra.mxu0 %v3518
    %5087 = vmatprep.subr.bf16.mxu0 %v3515
    %5088 = vmatpush1.bf16.msra.mxu0 %v3514
    %5089 = vmatprep.subr.bf16.mxu0 %v3511
    %5090 = vmatpush1.bf16.msra.mxu0 %v3510
    %5091 = vmatprep.subr.bf16.mxu0 %v3507
    %5092 = vmatpush1.bf16.msra.mxu0 %v3506
    %5093 = vmatprep.subr.bf16.mxu0 %v3503
    %5094 = vmatpush1.bf16.msra.mxu0 %v3502
    %5095 = vmatprep.subr.bf16.mxu0 %v3563
    %5096 = vmatpush2.bf16.msra.mxu0 %v3562
    %5097 = vmatprep.subr.bf16.mxu0 %v3559
    %5098 = vmatpush2.bf16.msra.mxu0 %v3558
    %5099 = vmatprep.subr.bf16.mxu0 %v3555
    %5100 = vmatpush2.bf16.msra.mxu0 %v3554
    %5101 = vmatprep.subr.bf16.mxu0 %v3551
    %5102 = vmatpush2.bf16.msra.mxu0 %v3550
    %5103 = vmatprep.subr.bf16.mxu0 %v3547
    %5104 = vmatpush2.bf16.msra.mxu0 %v3546
    %5105 = vmatprep.subr.bf16.mxu0 %v3543
    %5106 = vmatpush2.bf16.msra.mxu0 %v3542
    %5107 = vmatprep.subr.bf16.mxu0 %v3539
    %5108 = vmatpush2.bf16.msra.mxu0 %v3538
    %5109 = vmatprep.subr.bf16.mxu0 %v3535
    %5110 = vmatpush2.bf16.msra.mxu0 %v3534
    %5111 = vmatprep.mubr.bf16.mxu0 %v899
    %5112 = vmatmul.mubr.bf16.gmra.mxu0 %v897
    %v5113 = vpop.f32.mrf.mxu0
    %v5114 = vadd.f32 %v5073, %v5113
    %v5115 = vpop.f32.mrf.mxu0
    %v5116 = vadd.f32 %v5075, %v5115
    %v5117 = vpop.f32.mrf.mxu0
    %v5118 = vpop.f32.mrf.mxu0
    %5119 = vdwg.mxu0
    %5120 = vmatprep.subr.bf16.mxu0 %v3595
    %5121 = vmatpush1.bf16.msra.mxu0 %v3594
    %5122 = vmatprep.subr.bf16.mxu0 %v3591
    %5123 = vmatpush1.bf16.msra.mxu0 %v3590
    %5124 = vmatprep.subr.bf16.mxu0 %v3587
    %5125 = vmatpush1.bf16.msra.mxu0 %v3586
    %5126 = vmatprep.subr.bf16.mxu0 %v3583
    %5127 = vmatpush1.bf16.msra.mxu0 %v3582
    %5128 = vmatprep.subr.bf16.mxu0 %v3579
    %5129 = vmatpush1.bf16.msra.mxu0 %v3578
    %5130 = vmatprep.subr.bf16.mxu0 %v3575
    %5131 = vmatpush1.bf16.msra.mxu0 %v3574
    %5132 = vmatprep.subr.bf16.mxu0 %v3571
    %5133 = vmatpush1.bf16.msra.mxu0 %v3570
    %5134 = vmatprep.subr.bf16.mxu0 %v3567
    %5135 = vmatpush1.bf16.msra.mxu0 %v3566
    %5136 = vmatprep.subr.bf16.mxu0 %v3627
    %5137 = vmatpush2.bf16.msra.mxu0 %v3626
    %5138 = vmatprep.subr.bf16.mxu0 %v3623
    %5139 = vmatpush2.bf16.msra.mxu0 %v3622
    %5140 = vmatprep.subr.bf16.mxu0 %v3619
    %5141 = vmatpush2.bf16.msra.mxu0 %v3618
    %5142 = vmatprep.subr.bf16.mxu0 %v3615
    %5143 = vmatpush2.bf16.msra.mxu0 %v3614
    %5144 = vmatprep.subr.bf16.mxu0 %v3611
    %5145 = vmatpush2.bf16.msra.mxu0 %v3610
    %5146 = vmatprep.subr.bf16.mxu0 %v3607
    %5147 = vmatpush2.bf16.msra.mxu0 %v3606
    %5148 = vmatprep.subr.bf16.mxu0 %v3603
    %5149 = vmatpush2.bf16.msra.mxu0 %v3602
    %5150 = vmatprep.subr.bf16.mxu0 %v3599
    %5151 = vmatpush2.bf16.msra.mxu0 %v3598
    %5152 = vmatprep.mubr.bf16.mxu0 %v896
    %5153 = vmatmul.mubr.bf16.gmra.mxu0 %v882
    %v5154 = vpop.f32.mrf.mxu0
    %v5155 = vadd.f32 %v5114, %v5154
    %v5156 = vpop.f32.mrf.mxu0
    %v5157 = vadd.f32 %v5116, %v5156
    %v5158 = vpop.f32.mrf.mxu0
    %v5159 = vpop.f32.mrf.mxu0
    %5160 = vdwg.mxu0
    %5161 = vmatprep.subr.bf16.mxu0 %v3659
    %5162 = vmatpush1.bf16.msra.mxu0 %v3658
    %5163 = vmatprep.subr.bf16.mxu0 %v3655
    %5164 = vmatpush1.bf16.msra.mxu0 %v3654
    %5165 = vmatprep.subr.bf16.mxu0 %v3651
    %5166 = vmatpush1.bf16.msra.mxu0 %v3650
    %5167 = vmatprep.subr.bf16.mxu0 %v3647
    %5168 = vmatpush1.bf16.msra.mxu0 %v3646
    %5169 = vmatprep.subr.bf16.mxu0 %v3643
    %5170 = vmatpush1.bf16.msra.mxu0 %v3642
    %5171 = vmatprep.subr.bf16.mxu0 %v3639
    %5172 = vmatpush1.bf16.msra.mxu0 %v3638
    %5173 = vmatprep.subr.bf16.mxu0 %v3635
    %5174 = vmatpush1.bf16.msra.mxu0 %v3634
    %5175 = vmatprep.subr.bf16.mxu0 %v3631
    %5176 = vmatpush1.bf16.msra.mxu0 %v3630
    %5177 = vmatprep.subr.bf16.mxu0 %v3691
    %5178 = vmatpush2.bf16.msra.mxu0 %v3690
    %5179 = vmatprep.subr.bf16.mxu0 %v3687
    %5180 = vmatpush2.bf16.msra.mxu0 %v3686
    %5181 = vmatprep.subr.bf16.mxu0 %v3683
    %5182 = vmatpush2.bf16.msra.mxu0 %v3682
    %5183 = vmatprep.subr.bf16.mxu0 %v3679
    %5184 = vmatpush2.bf16.msra.mxu0 %v3678
    %5185 = vmatprep.subr.bf16.mxu0 %v3675
    %5186 = vmatpush2.bf16.msra.mxu0 %v3674
    %5187 = vmatprep.subr.bf16.mxu0 %v3671
    %5188 = vmatpush2.bf16.msra.mxu0 %v3670
    %5189 = vmatprep.subr.bf16.mxu0 %v3667
    %5190 = vmatpush2.bf16.msra.mxu0 %v3666
    %5191 = vmatprep.subr.bf16.mxu0 %v3663
    %5192 = vmatpush2.bf16.msra.mxu0 %v3662
    %5193 = vmatprep.mubr.bf16.mxu0 %v900
    %5194 = vmatmul.mubr.bf16.gmra.mxu0 %v898
    %v5195 = vpop.f32.mrf.mxu0
    %v5196 = vadd.f32 %v5155, %v5195
    %v5197 = vpop.f32.mrf.mxu0
    %v5198 = vadd.f32 %v5157, %v5197
    %v5199 = vpop.f32.mrf.mxu0
    %v5200 = vpop.f32.mrf.mxu0
    %5201 = vdwg.mxu0
    %5202 = vmatprep.subr.bf16.mxu0 %v3723
    %5203 = vmatpush1.bf16.msra.mxu0 %v3722
    %5204 = vmatprep.subr.bf16.mxu0 %v3719
    %5205 = vmatpush1.bf16.msra.mxu0 %v3718
    %5206 = vmatprep.subr.bf16.mxu0 %v3715
    %5207 = vmatpush1.bf16.msra.mxu0 %v3714
    %5208 = vmatprep.subr.bf16.mxu0 %v3711
    %5209 = vmatpush1.bf16.msra.mxu0 %v3710
    %5210 = vmatprep.subr.bf16.mxu0 %v3707
    %5211 = vmatpush1.bf16.msra.mxu0 %v3706
    %5212 = vmatprep.subr.bf16.mxu0 %v3703
    %5213 = vmatpush1.bf16.msra.mxu0 %v3702
    %5214 = vmatprep.subr.bf16.mxu0 %v3699
    %5215 = vmatpush1.bf16.msra.mxu0 %v3698
    %5216 = vmatprep.subr.bf16.mxu0 %v3695
    %5217 = vmatpush1.bf16.msra.mxu0 %v3694
    %5218 = vmatprep.subr.bf16.mxu0 %v3755
    %5219 = vmatpush2.bf16.msra.mxu0 %v3754
    %5220 = vmatprep.subr.bf16.mxu0 %v3751
    %5221 = vmatpush2.bf16.msra.mxu0 %v3750
    %5222 = vmatprep.subr.bf16.mxu0 %v3747
    %5223 = vmatpush2.bf16.msra.mxu0 %v3746
    %5224 = vmatprep.subr.bf16.mxu0 %v3743
    %5225 = vmatpush2.bf16.msra.mxu0 %v3742
    %5226 = vmatprep.subr.bf16.mxu0 %v3739
    %5227 = vmatpush2.bf16.msra.mxu0 %v3738
    %5228 = vmatprep.subr.bf16.mxu0 %v3735
    %5229 = vmatpush2.bf16.msra.mxu0 %v3734
    %5230 = vmatprep.subr.bf16.mxu0 %v3731
    %5231 = vmatpush2.bf16.msra.mxu0 %v3730
    %5232 = vmatprep.subr.bf16.mxu0 %v3727
    %5233 = vmatpush2.bf16.msra.mxu0 %v3726
    %5234 = vmatprep.mubr.bf16.mxu0 %v938
    %5235 = vmatmul.mubr.bf16.gmra.mxu0 %v924
    %v5236 = vpop.f32.mrf.mxu0
    %v5237 = vadd.f32 %v5196, %v5236
    %v5238 = vpop.f32.mrf.mxu0
    %v5239 = vadd.f32 %v5198, %v5238
    %v5240 = vpop.f32.mrf.mxu0
    %v5241 = vpop.f32.mrf.mxu0
    %5242 = vdwg.mxu0
    %5243 = vmatprep.subr.bf16.mxu0 %v3787
    %5244 = vmatpush1.bf16.msra.mxu0 %v3786
    %5245 = vmatprep.subr.bf16.mxu0 %v3783
    %5246 = vmatpush1.bf16.msra.mxu0 %v3782
    %5247 = vmatprep.subr.bf16.mxu0 %v3779
    %5248 = vmatpush1.bf16.msra.mxu0 %v3778
    %5249 = vmatprep.subr.bf16.mxu0 %v3775
    %5250 = vmatpush1.bf16.msra.mxu0 %v3774
    %5251 = vmatprep.subr.bf16.mxu0 %v3771
    %5252 = vmatpush1.bf16.msra.mxu0 %v3770
    %5253 = vmatprep.subr.bf16.mxu0 %v3767
    %5254 = vmatpush1.bf16.msra.mxu0 %v3766
    %5255 = vmatprep.subr.bf16.mxu0 %v3763
    %5256 = vmatpush1.bf16.msra.mxu0 %v3762
    %5257 = vmatprep.subr.bf16.mxu0 %v3759
    %5258 = vmatpush1.bf16.msra.mxu0 %v3758
    %5259 = vmatprep.subr.bf16.mxu0 %v3819
    %5260 = vmatpush2.bf16.msra.mxu0 %v3818
    %5261 = vmatprep.subr.bf16.mxu0 %v3815
    %5262 = vmatpush2.bf16.msra.mxu0 %v3814
    %5263 = vmatprep.subr.bf16.mxu0 %v3811
    %5264 = vmatpush2.bf16.msra.mxu0 %v3810
    %5265 = vmatprep.subr.bf16.mxu0 %v3807
    %5266 = vmatpush2.bf16.msra.mxu0 %v3806
    %5267 = vmatprep.subr.bf16.mxu0 %v3803
    %5268 = vmatpush2.bf16.msra.mxu0 %v3802
    %5269 = vmatprep.subr.bf16.mxu0 %v3799
    %5270 = vmatpush2.bf16.msra.mxu0 %v3798
    %5271 = vmatprep.subr.bf16.mxu0 %v3795
    %5272 = vmatpush2.bf16.msra.mxu0 %v3794
    %5273 = vmatprep.subr.bf16.mxu0 %v3791
    %5274 = vmatpush2.bf16.msra.mxu0 %v3790
    %5275 = vmatprep.mubr.bf16.mxu0 %v948
    %5276 = vmatmul.mubr.bf16.gmra.mxu0 %v946
    %v5277 = vpop.f32.mrf.mxu0
    %v5278 = vadd.f32 %v5237, %v5277
    %v5279 = vpop.f32.mrf.mxu0
    %v5280 = vadd.f32 %v5239, %v5279
    %v5281 = vpop.f32.mrf.mxu0
    %v5282 = vpop.f32.mrf.mxu0
    %5283 = vdwg.mxu0
    %5284 = vmatprep.subr.bf16.mxu0 %v3851
    %5285 = vmatpush1.bf16.msra.mxu0 %v3850
    %5286 = vmatprep.subr.bf16.mxu0 %v3847
    %5287 = vmatpush1.bf16.msra.mxu0 %v3846
    %5288 = vmatprep.subr.bf16.mxu0 %v3843
    %5289 = vmatpush1.bf16.msra.mxu0 %v3842
    %5290 = vmatprep.subr.bf16.mxu0 %v3839
    %5291 = vmatpush1.bf16.msra.mxu0 %v3838
    %5292 = vmatprep.subr.bf16.mxu0 %v3835
    %5293 = vmatpush1.bf16.msra.mxu0 %v3834
    %5294 = vmatprep.subr.bf16.mxu0 %v3831
    %5295 = vmatpush1.bf16.msra.mxu0 %v3830
    %5296 = vmatprep.subr.bf16.mxu0 %v3827
    %5297 = vmatpush1.bf16.msra.mxu0 %v3826
    %5298 = vmatprep.subr.bf16.mxu0 %v3823
    %5299 = vmatpush1.bf16.msra.mxu0 %v3822
    %5300 = vmatprep.subr.bf16.mxu0 %v3883
    %5301 = vmatpush2.bf16.msra.mxu0 %v3882
    %5302 = vmatprep.subr.bf16.mxu0 %v3879
    %5303 = vmatpush2.bf16.msra.mxu0 %v3878
    %5304 = vmatprep.subr.bf16.mxu0 %v3875
    %5305 = vmatpush2.bf16.msra.mxu0 %v3874
    %5306 = vmatprep.subr.bf16.mxu0 %v3871
    %5307 = vmatpush2.bf16.msra.mxu0 %v3870
    %5308 = vmatprep.subr.bf16.mxu0 %v3867
    %5309 = vmatpush2.bf16.msra.mxu0 %v3866
    %5310 = vmatprep.subr.bf16.mxu0 %v3863
    %5311 = vmatpush2.bf16.msra.mxu0 %v3862
    %5312 = vmatprep.subr.bf16.mxu0 %v3859
    %5313 = vmatpush2.bf16.msra.mxu0 %v3858
    %5314 = vmatprep.subr.bf16.mxu0 %v3855
    %5315 = vmatpush2.bf16.msra.mxu0 %v3854
    %5316 = vmatprep.mubr.bf16.mxu0 %v945
    %5317 = vmatmul.mubr.bf16.gmra.mxu0 %v931
    %v5318 = vpop.f32.mrf.mxu0
    %v5319 = vadd.f32 %v5278, %v5318
    %v5320 = vpop.f32.mrf.mxu0
    %v5321 = vadd.f32 %v5280, %v5320
    %v5322 = vpop.f32.mrf.mxu0
    %v5323 = vpop.f32.mrf.mxu0
    %5324 = vdwg.mxu0
    %5325 = vmatprep.subr.bf16.mxu0 %v3915
    %5326 = vmatpush1.bf16.msra.mxu0 %v3914
    %5327 = vmatprep.subr.bf16.mxu0 %v3911
    %5328 = vmatpush1.bf16.msra.mxu0 %v3910
    %5329 = vmatprep.subr.bf16.mxu0 %v3907
    %5330 = vmatpush1.bf16.msra.mxu0 %v3906
    %5331 = vmatprep.subr.bf16.mxu0 %v3903
    %5332 = vmatpush1.bf16.msra.mxu0 %v3902
    %5333 = vmatprep.subr.bf16.mxu0 %v3899
    %5334 = vmatpush1.bf16.msra.mxu0 %v3898
    %5335 = vmatprep.subr.bf16.mxu0 %v3895
    %5336 = vmatpush1.bf16.msra.mxu0 %v3894
    %5337 = vmatprep.subr.bf16.mxu0 %v3891
    %5338 = vmatpush1.bf16.msra.mxu0 %v3890
    %5339 = vmatprep.subr.bf16.mxu0 %v3887
    %5340 = vmatpush1.bf16.msra.mxu0 %v3886
    %5341 = vmatprep.subr.bf16.mxu0 %v3947
    %5342 = vmatpush2.bf16.msra.mxu0 %v3946
    %5343 = vmatprep.subr.bf16.mxu0 %v3943
    %5344 = vmatpush2.bf16.msra.mxu0 %v3942
    %5345 = vmatprep.subr.bf16.mxu0 %v3939
    %5346 = vmatpush2.bf16.msra.mxu0 %v3938
    %5347 = vmatprep.subr.bf16.mxu0 %v3935
    %5348 = vmatpush2.bf16.msra.mxu0 %v3934
    %5349 = vmatprep.subr.bf16.mxu0 %v3931
    %5350 = vmatpush2.bf16.msra.mxu0 %v3930
    %5351 = vmatprep.subr.bf16.mxu0 %v3927
    %5352 = vmatpush2.bf16.msra.mxu0 %v3926
    %5353 = vmatprep.subr.bf16.mxu0 %v3923
    %5354 = vmatpush2.bf16.msra.mxu0 %v3922
    %5355 = vmatprep.subr.bf16.mxu0 %v3919
    %5356 = vmatpush2.bf16.msra.mxu0 %v3918
    %5357 = vmatprep.mubr.bf16.mxu0 %v949
    %5358 = vmatmul.mubr.bf16.gmra.mxu0 %v947
    %v5359 = vpop.f32.mrf.mxu0
    %v5360 = vadd.f32 %v5319, %v5359
    %v5361 = vpop.f32.mrf.mxu0
    %v5362 = vadd.f32 %v5321, %v5361
    %v5363 = vpop.f32.mrf.mxu0
    %v5364 = vpop.f32.mrf.mxu0
    %5365 = vdwg.mxu0
    %5366 = vmatprep.subr.bf16.mxu0 %v3979
    %5367 = vmatpush1.bf16.msra.mxu0 %v3978
    %5368 = vmatprep.subr.bf16.mxu0 %v3975
    %5369 = vmatpush1.bf16.msra.mxu0 %v3974
    %5370 = vmatprep.subr.bf16.mxu0 %v3971
    %5371 = vmatpush1.bf16.msra.mxu0 %v3970
    %5372 = vmatprep.subr.bf16.mxu0 %v3967
    %5373 = vmatpush1.bf16.msra.mxu0 %v3966
    %5374 = vmatprep.subr.bf16.mxu0 %v3963
    %5375 = vmatpush1.bf16.msra.mxu0 %v3962
    %5376 = vmatprep.subr.bf16.mxu0 %v3959
    %5377 = vmatpush1.bf16.msra.mxu0 %v3958
    %5378 = vmatprep.subr.bf16.mxu0 %v3955
    %5379 = vmatpush1.bf16.msra.mxu0 %v3954
    %5380 = vmatprep.subr.bf16.mxu0 %v3951
    %5381 = vmatpush1.bf16.msra.mxu0 %v3950
    %5382 = vmatprep.subr.bf16.mxu0 %v4011
    %5383 = vmatpush2.bf16.msra.mxu0 %v4010
    %5384 = vmatprep.subr.bf16.mxu0 %v4007
    %5385 = vmatpush2.bf16.msra.mxu0 %v4006
    %5386 = vmatprep.subr.bf16.mxu0 %v4003
    %5387 = vmatpush2.bf16.msra.mxu0 %v4002
    %5388 = vmatprep.subr.bf16.mxu0 %v3999
    %5389 = vmatpush2.bf16.msra.mxu0 %v3998
    %5390 = vmatprep.subr.bf16.mxu0 %v3995
    %5391 = vmatpush2.bf16.msra.mxu0 %v3994
    %5392 = vmatprep.subr.bf16.mxu0 %v3991
    %5393 = vmatpush2.bf16.msra.mxu0 %v3990
    %5394 = vmatprep.subr.bf16.mxu0 %v3987
    %5395 = vmatpush2.bf16.msra.mxu0 %v3986
    %5396 = vmatprep.subr.bf16.mxu0 %v3983
    %5397 = vmatpush2.bf16.msra.mxu0 %v3982
    %5398 = vmatprep.mubr.bf16.mxu0 %v987
    %5399 = vmatmul.mubr.bf16.gmra.mxu0 %v973
    %v5400 = vpop.f32.mrf.mxu0
    %v5401 = vadd.f32 %v5360, %v5400
    %v5402 = vpop.f32.mrf.mxu0
    %v5403 = vadd.f32 %v5362, %v5402
    %v5404 = vpop.f32.mrf.mxu0
    %v5405 = vpop.f32.mrf.mxu0
    %5406 = vdwg.mxu0
    %5407 = vmatprep.subr.bf16.mxu0 %v4043
    %5408 = vmatpush1.bf16.msra.mxu0 %v4042
    %5409 = vmatprep.subr.bf16.mxu0 %v4039
    %5410 = vmatpush1.bf16.msra.mxu0 %v4038
    %5411 = vmatprep.subr.bf16.mxu0 %v4035
    %5412 = vmatpush1.bf16.msra.mxu0 %v4034
    %5413 = vmatprep.subr.bf16.mxu0 %v4031
    %5414 = vmatpush1.bf16.msra.mxu0 %v4030
    %5415 = vmatprep.subr.bf16.mxu0 %v4027
    %5416 = vmatpush1.bf16.msra.mxu0 %v4026
    %5417 = vmatprep.subr.bf16.mxu0 %v4023
    %5418 = vmatpush1.bf16.msra.mxu0 %v4022
    %5419 = vmatprep.subr.bf16.mxu0 %v4019
    %5420 = vmatpush1.bf16.msra.mxu0 %v4018
    %5421 = vmatprep.subr.bf16.mxu0 %v4015
    %5422 = vmatpush1.bf16.msra.mxu0 %v4014
    %5423 = vmatprep.subr.bf16.mxu0 %v4075
    %5424 = vmatpush2.bf16.msra.mxu0 %v4074
    %5425 = vmatprep.subr.bf16.mxu0 %v4071
    %5426 = vmatpush2.bf16.msra.mxu0 %v4070
    %5427 = vmatprep.subr.bf16.mxu0 %v4067
    %5428 = vmatpush2.bf16.msra.mxu0 %v4066
    %5429 = vmatprep.subr.bf16.mxu0 %v4063
    %5430 = vmatpush2.bf16.msra.mxu0 %v4062
    %5431 = vmatprep.subr.bf16.mxu0 %v4059
    %5432 = vmatpush2.bf16.msra.mxu0 %v4058
    %5433 = vmatprep.subr.bf16.mxu0 %v4055
    %5434 = vmatpush2.bf16.msra.mxu0 %v4054
    %5435 = vmatprep.subr.bf16.mxu0 %v4051
    %5436 = vmatpush2.bf16.msra.mxu0 %v4050
    %5437 = vmatprep.subr.bf16.mxu0 %v4047
    %5438 = vmatpush2.bf16.msra.mxu0 %v4046
    %5439 = vmatprep.mubr.bf16.mxu0 %v997
    %5440 = vmatmul.mubr.bf16.gmra.mxu0 %v995
    %v5441 = vpop.f32.mrf.mxu0
    %v5442 = vadd.f32 %v5401, %v5441
    %v5443 = vpop.f32.mrf.mxu0
    %v5444 = vadd.f32 %v5403, %v5443
    %v5445 = vpop.f32.mrf.mxu0
    %v5446 = vpop.f32.mrf.mxu0
    %5447 = vdwg.mxu0
    %5448 = vmatprep.subr.bf16.mxu0 %v4107
    %5449 = vmatpush1.bf16.msra.mxu0 %v4106
    %5450 = vmatprep.subr.bf16.mxu0 %v4103
    %5451 = vmatpush1.bf16.msra.mxu0 %v4102
    %5452 = vmatprep.subr.bf16.mxu0 %v4099
    %5453 = vmatpush1.bf16.msra.mxu0 %v4098
    %5454 = vmatprep.subr.bf16.mxu0 %v4095
    %5455 = vmatpush1.bf16.msra.mxu0 %v4094
    %5456 = vmatprep.subr.bf16.mxu0 %v4091
    %5457 = vmatpush1.bf16.msra.mxu0 %v4090
    %5458 = vmatprep.subr.bf16.mxu0 %v4087
    %5459 = vmatpush1.bf16.msra.mxu0 %v4086
    %5460 = vmatprep.subr.bf16.mxu0 %v4083
    %5461 = vmatpush1.bf16.msra.mxu0 %v4082
    %5462 = vmatprep.subr.bf16.mxu0 %v4079
    %5463 = vmatpush1.bf16.msra.mxu0 %v4078
    %5464 = vmatprep.subr.bf16.mxu0 %v4139
    %5465 = vmatpush2.bf16.msra.mxu0 %v4138
    %5466 = vmatprep.subr.bf16.mxu0 %v4135
    %5467 = vmatpush2.bf16.msra.mxu0 %v4134
    %5468 = vmatprep.subr.bf16.mxu0 %v4131
    %5469 = vmatpush2.bf16.msra.mxu0 %v4130
    %5470 = vmatprep.subr.bf16.mxu0 %v4127
    %5471 = vmatpush2.bf16.msra.mxu0 %v4126
    %5472 = vmatprep.subr.bf16.mxu0 %v4123
    %5473 = vmatpush2.bf16.msra.mxu0 %v4122
    %5474 = vmatprep.subr.bf16.mxu0 %v4119
    %5475 = vmatpush2.bf16.msra.mxu0 %v4118
    %5476 = vmatprep.subr.bf16.mxu0 %v4115
    %5477 = vmatpush2.bf16.msra.mxu0 %v4114
    %5478 = vmatprep.subr.bf16.mxu0 %v4111
    %5479 = vmatpush2.bf16.msra.mxu0 %v4110
    %5480 = vmatprep.mubr.bf16.mxu0 %v994
    %5481 = vmatmul.mubr.bf16.gmra.mxu0 %v980
    %v5482 = vpop.f32.mrf.mxu0
    %v5483 = vadd.f32 %v5442, %v5482
    %v5484 = vpop.f32.mrf.mxu0
    %v5485 = vadd.f32 %v5444, %v5484
    %v5486 = vpop.f32.mrf.mxu0
    %v5487 = vpop.f32.mrf.mxu0
    %5488 = vdwg.mxu0
    %5489 = vmatprep.subr.bf16.mxu0 %v4171
    %5490 = vmatpush1.bf16.msra.mxu0 %v4170
    %5491 = vmatprep.subr.bf16.mxu0 %v4167
    %5492 = vmatpush1.bf16.msra.mxu0 %v4166
    %5493 = vmatprep.subr.bf16.mxu0 %v4163
    %5494 = vmatpush1.bf16.msra.mxu0 %v4162
    %5495 = vmatprep.subr.bf16.mxu0 %v4159
    %5496 = vmatpush1.bf16.msra.mxu0 %v4158
    %5497 = vmatprep.subr.bf16.mxu0 %v4155
    %5498 = vmatpush1.bf16.msra.mxu0 %v4154
    %5499 = vmatprep.subr.bf16.mxu0 %v4151
    %5500 = vmatpush1.bf16.msra.mxu0 %v4150
    %5501 = vmatprep.subr.bf16.mxu0 %v4147
    %5502 = vmatpush1.bf16.msra.mxu0 %v4146
    %5503 = vmatprep.subr.bf16.mxu0 %v4143
    %5504 = vmatpush1.bf16.msra.mxu0 %v4142
    %5505 = vmatprep.subr.bf16.mxu0 %v4203
    %5506 = vmatpush2.bf16.msra.mxu0 %v4202
    %5507 = vmatprep.subr.bf16.mxu0 %v4199
    %5508 = vmatpush2.bf16.msra.mxu0 %v4198
    %5509 = vmatprep.subr.bf16.mxu0 %v4195
    %5510 = vmatpush2.bf16.msra.mxu0 %v4194
    %5511 = vmatprep.subr.bf16.mxu0 %v4191
    %5512 = vmatpush2.bf16.msra.mxu0 %v4190
    %5513 = vmatprep.subr.bf16.mxu0 %v4187
    %5514 = vmatpush2.bf16.msra.mxu0 %v4186
    %5515 = vmatprep.subr.bf16.mxu0 %v4183
    %5516 = vmatpush2.bf16.msra.mxu0 %v4182
    %5517 = vmatprep.subr.bf16.mxu0 %v4179
    %5518 = vmatpush2.bf16.msra.mxu0 %v4178
    %5519 = vmatprep.subr.bf16.mxu0 %v4175
    %5520 = vmatpush2.bf16.msra.mxu0 %v4174
    %5521 = vmatprep.mubr.bf16.mxu0 %v998
    %5522 = vmatmul.mubr.bf16.gmra.mxu0 %v996
    %v5523 = vpop.f32.mrf.mxu0
    %v5524 = vadd.f32 %v5483, %v5523
    %v5525 = vpop.f32.mrf.mxu0
    %v5526 = vadd.f32 %v5485, %v5525
    %v5527 = vpop.f32.mrf.mxu0
    %v5528 = vpop.f32.mrf.mxu0
    %5529 = vdwg.mxu0
    %5530 = vmatprep.subr.bf16.mxu0 %v4235
    %5531 = vmatpush1.bf16.msra.mxu0 %v4234
    %5532 = vmatprep.subr.bf16.mxu0 %v4231
    %5533 = vmatpush1.bf16.msra.mxu0 %v4230
    %5534 = vmatprep.subr.bf16.mxu0 %v4227
    %5535 = vmatpush1.bf16.msra.mxu0 %v4226
    %5536 = vmatprep.subr.bf16.mxu0 %v4223
    %5537 = vmatpush1.bf16.msra.mxu0 %v4222
    %5538 = vmatprep.subr.bf16.mxu0 %v4219
    %5539 = vmatpush1.bf16.msra.mxu0 %v4218
    %5540 = vmatprep.subr.bf16.mxu0 %v4215
    %5541 = vmatpush1.bf16.msra.mxu0 %v4214
    %5542 = vmatprep.subr.bf16.mxu0 %v4211
    %5543 = vmatpush1.bf16.msra.mxu0 %v4210
    %5544 = vmatprep.subr.bf16.mxu0 %v4207
    %5545 = vmatpush1.bf16.msra.mxu0 %v4206
    %5546 = vmatprep.subr.bf16.mxu0 0
    %5547 = vmatpush2.bf16.msra.mxu0 0
    %5548 = vmatprep.subr.bf16.mxu0 0
    %5549 = vmatpush2.bf16.msra.mxu0 0
    %5550 = vmatprep.subr.bf16.mxu0 0
    %5551 = vmatpush2.bf16.msra.mxu0 0
    %5552 = vmatprep.subr.bf16.mxu0 0
    %5553 = vmatpush2.bf16.msra.mxu0 0
    %5554 = vmatprep.subr.bf16.mxu0 0
    %5555 = vmatpush2.bf16.msra.mxu0 0
    %5556 = vmatprep.subr.bf16.mxu0 0
    %5557 = vmatpush2.bf16.msra.mxu0 0
    %5558 = vmatprep.subr.bf16.mxu0 0
    %5559 = vmatpush2.bf16.msra.mxu0 0
    %5560 = vmatprep.subr.bf16.mxu0 0
    %5561 = vmatpush2.bf16.msra.mxu0 0
    %5562 = vmatprep.mubr.bf16.mxu0 0
    %5563 = vmatmul.mubr.bf16.gmra.mxu0 %v1012
    %v5564 = vpop.f32.mrf.mxu0
    %v5565 = vadd.f32 %v5524, %v5564
    %v5566 = vpop.f32.mrf.mxu0
    %v5567 = vadd.f32 %v5526, %v5566
    %v5568 = vpop.f32.mrf.mxu0
    %v5569 = vpop.f32.mrf.mxu0
    %5570 = vdwg.mxu0
    %5571 = vmatprep.subr.bf16.mxu0 %v3469
    %5572 = vmatpush1.bf16.msra.mxu0 %v3468
    %5573 = vmatprep.subr.bf16.mxu0 %v3465
    %5574 = vmatpush1.bf16.msra.mxu0 %v3464
    %5575 = vmatprep.subr.bf16.mxu0 %v3461
    %5576 = vmatpush1.bf16.msra.mxu0 %v3460
    %5577 = vmatprep.subr.bf16.mxu0 %v3457
    %5578 = vmatpush1.bf16.msra.mxu0 %v3456
    %5579 = vmatprep.subr.bf16.mxu0 %v3453
    %5580 = vmatpush1.bf16.msra.mxu0 %v3452
    %5581 = vmatprep.subr.bf16.mxu0 %v3449
    %5582 = vmatpush1.bf16.msra.mxu0 %v3448
    %5583 = vmatprep.subr.bf16.mxu0 %v3445
    %5584 = vmatpush1.bf16.msra.mxu0 %v3444
    %5585 = vmatprep.subr.bf16.mxu0 %v3441
    %5586 = vmatpush1.bf16.msra.mxu0 %v3440
    %5587 = vmatprep.subr.bf16.mxu0 %v3501
    %5588 = vmatpush2.bf16.msra.mxu0 %v3500
    %5589 = vmatprep.subr.bf16.mxu0 %v3497
    %5590 = vmatpush2.bf16.msra.mxu0 %v3496
    %5591 = vmatprep.subr.bf16.mxu0 %v3493
    %5592 = vmatpush2.bf16.msra.mxu0 %v3492
    %5593 = vmatprep.subr.bf16.mxu0 %v3489
    %5594 = vmatpush2.bf16.msra.mxu0 %v3488
    %5595 = vmatprep.subr.bf16.mxu0 %v3485
    %5596 = vmatpush2.bf16.msra.mxu0 %v3484
    %5597 = vmatprep.subr.bf16.mxu0 %v3481
    %5598 = vmatpush2.bf16.msra.mxu0 %v3480
    %5599 = vmatprep.subr.bf16.mxu0 %v3477
    %5600 = vmatpush2.bf16.msra.mxu0 %v3476
    %5601 = vmatprep.subr.bf16.mxu0 %v3473
    %5602 = vmatpush2.bf16.msra.mxu0 %v3472
    %5603 = vmatprep.mubr.bf16.mxu0 %v889
    %5604 = vmatmul.mubr.bf16.gmra.mxu0 %v875
    %v5605 = vpop.f32.mrf.mxu0
    %v5606 = vadd.f32 %v839, %v5605
    %v5607 = vpop.f32.mrf.mxu0
    %v5608 = vadd.f32 %v843, %v5607
    %v5609 = vpop.f32.mrf.mxu0
    %v5610 = vpop.f32.mrf.mxu0
    %5611 = vdwg.mxu0
    %5612 = vmatprep.subr.bf16.mxu0 %v3533
    %5613 = vmatpush1.bf16.msra.mxu0 %v3532
    %5614 = vmatprep.subr.bf16.mxu0 %v3529
    %5615 = vmatpush1.bf16.msra.mxu0 %v3528
    %5616 = vmatprep.subr.bf16.mxu0 %v3525
    %5617 = vmatpush1.bf16.msra.mxu0 %v3524
    %5618 = vmatprep.subr.bf16.mxu0 %v3521
    %5619 = vmatpush1.bf16.msra.mxu0 %v3520
    %5620 = vmatprep.subr.bf16.mxu0 %v3517
    %5621 = vmatpush1.bf16.msra.mxu0 %v3516
    %5622 = vmatprep.subr.bf16.mxu0 %v3513
    %5623 = vmatpush1.bf16.msra.mxu0 %v3512
    %5624 = vmatprep.subr.bf16.mxu0 %v3509
    %5625 = vmatpush1.bf16.msra.mxu0 %v3508
    %5626 = vmatprep.subr.bf16.mxu0 %v3505
    %5627 = vmatpush1.bf16.msra.mxu0 %v3504
    %5628 = vmatprep.subr.bf16.mxu0 %v3565
    %5629 = vmatpush2.bf16.msra.mxu0 %v3564
    %5630 = vmatprep.subr.bf16.mxu0 %v3561
    %5631 = vmatpush2.bf16.msra.mxu0 %v3560
    %5632 = vmatprep.subr.bf16.mxu0 %v3557
    %5633 = vmatpush2.bf16.msra.mxu0 %v3556
    %5634 = vmatprep.subr.bf16.mxu0 %v3553
    %5635 = vmatpush2.bf16.msra.mxu0 %v3552
    %5636 = vmatprep.subr.bf16.mxu0 %v3549
    %5637 = vmatpush2.bf16.msra.mxu0 %v3548
    %5638 = vmatprep.subr.bf16.mxu0 %v3545
    %5639 = vmatpush2.bf16.msra.mxu0 %v3544
    %5640 = vmatprep.subr.bf16.mxu0 %v3541
    %5641 = vmatpush2.bf16.msra.mxu0 %v3540
    %5642 = vmatprep.subr.bf16.mxu0 %v3537
    %5643 = vmatpush2.bf16.msra.mxu0 %v3536
    %5644 = vmatprep.mubr.bf16.mxu0 %v899
    %5645 = vmatmul.mubr.bf16.gmra.mxu0 %v897
    %v5646 = vpop.f32.mrf.mxu0
    %v5647 = vadd.f32 %v5606, %v5646
    %v5648 = vpop.f32.mrf.mxu0
    %v5649 = vadd.f32 %v5608, %v5648
    %v5650 = vpop.f32.mrf.mxu0
    %v5651 = vpop.f32.mrf.mxu0
    %5652 = vdwg.mxu0
    %5653 = vmatprep.subr.bf16.mxu0 %v3597
    %5654 = vmatpush1.bf16.msra.mxu0 %v3596
    %5655 = vmatprep.subr.bf16.mxu0 %v3593
    %5656 = vmatpush1.bf16.msra.mxu0 %v3592
    %5657 = vmatprep.subr.bf16.mxu0 %v3589
    %5658 = vmatpush1.bf16.msra.mxu0 %v3588
    %5659 = vmatprep.subr.bf16.mxu0 %v3585
    %5660 = vmatpush1.bf16.msra.mxu0 %v3584
    %5661 = vmatprep.subr.bf16.mxu0 %v3581
    %5662 = vmatpush1.bf16.msra.mxu0 %v3580
    %5663 = vmatprep.subr.bf16.mxu0 %v3577
    %5664 = vmatpush1.bf16.msra.mxu0 %v3576
    %5665 = vmatprep.subr.bf16.mxu0 %v3573
    %5666 = vmatpush1.bf16.msra.mxu0 %v3572
    %5667 = vmatprep.subr.bf16.mxu0 %v3569
    %5668 = vmatpush1.bf16.msra.mxu0 %v3568
    %5669 = vmatprep.subr.bf16.mxu0 %v3629
    %5670 = vmatpush2.bf16.msra.mxu0 %v3628
    %5671 = vmatprep.subr.bf16.mxu0 %v3625
    %5672 = vmatpush2.bf16.msra.mxu0 %v3624
    %5673 = vmatprep.subr.bf16.mxu0 %v3621
    %5674 = vmatpush2.bf16.msra.mxu0 %v3620
    %5675 = vmatprep.subr.bf16.mxu0 %v3617
    %5676 = vmatpush2.bf16.msra.mxu0 %v3616
    %5677 = vmatprep.subr.bf16.mxu0 %v3613
    %5678 = vmatpush2.bf16.msra.mxu0 %v3612
    %5679 = vmatprep.subr.bf16.mxu0 %v3609
    %5680 = vmatpush2.bf16.msra.mxu0 %v3608
    %5681 = vmatprep.subr.bf16.mxu0 %v3605
    %5682 = vmatpush2.bf16.msra.mxu0 %v3604
    %5683 = vmatprep.subr.bf16.mxu0 %v3601
    %5684 = vmatpush2.bf16.msra.mxu0 %v3600
    %5685 = vmatprep.mubr.bf16.mxu0 %v896
    %5686 = vmatmul.mubr.bf16.gmra.mxu0 %v882
    %v5687 = vpop.f32.mrf.mxu0
    %v5688 = vadd.f32 %v5647, %v5687
    %v5689 = vpop.f32.mrf.mxu0
    %v5690 = vadd.f32 %v5649, %v5689
    %v5691 = vpop.f32.mrf.mxu0
    %v5692 = vpop.f32.mrf.mxu0
    %5693 = vdwg.mxu0
    %5694 = vmatprep.subr.bf16.mxu0 %v3661
    %5695 = vmatpush1.bf16.msra.mxu0 %v3660
    %5696 = vmatprep.subr.bf16.mxu0 %v3657
    %5697 = vmatpush1.bf16.msra.mxu0 %v3656
    %5698 = vmatprep.subr.bf16.mxu0 %v3653
    %5699 = vmatpush1.bf16.msra.mxu0 %v3652
    %5700 = vmatprep.subr.bf16.mxu0 %v3649
    %5701 = vmatpush1.bf16.msra.mxu0 %v3648
    %5702 = vmatprep.subr.bf16.mxu0 %v3645
    %5703 = vmatpush1.bf16.msra.mxu0 %v3644
    %5704 = vmatprep.subr.bf16.mxu0 %v3641
    %5705 = vmatpush1.bf16.msra.mxu0 %v3640
    %5706 = vmatprep.subr.bf16.mxu0 %v3637
    %5707 = vmatpush1.bf16.msra.mxu0 %v3636
    %5708 = vmatprep.subr.bf16.mxu0 %v3633
    %5709 = vmatpush1.bf16.msra.mxu0 %v3632
    %5710 = vmatprep.subr.bf16.mxu0 %v3693
    %5711 = vmatpush2.bf16.msra.mxu0 %v3692
    %5712 = vmatprep.subr.bf16.mxu0 %v3689
    %5713 = vmatpush2.bf16.msra.mxu0 %v3688
    %5714 = vmatprep.subr.bf16.mxu0 %v3685
    %5715 = vmatpush2.bf16.msra.mxu0 %v3684
    %5716 = vmatprep.subr.bf16.mxu0 %v3681
    %5717 = vmatpush2.bf16.msra.mxu0 %v3680
    %5718 = vmatprep.subr.bf16.mxu0 %v3677
    %5719 = vmatpush2.bf16.msra.mxu0 %v3676
    %5720 = vmatprep.subr.bf16.mxu0 %v3673
    %5721 = vmatpush2.bf16.msra.mxu0 %v3672
    %5722 = vmatprep.subr.bf16.mxu0 %v3669
    %5723 = vmatpush2.bf16.msra.mxu0 %v3668
    %5724 = vmatprep.subr.bf16.mxu0 %v3665
    %5725 = vmatpush2.bf16.msra.mxu0 %v3664
    %5726 = vmatprep.mubr.bf16.mxu0 %v900
    %5727 = vmatmul.mubr.bf16.gmra.mxu0 %v898
    %v5728 = vpop.f32.mrf.mxu0
    %v5729 = vadd.f32 %v5688, %v5728
    %v5730 = vpop.f32.mrf.mxu0
    %v5731 = vadd.f32 %v5690, %v5730
    %v5732 = vpop.f32.mrf.mxu0
    %v5733 = vpop.f32.mrf.mxu0
    %5734 = vdwg.mxu0
    %5735 = vmatprep.subr.bf16.mxu0 %v3725
    %5736 = vmatpush1.bf16.msra.mxu0 %v3724
    %5737 = vmatprep.subr.bf16.mxu0 %v3721
    %5738 = vmatpush1.bf16.msra.mxu0 %v3720
    %5739 = vmatprep.subr.bf16.mxu0 %v3717
    %5740 = vmatpush1.bf16.msra.mxu0 %v3716
    %5741 = vmatprep.subr.bf16.mxu0 %v3713
    %5742 = vmatpush1.bf16.msra.mxu0 %v3712
    %5743 = vmatprep.subr.bf16.mxu0 %v3709
    %5744 = vmatpush1.bf16.msra.mxu0 %v3708
    %5745 = vmatprep.subr.bf16.mxu0 %v3705
    %5746 = vmatpush1.bf16.msra.mxu0 %v3704
    %5747 = vmatprep.subr.bf16.mxu0 %v3701
    %5748 = vmatpush1.bf16.msra.mxu0 %v3700
    %5749 = vmatprep.subr.bf16.mxu0 %v3697
    %5750 = vmatpush1.bf16.msra.mxu0 %v3696
    %5751 = vmatprep.subr.bf16.mxu0 %v3757
    %5752 = vmatpush2.bf16.msra.mxu0 %v3756
    %5753 = vmatprep.subr.bf16.mxu0 %v3753
    %5754 = vmatpush2.bf16.msra.mxu0 %v3752
    %5755 = vmatprep.subr.bf16.mxu0 %v3749
    %5756 = vmatpush2.bf16.msra.mxu0 %v3748
    %5757 = vmatprep.subr.bf16.mxu0 %v3745
    %5758 = vmatpush2.bf16.msra.mxu0 %v3744
    %5759 = vmatprep.subr.bf16.mxu0 %v3741
    %5760 = vmatpush2.bf16.msra.mxu0 %v3740
    %5761 = vmatprep.subr.bf16.mxu0 %v3737
    %5762 = vmatpush2.bf16.msra.mxu0 %v3736
    %5763 = vmatprep.subr.bf16.mxu0 %v3733
    %5764 = vmatpush2.bf16.msra.mxu0 %v3732
    %5765 = vmatprep.subr.bf16.mxu0 %v3729
    %5766 = vmatpush2.bf16.msra.mxu0 %v3728
    %5767 = vmatprep.mubr.bf16.mxu0 %v938
    %5768 = vmatmul.mubr.bf16.gmra.mxu0 %v924
    %v5769 = vpop.f32.mrf.mxu0
    %v5770 = vadd.f32 %v5729, %v5769
    %v5771 = vpop.f32.mrf.mxu0
    %v5772 = vadd.f32 %v5731, %v5771
    %v5773 = vpop.f32.mrf.mxu0
    %v5774 = vpop.f32.mrf.mxu0
    %5775 = vdwg.mxu0
    %5776 = vmatprep.subr.bf16.mxu0 %v3789
    %5777 = vmatpush1.bf16.msra.mxu0 %v3788
    %5778 = vmatprep.subr.bf16.mxu0 %v3785
    %5779 = vmatpush1.bf16.msra.mxu0 %v3784
    %5780 = vmatprep.subr.bf16.mxu0 %v3781
    %5781 = vmatpush1.bf16.msra.mxu0 %v3780
    %5782 = vmatprep.subr.bf16.mxu0 %v3777
    %5783 = vmatpush1.bf16.msra.mxu0 %v3776
    %5784 = vmatprep.subr.bf16.mxu0 %v3773
    %5785 = vmatpush1.bf16.msra.mxu0 %v3772
    %5786 = vmatprep.subr.bf16.mxu0 %v3769
    %5787 = vmatpush1.bf16.msra.mxu0 %v3768
    %5788 = vmatprep.subr.bf16.mxu0 %v3765
    %5789 = vmatpush1.bf16.msra.mxu0 %v3764
    %5790 = vmatprep.subr.bf16.mxu0 %v3761
    %5791 = vmatpush1.bf16.msra.mxu0 %v3760
    %5792 = vmatprep.subr.bf16.mxu0 %v3821
    %5793 = vmatpush2.bf16.msra.mxu0 %v3820
    %5794 = vmatprep.subr.bf16.mxu0 %v3817
    %5795 = vmatpush2.bf16.msra.mxu0 %v3816
    %5796 = vmatprep.subr.bf16.mxu0 %v3813
    %5797 = vmatpush2.bf16.msra.mxu0 %v3812
    %5798 = vmatprep.subr.bf16.mxu0 %v3809
    %5799 = vmatpush2.bf16.msra.mxu0 %v3808
    %5800 = vmatprep.subr.bf16.mxu0 %v3805
    %5801 = vmatpush2.bf16.msra.mxu0 %v3804
    %5802 = vmatprep.subr.bf16.mxu0 %v3801
    %5803 = vmatpush2.bf16.msra.mxu0 %v3800
    %5804 = vmatprep.subr.bf16.mxu0 %v3797
    %5805 = vmatpush2.bf16.msra.mxu0 %v3796
    %5806 = vmatprep.subr.bf16.mxu0 %v3793
    %5807 = vmatpush2.bf16.msra.mxu0 %v3792
    %5808 = vmatprep.mubr.bf16.mxu0 %v948
    %5809 = vmatmul.mubr.bf16.gmra.mxu0 %v946
    %v5810 = vpop.f32.mrf.mxu0
    %v5811 = vadd.f32 %v5770, %v5810
    %v5812 = vpop.f32.mrf.mxu0
    %v5813 = vadd.f32 %v5772, %v5812
    %v5814 = vpop.f32.mrf.mxu0
    %v5815 = vpop.f32.mrf.mxu0
    %5816 = vdwg.mxu0
    %5817 = vmatprep.subr.bf16.mxu0 %v3853
    %5818 = vmatpush1.bf16.msra.mxu0 %v3852
    %5819 = vmatprep.subr.bf16.mxu0 %v3849
    %5820 = vmatpush1.bf16.msra.mxu0 %v3848
    %5821 = vmatprep.subr.bf16.mxu0 %v3845
    %5822 = vmatpush1.bf16.msra.mxu0 %v3844
    %5823 = vmatprep.subr.bf16.mxu0 %v3841
    %5824 = vmatpush1.bf16.msra.mxu0 %v3840
    %5825 = vmatprep.subr.bf16.mxu0 %v3837
    %5826 = vmatpush1.bf16.msra.mxu0 %v3836
    %5827 = vmatprep.subr.bf16.mxu0 %v3833
    %5828 = vmatpush1.bf16.msra.mxu0 %v3832
    %5829 = vmatprep.subr.bf16.mxu0 %v3829
    %5830 = vmatpush1.bf16.msra.mxu0 %v3828
    %5831 = vmatprep.subr.bf16.mxu0 %v3825
    %5832 = vmatpush1.bf16.msra.mxu0 %v3824
    %5833 = vmatprep.subr.bf16.mxu0 %v3885
    %5834 = vmatpush2.bf16.msra.mxu0 %v3884
    %5835 = vmatprep.subr.bf16.mxu0 %v3881
    %5836 = vmatpush2.bf16.msra.mxu0 %v3880
    %5837 = vmatprep.subr.bf16.mxu0 %v3877
    %5838 = vmatpush2.bf16.msra.mxu0 %v3876
    %5839 = vmatprep.subr.bf16.mxu0 %v3873
    %5840 = vmatpush2.bf16.msra.mxu0 %v3872
    %5841 = vmatprep.subr.bf16.mxu0 %v3869
    %5842 = vmatpush2.bf16.msra.mxu0 %v3868
    %5843 = vmatprep.subr.bf16.mxu0 %v3865
    %5844 = vmatpush2.bf16.msra.mxu0 %v3864
    %5845 = vmatprep.subr.bf16.mxu0 %v3861
    %5846 = vmatpush2.bf16.msra.mxu0 %v3860
    %5847 = vmatprep.subr.bf16.mxu0 %v3857
    %5848 = vmatpush2.bf16.msra.mxu0 %v3856
    %5849 = vmatprep.mubr.bf16.mxu0 %v945
    %5850 = vmatmul.mubr.bf16.gmra.mxu0 %v931
    %v5851 = vpop.f32.mrf.mxu0
    %v5852 = vadd.f32 %v5811, %v5851
    %v5853 = vpop.f32.mrf.mxu0
    %v5854 = vadd.f32 %v5813, %v5853
    %v5855 = vpop.f32.mrf.mxu0
    %v5856 = vpop.f32.mrf.mxu0
    %5857 = vdwg.mxu0
    %5858 = vmatprep.subr.bf16.mxu0 %v3917
    %5859 = vmatpush1.bf16.msra.mxu0 %v3916
    %5860 = vmatprep.subr.bf16.mxu0 %v3913
    %5861 = vmatpush1.bf16.msra.mxu0 %v3912
    %5862 = vmatprep.subr.bf16.mxu0 %v3909
    %5863 = vmatpush1.bf16.msra.mxu0 %v3908
    %5864 = vmatprep.subr.bf16.mxu0 %v3905
    %5865 = vmatpush1.bf16.msra.mxu0 %v3904
    %5866 = vmatprep.subr.bf16.mxu0 %v3901
    %5867 = vmatpush1.bf16.msra.mxu0 %v3900
    %5868 = vmatprep.subr.bf16.mxu0 %v3897
    %5869 = vmatpush1.bf16.msra.mxu0 %v3896
    %5870 = vmatprep.subr.bf16.mxu0 %v3893
    %5871 = vmatpush1.bf16.msra.mxu0 %v3892
    %5872 = vmatprep.subr.bf16.mxu0 %v3889
    %5873 = vmatpush1.bf16.msra.mxu0 %v3888
    %5874 = vmatprep.subr.bf16.mxu0 %v3949
    %5875 = vmatpush2.bf16.msra.mxu0 %v3948
    %5876 = vmatprep.subr.bf16.mxu0 %v3945
    %5877 = vmatpush2.bf16.msra.mxu0 %v3944
    %5878 = vmatprep.subr.bf16.mxu0 %v3941
    %5879 = vmatpush2.bf16.msra.mxu0 %v3940
    %5880 = vmatprep.subr.bf16.mxu0 %v3937
    %5881 = vmatpush2.bf16.msra.mxu0 %v3936
    %5882 = vmatprep.subr.bf16.mxu0 %v3933
    %5883 = vmatpush2.bf16.msra.mxu0 %v3932
    %5884 = vmatprep.subr.bf16.mxu0 %v3929
    %5885 = vmatpush2.bf16.msra.mxu0 %v3928
    %5886 = vmatprep.subr.bf16.mxu0 %v3925
    %5887 = vmatpush2.bf16.msra.mxu0 %v3924
    %5888 = vmatprep.subr.bf16.mxu0 %v3921
    %5889 = vmatpush2.bf16.msra.mxu0 %v3920
    %5890 = vmatprep.mubr.bf16.mxu0 %v949
    %5891 = vmatmul.mubr.bf16.gmra.mxu0 %v947
    %v5892 = vpop.f32.mrf.mxu0
    %v5893 = vadd.f32 %v5852, %v5892
    %v5894 = vpop.f32.mrf.mxu0
    %v5895 = vadd.f32 %v5854, %v5894
    %v5896 = vpop.f32.mrf.mxu0
    %v5897 = vpop.f32.mrf.mxu0
    %5898 = vdwg.mxu0
    %5899 = vmatprep.subr.bf16.mxu0 %v3981
    %5900 = vmatpush1.bf16.msra.mxu0 %v3980
    %5901 = vmatprep.subr.bf16.mxu0 %v3977
    %5902 = vmatpush1.bf16.msra.mxu0 %v3976
    %5903 = vmatprep.subr.bf16.mxu0 %v3973
    %5904 = vmatpush1.bf16.msra.mxu0 %v3972
    %5905 = vmatprep.subr.bf16.mxu0 %v3969
    %5906 = vmatpush1.bf16.msra.mxu0 %v3968
    %5907 = vmatprep.subr.bf16.mxu0 %v3965
    %5908 = vmatpush1.bf16.msra.mxu0 %v3964
    %5909 = vmatprep.subr.bf16.mxu0 %v3961
    %5910 = vmatpush1.bf16.msra.mxu0 %v3960
    %5911 = vmatprep.subr.bf16.mxu0 %v3957
    %5912 = vmatpush1.bf16.msra.mxu0 %v3956
    %5913 = vmatprep.subr.bf16.mxu0 %v3953
    %5914 = vmatpush1.bf16.msra.mxu0 %v3952
    %5915 = vmatprep.subr.bf16.mxu0 %v4013
    %5916 = vmatpush2.bf16.msra.mxu0 %v4012
    %5917 = vmatprep.subr.bf16.mxu0 %v4009
    %5918 = vmatpush2.bf16.msra.mxu0 %v4008
    %5919 = vmatprep.subr.bf16.mxu0 %v4005
    %5920 = vmatpush2.bf16.msra.mxu0 %v4004
    %5921 = vmatprep.subr.bf16.mxu0 %v4001
    %5922 = vmatpush2.bf16.msra.mxu0 %v4000
    %5923 = vmatprep.subr.bf16.mxu0 %v3997
    %5924 = vmatpush2.bf16.msra.mxu0 %v3996
    %5925 = vmatprep.subr.bf16.mxu0 %v3993
    %5926 = vmatpush2.bf16.msra.mxu0 %v3992
    %5927 = vmatprep.subr.bf16.mxu0 %v3989
    %5928 = vmatpush2.bf16.msra.mxu0 %v3988
    %5929 = vmatprep.subr.bf16.mxu0 %v3985
    %5930 = vmatpush2.bf16.msra.mxu0 %v3984
    %5931 = vmatprep.mubr.bf16.mxu0 %v987
    %5932 = vmatmul.mubr.bf16.gmra.mxu0 %v973
    %v5933 = vpop.f32.mrf.mxu0
    %v5934 = vadd.f32 %v5893, %v5933
    %v5935 = vpop.f32.mrf.mxu0
    %v5936 = vadd.f32 %v5895, %v5935
    %v5937 = vpop.f32.mrf.mxu0
    %v5938 = vpop.f32.mrf.mxu0
    %5939 = vdwg.mxu0
    %5940 = vmatprep.subr.bf16.mxu0 %v4045
    %5941 = vmatpush1.bf16.msra.mxu0 %v4044
    %5942 = vmatprep.subr.bf16.mxu0 %v4041
    %5943 = vmatpush1.bf16.msra.mxu0 %v4040
    %5944 = vmatprep.subr.bf16.mxu0 %v4037
    %5945 = vmatpush1.bf16.msra.mxu0 %v4036
    %5946 = vmatprep.subr.bf16.mxu0 %v4033
    %5947 = vmatpush1.bf16.msra.mxu0 %v4032
    %5948 = vmatprep.subr.bf16.mxu0 %v4029
    %5949 = vmatpush1.bf16.msra.mxu0 %v4028
    %5950 = vmatprep.subr.bf16.mxu0 %v4025
    %5951 = vmatpush1.bf16.msra.mxu0 %v4024
    %5952 = vmatprep.subr.bf16.mxu0 %v4021
    %5953 = vmatpush1.bf16.msra.mxu0 %v4020
    %5954 = vmatprep.subr.bf16.mxu0 %v4017
    %5955 = vmatpush1.bf16.msra.mxu0 %v4016
    %5956 = vmatprep.subr.bf16.mxu0 %v4077
    %5957 = vmatpush2.bf16.msra.mxu0 %v4076
    %5958 = vmatprep.subr.bf16.mxu0 %v4073
    %5959 = vmatpush2.bf16.msra.mxu0 %v4072
    %5960 = vmatprep.subr.bf16.mxu0 %v4069
    %5961 = vmatpush2.bf16.msra.mxu0 %v4068
    %5962 = vmatprep.subr.bf16.mxu0 %v4065
    %5963 = vmatpush2.bf16.msra.mxu0 %v4064
    %5964 = vmatprep.subr.bf16.mxu0 %v4061
    %5965 = vmatpush2.bf16.msra.mxu0 %v4060
    %5966 = vmatprep.subr.bf16.mxu0 %v4057
    %5967 = vmatpush2.bf16.msra.mxu0 %v4056
    %5968 = vmatprep.subr.bf16.mxu0 %v4053
    %5969 = vmatpush2.bf16.msra.mxu0 %v4052
    %5970 = vmatprep.subr.bf16.mxu0 %v4049
    %5971 = vmatpush2.bf16.msra.mxu0 %v4048
    %5972 = vmatprep.mubr.bf16.mxu0 %v997
    %5973 = vmatmul.mubr.bf16.gmra.mxu0 %v995
    %v5974 = vpop.f32.mrf.mxu0
    %v5975 = vadd.f32 %v5934, %v5974
    %v5976 = vpop.f32.mrf.mxu0
    %v5977 = vadd.f32 %v5936, %v5976
    %v5978 = vpop.f32.mrf.mxu0
    %v5979 = vpop.f32.mrf.mxu0
    %5980 = vdwg.mxu0
    %5981 = vmatprep.subr.bf16.mxu0 %v4109
    %5982 = vmatpush1.bf16.msra.mxu0 %v4108
    %5983 = vmatprep.subr.bf16.mxu0 %v4105
    %5984 = vmatpush1.bf16.msra.mxu0 %v4104
    %5985 = vmatprep.subr.bf16.mxu0 %v4101
    %5986 = vmatpush1.bf16.msra.mxu0 %v4100
    %5987 = vmatprep.subr.bf16.mxu0 %v4097
    %5988 = vmatpush1.bf16.msra.mxu0 %v4096
    %5989 = vmatprep.subr.bf16.mxu0 %v4093
    %5990 = vmatpush1.bf16.msra.mxu0 %v4092
    %5991 = vmatprep.subr.bf16.mxu0 %v4089
    %5992 = vmatpush1.bf16.msra.mxu0 %v4088
    %5993 = vmatprep.subr.bf16.mxu0 %v4085
    %5994 = vmatpush1.bf16.msra.mxu0 %v4084
    %5995 = vmatprep.subr.bf16.mxu0 %v4081
    %5996 = vmatpush1.bf16.msra.mxu0 %v4080
    %5997 = vmatprep.subr.bf16.mxu0 %v4141
    %5998 = vmatpush2.bf16.msra.mxu0 %v4140
    %5999 = vmatprep.subr.bf16.mxu0 %v4137
    %6000 = vmatpush2.bf16.msra.mxu0 %v4136
    %6001 = vmatprep.subr.bf16.mxu0 %v4133
    %6002 = vmatpush2.bf16.msra.mxu0 %v4132
    %6003 = vmatprep.subr.bf16.mxu0 %v4129
    %6004 = vmatpush2.bf16.msra.mxu0 %v4128
    %6005 = vmatprep.subr.bf16.mxu0 %v4125
    %6006 = vmatpush2.bf16.msra.mxu0 %v4124
    %6007 = vmatprep.subr.bf16.mxu0 %v4121
    %6008 = vmatpush2.bf16.msra.mxu0 %v4120
    %6009 = vmatprep.subr.bf16.mxu0 %v4117
    %6010 = vmatpush2.bf16.msra.mxu0 %v4116
    %6011 = vmatprep.subr.bf16.mxu0 %v4113
    %6012 = vmatpush2.bf16.msra.mxu0 %v4112
    %6013 = vmatprep.mubr.bf16.mxu0 %v994
    %6014 = vmatmul.mubr.bf16.gmra.mxu0 %v980
    %v6015 = vpop.f32.mrf.mxu0
    %v6016 = vadd.f32 %v5975, %v6015
    %v6017 = vpop.f32.mrf.mxu0
    %v6018 = vadd.f32 %v5977, %v6017
    %v6019 = vpop.f32.mrf.mxu0
    %v6020 = vpop.f32.mrf.mxu0
    %6021 = vdwg.mxu0
    %6022 = vmatprep.subr.bf16.mxu0 %v4173
    %6023 = vmatpush1.bf16.msra.mxu0 %v4172
    %6024 = vmatprep.subr.bf16.mxu0 %v4169
    %6025 = vmatpush1.bf16.msra.mxu0 %v4168
    %6026 = vmatprep.subr.bf16.mxu0 %v4165
    %6027 = vmatpush1.bf16.msra.mxu0 %v4164
    %6028 = vmatprep.subr.bf16.mxu0 %v4161
    %6029 = vmatpush1.bf16.msra.mxu0 %v4160
    %6030 = vmatprep.subr.bf16.mxu0 %v4157
    %6031 = vmatpush1.bf16.msra.mxu0 %v4156
    %6032 = vmatprep.subr.bf16.mxu0 %v4153
    %6033 = vmatpush1.bf16.msra.mxu0 %v4152
    %6034 = vmatprep.subr.bf16.mxu0 %v4149
    %6035 = vmatpush1.bf16.msra.mxu0 %v4148
    %6036 = vmatprep.subr.bf16.mxu0 %v4145
    %6037 = vmatpush1.bf16.msra.mxu0 %v4144
    %6038 = vmatprep.subr.bf16.mxu0 %v4205
    %6039 = vmatpush2.bf16.msra.mxu0 %v4204
    %6040 = vmatprep.subr.bf16.mxu0 %v4201
    %6041 = vmatpush2.bf16.msra.mxu0 %v4200
    %6042 = vmatprep.subr.bf16.mxu0 %v4197
    %6043 = vmatpush2.bf16.msra.mxu0 %v4196
    %6044 = vmatprep.subr.bf16.mxu0 %v4193
    %6045 = vmatpush2.bf16.msra.mxu0 %v4192
    %6046 = vmatprep.subr.bf16.mxu0 %v4189
    %6047 = vmatpush2.bf16.msra.mxu0 %v4188
    %6048 = vmatprep.subr.bf16.mxu0 %v4185
    %6049 = vmatpush2.bf16.msra.mxu0 %v4184
    %6050 = vmatprep.subr.bf16.mxu0 %v4181
    %6051 = vmatpush2.bf16.msra.mxu0 %v4180
    %6052 = vmatprep.subr.bf16.mxu0 %v4177
    %6053 = vmatpush2.bf16.msra.mxu0 %v4176
    %6054 = vmatprep.mubr.bf16.mxu0 %v998
    %6055 = vmatmul.mubr.bf16.gmra.mxu0 %v996
    %v6056 = vpop.f32.mrf.mxu0
    %v6057 = vadd.f32 %v6016, %v6056
    %v6058 = vpop.f32.mrf.mxu0
    %v6059 = vadd.f32 %v6018, %v6058
    %v6060 = vpop.f32.mrf.mxu0
    %v6061 = vpop.f32.mrf.mxu0
    %6062 = vdwg.mxu0
    %6063 = vmatprep.subr.bf16.mxu0 %v4237
    %6064 = vmatpush1.bf16.msra.mxu0 %v4236
    %6065 = vmatprep.subr.bf16.mxu0 %v4233
    %6066 = vmatpush1.bf16.msra.mxu0 %v4232
    %6067 = vmatprep.subr.bf16.mxu0 %v4229
    %6068 = vmatpush1.bf16.msra.mxu0 %v4228
    %6069 = vmatprep.subr.bf16.mxu0 %v4225
    %6070 = vmatpush1.bf16.msra.mxu0 %v4224
    %6071 = vmatprep.subr.bf16.mxu0 %v4221
    %6072 = vmatpush1.bf16.msra.mxu0 %v4220
    %6073 = vmatprep.subr.bf16.mxu0 %v4217
    %6074 = vmatpush1.bf16.msra.mxu0 %v4216
    %6075 = vmatprep.subr.bf16.mxu0 %v4213
    %6076 = vmatpush1.bf16.msra.mxu0 %v4212
    %6077 = vmatprep.subr.bf16.mxu0 %v4209
    %6078 = vmatpush1.bf16.msra.mxu0 %v4208
    %6079 = vmatprep.subr.bf16.mxu0 0
    %6080 = vmatpush2.bf16.msra.mxu0 0
    %6081 = vmatprep.subr.bf16.mxu0 0
    %6082 = vmatpush2.bf16.msra.mxu0 0
    %6083 = vmatprep.subr.bf16.mxu0 0
    %6084 = vmatpush2.bf16.msra.mxu0 0
    %6085 = vmatprep.subr.bf16.mxu0 0
    %6086 = vmatpush2.bf16.msra.mxu0 0
    %6087 = vmatprep.subr.bf16.mxu0 0
    %6088 = vmatpush2.bf16.msra.mxu0 0
    %6089 = vmatprep.subr.bf16.mxu0 0
    %6090 = vmatpush2.bf16.msra.mxu0 0
    %6091 = vmatprep.subr.bf16.mxu0 0
    %6092 = vmatpush2.bf16.msra.mxu0 0
    %6093 = vmatprep.subr.bf16.mxu0 0
    %6094 = vmatpush2.bf16.msra.mxu0 0
    %6095 = vmatprep.mubr.bf16.mxu0 0
    %6096 = vmatmul.mubr.bf16.gmra.mxu0 %v1012
    %v6097 = vpop.f32.mrf.mxu0
    %v6098 = vadd.f32 %v6057, %v6097
    %v6099 = vpop.f32.mrf.mxu0
    %v6100 = vadd.f32 %v6059, %v6099
    %v6101 = vpop.f32.mrf.mxu0
    %v6102 = vpop.f32.mrf.mxu0
    %6103 = vdwg.mxu0
    %v6104 = vmax.f32 %v5565, 0.0
    %v6105 = vmax.f32 %v5567, 0.0
    %v6106 = vmax.f32 %v6098, 0.0
    %v6107 = vmax.f32 %v6100, 0.0
    %v6108 = vpack.c.bf16 %v6104, %v6104
    %v6109 = vpack.c.bf16 %v6105, %v6105
    %v6110 = vpack.c.bf16 %v6106, %v6106
    %v6111 = vpack.c.bf16 %v6107, %v6107
    %v6112 = vld [vmem:[%s3] sm:$0xf]
    %v6113 = vld [vmem:[%s3 + $0x4] sm:$0xf]
    %v6114 = vld [vmem:[%s3 + $0x8] sm:$0xf]
    %v6115 = vld [vmem:[%s3 + $0xc] sm:$0xf]
    %v6116 = vld [vmem:[%s3 + $0x10] sm:$0xf]
    %v6117 = vld [vmem:[%s3 + $0x14] sm:$0xf]
    %v6118 = vld [vmem:[%s3 + $0x18] sm:$0xf]
    %v6119 = vld [vmem:[%s3 + $0x1c] sm:$0xf]
    %v6120 = vld [vmem:[%s3 + $0x20] sm:$0xf]
    %v6121 = vld [vmem:[%s3 + $0x24] sm:$0xf]
    %v6122 = vld [vmem:[%s3 + $0x28] sm:$0xf]
    %v6123 = vld [vmem:[%s3 + $0x2c] sm:$0xf]
    %v6124 = vld [vmem:[%s3 + $0x30] sm:$0xf]
    %v6125 = vld [vmem:[%s3 + $0x34] sm:$0xf]
    %v6126 = vld [vmem:[%s3 + $0x38] sm:$0xf]
    %v6127 = vld [vmem:[%s3 + $0x3c] sm:$0xf]
    %v6128 = vld [vmem:[%s3 + $0x40] sm:$0xf]
    %v6129 = vld [vmem:[%s3 + $0x44] sm:$0xf]
    %v6130 = vld [vmem:[%s3 + $0x48] sm:$0xf]
    %v6131 = vld [vmem:[%s3 + $0x4c] sm:$0xf]
    %v6132 = vld [vmem:[%s3 + $0x50] sm:$0xf]
    %v6133 = vld [vmem:[%s3 + $0x54] sm:$0xf]
    %v6134 = vld [vmem:[%s3 + $0x58] sm:$0xf]
    %v6135 = vld [vmem:[%s3 + $0x5c] sm:$0xf]
    %v6136 = vld [vmem:[%s3 + $0x60] sm:$0xf]
    %v6137 = vld [vmem:[%s3 + $0x64] sm:$0xf]
    %v6138 = vld [vmem:[%s3 + $0x68] sm:$0xf]
    %v6139 = vld [vmem:[%s3 + $0x6c] sm:$0xf]
    %v6140 = vld [vmem:[%s3 + $0x70] sm:$0xf]
    %v6141 = vld [vmem:[%s3 + $0x74] sm:$0xf]
    %v6142 = vld [vmem:[%s3 + $0x78] sm:$0xf]
    %v6143 = vld [vmem:[%s3 + $0x7c] sm:$0xf]
    %v6144 = vld [vmem:[%s3 + $0x80] sm:$0xf]
    %v6145 = vld [vmem:[%s3 + $0x84] sm:$0xf]
    %v6146 = vld [vmem:[%s3 + $0x88] sm:$0xf]
    %v6147 = vld [vmem:[%s3 + $0x8c] sm:$0xf]
    %v6148 = vld [vmem:[%s3 + $0x90] sm:$0xf]
    %v6149 = vld [vmem:[%s3 + $0x94] sm:$0xf]
    %v6150 = vld [vmem:[%s3 + $0x98] sm:$0xf]
    %v6151 = vld [vmem:[%s3 + $0x9c] sm:$0xf]
    %v6152 = vld [vmem:[%s3 + $0xa0] sm:$0xf]
    %v6153 = vld [vmem:[%s3 + $0xa4] sm:$0xf]
    %v6154 = vld [vmem:[%s3 + $0xa8] sm:$0xf]
    %v6155 = vld [vmem:[%s3 + $0xac] sm:$0xf]
    %v6156 = vld [vmem:[%s3 + $0xb0] sm:$0xf]
    %v6157 = vld [vmem:[%s3 + $0xb4] sm:$0xf]
    %v6158 = vld [vmem:[%s3 + $0xb8] sm:$0xf]
    %v6159 = vld [vmem:[%s3 + $0xbc] sm:$0xf]
    %v6160 = vld [vmem:[%s3 + $0xc0] sm:$0xf]
    %v6161 = vld [vmem:[%s3 + $0xc4] sm:$0xf]
    %v6162 = vld [vmem:[%s3 + $0xc8] sm:$0xf]
    %v6163 = vld [vmem:[%s3 + $0xcc] sm:$0xf]
    %v6164 = vld [vmem:[%s3 + $0xd0] sm:$0xf]
    %v6165 = vld [vmem:[%s3 + $0xd4] sm:$0xf]
    %v6166 = vld [vmem:[%s3 + $0xd8] sm:$0xf]
    %v6167 = vld [vmem:[%s3 + $0xdc] sm:$0xf]
    %v6168 = vld [vmem:[%s3 + $0xe0] sm:$0xf]
    %v6169 = vld [vmem:[%s3 + $0xe4] sm:$0xf]
    %v6170 = vld [vmem:[%s3 + $0xe8] sm:$0xf]
    %v6171 = vld [vmem:[%s3 + $0xec] sm:$0xf]
    %v6172 = vld [vmem:[%s3 + $0xf0] sm:$0xf]
    %v6173 = vld [vmem:[%s3 + $0xf4] sm:$0xf]
    %v6174 = vld [vmem:[%s3 + $0xf8] sm:$0xf]
    %v6175 = vld [vmem:[%s3 + $0xfc] sm:$0xf]
    %v6176 = vld [vmem:[%s4] sm:$0x1]
    %v6178 = vlaneseq
    %v6179 = vshrl.u32 %v6178, 7
    %v6180 = vsub.s32 0, %v6179
    %v6181 = vrot.slane %v6176, %v6180
    %v6247 = vunpack.c.l.b16 %v6112
    %v6248 = vunpack.c.l.b16 %v6113
    %v6249 = vunpack.c.l.b16 %v6114
    %v6250 = vunpack.c.l.b16 %v6115
    %v6251 = vunpack.c.l.b16 %v6116
    %v6252 = vunpack.c.l.b16 %v6117
    %v6253 = vunpack.c.l.b16 %v6118
    %v6254 = vunpack.c.l.b16 %v6119
    %v6255 = vunpack.c.l.b16 %v6120
    %v6256 = vunpack.c.l.b16 %v6121
    %v6257 = vunpack.c.l.b16 %v6122
    %v6258 = vunpack.c.l.b16 %v6123
    %v6259 = vunpack.c.l.b16 %v6124
    %v6260 = vunpack.c.l.b16 %v6125
    %v6261 = vunpack.c.l.b16 %v6126
    %v6262 = vunpack.c.l.b16 %v6127
    %v6263 = vunpack.c.l.b16 %v6128
    %v6264 = vunpack.c.l.b16 %v6129
    %v6265 = vunpack.c.l.b16 %v6130
    %v6266 = vunpack.c.l.b16 %v6131
    %v6267 = vunpack.c.l.b16 %v6132
    %v6268 = vunpack.c.l.b16 %v6133
    %v6269 = vunpack.c.l.b16 %v6134
    %v6270 = vunpack.c.l.b16 %v6135
    %v6271 = vunpack.c.l.b16 %v6136
    %v6272 = vunpack.c.l.b16 %v6137
    %v6273 = vunpack.c.l.b16 %v6138
    %v6274 = vunpack.c.l.b16 %v6139
    %v6275 = vunpack.c.l.b16 %v6140
    %v6276 = vunpack.c.l.b16 %v6141
    %v6277 = vunpack.c.l.b16 %v6142
    %v6278 = vunpack.c.l.b16 %v6143
    %v6279 = vunpack.c.l.b16 %v6144
    %v6280 = vunpack.c.l.b16 %v6145
    %v6281 = vunpack.c.l.b16 %v6146
    %v6282 = vunpack.c.l.b16 %v6147
    %v6283 = vunpack.c.l.b16 %v6148
    %v6284 = vunpack.c.l.b16 %v6149
    %v6285 = vunpack.c.l.b16 %v6150
    %v6286 = vunpack.c.l.b16 %v6151
    %v6287 = vunpack.c.l.b16 %v6152
    %v6288 = vunpack.c.l.b16 %v6153
    %v6289 = vunpack.c.l.b16 %v6154
    %v6290 = vunpack.c.l.b16 %v6155
    %v6291 = vunpack.c.l.b16 %v6156
    %v6292 = vunpack.c.l.b16 %v6157
    %v6293 = vunpack.c.l.b16 %v6158
    %v6294 = vunpack.c.l.b16 %v6159
    %v6295 = vunpack.c.l.b16 %v6160
    %v6296 = vunpack.c.l.b16 %v6161
    %v6297 = vunpack.c.l.b16 %v6162
    %v6298 = vunpack.c.l.b16 %v6163
    %v6299 = vunpack.c.l.b16 %v6164
    %v6300 = vunpack.c.l.b16 %v6165
    %v6301 = vunpack.c.l.b16 %v6166
    %v6302 = vunpack.c.l.b16 %v6167
    %v6303 = vunpack.c.l.b16 %v6168
    %v6304 = vunpack.c.l.b16 %v6169
    %v6305 = vunpack.c.l.b16 %v6170
    %v6306 = vunpack.c.l.b16 %v6171
    %v6307 = vunpack.c.l.b16 %v6172
    %v6308 = vunpack.c.l.b16 %v6173
    %v6309 = vunpack.c.l.b16 %v6174
    %v6310 = vunpack.c.l.b16 %v6175
    %v6311 = vpack.c.b16 %v6248, %v6247
    %v6312 = vpack.c.b16 %v6250, %v6249
    %v6313 = vpack.c.b16 %v6252, %v6251
    %v6314 = vpack.c.b16 %v6254, %v6253
    %v6315 = vpack.c.b16 %v6256, %v6255
    %v6316 = vpack.c.b16 %v6258, %v6257
    %v6317 = vpack.c.b16 %v6260, %v6259
    %v6318 = vpack.c.b16 %v6262, %v6261
    %v6319 = vpack.c.b16 %v6264, %v6263
    %v6320 = vpack.c.b16 %v6266, %v6265
    %v6321 = vpack.c.b16 %v6268, %v6267
    %v6322 = vpack.c.b16 %v6270, %v6269
    %v6323 = vpack.c.b16 %v6272, %v6271
    %v6324 = vpack.c.b16 %v6274, %v6273
    %v6325 = vpack.c.b16 %v6276, %v6275
    %v6326 = vpack.c.b16 %v6278, %v6277
    %v6327 = vpack.c.b16 %v6280, %v6279
    %v6328 = vpack.c.b16 %v6282, %v6281
    %v6329 = vpack.c.b16 %v6284, %v6283
    %v6330 = vpack.c.b16 %v6286, %v6285
    %v6331 = vpack.c.b16 %v6288, %v6287
    %v6332 = vpack.c.b16 %v6290, %v6289
    %v6333 = vpack.c.b16 %v6292, %v6291
    %v6334 = vpack.c.b16 %v6294, %v6293
    %v6335 = vpack.c.b16 %v6296, %v6295
    %v6336 = vpack.c.b16 %v6298, %v6297
    %v6337 = vpack.c.b16 %v6300, %v6299
    %v6338 = vpack.c.b16 %v6302, %v6301
    %v6339 = vpack.c.b16 %v6304, %v6303
    %v6340 = vpack.c.b16 %v6306, %v6305
    %v6341 = vpack.c.b16 %v6308, %v6307
    %v6342 = vpack.c.b16 %v6310, %v6309
    %6375 = vmatprep.subr.bf16.mxu0 0
    %6376 = vmatpush1.bf16.msra.mxu0 %v6318
    %6377 = vmatprep.subr.bf16.mxu0 0
    %6378 = vmatpush1.bf16.msra.mxu0 %v6317
    %6379 = vmatprep.subr.bf16.mxu0 0
    %6380 = vmatpush1.bf16.msra.mxu0 %v6316
    %6381 = vmatprep.subr.bf16.mxu0 0
    %6382 = vmatpush1.bf16.msra.mxu0 %v6315
    %6383 = vmatprep.subr.bf16.mxu0 0
    %6384 = vmatpush1.bf16.msra.mxu0 %v6314
    %6385 = vmatprep.subr.bf16.mxu0 0
    %6386 = vmatpush1.bf16.msra.mxu0 %v6313
    %6387 = vmatprep.subr.bf16.mxu0 0
    %6388 = vmatpush1.bf16.msra.mxu0 %v6312
    %6389 = vmatprep.subr.bf16.mxu0 0
    %6390 = vmatpush1.bf16.msra.mxu0 %v6311
    %6391 = vmatprep.subr.bf16.mxu0 0
    %6392 = vmatpush2.bf16.msra.mxu0 %v6326
    %6393 = vmatprep.subr.bf16.mxu0 0
    %6394 = vmatpush2.bf16.msra.mxu0 %v6325
    %6395 = vmatprep.subr.bf16.mxu0 0
    %6396 = vmatpush2.bf16.msra.mxu0 %v6324
    %6397 = vmatprep.subr.bf16.mxu0 0
    %6398 = vmatpush2.bf16.msra.mxu0 %v6323
    %6399 = vmatprep.subr.bf16.mxu0 0
    %6400 = vmatpush2.bf16.msra.mxu0 %v6322
    %6401 = vmatprep.subr.bf16.mxu0 0
    %6402 = vmatpush2.bf16.msra.mxu0 %v6321
    %6403 = vmatprep.subr.bf16.mxu0 0
    %6404 = vmatpush2.bf16.msra.mxu0 %v6320
    %6405 = vmatprep.subr.bf16.mxu0 0
    %6406 = vmatpush2.bf16.msra.mxu0 %v6319
    %6407 = vmatprep.mubr.bf16.mxu0 %v6109
    %6408 = vmatmul.mubr.bf16.gmra.mxu0 %v6108
    %v6409 = vpop.f32.mrf.mxu0
    %v6410 = vadd.f32 %v6181, %v6409
    %v6411 = vpop.f32.mrf.mxu0
    %v6412 = vpop.f32.mrf.mxu0
    %v6413 = vpop.f32.mrf.mxu0
    %6414 = vdwg.mxu0
    %6415 = vmatprep.subr.bf16.mxu0 0
    %6416 = vmatpush1.bf16.msra.mxu0 %v6334
    %6417 = vmatprep.subr.bf16.mxu0 0
    %6418 = vmatpush1.bf16.msra.mxu0 %v6333
    %6419 = vmatprep.subr.bf16.mxu0 0
    %6420 = vmatpush1.bf16.msra.mxu0 %v6332
    %6421 = vmatprep.subr.bf16.mxu0 0
    %6422 = vmatpush1.bf16.msra.mxu0 %v6331
    %6423 = vmatprep.subr.bf16.mxu0 0
    %6424 = vmatpush1.bf16.msra.mxu0 %v6330
    %6425 = vmatprep.subr.bf16.mxu0 0
    %6426 = vmatpush1.bf16.msra.mxu0 %v6329
    %6427 = vmatprep.subr.bf16.mxu0 0
    %6428 = vmatpush1.bf16.msra.mxu0 %v6328
    %6429 = vmatprep.subr.bf16.mxu0 0
    %6430 = vmatpush1.bf16.msra.mxu0 %v6327
    %6431 = vmatprep.subr.bf16.mxu0 0
    %6432 = vmatpush2.bf16.msra.mxu0 %v6342
    %6433 = vmatprep.subr.bf16.mxu0 0
    %6434 = vmatpush2.bf16.msra.mxu0 %v6341
    %6435 = vmatprep.subr.bf16.mxu0 0
    %6436 = vmatpush2.bf16.msra.mxu0 %v6340
    %6437 = vmatprep.subr.bf16.mxu0 0
    %6438 = vmatpush2.bf16.msra.mxu0 %v6339
    %6439 = vmatprep.subr.bf16.mxu0 0
    %6440 = vmatpush2.bf16.msra.mxu0 %v6338
    %6441 = vmatprep.subr.bf16.mxu0 0
    %6442 = vmatpush2.bf16.msra.mxu0 %v6337
    %6443 = vmatprep.subr.bf16.mxu0 0
    %6444 = vmatpush2.bf16.msra.mxu0 %v6336
    %6445 = vmatprep.subr.bf16.mxu0 0
    %6446 = vmatpush2.bf16.msra.mxu0 %v6335
    %6447 = vmatprep.mubr.bf16.mxu0 %v6111
    %6448 = vmatmul.mubr.bf16.gmra.mxu0 %v6110
    %v6449 = vpop.f32.mrf.mxu0
    %v6450 = vadd.f32 %v6410, %v6449
    %v6451 = vpop.f32.mrf.mxu0
    %v6452 = vpop.f32.mrf.mxu0
    %v6453 = vpop.f32.mrf.mxu0
    %6454 = vdwg.mxu0
    %6455 = vst [vmem:[#allocation2] sm:$0x3] %v6450
    // Predicated region
    $region22: #{qnet_forward.7} parent=1 // pred_check
      _
    $region23: #{qnet_forward.7} parent=1 // pred_check_branch
      %6457 = sbr.rel (0) target = $region25
    $region24: #{qnet_forward.7} parent=1 // pred_region
      %s6459 = ssub.s32 32, 32
      %6460 = vsyncadd [#allocation3], %s6459
      %s6462 = sshll.u32 [#allocation2], 4
      %s6463 = int_to_ptr.vmem [resolvable:$true] %s6462
      %6465 = dma.vmem_to_hbm [thread:$0]  %s6463, 32, %s5, [#allocation3]
    $region25: #{qnet_forward.7} parent=1 // pred_fallthru
      _
    // Predicated region
    $region26: #{qnet_forward.7} parent=1 // pred_check
      _
    $region27: #{qnet_forward.7} parent=1 // pred_check_branch
      %6467 = sbr.rel (0) target = $region29
    $region28: #{qnet_forward.7} parent=1 // pred_region
      %6468 = dma.done [#allocation3], 32
    $region29: #{qnet_forward.7} parent=1 // pred_fallthru
      _
    %6469 = vsyncpa [#allocation3], 1

</llo_original>
